<compile_context>
chip_gen: v7x
topology: tpu7x:2x2x1
jax: 0.10.0
libtpu: 0.0.40
codegen_flags: <defaults>
</compile_context>

<pallas_src>
import functools

import jax
import jax.numpy as jnp
from jax.experimental import pallas as pl
from jax.experimental.pallas import tpu as pltpu


_VMEM_LIMIT = 48 * 1024 * 1024          # fits v5e/v6e (128 MiB) and v7x (64 MiB)
_FULLK_MAX_ELEMS = 3 * 1024 * 1024      # K*tn above this -> K-tiled accumulator path


# ---------------------------------------------------------------------------
# Pallas kernels
# ---------------------------------------------------------------------------
def _mm_fused_kernel(x_ref, w_ref, b_ref, o_ref, *, relu):
    """Single-shot matmul (full K in one block) + bias (+ReLU). bf16 in, f32 acc."""
    acc = jnp.dot(x_ref[...], w_ref[...], preferred_element_type=jnp.float32)
    acc = acc + b_ref[...]                       # (tm, tn) + (1, tn)
    if relu:
        acc = jnp.maximum(acc, 0.0)
    o_ref[...] = acc.astype(o_ref.dtype)


def _mm_acc_kernel(x_ref, w_ref, b_ref, o_ref, acc_ref, *, relu):
    """K-tiled matmul with f32 VMEM accumulator; bias+ReLU fused in finalize."""
    @pl.when(pl.program_id(2) == 0)
    def _init():
        acc_ref[...] = jnp.zeros_like(acc_ref)

    acc_ref[...] += jnp.dot(x_ref[...], w_ref[...],
                            preferred_element_type=jnp.float32)

    @pl.when(pl.program_id(2) == pl.num_programs(2) - 1)
    def _finalize():
        out = acc_ref[...] + b_ref[...]
        if relu:
            out = jnp.maximum(out, 0.0)
        o_ref[...] = out.astype(o_ref.dtype)


def _maxpool_kernel(x_ref, o_ref):
    """2x2/2 max pool on a (tr, 2, Wo, 2*C) block -> (tr, Wo, C)."""
    x = x_ref[...]
    v = jnp.maximum(x[:, 0], x[:, 1])            # vertical max  -> (tr, Wo, 2*C)
    c = o_ref.shape[-1]
    o_ref[...] = jnp.maximum(v[..., :c], v[..., c:])   # horizontal max


def _softmax_kernel(x_ref, o_ref):
    x = x_ref[...].astype(jnp.float32)
    m = jnp.max(x, axis=-1, keepdims=True)
    e = jnp.exp(x - m)
    o_ref[...] = (e / jnp.sum(e, axis=-1, keepdims=True)).astype(o_ref.dtype)


# ---------------------------------------------------------------------------
# Tiling helpers
# ---------------------------------------------------------------------------
def _round_up(v, m):
    return (v + m - 1) // m * m


def _largest_divisor(n, cap, multiple_of=1):
    cap = max(1, min(cap, n))
    for d in range(cap, 0, -1):
        if n % d == 0 and d % multiple_of == 0:
            return d
    return n


def _pick_tm(mp):
    cap = 256
    if mp >= 16:
        cap = min(cap, mp // 2)      # keep >=2 row tiles so both v7x TCs get work
    cap = max(cap, 8)
    return _largest_divisor(mp, cap, multiple_of=8)


def _pick_tn(n):
    for t in (512, 256, 128):        # 256+ tiles fill the v6e/v7x 256x256 MXU
        if n % t == 0:
            return t, n
    if n <= 256:                     # e.g. Cout=64: full-dim block, no pad copy
        return n, n
    np_ = _round_up(n, 128)
    for t in (512, 256, 128):
        if np_ % t == 0:
            return t, np_
    return 128, np_


def _pick_tk(k):
    kp = k if k % 128 == 0 else _round_up(k, 128)
    f = _largest_divisor(kp // 128, 32)      # tk = f*128 <= 4096
    return f * 128, kp


# ---------------------------------------------------------------------------
# Pallas wrappers
# ---------------------------------------------------------------------------
def matmul_bias_act(x, w, b, *, relu, out_dtype=jnp.bfloat16):
    """y = x @ w + b (optional ReLU).  x:(M,K), w:(K,N), b:(N,). bf16 MXU path."""
    m, k = x.shape
    k2, n = w.shape
    assert k == k2 and b.shape == (n,)

    x = x.astype(jnp.bfloat16)
    w = w.astype(jnp.bfloat16)
    b = b.astype(jnp.float32)

    mp = _round_up(m, 8)
    tm = _pick_tm(mp)
    tn, np_ = _pick_tn(n)

    if mp != m:
        x = jnp.pad(x, ((0, mp - m), (0, 0)))          # tiny (FC inputs only)
    if np_ != n:
        w = jnp.pad(w, ((0, 0), (0, np_ - n)))         # 500 -> 512 classes only
        b = jnp.pad(b, ((0, np_ - n),))
    b2 = b.reshape(1, np_)

    mt, nt = mp // tm, np_ // tn

    if k * tn <= _FULLK_MAX_ELEMS:
        # Weight-resident path: full-K blocks; weight block index depends only
        # on j (outermost), so the whole weight matrix is DMA'd once per layer.
        out = pl.pallas_call(
            functools.partial(_mm_fused_kernel, relu=relu),
            out_shape=jax.ShapeDtypeStruct((mp, np_), out_dtype),
            grid_spec=pltpu.PrefetchScalarGridSpec(
                num_scalar_prefetch=0,
                grid=(nt, mt),
                in_specs=[
                    pl.BlockSpec((tm, k), lambda j, i: (i, 0)),
                    pl.BlockSpec((k, tn), lambda j, i: (0, j)),
                    pl.BlockSpec((1, tn), lambda j, i: (0, j)),
                ],
                out_specs=pl.BlockSpec((tm, tn), lambda j, i: (i, j)),
            ),
            compiler_params=pltpu.CompilerParams(
                dimension_semantics=("parallel", "parallel"),
                vmem_limit_bytes=_VMEM_LIMIT),
        )(x, w, b2)
    else:
        # Huge-K (e.g. FC1 at 224x224 scale): K-tiled accumulator, K innermost.
        tk, kp = _pick_tk(k)
        if kp != k:
            x = jnp.pad(x, ((0, 0), (0, kp - k)))
            w = jnp.pad(w, ((0, kp - k), (0, 0)))
        kt = kp // tk
        out = pl.pallas_call(
            functools.partial(_mm_acc_kernel, relu=relu),
            out_shape=jax.ShapeDtypeStruct((mp, np_), out_dtype),
            grid_spec=pltpu.PrefetchScalarGridSpec(
                num_scalar_prefetch=0,
                grid=(nt, mt, kt),
                in_specs=[
                    pl.BlockSpec((tm, tk), lambda j, i, kk: (i, kk)),
                    # TODO(synk): pipeline_mode=pl.Buffered(3) here would deepen
                    # weight prefetch for the bandwidth-bound FC1 stream.
                    pl.BlockSpec((tk, tn), lambda j, i, kk: (kk, j)),
                    pl.BlockSpec((1, tn), lambda j, i, kk: (0, j)),
                ],
                out_specs=pl.BlockSpec((tm, tn), lambda j, i, kk: (i, j)),
                scratch_shapes=[pltpu.VMEM((tm, tn), jnp.float32)],
            ),
            compiler_params=pltpu.CompilerParams(
                dimension_semantics=("parallel", "parallel", "arbitrary"),
                vmem_limit_bytes=_VMEM_LIMIT),
        )(x, w, b2)

    if mp != m or np_ != n:
        out = out[:m, :n]
    return out


def _im2col_3x3(x):
    """x:(N,H,W,C) bf16 -> (N*H*W, 9*C), same padding, patch order (kh,kw,C)."""
    n, h, w, c = x.shape
    xp = jnp.pad(x, ((0, 0), (1, 1), (1, 1), (0, 0)))
    cols = [xp[:, dy:dy + h, dx:dx + w, :] for dy in range(3) for dx in range(3)]
    return jnp.concatenate(cols, axis=-1).reshape(n * h * w, 9 * c)


def conv3x3_relu(x, w, b):
    """x:(N,H,W,Cin) NHWC bf16, w:(3,3,Cin,Cout), b:(Cout,) -> bf16 NHWC."""
    n, h, wd, c = x.shape
    cout = w.shape[-1]
    # TODO(synk): im2col patches are still materialized in HBM (in bf16); a
    # further win is fusing patch construction into the matmul via halo DMA,
    # and fusing the following maxpool into the conv epilogue.
    cols = _im2col_3x3(x.astype(jnp.bfloat16))
    y = matmul_bias_act(cols, w.reshape(9 * c, cout), b, relu=True)
    return y.reshape(n, h, wd, cout)


def maxpool2x2(x):
    """x:(N,H,W,C) -> (N,H//2,W//2,C), kernel=2 stride=2, single dense pass."""
    n, h, w, c = x.shape
    ho, wo = h // 2, w // 2
    r = n * ho
    # Free, contiguous reshape: (N,H,W,C) -> (N*Ho, 2, Wo, 2*C)
    xr = x.reshape(r, 2, wo, 2 * c)
    row_bytes = 4 * wo * c * x.dtype.itemsize
    cap = max(1, min(256, (4 * 1024 * 1024) // max(1, row_bytes)))
    tr = _largest_divisor(r, cap)
    out = pl.pallas_call(
        _maxpool_kernel,
        out_shape=jax.ShapeDtypeStruct((r, wo, c), x.dtype),
        grid_spec=pltpu.PrefetchScalarGridSpec(
            num_scalar_prefetch=0,
            grid=(r // tr,),
            in_specs=[pl.BlockSpec((tr, 2, wo, 2 * c), lambda i: (i, 0, 0, 0))],
            out_specs=pl.BlockSpec((tr, wo, c), lambda i: (i, 0, 0)),
        ),
        compiler_params=pltpu.CompilerParams(
            dimension_semantics=("parallel",),
            vmem_limit_bytes=_VMEM_LIMIT),
    )(xr)
    return out.reshape(n, ho, wo, c)


def softmax_rows(x):
    """Softmax over dim=1 of a (B, C) f32 array, single block."""
    x = x.astype(jnp.float32)
    b, ncls = x.shape
    return pl.pallas_call(
        _softmax_kernel,
        out_shape=jax.ShapeDtypeStruct((b, ncls), jnp.float32),
        grid_spec=pltpu.PrefetchScalarGridSpec(
            num_scalar_prefetch=0,
            grid=(1,),
            in_specs=[pl.BlockSpec((b, ncls), lambda i: (0, 0))],
            out_specs=pl.BlockSpec((b, ncls), lambda i: (0, 0)),
        ),
        compiler_params=pltpu.CompilerParams(vmem_limit_bytes=_VMEM_LIMIT),
    )(x)


# ---------------------------------------------------------------------------
# Parameter construction (deterministic, synthetic He-style init)
# ---------------------------------------------------------------------------
VGG16_BLOCKS = [[64, 64], [128, 128], [256, 256, 256],
                [512, 512, 512], [512, 512, 512]]
NUM_CLASSES = 500


def init_params(key, image_hw=224, num_classes=NUM_CLASSES):
    # With image_hw=224 the classifier input is exactly 512*7*7 as in the spec;
    # the demo uses a smaller spatial size to keep the self-test fast.
    feat_hw = image_hw // 32
    fc_dims = [(512 * feat_hw * feat_hw, 4096), (4096, 4096), (4096, num_classes)]
    params = {"conv": [], "fc": []}
    cin = 3
    for block in VGG16_BLOCKS:
        for cout in block:
            key, kw = jax.random.split(key)
            scale = (2.0 / (9 * cin)) ** 0.5
            w = jax.random.normal(kw, (3, 3, cin, cout), jnp.float32) * scale
            b = jnp.zeros((cout,), jnp.float32)
            params["conv"].append((w, b))
            cin = cout
    for din, dout in fc_dims:
        key, kw = jax.random.split(key)
        scale = (2.0 / din) ** 0.5
        w = jax.random.normal(kw, (din, dout), jnp.float32) * scale
        b = jnp.zeros((dout,), jnp.float32)
        params["fc"].append((w, b))
    return params


# ---------------------------------------------------------------------------
# Forward pass (matches VGG16Net.forward semantics, inference mode)
# ---------------------------------------------------------------------------
def vgg16_forward(x_nchw, params):
    # NCHW (PyTorch) -> NHWC, bf16 activations for the MXU path.
    x = jnp.transpose(x_nchw, (0, 2, 3, 1)).astype(jnp.bfloat16)

    idx = 0
    for block in VGG16_BLOCKS:
        for _ in block:
            w, b = params["conv"][idx]
            idx += 1
            x = conv3x3_relu(x, w, b)          # Conv2d(3x3, pad=1) + ReLU
        x = maxpool2x2(x)                      # MaxPool2d(2, 2)

    # torch.flatten(x, start_dim=1) on NCHW => flatten in (C, H, W) order.
    n = x.shape[0]
    xf = jnp.transpose(x, (0, 3, 1, 2)).reshape(n, -1)

    w1, b1 = params["fc"][0]
    h = matmul_bias_act(xf, w1, b1, relu=True)
    # TODO(synk): nn.Dropout(p=0.5) is identity here (inference mode), no RNG mask.
    w2, b2 = params["fc"][1]
    h = matmul_bias_act(h, w2, b2, relu=True)
    w3, b3 = params["fc"][2]
    logits = matmul_bias_act(h, w3, b3, relu=False, out_dtype=jnp.float32)
    return softmax_rows(logits)                # Softmax(dim=1), f32


# ---------------------------------------------------------------------------
if __name__ == "__main__":
    key = jax.random.PRNGKey(0)
    key, kx = jax.random.split(key)

    # Small, fast self-test shapes: batch=2, 3x32x32 input (five stride-2 pools
    # -> 1x1x512 features feeding the 4096/4096/500 classifier).
    IMAGE_HW = 32
    BATCH = 2
    params = init_params(key, image_hw=IMAGE_HW)
    x = jax.random.normal(kx, (BATCH, 3, IMAGE_HW, IMAGE_HW), jnp.float32)

    # --- unit check: K-tiled accumulator matmul path vs bf16 reference -------
    k1, k2, k3 = jax.random.split(jax.random.PRNGKey(1), 3)
    xa = jax.random.normal(k1, (8, 8192), jnp.float32)
    wa = jax.random.normal(k2, (8192, 512), jnp.float32) * 0.02
    ba = jax.random.normal(k3, (512,), jnp.float32)
    got = matmul_bias_act(xa, wa, ba, relu=True, out_dtype=jnp.float32)
    ref = jnp.maximum(
        jnp.dot(xa.astype(jnp.bfloat16).astype(jnp.float32),
                wa.astype(jnp.bfloat16).astype(jnp.float32)) + ba, 0.0)
    rel_err = jnp.max(jnp.abs(got - ref)) / (jnp.max(jnp.abs(ref)) + 1e-6)
    assert float(rel_err) < 2e-2, f"matmul mismatch: {float(rel_err)}"

    # --- unit check: single-pass maxpool vs jnp reference ---------------------
    xp_ = jax.random.normal(jax.random.PRNGKey(2), (2, 8, 8, 128), jnp.float32)
    pooled = maxpool2x2(xp_)
    ref_pool = jnp.max(xp_.reshape(2, 4, 2, 4, 2, 128), axis=(2, 4))
    assert bool(jnp.allclose(pooled, ref_pool)), "maxpool mismatch"

    # --- full forward pass ----------------------------------------------------
    fwd = jax.jit(vgg16_forward)
    out = jax.block_until_ready(fwd(x, params))

    assert out.shape == (BATCH, NUM_CLASSES)
    assert bool(jnp.all(jnp.isfinite(out)))
    assert bool(jnp.allclose(jnp.sum(out, axis=1), 1.0, atol=1e-3))
    print("KERNEL_OK")
</pallas_src>

<mosaic_0001>
module attributes {stable_mosaic.version = 11 : i64} {
  func.func @_mm_acc_kernel(%arg0: i32, %arg1: i32, %arg2: i32, %arg3: memref<8x4096xbf16, #tpu.memory_space<vmem>>, %arg4: memref<4096x512xbf16, #tpu.memory_space<vmem>>, %arg5: memref<1x512xf32, #tpu.memory_space<vmem>>, %arg6: memref<8x512xf32, #tpu.memory_space<vmem>>, %arg7: memref<8x512xf32, #tpu.memory_space<vmem>>) attributes {dimension_semantics = [#tpu.dimension_semantics<parallel>, #tpu.dimension_semantics<parallel>, #tpu.dimension_semantics<arbitrary>], iteration_bounds = array<i64: 1, 1, 2>, scalar_prefetch = 0 : i64, scratch_operands = 1 : i64, tpu.core_type = #tpu.core_type<tc>, window_params = [{transform_indices = @transform_0, window_bounds = array<i64: 8, 4096>}, {transform_indices = @transform_1, window_bounds = array<i64: 4096, 512>}, {transform_indices = @transform_2, window_bounds = array<i64: 1, 512>}, {transform_indices = @transform_3, window_bounds = array<i64: 8, 512>}]} {
    %c0_i32 = arith.constant 0 : i32
    %0 = arith.cmpi eq, %arg2, %c0_i32 : i32
    %1 = arith.extui %0 : i1 to i32
    %c0_i32_0 = arith.constant 0 : i32
    %2 = arith.cmpi ne, %1, %c0_i32_0 : i32
    scf.if %2 {
      %cst_9 = arith.constant 0.000000e+00 : f32
      %12 = vector.broadcast %cst_9 : f32 to vector<8x512xf32>
      %c0_10 = arith.constant 0 : index
      %c0_11 = arith.constant 0 : index
      %13 = vector.load %arg7[%c0_10, %c0_11] : memref<8x512xf32, #tpu.memory_space<vmem>>, vector<8x512xf32>
      tpu.vector_store %arg7[%c0_10, %c0_11], %12 {strides = array<i32>} : memref<8x512xf32, #tpu.memory_space<vmem>>, vector<8x512xf32>,
    } else {
    }
    %c0 = arith.constant 0 : index
    %c0_1 = arith.constant 0 : index
    %3 = vector.load %arg7[%c0, %c0_1] : memref<8x512xf32, #tpu.memory_space<vmem>>, vector<8x512xf32>
    %c0_2 = arith.constant 0 : index
    %c0_3 = arith.constant 0 : index
    %4 = vector.load %arg3[%c0_2, %c0_3] : memref<8x4096xbf16, #tpu.memory_space<vmem>>, vector<8x4096xbf16>
    %c0_4 = arith.constant 0 : index
    %c0_5 = arith.constant 0 : index
    %5 = vector.load %arg4[%c0_4, %c0_5] : memref<4096x512xbf16, #tpu.memory_space<vmem>>, vector<4096x512xbf16>
    %cst = arith.constant dense<0.000000e+00> : vector<8x512xf32>
    %6 = tpu.matmul %4, %5, %cst {dimension_numbers = #tpu.dot_dimension_numbers<[1], [0], [0], [1], [0, 0, 1, 1], [], []>} : vector<8x4096xbf16>, vector<4096x512xbf16>, vector<8x512xf32> -> vector<8x512xf32>
    %7 = arith.addf %3, %6 : vector<8x512xf32>
    %c0_6 = arith.constant 0 : index
    %c0_7 = arith.constant 0 : index
    %8 = vector.load %arg7[%c0_6, %c0_7] : memref<8x512xf32, #tpu.memory_space<vmem>>, vector<8x512xf32>
    tpu.vector_store %arg7[%c0_6, %c0_7], %7 {strides = array<i32>} : memref<8x512xf32, #tpu.memory_space<vmem>>, vector<8x512xf32>,
    %c1_i32 = arith.constant 1 : i32
    %9 = arith.cmpi eq, %arg2, %c1_i32 : i32
    %10 = arith.extui %9 : i1 to i32
    %c0_i32_8 = arith.constant 0 : i32
    %11 = arith.cmpi ne, %10, %c0_i32_8 : i32
    scf.if %11 {
      %c0_9 = arith.constant 0 : index
      %c0_10 = arith.constant 0 : index
      %12 = vector.load %arg7[%c0_9, %c0_10] : memref<8x512xf32, #tpu.memory_space<vmem>>, vector<8x512xf32>
      %c0_11 = arith.constant 0 : index
      %c0_12 = arith.constant 0 : index
      %13 = vector.load %arg5[%c0_11, %c0_12] : memref<1x512xf32, #tpu.memory_space<vmem>>, vector<1x512xf32>
      %14 = vector.broadcast %13 : vector<1x512xf32> to vector<8x512xf32>
      %15 = arith.addf %12, %14 : vector<8x512xf32>
      %cst_13 = arith.constant 0.000000e+00 : f32
      %16 = vector.broadcast %cst_13 : f32 to vector<8x512xf32>
      %17 = arith.maximumf %15, %16 : vector<8x512xf32>
      %c0_14 = arith.constant 0 : index
      %c0_15 = arith.constant 0 : index
      %18 = vector.load %arg6[%c0_14, %c0_15] : memref<8x512xf32, #tpu.memory_space<vmem>>, vector<8x512xf32>
      tpu.vector_store %arg6[%c0_14, %c0_15], %17 {strides = array<i32>} : memref<8x512xf32, #tpu.memory_space<vmem>>, vector<8x512xf32>,
    } else {
    }
    return
  }
  func.func @transform_0(%arg0: i32, %arg1: i32, %arg2: i32) -> (i32, i32) {
    %c0_i32 = arith.constant 0 : i32
    return %arg1, %arg2 : i32, i32
  }
  func.func @transform_1(%arg0: i32, %arg1: i32, %arg2: i32) -> (i32, i32) {
    %c0_i32 = arith.constant 0 : i32
    return %arg2, %arg0 : i32, i32
  }
  func.func @transform_2(%arg0: i32, %arg1: i32, %arg2: i32) -> (i32, i32) {
    %c0_i32 = arith.constant 0 : i32
    %c0_i32_0 = arith.constant 0 : i32
    return %c0_i32, %arg0 : i32, i32
  }
  func.func @transform_3(%arg0: i32, %arg1: i32, %arg2: i32) -> (i32, i32) {
    %c0_i32 = arith.constant 0 : i32
    return %arg1, %arg0 : i32, i32
  }
}

</mosaic_0001>

<llo_original>
// kernel: tpu_custom_call.1
$region0: #{tpu_custom_call.1}
  #allocation0 [shape = 'u32[]', space=smem, size = 0x4, offset = 0x4, fixed_abs, tag = 'smem constant byte address 0x4 - core index']
  #allocation1 [shape = 'u32[144,128]{1,0:T(1,128)}', space=vmem, size = 0x12000, scoped, tag = 'internal scratch']
  #allocation2 [shape = 'f32[8,512]{1,0:T(8,128)}', space=vmem, size = 0x4000, scoped, tag = 'scratch operand']
  %s0 = inlined_call_operand.hbm [shape: bf16[8,8192], index: 0, kind: input, shape index: {}]
  %s1 = inlined_call_operand.hbm [shape: bf16[8192,512], index: 1, kind: input, shape index: {}]
  %s2 = inlined_call_operand.hbm [shape: f32[1,512], index: 2, kind: input, shape index: {}]
  %s3 = inlined_call_operand.hbm [shape: f32[8,512], index: 3, kind: output, shape index: {}]
  %s4 = sld [smem:[#allocation0]]
  $region65: #{tpu_custom_call.1} parent=0
    _
  %s6 = ssub.s32 1, %s4
  %s7 = scalar_select 0, %s6, %s4
  $region1: #{tpu_custom_call.1} parent=0
    #allocation3 [shape = 'u8[131072]{0}', space=vmem, size = 0x20000, scoped, tag = 'input window, operand 0']
    #allocation4 [shape = 's32[2]{0}', space=sflag, size = 0x8, scoped, tag = 'scoped memory for tpu_custom_call.1']
    #allocation5 [shape = 's32[2]{0}', space=sflag, size = 0x8, scoped, tag = 'scoped memory for tpu_custom_call.1']
    #allocation6 [shape = 'u8[8388608]{0}', space=vmem, size = 0x800000, scoped, tag = 'input window, operand 1']
    #allocation7 [shape = 's32[2]{0}', space=sflag, size = 0x8, scoped, tag = 'scoped memory for tpu_custom_call.1']
    #allocation8 [shape = 'u8[2048]{0}', space=vmem, size = 0x800, scoped, tag = 'input window, operand 2, single buffered']
    #allocation9 [shape = 'u8[16384]{0}', space=vmem, size = 0x4000, scoped, tag = 'output window, operand 0, single buffered']
    %8 = vsyncpa [#allocation4], 0
    %s9 = scalar_lea.sflag [#allocation4], 1
    %10 = vsyncpa %s9, 0
    %11 = vsyncpa [#allocation7], 0
    %s12 = scalar_lea.sflag [#allocation7], 1
    %13 = vsyncpa %s12, 0
    %14 = vsyncpa [#allocation5], 0
    loop: start=0, step=1, limit=4
    $region2: #{tpu_custom_call.1} parent=1 // loop_pre_header
      _
    $region3: #{tpu_custom_call.1} parent=1 // loop_header
      %s16 = sphi 0, %s20
      %p17 = scmp.ge.s32.totalorder %s16, 4
      %s23 = sphi 0, %s42
      %s24 = sphi 0, %s38
      %s25 = sphi 0, %s34
      %s26 = sphi 0, %s23
      %s27 = sphi 0, %s24
      %s28 = sphi 0, %s25
      %s29 = sphi 0, %s26
      %s30 = sphi 0, %s27
      %s31 = sphi 0, %s28
      %s47 = sphi 0, %s49
      %s50 = sphi 0, %s47
      %s51 = sphi 0, %s50
      %s67 = sphi 0, %s51
      %s75 = sphi 0, %s77
      %s78 = sphi 0, %s75
      %s79 = sphi 0, %s78
      %s95 = sphi 0, %s79
      %s101 = sphi 0, %s103
      %s104 = sphi 0, %s101
      %s105 = sphi 0, %s104
      %s121 = sphi 0, %s105
      %s129 = sphi 0, %s131
      %s132 = sphi 0, %s129
      %s133 = sphi 0, %s132
      %s149 = sphi 0, %s133
    $region4: #{tpu_custom_call.1} parent=1 // loop_header_branch
      %19 = sbr.rel (%p17) target = $region8
    $region5: #{tpu_custom_call.1} parent=1 // loop_body
      %s21 = ssub.s32 %s16, 1
      %s22 = ssub.s32 %s16, 2
      %s32 = sadd.s32 1, %s25
      %p33 = scmp.ge.s32.totalorder %s32, 2
      %s34 = scalar_select %p33, 0, %s32
      %s35 = sadd.s32 1, %s24
      %s36 = scalar_select %p33, %s35, %s24
      %p37 = scmp.ge.s32.totalorder %s36, 1
      %s38 = scalar_select %p37, 0, %s36
      %s39 = sadd.s32 1, %s23
      %s40 = scalar_select %p37, %s39, %s23
      %p41 = scmp.ge.s32.totalorder %s40, 1
      %s42 = scalar_select %p41, 0, %s40
      %s43 = ssub.s32 %s24, %s38
      %s44 = ssub.s32 %s25, %s34
      %s45 = sor.u32 %s43, %s44
      %p46 = scmp.eq.s32.totalorder %s45, 0
      %s48 = sadd.s32 %s47, 1
      %s49 = scalar_select %p46, %s47, %s48
      %p52 = pneg %p46
      %p53 = scmp.eq.s32.totalorder %s16, 1
      %p54 = por %p52, %p53
      %p55 = scmp.ne.s32.totalorder %s47, %s50
      %p56 = scmp.eq.s32.totalorder %s16, 0
      %p57 = por %p55, %p56
      %p58 = scmp.ne.s32.totalorder %s47, %s50
      %p59 = scmp.eq.s32.totalorder %s21, 1
      %p60 = por %p58, %p59
      %p61 = scmp.ne.s32.totalorder %s50, %s51
      %p62 = scmp.eq.s32.totalorder %s21, 0
      %p63 = por %p61, %p62
      %p64 = scmp.ne.s32.totalorder %s50, %s51
      %p65 = scmp.eq.s32.totalorder %s22, 1
      %p66 = por %p64, %p65
      %p68 = scmp.ne.s32.totalorder %s51, %s67
      %p69 = scmp.eq.s32.totalorder %s22, 0
      %p70 = por %p68, %p69
      %s71 = ssub.s32 %s25, %s34
      %s72 = ssub.s32 %s23, %s42
      %s73 = sor.u32 %s71, %s72
      %p74 = scmp.eq.s32.totalorder %s73, 0
      %s76 = sadd.s32 %s75, 1
      %s77 = scalar_select %p74, %s75, %s76
      %p80 = pneg %p74
      %p81 = scmp.eq.s32.totalorder %s16, 1
      %p82 = por %p80, %p81
      %p83 = scmp.ne.s32.totalorder %s75, %s78
      %p84 = scmp.eq.s32.totalorder %s16, 0
      %p85 = por %p83, %p84
      %p86 = scmp.ne.s32.totalorder %s75, %s78
      %p87 = scmp.eq.s32.totalorder %s21, 1
      %p88 = por %p86, %p87
      %p89 = scmp.ne.s32.totalorder %s78, %s79
      %p90 = scmp.eq.s32.totalorder %s21, 0
      %p91 = por %p89, %p90
      %p92 = scmp.ne.s32.totalorder %s78, %s79
      %p93 = scmp.eq.s32.totalorder %s22, 1
      %p94 = por %p92, %p93
      %p96 = scmp.ne.s32.totalorder %s79, %s95
      %p97 = scmp.eq.s32.totalorder %s22, 0
      %p98 = por %p96, %p97
      %s99 = ssub.s32 %s23, %s42
      %p100 = scmp.eq.s32.totalorder %s99, 0
      %s102 = sadd.s32 %s101, 1
      %s103 = scalar_select %p100, %s101, %s102
      %p106 = pneg %p100
      %p107 = scmp.eq.s32.totalorder %s16, 1
      %p108 = por %p106, %p107
      %p109 = scmp.ne.s32.totalorder %s101, %s104
      %p110 = scmp.eq.s32.totalorder %s16, 0
      %p111 = por %p109, %p110
      %p112 = scmp.ne.s32.totalorder %s101, %s104
      %p113 = scmp.eq.s32.totalorder %s21, 1
      %p114 = por %p112, %p113
      %p115 = scmp.ne.s32.totalorder %s104, %s105
      %p116 = scmp.eq.s32.totalorder %s21, 0
      %p117 = por %p115, %p116
      %p118 = scmp.ne.s32.totalorder %s104, %s105
      %p119 = scmp.eq.s32.totalorder %s22, 1
      %p120 = por %p118, %p119
      %p122 = scmp.ne.s32.totalorder %s105, %s121
      %p123 = scmp.eq.s32.totalorder %s22, 0
      %p124 = por %p122, %p123
      %s125 = ssub.s32 %s24, %s38
      %s126 = ssub.s32 %s23, %s42
      %s127 = sor.u32 %s125, %s126
      %p128 = scmp.eq.s32.totalorder %s127, 0
      %s130 = sadd.s32 %s129, 1
      %s131 = scalar_select %p128, %s129, %s130
      %p134 = pneg %p128
      %p135 = scmp.eq.s32.totalorder %s16, 1
      %p136 = por %p134, %p135
      %p137 = scmp.ne.s32.totalorder %s129, %s132
      %p138 = scmp.eq.s32.totalorder %s16, 0
      %p139 = por %p137, %p138
      %p140 = scmp.ne.s32.totalorder %s129, %s132
      %p141 = scmp.eq.s32.totalorder %s21, 1
      %p142 = por %p140, %p141
      %p143 = scmp.ne.s32.totalorder %s132, %s133
      %p144 = scmp.eq.s32.totalorder %s21, 0
      %p145 = por %p143, %p144
      %p146 = scmp.ne.s32.totalorder %s132, %s133
      %p147 = scmp.eq.s32.totalorder %s22, 1
      %p148 = por %p146, %p147
      %p150 = scmp.ne.s32.totalorder %s133, %s149
      %p151 = scmp.eq.s32.totalorder %s22, 0
      %p152 = por %p150, %p151
      %p153 = scmp.le.s32.totalorder 1, %s16
      %p154 = scmp.lt.s32.totalorder %s16, 3
      %p155 = pnand %p153, %p154
      %p156 = pneg %p155
      // Predicated region
      $region9: #{tpu_custom_call.1} parent=5 // pred_check
        _
      $region10: #{tpu_custom_call.1} parent=5 // pred_check_branch
        %158 = sbr.rel (%p155) target = $region12
      $region11: #{tpu_custom_call.1} parent=5 // pred_region
        %s159 = ssub.s32 %s16, 1
        // Predicated region
        $region13: #{tpu_custom_call.1} parent=11 // pred_check
          %p160 = pneg %p117
        $region14: #{tpu_custom_call.1} parent=11 // pred_check_branch
          %162 = sbr.rel (%p160) target = $region16
        $region15: #{tpu_custom_call.1} parent=11 // pred_region
          %s163 = smul.u32 4, %s26
          %s165 = ssub.s32 64, 64
          %166 = vsyncadd [#allocation7], %s165
          %s167 = smul.addr %s163, 16
          %s168 = scalar_lea.hbm %s2, %s167
          %s170 = sshll.u32 [#allocation8], 4
          %s171 = int_to_ptr.vmem [resolvable:$true] %s170
          %173 = dma.hbm_to_vmem [thread:$0]  %s168, 64, %s171, [#allocation7]
        $region16: #{tpu_custom_call.1} parent=11 // pred_fallthru
          _
      $region12: #{tpu_custom_call.1} parent=5 // pred_fallthru
        _
      %p174 = scmp.lt.s32.totalorder %s16, 2
      // Predicated region
      $region17: #{tpu_custom_call.1} parent=5 // pred_check
        %p175 = pneg %p174
      $region18: #{tpu_custom_call.1} parent=5 // pred_check_branch
        %177 = sbr.rel (%p175) target = $region20
      $region19: #{tpu_custom_call.1} parent=5 // pred_region
        // Predicated region
        $region21: #{tpu_custom_call.1} parent=19 // pred_check
          %p178 = pneg %p57
        $region22: #{tpu_custom_call.1} parent=19 // pred_check_branch
          %180 = sbr.rel (%p178) target = $region24
        $region23: #{tpu_custom_call.1} parent=19 // pred_region
          %s181 = sand.u32 %s47, 1
          %s182 = scalar_lea.sflag [#allocation4], %s181
          %s183 = sand.u32 %s47, 1
          %s184 = smul.addr %s183, 128
          %s185 = scalar_lea.vmem [#allocation3], %s184
          %s186 = smul.u32 32, %s25
          %s188 = ssub.s32 2048, 2048
          %189 = vsyncadd %s182, %s188
          %s190 = smul.addr %s24, 64
          %s191 = sadd.s32 %s186, %s190
          %s192 = smul.addr %s191, 64
          %s193 = scalar_lea.hbm %s0, %s192
          %s195 = sshll.u32 %s185, 4
          %s196 = int_to_ptr.vmem [resolvable:$true] %s195
          %198 = dma.hbm_to_vmem [thread:$0]  %s193, 2048, %s196, %s182
        $region24: #{tpu_custom_call.1} parent=19 // pred_fallthru
          _
        // Predicated region
        $region25: #{tpu_custom_call.1} parent=19 // pred_check
          %p199 = pneg %p85
        $region26: #{tpu_custom_call.1} parent=19 // pred_check_branch
          %201 = sbr.rel (%p199) target = $region28
        $region27: #{tpu_custom_call.1} parent=19 // pred_region
          %s202 = sand.u32 %s16, 1
          %s203 = scalar_lea.sflag [#allocation7], %s202
          %s204 = sand.u32 %s75, 1
          %s205 = smul.addr %s204, 8192
          %s206 = scalar_lea.vmem [#allocation6], %s205
          %s207 = smul.u32 512, %s25
          %s208 = smul.u32 4, %s23
          %s210 = ssub.s32 131072, 131072
          %211 = vsyncadd %s203, %s210
          %s212 = smul.addr %s207, 4
          %s213 = sadd.s32 %s208, %s212
          %s214 = smul.addr %s213, 64
          %s215 = scalar_lea.hbm %s1, %s214
          %s216 = sshll.u32 %s206, 4
          %s217 = int_to_ptr.vmem [resolvable:$true] %s216
          %222 = dma.hbm_to_vmem [thread:$0]  %s215, 131072, %s217, %s203, 256, 256, 16
        $region28: #{tpu_custom_call.1} parent=19 // pred_fallthru
          _
      $region20: #{tpu_custom_call.1} parent=5 // pred_fallthru
        _
      %p223 = scmp.le.s32.totalorder 1, %s16
      %p224 = scmp.lt.s32.totalorder %s16, 3
      %p225 = pnand %p223, %p224
      %p226 = pneg %p225
      // Predicated region
      $region29: #{tpu_custom_call.1} parent=5 // pred_check
        _
      $region30: #{tpu_custom_call.1} parent=5 // pred_check_branch
        %228 = sbr.rel (%p225) target = $region32
      $region31: #{tpu_custom_call.1} parent=5 // pred_region
        %s229 = ssub.s32 %s16, 1
        %s230 = sand.u32 %s50, 1
        %s231 = scalar_lea.sflag [#allocation4], %s230
        %s232 = sand.u32 %s50, 1
        %s233 = smul.addr %s232, 128
        %s234 = scalar_lea.vmem [#allocation3], %s233
        // Predicated region
        $region33: #{tpu_custom_call.1} parent=31 // pred_check
          %p235 = pneg %p63
        $region34: #{tpu_custom_call.1} parent=31 // pred_check_branch
          %237 = sbr.rel (%p235) target = $region36
        $region35: #{tpu_custom_call.1} parent=31 // pred_region
          %238 = dma.done %s231, 2048
        $region36: #{tpu_custom_call.1} parent=31 // pred_fallthru
          _
        %s239 = sand.u32 %s21, 1
        %s240 = scalar_lea.sflag [#allocation7], %s239
        %s241 = sand.u32 %s78, 1
        %s242 = smul.addr %s241, 8192
        %s243 = scalar_lea.vmem [#allocation6], %s242
        // Predicated region
        $region37: #{tpu_custom_call.1} parent=31 // pred_check
          %p244 = pneg %p91
        $region38: #{tpu_custom_call.1} parent=31 // pred_check_branch
          %246 = sbr.rel (%p244) target = $region40
        $region39: #{tpu_custom_call.1} parent=31 // pred_region
          %247 = dma.done %s240, 131072
        $region40: #{tpu_custom_call.1} parent=31 // pred_fallthru
          _
        // Predicated region
        $region41: #{tpu_custom_call.1} parent=31 // pred_check
          %p248 = pneg %p117
        $region42: #{tpu_custom_call.1} parent=31 // pred_check_branch
          %250 = sbr.rel (%p248) target = $region44
        $region43: #{tpu_custom_call.1} parent=31 // pred_region
          %251 = dma.done [#allocation7], 64
        $region44: #{tpu_custom_call.1} parent=31 // pred_fallthru
          _
        %s252 = sand.u32 %s50, 1
        %s253 = scalar_lea.sflag [#allocation4], %s252
        %s254 = sand.u32 %s50, 1
        %s255 = smul.addr %s254, 128
        %s256 = scalar_lea.vmem [#allocation3], %s255
        %p257 = pneg %p63
        %p258 = pneg %p60
        %s259 = sand.u32 %s21, 1
        %s260 = scalar_lea.sflag [#allocation7], %s259
        %s261 = sand.u32 %s78, 1
        %s262 = smul.addr %s261, 8192
        %s263 = scalar_lea.vmem [#allocation6], %s262
        %p264 = pneg %p91
        %p265 = pneg %p88
        %p266 = pneg %p117
        %p267 = pneg %p114
        %p268 = pneg %p145
        %p269 = pneg %p142
        %s270 = smul.u32 32, %s28
        %s271 = smul.u32 512, %s28
        %s272 = smul.u32 4, %s26
        %s273 = smul.u32 4, %s26
        %s274 = smul.u32 4, %s26
        %p275 = scmp.eq.s32.totalorder %s28, 0
        // Predicated region
        $region45: #{tpu_custom_call.1} parent=31 // pred_check
          %p276 = pneg %p275
        $region46: #{tpu_custom_call.1} parent=31 // pred_check_branch
          %278 = sbr.rel (%p276) target = $region48
        $region47: #{tpu_custom_call.1} parent=31 // pred_region
          %279 = vst [vmem:[#allocation2] sm:$0xff] 0.0
          %280 = vst [vmem:[#allocation2 + $0x8] sm:$0xff] 0.0
          %281 = vst [vmem:[#allocation2 + $0x10] sm:$0xff] 0.0
          %282 = vst [vmem:[#allocation2 + $0x18] sm:$0xff] 0.0
        $region48: #{tpu_custom_call.1} parent=31 // pred_fallthru
          _
        %v283 = vld [vmem:[#allocation2] sm:$0xff]
        %v284 = vld [vmem:[#allocation2 + $0x8] sm:$0xff]
        %v285 = vld [vmem:[#allocation2 + $0x10] sm:$0xff]
        %v286 = vld [vmem:[#allocation2 + $0x18] sm:$0xff]
        %v287 = vld [vmem:[%s234] sm:$0xff]
        %v288 = vld [vmem:[%s234 + $0x8] sm:$0xff]
        %v289 = vld [vmem:[%s234 + $0x10] sm:$0xff]
        %v290 = vld [vmem:[%s234 + $0x18] sm:$0xff]
        %v291 = vld [vmem:[%s234 + $0x20] sm:$0xff]
        %v292 = vld [vmem:[%s234 + $0x28] sm:$0xff]
        %v293 = vld [vmem:[%s234 + $0x30] sm:$0xff]
        %v294 = vld [vmem:[%s234 + $0x38] sm:$0xff]
        %v295 = vld [vmem:[%s234 + $0x40] sm:$0xff]
        %v296 = vld [vmem:[%s234 + $0x48] sm:$0xff]
        %v297 = vld [vmem:[%s234 + $0x50] sm:$0xff]
        %v298 = vld [vmem:[%s234 + $0x58] sm:$0xff]
        %v299 = vld [vmem:[%s234 + $0x60] sm:$0xff]
        %v300 = vld [vmem:[%s234 + $0x68] sm:$0xff]
        %v301 = vld [vmem:[%s234 + $0x70] sm:$0xff]
        %v302 = vld [vmem:[%s234 + $0x78] sm:$0xff]
        %v303 = vld [vmem:[%s243] sm:$0xff]
        %v304 = vld [vmem:[%s243 + $0x8] sm:$0xff]
        %v305 = vld [vmem:[%s243 + $0x10] sm:$0xff]
        %v306 = vld [vmem:[%s243 + $0x18] sm:$0xff]
        %v307 = vld [vmem:[%s243 + $0x20] sm:$0xff]
        %v308 = vld [vmem:[%s243 + $0x28] sm:$0xff]
        %v309 = vld [vmem:[%s243 + $0x30] sm:$0xff]
        %v310 = vld [vmem:[%s243 + $0x38] sm:$0xff]
        %v311 = vld [vmem:[%s243 + $0x40] sm:$0xff]
        %v312 = vld [vmem:[%s243 + $0x48] sm:$0xff]
        %v313 = vld [vmem:[%s243 + $0x50] sm:$0xff]
        %v314 = vld [vmem:[%s243 + $0x58] sm:$0xff]
        %v315 = vld [vmem:[%s243 + $0x60] sm:$0xff]
        %v316 = vld [vmem:[%s243 + $0x68] sm:$0xff]
        %v317 = vld [vmem:[%s243 + $0x70] sm:$0xff]
        %v318 = vld [vmem:[%s243 + $0x78] sm:$0xff]
        %v319 = vld [vmem:[%s243 + $0x80] sm:$0xff]
        %v320 = vld [vmem:[%s243 + $0x88] sm:$0xff]
        %v321 = vld [vmem:[%s243 + $0x90] sm:$0xff]
        %v322 = vld [vmem:[%s243 + $0x98] sm:$0xff]
        %v323 = vld [vmem:[%s243 + $0xa0] sm:$0xff]
        %v324 = vld [vmem:[%s243 + $0xa8] sm:$0xff]
        %v325 = vld [vmem:[%s243 + $0xb0] sm:$0xff]
        %v326 = vld [vmem:[%s243 + $0xb8] sm:$0xff]
        %v327 = vld [vmem:[%s243 + $0xc0] sm:$0xff]
        %v328 = vld [vmem:[%s243 + $0xc8] sm:$0xff]
        %v329 = vld [vmem:[%s243 + $0xd0] sm:$0xff]
        %v330 = vld [vmem:[%s243 + $0xd8] sm:$0xff]
        %v331 = vld [vmem:[%s243 + $0xe0] sm:$0xff]
        %v332 = vld [vmem:[%s243 + $0xe8] sm:$0xff]
        %v333 = vld [vmem:[%s243 + $0xf0] sm:$0xff]
        %v334 = vld [vmem:[%s243 + $0xf8] sm:$0xff]
        %v335 = vld [vmem:[%s243 + $0x100] sm:$0xff]
        %v336 = vld [vmem:[%s243 + $0x108] sm:$0xff]
        %v337 = vld [vmem:[%s243 + $0x110] sm:$0xff]
        %v338 = vld [vmem:[%s243 + $0x118] sm:$0xff]
        %v339 = vld [vmem:[%s243 + $0x120] sm:$0xff]
        %v340 = vld [vmem:[%s243 + $0x128] sm:$0xff]
        %v341 = vld [vmem:[%s243 + $0x130] sm:$0xff]
        %v342 = vld [vmem:[%s243 + $0x138] sm:$0xff]
        %v343 = vld [vmem:[%s243 + $0x140] sm:$0xff]
        %v344 = vld [vmem:[%s243 + $0x148] sm:$0xff]
        %v345 = vld [vmem:[%s243 + $0x150] sm:$0xff]
        %v346 = vld [vmem:[%s243 + $0x158] sm:$0xff]
        %v347 = vld [vmem:[%s243 + $0x160] sm:$0xff]
        %v348 = vld [vmem:[%s243 + $0x168] sm:$0xff]
        %v349 = vld [vmem:[%s243 + $0x170] sm:$0xff]
        %v350 = vld [vmem:[%s243 + $0x178] sm:$0xff]
        %v351 = vld [vmem:[%s243 + $0x180] sm:$0xff]
        %v352 = vld [vmem:[%s243 + $0x188] sm:$0xff]
        %v353 = vld [vmem:[%s243 + $0x190] sm:$0xff]
        %v354 = vld [vmem:[%s243 + $0x198] sm:$0xff]
        %v355 = vld [vmem:[%s243 + $0x1a0] sm:$0xff]
        %v356 = vld [vmem:[%s243 + $0x1a8] sm:$0xff]
        %v357 = vld [vmem:[%s243 + $0x1b0] sm:$0xff]
        %v358 = vld [vmem:[%s243 + $0x1b8] sm:$0xff]
        %v359 = vld [vmem:[%s243 + $0x1c0] sm:$0xff]
        %v360 = vld [vmem:[%s243 + $0x1c8] sm:$0xff]
        %v361 = vld [vmem:[%s243 + $0x1d0] sm:$0xff]
        %v362 = vld [vmem:[%s243 + $0x1d8] sm:$0xff]
        %v363 = vld [vmem:[%s243 + $0x1e0] sm:$0xff]
        %v364 = vld [vmem:[%s243 + $0x1e8] sm:$0xff]
        %v365 = vld [vmem:[%s243 + $0x1f0] sm:$0xff]
        %v366 = vld [vmem:[%s243 + $0x1f8] sm:$0xff]
        %v367 = vld [vmem:[%s243 + $0x200] sm:$0xff]
        %v368 = vld [vmem:[%s243 + $0x208] sm:$0xff]
        %v369 = vld [vmem:[%s243 + $0x210] sm:$0xff]
        %v370 = vld [vmem:[%s243 + $0x218] sm:$0xff]
        %v371 = vld [vmem:[%s243 + $0x220] sm:$0xff]
        %v372 = vld [vmem:[%s243 + $0x228] sm:$0xff]
        %v373 = vld [vmem:[%s243 + $0x230] sm:$0xff]
        %v374 = vld [vmem:[%s243 + $0x238] sm:$0xff]
        %v375 = vld [vmem:[%s243 + $0x240] sm:$0xff]
        %v376 = vld [vmem:[%s243 + $0x248] sm:$0xff]
        %v377 = vld [vmem:[%s243 + $0x250] sm:$0xff]
        %v378 = vld [vmem:[%s243 + $0x258] sm:$0xff]
        %v379 = vld [vmem:[%s243 + $0x260] sm:$0xff]
        %v380 = vld [vmem:[%s243 + $0x268] sm:$0xff]
        %v381 = vld [vmem:[%s243 + $0x270] sm:$0xff]
        %v382 = vld [vmem:[%s243 + $0x278] sm:$0xff]
        %v383 = vld [vmem:[%s243 + $0x280] sm:$0xff]
        %v384 = vld [vmem:[%s243 + $0x288] sm:$0xff]
        %v385 = vld [vmem:[%s243 + $0x290] sm:$0xff]
        %v386 = vld [vmem:[%s243 + $0x298] sm:$0xff]
        %v387 = vld [vmem:[%s243 + $0x2a0] sm:$0xff]
        %v388 = vld [vmem:[%s243 + $0x2a8] sm:$0xff]
        %v389 = vld [vmem:[%s243 + $0x2b0] sm:$0xff]
        %v390 = vld [vmem:[%s243 + $0x2b8] sm:$0xff]
        %v391 = vld [vmem:[%s243 + $0x2c0] sm:$0xff]
        %v392 = vld [vmem:[%s243 + $0x2c8] sm:$0xff]
        %v393 = vld [vmem:[%s243 + $0x2d0] sm:$0xff]
        %v394 = vld [vmem:[%s243 + $0x2d8] sm:$0xff]
        %v395 = vld [vmem:[%s243 + $0x2e0] sm:$0xff]
        %v396 = vld [vmem:[%s243 + $0x2e8] sm:$0xff]
        %v397 = vld [vmem:[%s243 + $0x2f0] sm:$0xff]
        %v398 = vld [vmem:[%s243 + $0x2f8] sm:$0xff]
        %v399 = vld [vmem:[%s243 + $0x300] sm:$0xff]
        %v400 = vld [vmem:[%s243 + $0x308] sm:$0xff]
        %v401 = vld [vmem:[%s243 + $0x310] sm:$0xff]
        %v402 = vld [vmem:[%s243 + $0x318] sm:$0xff]
        %v403 = vld [vmem:[%s243 + $0x320] sm:$0xff]
        %v404 = vld [vmem:[%s243 + $0x328] sm:$0xff]
        %v405 = vld [vmem:[%s243 + $0x330] sm:$0xff]
        %v406 = vld [vmem:[%s243 + $0x338] sm:$0xff]
        %v407 = vld [vmem:[%s243 + $0x340] sm:$0xff]
        %v408 = vld [vmem:[%s243 + $0x348] sm:$0xff]
        %v409 = vld [vmem:[%s243 + $0x350] sm:$0xff]
        %v410 = vld [vmem:[%s243 + $0x358] sm:$0xff]
        %v411 = vld [vmem:[%s243 + $0x360] sm:$0xff]
        %v412 = vld [vmem:[%s243 + $0x368] sm:$0xff]
        %v413 = vld [vmem:[%s243 + $0x370] sm:$0xff]
        %v414 = vld [vmem:[%s243 + $0x378] sm:$0xff]
        %v415 = vld [vmem:[%s243 + $0x380] sm:$0xff]
        %v416 = vld [vmem:[%s243 + $0x388] sm:$0xff]
        %v417 = vld [vmem:[%s243 + $0x390] sm:$0xff]
        %v418 = vld [vmem:[%s243 + $0x398] sm:$0xff]
        %v419 = vld [vmem:[%s243 + $0x3a0] sm:$0xff]
        %v420 = vld [vmem:[%s243 + $0x3a8] sm:$0xff]
        %v421 = vld [vmem:[%s243 + $0x3b0] sm:$0xff]
        %v422 = vld [vmem:[%s243 + $0x3b8] sm:$0xff]
        %v423 = vld [vmem:[%s243 + $0x3c0] sm:$0xff]
        %v424 = vld [vmem:[%s243 + $0x3c8] sm:$0xff]
        %v425 = vld [vmem:[%s243 + $0x3d0] sm:$0xff]
        %v426 = vld [vmem:[%s243 + $0x3d8] sm:$0xff]
        %v427 = vld [vmem:[%s243 + $0x3e0] sm:$0xff]
        %v428 = vld [vmem:[%s243 + $0x3e8] sm:$0xff]
        %v429 = vld [vmem:[%s243 + $0x3f0] sm:$0xff]
        %v430 = vld [vmem:[%s243 + $0x3f8] sm:$0xff]
        %v431 = vld [vmem:[%s243 + $0x400] sm:$0xff]
        %v432 = vld [vmem:[%s243 + $0x408] sm:$0xff]
        %v433 = vld [vmem:[%s243 + $0x410] sm:$0xff]
        %v434 = vld [vmem:[%s243 + $0x418] sm:$0xff]
        %v435 = vld [vmem:[%s243 + $0x420] sm:$0xff]
        %v436 = vld [vmem:[%s243 + $0x428] sm:$0xff]
        %v437 = vld [vmem:[%s243 + $0x430] sm:$0xff]
        %v438 = vld [vmem:[%s243 + $0x438] sm:$0xff]
        %v439 = vld [vmem:[%s243 + $0x440] sm:$0xff]
        %v440 = vld [vmem:[%s243 + $0x448] sm:$0xff]
        %v441 = vld [vmem:[%s243 + $0x450] sm:$0xff]
        %v442 = vld [vmem:[%s243 + $0x458] sm:$0xff]
        %v443 = vld [vmem:[%s243 + $0x460] sm:$0xff]
        %v444 = vld [vmem:[%s243 + $0x468] sm:$0xff]
        %v445 = vld [vmem:[%s243 + $0x470] sm:$0xff]
        %v446 = vld [vmem:[%s243 + $0x478] sm:$0xff]
        %v447 = vld [vmem:[%s243 + $0x480] sm:$0xff]
        %v448 = vld [vmem:[%s243 + $0x488] sm:$0xff]
        %v449 = vld [vmem:[%s243 + $0x490] sm:$0xff]
        %v450 = vld [vmem:[%s243 + $0x498] sm:$0xff]
        %v451 = vld [vmem:[%s243 + $0x4a0] sm:$0xff]
        %v452 = vld [vmem:[%s243 + $0x4a8] sm:$0xff]
        %v453 = vld [vmem:[%s243 + $0x4b0] sm:$0xff]
        %v454 = vld [vmem:[%s243 + $0x4b8] sm:$0xff]
        %v455 = vld [vmem:[%s243 + $0x4c0] sm:$0xff]
        %v456 = vld [vmem:[%s243 + $0x4c8] sm:$0xff]
        %v457 = vld [vmem:[%s243 + $0x4d0] sm:$0xff]
        %v458 = vld [vmem:[%s243 + $0x4d8] sm:$0xff]
        %v459 = vld [vmem:[%s243 + $0x4e0] sm:$0xff]
        %v460 = vld [vmem:[%s243 + $0x4e8] sm:$0xff]
        %v461 = vld [vmem:[%s243 + $0x4f0] sm:$0xff]
        %v462 = vld [vmem:[%s243 + $0x4f8] sm:$0xff]
        %v463 = vld [vmem:[%s243 + $0x500] sm:$0xff]
        %v464 = vld [vmem:[%s243 + $0x508] sm:$0xff]
        %v465 = vld [vmem:[%s243 + $0x510] sm:$0xff]
        %v466 = vld [vmem:[%s243 + $0x518] sm:$0xff]
        %v467 = vld [vmem:[%s243 + $0x520] sm:$0xff]
        %v468 = vld [vmem:[%s243 + $0x528] sm:$0xff]
        %v469 = vld [vmem:[%s243 + $0x530] sm:$0xff]
        %v470 = vld [vmem:[%s243 + $0x538] sm:$0xff]
        %v471 = vld [vmem:[%s243 + $0x540] sm:$0xff]
        %v472 = vld [vmem:[%s243 + $0x548] sm:$0xff]
        %v473 = vld [vmem:[%s243 + $0x550] sm:$0xff]
        %v474 = vld [vmem:[%s243 + $0x558] sm:$0xff]
        %v475 = vld [vmem:[%s243 + $0x560] sm:$0xff]
        %v476 = vld [vmem:[%s243 + $0x568] sm:$0xff]
        %v477 = vld [vmem:[%s243 + $0x570] sm:$0xff]
        %v478 = vld [vmem:[%s243 + $0x578] sm:$0xff]
        %v479 = vld [vmem:[%s243 + $0x580] sm:$0xff]
        %v480 = vld [vmem:[%s243 + $0x588] sm:$0xff]
        %v481 = vld [vmem:[%s243 + $0x590] sm:$0xff]
        %v482 = vld [vmem:[%s243 + $0x598] sm:$0xff]
        %v483 = vld [vmem:[%s243 + $0x5a0] sm:$0xff]
        %v484 = vld [vmem:[%s243 + $0x5a8] sm:$0xff]
        %v485 = vld [vmem:[%s243 + $0x5b0] sm:$0xff]
        %v486 = vld [vmem:[%s243 + $0x5b8] sm:$0xff]
        %v487 = vld [vmem:[%s243 + $0x5c0] sm:$0xff]
        %v488 = vld [vmem:[%s243 + $0x5c8] sm:$0xff]
        %v489 = vld [vmem:[%s243 + $0x5d0] sm:$0xff]
        %v490 = vld [vmem:[%s243 + $0x5d8] sm:$0xff]
        %v491 = vld [vmem:[%s243 + $0x5e0] sm:$0xff]
        %v492 = vld [vmem:[%s243 + $0x5e8] sm:$0xff]
        %v493 = vld [vmem:[%s243 + $0x5f0] sm:$0xff]
        %v494 = vld [vmem:[%s243 + $0x5f8] sm:$0xff]
        %v495 = vld [vmem:[%s243 + $0x600] sm:$0xff]
        %v496 = vld [vmem:[%s243 + $0x608] sm:$0xff]
        %v497 = vld [vmem:[%s243 + $0x610] sm:$0xff]
        %v498 = vld [vmem:[%s243 + $0x618] sm:$0xff]
        %v499 = vld [vmem:[%s243 + $0x620] sm:$0xff]
        %v500 = vld [vmem:[%s243 + $0x628] sm:$0xff]
        %v501 = vld [vmem:[%s243 + $0x630] sm:$0xff]
        %v502 = vld [vmem:[%s243 + $0x638] sm:$0xff]
        %v503 = vld [vmem:[%s243 + $0x640] sm:$0xff]
        %v504 = vld [vmem:[%s243 + $0x648] sm:$0xff]
        %v505 = vld [vmem:[%s243 + $0x650] sm:$0xff]
        %v506 = vld [vmem:[%s243 + $0x658] sm:$0xff]
        %v507 = vld [vmem:[%s243 + $0x660] sm:$0xff]
        %v508 = vld [vmem:[%s243 + $0x668] sm:$0xff]
        %v509 = vld [vmem:[%s243 + $0x670] sm:$0xff]
        %v510 = vld [vmem:[%s243 + $0x678] sm:$0xff]
        %v511 = vld [vmem:[%s243 + $0x680] sm:$0xff]
        %v512 = vld [vmem:[%s243 + $0x688] sm:$0xff]
        %v513 = vld [vmem:[%s243 + $0x690] sm:$0xff]
        %v514 = vld [vmem:[%s243 + $0x698] sm:$0xff]
        %v515 = vld [vmem:[%s243 + $0x6a0] sm:$0xff]
        %v516 = vld [vmem:[%s243 + $0x6a8] sm:$0xff]
        %v517 = vld [vmem:[%s243 + $0x6b0] sm:$0xff]
        %v518 = vld [vmem:[%s243 + $0x6b8] sm:$0xff]
        %v519 = vld [vmem:[%s243 + $0x6c0] sm:$0xff]
        %v520 = vld [vmem:[%s243 + $0x6c8] sm:$0xff]
        %v521 = vld [vmem:[%s243 + $0x6d0] sm:$0xff]
        %v522 = vld [vmem:[%s243 + $0x6d8] sm:$0xff]
        %v523 = vld [vmem:[%s243 + $0x6e0] sm:$0xff]
        %v524 = vld [vmem:[%s243 + $0x6e8] sm:$0xff]
        %v525 = vld [vmem:[%s243 + $0x6f0] sm:$0xff]
        %v526 = vld [vmem:[%s243 + $0x6f8] sm:$0xff]
        %v527 = vld [vmem:[%s243 + $0x700] sm:$0xff]
        %v528 = vld [vmem:[%s243 + $0x708] sm:$0xff]
        %v529 = vld [vmem:[%s243 + $0x710] sm:$0xff]
        %v530 = vld [vmem:[%s243 + $0x718] sm:$0xff]
        %v531 = vld [vmem:[%s243 + $0x720] sm:$0xff]
        %v532 = vld [vmem:[%s243 + $0x728] sm:$0xff]
        %v533 = vld [vmem:[%s243 + $0x730] sm:$0xff]
        %v534 = vld [vmem:[%s243 + $0x738] sm:$0xff]
        %v535 = vld [vmem:[%s243 + $0x740] sm:$0xff]
        %v536 = vld [vmem:[%s243 + $0x748] sm:$0xff]
        %v537 = vld [vmem:[%s243 + $0x750] sm:$0xff]
        %v538 = vld [vmem:[%s243 + $0x758] sm:$0xff]
        %v539 = vld [vmem:[%s243 + $0x760] sm:$0xff]
        %v540 = vld [vmem:[%s243 + $0x768] sm:$0xff]
        %v541 = vld [vmem:[%s243 + $0x770] sm:$0xff]
        %v542 = vld [vmem:[%s243 + $0x778] sm:$0xff]
        %v543 = vld [vmem:[%s243 + $0x780] sm:$0xff]
        %v544 = vld [vmem:[%s243 + $0x788] sm:$0xff]
        %v545 = vld [vmem:[%s243 + $0x790] sm:$0xff]
        %v546 = vld [vmem:[%s243 + $0x798] sm:$0xff]
        %v547 = vld [vmem:[%s243 + $0x7a0] sm:$0xff]
        %v548 = vld [vmem:[%s243 + $0x7a8] sm:$0xff]
        %v549 = vld [vmem:[%s243 + $0x7b0] sm:$0xff]
        %v550 = vld [vmem:[%s243 + $0x7b8] sm:$0xff]
        %v551 = vld [vmem:[%s243 + $0x7c0] sm:$0xff]
        %v552 = vld [vmem:[%s243 + $0x7c8] sm:$0xff]
        %v553 = vld [vmem:[%s243 + $0x7d0] sm:$0xff]
        %v554 = vld [vmem:[%s243 + $0x7d8] sm:$0xff]
        %v555 = vld [vmem:[%s243 + $0x7e0] sm:$0xff]
        %v556 = vld [vmem:[%s243 + $0x7e8] sm:$0xff]
        %v557 = vld [vmem:[%s243 + $0x7f0] sm:$0xff]
        %v558 = vld [vmem:[%s243 + $0x7f8] sm:$0xff]
        %v559 = vld [vmem:[%s243 + $0x800] sm:$0xff]
        %v560 = vld [vmem:[%s243 + $0x808] sm:$0xff]
        %v561 = vld [vmem:[%s243 + $0x810] sm:$0xff]
        %v562 = vld [vmem:[%s243 + $0x818] sm:$0xff]
        %v563 = vld [vmem:[%s243 + $0x820] sm:$0xff]
        %v564 = vld [vmem:[%s243 + $0x828] sm:$0xff]
        %v565 = vld [vmem:[%s243 + $0x830] sm:$0xff]
        %v566 = vld [vmem:[%s243 + $0x838] sm:$0xff]
        %v567 = vld [vmem:[%s243 + $0x840] sm:$0xff]
        %v568 = vld [vmem:[%s243 + $0x848] sm:$0xff]
        %v569 = vld [vmem:[%s243 + $0x850] sm:$0xff]
        %v570 = vld [vmem:[%s243 + $0x858] sm:$0xff]
        %v571 = vld [vmem:[%s243 + $0x860] sm:$0xff]
        %v572 = vld [vmem:[%s243 + $0x868] sm:$0xff]
        %v573 = vld [vmem:[%s243 + $0x870] sm:$0xff]
        %v574 = vld [vmem:[%s243 + $0x878] sm:$0xff]
        %v575 = vld [vmem:[%s243 + $0x880] sm:$0xff]
        %v576 = vld [vmem:[%s243 + $0x888] sm:$0xff]
        %v577 = vld [vmem:[%s243 + $0x890] sm:$0xff]
        %v578 = vld [vmem:[%s243 + $0x898] sm:$0xff]
        %v579 = vld [vmem:[%s243 + $0x8a0] sm:$0xff]
        %v580 = vld [vmem:[%s243 + $0x8a8] sm:$0xff]
        %v581 = vld [vmem:[%s243 + $0x8b0] sm:$0xff]
        %v582 = vld [vmem:[%s243 + $0x8b8] sm:$0xff]
        %v583 = vld [vmem:[%s243 + $0x8c0] sm:$0xff]
        %v584 = vld [vmem:[%s243 + $0x8c8] sm:$0xff]
        %v585 = vld [vmem:[%s243 + $0x8d0] sm:$0xff]
        %v586 = vld [vmem:[%s243 + $0x8d8] sm:$0xff]
        %v587 = vld [vmem:[%s243 + $0x8e0] sm:$0xff]
        %v588 = vld [vmem:[%s243 + $0x8e8] sm:$0xff]
        %v589 = vld [vmem:[%s243 + $0x8f0] sm:$0xff]
        %v590 = vld [vmem:[%s243 + $0x8f8] sm:$0xff]
        %v591 = vld [vmem:[%s243 + $0x900] sm:$0xff]
        %v592 = vld [vmem:[%s243 + $0x908] sm:$0xff]
        %v593 = vld [vmem:[%s243 + $0x910] sm:$0xff]
        %v594 = vld [vmem:[%s243 + $0x918] sm:$0xff]
        %v595 = vld [vmem:[%s243 + $0x920] sm:$0xff]
        %v596 = vld [vmem:[%s243 + $0x928] sm:$0xff]
        %v597 = vld [vmem:[%s243 + $0x930] sm:$0xff]
        %v598 = vld [vmem:[%s243 + $0x938] sm:$0xff]
        %v599 = vld [vmem:[%s243 + $0x940] sm:$0xff]
        %v600 = vld [vmem:[%s243 + $0x948] sm:$0xff]
        %v601 = vld [vmem:[%s243 + $0x950] sm:$0xff]
        %v602 = vld [vmem:[%s243 + $0x958] sm:$0xff]
        %v603 = vld [vmem:[%s243 + $0x960] sm:$0xff]
        %v604 = vld [vmem:[%s243 + $0x968] sm:$0xff]
        %v605 = vld [vmem:[%s243 + $0x970] sm:$0xff]
        %v606 = vld [vmem:[%s243 + $0x978] sm:$0xff]
        %v607 = vld [vmem:[%s243 + $0x980] sm:$0xff]
        %v608 = vld [vmem:[%s243 + $0x988] sm:$0xff]
        %v609 = vld [vmem:[%s243 + $0x990] sm:$0xff]
        %v610 = vld [vmem:[%s243 + $0x998] sm:$0xff]
        %v611 = vld [vmem:[%s243 + $0x9a0] sm:$0xff]
        %v612 = vld [vmem:[%s243 + $0x9a8] sm:$0xff]
        %v613 = vld [vmem:[%s243 + $0x9b0] sm:$0xff]
        %v614 = vld [vmem:[%s243 + $0x9b8] sm:$0xff]
        %v615 = vld [vmem:[%s243 + $0x9c0] sm:$0xff]
        %v616 = vld [vmem:[%s243 + $0x9c8] sm:$0xff]
        %v617 = vld [vmem:[%s243 + $0x9d0] sm:$0xff]
        %v618 = vld [vmem:[%s243 + $0x9d8] sm:$0xff]
        %v619 = vld [vmem:[%s243 + $0x9e0] sm:$0xff]
        %v620 = vld [vmem:[%s243 + $0x9e8] sm:$0xff]
        %v621 = vld [vmem:[%s243 + $0x9f0] sm:$0xff]
        %v622 = vld [vmem:[%s243 + $0x9f8] sm:$0xff]
        %v623 = vld [vmem:[%s243 + $0xa00] sm:$0xff]
        %v624 = vld [vmem:[%s243 + $0xa08] sm:$0xff]
        %v625 = vld [vmem:[%s243 + $0xa10] sm:$0xff]
        %v626 = vld [vmem:[%s243 + $0xa18] sm:$0xff]
        %v627 = vld [vmem:[%s243 + $0xa20] sm:$0xff]
        %v628 = vld [vmem:[%s243 + $0xa28] sm:$0xff]
        %v629 = vld [vmem:[%s243 + $0xa30] sm:$0xff]
        %v630 = vld [vmem:[%s243 + $0xa38] sm:$0xff]
        %v631 = vld [vmem:[%s243 + $0xa40] sm:$0xff]
        %v632 = vld [vmem:[%s243 + $0xa48] sm:$0xff]
        %v633 = vld [vmem:[%s243 + $0xa50] sm:$0xff]
        %v634 = vld [vmem:[%s243 + $0xa58] sm:$0xff]
        %v635 = vld [vmem:[%s243 + $0xa60] sm:$0xff]
        %v636 = vld [vmem:[%s243 + $0xa68] sm:$0xff]
        %v637 = vld [vmem:[%s243 + $0xa70] sm:$0xff]
        %v638 = vld [vmem:[%s243 + $0xa78] sm:$0xff]
        %v639 = vld [vmem:[%s243 + $0xa80] sm:$0xff]
        %v640 = vld [vmem:[%s243 + $0xa88] sm:$0xff]
        %v641 = vld [vmem:[%s243 + $0xa90] sm:$0xff]
        %v642 = vld [vmem:[%s243 + $0xa98] sm:$0xff]
        %v643 = vld [vmem:[%s243 + $0xaa0] sm:$0xff]
        %v644 = vld [vmem:[%s243 + $0xaa8] sm:$0xff]
        %v645 = vld [vmem:[%s243 + $0xab0] sm:$0xff]
        %v646 = vld [vmem:[%s243 + $0xab8] sm:$0xff]
        %v647 = vld [vmem:[%s243 + $0xac0] sm:$0xff]
        %v648 = vld [vmem:[%s243 + $0xac8] sm:$0xff]
        %v649 = vld [vmem:[%s243 + $0xad0] sm:$0xff]
        %v650 = vld [vmem:[%s243 + $0xad8] sm:$0xff]
        %v651 = vld [vmem:[%s243 + $0xae0] sm:$0xff]
        %v652 = vld [vmem:[%s243 + $0xae8] sm:$0xff]
        %v653 = vld [vmem:[%s243 + $0xaf0] sm:$0xff]
        %v654 = vld [vmem:[%s243 + $0xaf8] sm:$0xff]
        %v655 = vld [vmem:[%s243 + $0xb00] sm:$0xff]
        %v656 = vld [vmem:[%s243 + $0xb08] sm:$0xff]
        %v657 = vld [vmem:[%s243 + $0xb10] sm:$0xff]
        %v658 = vld [vmem:[%s243 + $0xb18] sm:$0xff]
        %v659 = vld [vmem:[%s243 + $0xb20] sm:$0xff]
        %v660 = vld [vmem:[%s243 + $0xb28] sm:$0xff]
        %v661 = vld [vmem:[%s243 + $0xb30] sm:$0xff]
        %v662 = vld [vmem:[%s243 + $0xb38] sm:$0xff]
        %v663 = vld [vmem:[%s243 + $0xb40] sm:$0xff]
        %v664 = vld [vmem:[%s243 + $0xb48] sm:$0xff]
        %v665 = vld [vmem:[%s243 + $0xb50] sm:$0xff]
        %v666 = vld [vmem:[%s243 + $0xb58] sm:$0xff]
        %v667 = vld [vmem:[%s243 + $0xb60] sm:$0xff]
        %v668 = vld [vmem:[%s243 + $0xb68] sm:$0xff]
        %v669 = vld [vmem:[%s243 + $0xb70] sm:$0xff]
        %v670 = vld [vmem:[%s243 + $0xb78] sm:$0xff]
        %v671 = vld [vmem:[%s243 + $0xb80] sm:$0xff]
        %v672 = vld [vmem:[%s243 + $0xb88] sm:$0xff]
        %v673 = vld [vmem:[%s243 + $0xb90] sm:$0xff]
        %v674 = vld [vmem:[%s243 + $0xb98] sm:$0xff]
        %v675 = vld [vmem:[%s243 + $0xba0] sm:$0xff]
        %v676 = vld [vmem:[%s243 + $0xba8] sm:$0xff]
        %v677 = vld [vmem:[%s243 + $0xbb0] sm:$0xff]
        %v678 = vld [vmem:[%s243 + $0xbb8] sm:$0xff]
        %v679 = vld [vmem:[%s243 + $0xbc0] sm:$0xff]
        %v680 = vld [vmem:[%s243 + $0xbc8] sm:$0xff]
        %v681 = vld [vmem:[%s243 + $0xbd0] sm:$0xff]
        %v682 = vld [vmem:[%s243 + $0xbd8] sm:$0xff]
        %v683 = vld [vmem:[%s243 + $0xbe0] sm:$0xff]
        %v684 = vld [vmem:[%s243 + $0xbe8] sm:$0xff]
        %v685 = vld [vmem:[%s243 + $0xbf0] sm:$0xff]
        %v686 = vld [vmem:[%s243 + $0xbf8] sm:$0xff]
        %v687 = vld [vmem:[%s243 + $0xc00] sm:$0xff]
        %v688 = vld [vmem:[%s243 + $0xc08] sm:$0xff]
        %v689 = vld [vmem:[%s243 + $0xc10] sm:$0xff]
        %v690 = vld [vmem:[%s243 + $0xc18] sm:$0xff]
        %v691 = vld [vmem:[%s243 + $0xc20] sm:$0xff]
        %v692 = vld [vmem:[%s243 + $0xc28] sm:$0xff]
        %v693 = vld [vmem:[%s243 + $0xc30] sm:$0xff]
        %v694 = vld [vmem:[%s243 + $0xc38] sm:$0xff]
        %v695 = vld [vmem:[%s243 + $0xc40] sm:$0xff]
        %v696 = vld [vmem:[%s243 + $0xc48] sm:$0xff]
        %v697 = vld [vmem:[%s243 + $0xc50] sm:$0xff]
        %v698 = vld [vmem:[%s243 + $0xc58] sm:$0xff]
        %v699 = vld [vmem:[%s243 + $0xc60] sm:$0xff]
        %v700 = vld [vmem:[%s243 + $0xc68] sm:$0xff]
        %v701 = vld [vmem:[%s243 + $0xc70] sm:$0xff]
        %v702 = vld [vmem:[%s243 + $0xc78] sm:$0xff]
        %v703 = vld [vmem:[%s243 + $0xc80] sm:$0xff]
        %v704 = vld [vmem:[%s243 + $0xc88] sm:$0xff]
        %v705 = vld [vmem:[%s243 + $0xc90] sm:$0xff]
        %v706 = vld [vmem:[%s243 + $0xc98] sm:$0xff]
        %v707 = vld [vmem:[%s243 + $0xca0] sm:$0xff]
        %v708 = vld [vmem:[%s243 + $0xca8] sm:$0xff]
        %v709 = vld [vmem:[%s243 + $0xcb0] sm:$0xff]
        %v710 = vld [vmem:[%s243 + $0xcb8] sm:$0xff]
        %v711 = vld [vmem:[%s243 + $0xcc0] sm:$0xff]
        %v712 = vld [vmem:[%s243 + $0xcc8] sm:$0xff]
        %v713 = vld [vmem:[%s243 + $0xcd0] sm:$0xff]
        %v714 = vld [vmem:[%s243 + $0xcd8] sm:$0xff]
        %v715 = vld [vmem:[%s243 + $0xce0] sm:$0xff]
        %v716 = vld [vmem:[%s243 + $0xce8] sm:$0xff]
        %v717 = vld [vmem:[%s243 + $0xcf0] sm:$0xff]
        %v718 = vld [vmem:[%s243 + $0xcf8] sm:$0xff]
        %v719 = vld [vmem:[%s243 + $0xd00] sm:$0xff]
        %v720 = vld [vmem:[%s243 + $0xd08] sm:$0xff]
        %v721 = vld [vmem:[%s243 + $0xd10] sm:$0xff]
        %v722 = vld [vmem:[%s243 + $0xd18] sm:$0xff]
        %v723 = vld [vmem:[%s243 + $0xd20] sm:$0xff]
        %v724 = vld [vmem:[%s243 + $0xd28] sm:$0xff]
        %v725 = vld [vmem:[%s243 + $0xd30] sm:$0xff]
        %v726 = vld [vmem:[%s243 + $0xd38] sm:$0xff]
        %v727 = vld [vmem:[%s243 + $0xd40] sm:$0xff]
        %v728 = vld [vmem:[%s243 + $0xd48] sm:$0xff]
        %v729 = vld [vmem:[%s243 + $0xd50] sm:$0xff]
        %v730 = vld [vmem:[%s243 + $0xd58] sm:$0xff]
        %v731 = vld [vmem:[%s243 + $0xd60] sm:$0xff]
        %v732 = vld [vmem:[%s243 + $0xd68] sm:$0xff]
        %v733 = vld [vmem:[%s243 + $0xd70] sm:$0xff]
        %v734 = vld [vmem:[%s243 + $0xd78] sm:$0xff]
        %v735 = vld [vmem:[%s243 + $0xd80] sm:$0xff]
        %v736 = vld [vmem:[%s243 + $0xd88] sm:$0xff]
        %v737 = vld [vmem:[%s243 + $0xd90] sm:$0xff]
        %v738 = vld [vmem:[%s243 + $0xd98] sm:$0xff]
        %v739 = vld [vmem:[%s243 + $0xda0] sm:$0xff]
        %v740 = vld [vmem:[%s243 + $0xda8] sm:$0xff]
        %v741 = vld [vmem:[%s243 + $0xdb0] sm:$0xff]
        %v742 = vld [vmem:[%s243 + $0xdb8] sm:$0xff]
        %v743 = vld [vmem:[%s243 + $0xdc0] sm:$0xff]
        %v744 = vld [vmem:[%s243 + $0xdc8] sm:$0xff]
        %v745 = vld [vmem:[%s243 + $0xdd0] sm:$0xff]
        %v746 = vld [vmem:[%s243 + $0xdd8] sm:$0xff]
        %v747 = vld [vmem:[%s243 + $0xde0] sm:$0xff]
        %v748 = vld [vmem:[%s243 + $0xde8] sm:$0xff]
        %v749 = vld [vmem:[%s243 + $0xdf0] sm:$0xff]
        %v750 = vld [vmem:[%s243 + $0xdf8] sm:$0xff]
        %v751 = vld [vmem:[%s243 + $0xe00] sm:$0xff]
        %v752 = vld [vmem:[%s243 + $0xe08] sm:$0xff]
        %v753 = vld [vmem:[%s243 + $0xe10] sm:$0xff]
        %v754 = vld [vmem:[%s243 + $0xe18] sm:$0xff]
        %v755 = vld [vmem:[%s243 + $0xe20] sm:$0xff]
        %v756 = vld [vmem:[%s243 + $0xe28] sm:$0xff]
        %v757 = vld [vmem:[%s243 + $0xe30] sm:$0xff]
        %v758 = vld [vmem:[%s243 + $0xe38] sm:$0xff]
        %v759 = vld [vmem:[%s243 + $0xe40] sm:$0xff]
        %v760 = vld [vmem:[%s243 + $0xe48] sm:$0xff]
        %v761 = vld [vmem:[%s243 + $0xe50] sm:$0xff]
        %v762 = vld [vmem:[%s243 + $0xe58] sm:$0xff]
        %v763 = vld [vmem:[%s243 + $0xe60] sm:$0xff]
        %v764 = vld [vmem:[%s243 + $0xe68] sm:$0xff]
        %v765 = vld [vmem:[%s243 + $0xe70] sm:$0xff]
        %v766 = vld [vmem:[%s243 + $0xe78] sm:$0xff]
        %v767 = vld [vmem:[%s243 + $0xe80] sm:$0xff]
        %v768 = vld [vmem:[%s243 + $0xe88] sm:$0xff]
        %v769 = vld [vmem:[%s243 + $0xe90] sm:$0xff]
        %v770 = vld [vmem:[%s243 + $0xe98] sm:$0xff]
        %v771 = vld [vmem:[%s243 + $0xea0] sm:$0xff]
        %v772 = vld [vmem:[%s243 + $0xea8] sm:$0xff]
        %v773 = vld [vmem:[%s243 + $0xeb0] sm:$0xff]
        %v774 = vld [vmem:[%s243 + $0xeb8] sm:$0xff]
        %v775 = vld [vmem:[%s243 + $0xec0] sm:$0xff]
        %v776 = vld [vmem:[%s243 + $0xec8] sm:$0xff]
        %v777 = vld [vmem:[%s243 + $0xed0] sm:$0xff]
        %v778 = vld [vmem:[%s243 + $0xed8] sm:$0xff]
        %v779 = vld [vmem:[%s243 + $0xee0] sm:$0xff]
        %v780 = vld [vmem:[%s243 + $0xee8] sm:$0xff]
        %v781 = vld [vmem:[%s243 + $0xef0] sm:$0xff]
        %v782 = vld [vmem:[%s243 + $0xef8] sm:$0xff]
        %v783 = vld [vmem:[%s243 + $0xf00] sm:$0xff]
        %v784 = vld [vmem:[%s243 + $0xf08] sm:$0xff]
        %v785 = vld [vmem:[%s243 + $0xf10] sm:$0xff]
        %v786 = vld [vmem:[%s243 + $0xf18] sm:$0xff]
        %v787 = vld [vmem:[%s243 + $0xf20] sm:$0xff]
        %v788 = vld [vmem:[%s243 + $0xf28] sm:$0xff]
        %v789 = vld [vmem:[%s243 + $0xf30] sm:$0xff]
        %v790 = vld [vmem:[%s243 + $0xf38] sm:$0xff]
        %v791 = vld [vmem:[%s243 + $0xf40] sm:$0xff]
        %v792 = vld [vmem:[%s243 + $0xf48] sm:$0xff]
        %v793 = vld [vmem:[%s243 + $0xf50] sm:$0xff]
        %v794 = vld [vmem:[%s243 + $0xf58] sm:$0xff]
        %v795 = vld [vmem:[%s243 + $0xf60] sm:$0xff]
        %v796 = vld [vmem:[%s243 + $0xf68] sm:$0xff]
        %v797 = vld [vmem:[%s243 + $0xf70] sm:$0xff]
        %v798 = vld [vmem:[%s243 + $0xf78] sm:$0xff]
        %v799 = vld [vmem:[%s243 + $0xf80] sm:$0xff]
        %v800 = vld [vmem:[%s243 + $0xf88] sm:$0xff]
        %v801 = vld [vmem:[%s243 + $0xf90] sm:$0xff]
        %v802 = vld [vmem:[%s243 + $0xf98] sm:$0xff]
        %v803 = vld [vmem:[%s243 + $0xfa0] sm:$0xff]
        %v804 = vld [vmem:[%s243 + $0xfa8] sm:$0xff]
        %v805 = vld [vmem:[%s243 + $0xfb0] sm:$0xff]
        %v806 = vld [vmem:[%s243 + $0xfb8] sm:$0xff]
        %v807 = vld [vmem:[%s243 + $0xfc0] sm:$0xff]
        %v808 = vld [vmem:[%s243 + $0xfc8] sm:$0xff]
        %v809 = vld [vmem:[%s243 + $0xfd0] sm:$0xff]
        %v810 = vld [vmem:[%s243 + $0xfd8] sm:$0xff]
        %v811 = vld [vmem:[%s243 + $0xfe0] sm:$0xff]
        %v812 = vld [vmem:[%s243 + $0xfe8] sm:$0xff]
        %v813 = vld [vmem:[%s243 + $0xff0] sm:$0xff]
        %v814 = vld [vmem:[%s243 + $0xff8] sm:$0xff]
        %v815 = vld [vmem:[%s243 + $0x1000] sm:$0xff]
        %v816 = vld [vmem:[%s243 + $0x1008] sm:$0xff]
        %v817 = vld [vmem:[%s243 + $0x1010] sm:$0xff]
        %v818 = vld [vmem:[%s243 + $0x1018] sm:$0xff]
        %v819 = vld [vmem:[%s243 + $0x1020] sm:$0xff]
        %v820 = vld [vmem:[%s243 + $0x1028] sm:$0xff]
        %v821 = vld [vmem:[%s243 + $0x1030] sm:$0xff]
        %v822 = vld [vmem:[%s243 + $0x1038] sm:$0xff]
        %v823 = vld [vmem:[%s243 + $0x1040] sm:$0xff]
        %v824 = vld [vmem:[%s243 + $0x1048] sm:$0xff]
        %v825 = vld [vmem:[%s243 + $0x1050] sm:$0xff]
        %v826 = vld [vmem:[%s243 + $0x1058] sm:$0xff]
        %v827 = vld [vmem:[%s243 + $0x1060] sm:$0xff]
        %v828 = vld [vmem:[%s243 + $0x1068] sm:$0xff]
        %v829 = vld [vmem:[%s243 + $0x1070] sm:$0xff]
        %v830 = vld [vmem:[%s243 + $0x1078] sm:$0xff]
        %v831 = vld [vmem:[%s243 + $0x1080] sm:$0xff]
        %v832 = vld [vmem:[%s243 + $0x1088] sm:$0xff]
        %v833 = vld [vmem:[%s243 + $0x1090] sm:$0xff]
        %v834 = vld [vmem:[%s243 + $0x1098] sm:$0xff]
        %v835 = vld [vmem:[%s243 + $0x10a0] sm:$0xff]
        %v836 = vld [vmem:[%s243 + $0x10a8] sm:$0xff]
        %v837 = vld [vmem:[%s243 + $0x10b0] sm:$0xff]
        %v838 = vld [vmem:[%s243 + $0x10b8] sm:$0xff]
        %v839 = vld [vmem:[%s243 + $0x10c0] sm:$0xff]
        %v840 = vld [vmem:[%s243 + $0x10c8] sm:$0xff]
        %v841 = vld [vmem:[%s243 + $0x10d0] sm:$0xff]
        %v842 = vld [vmem:[%s243 + $0x10d8] sm:$0xff]
        %v843 = vld [vmem:[%s243 + $0x10e0] sm:$0xff]
        %v844 = vld [vmem:[%s243 + $0x10e8] sm:$0xff]
        %v845 = vld [vmem:[%s243 + $0x10f0] sm:$0xff]
        %v846 = vld [vmem:[%s243 + $0x10f8] sm:$0xff]
        %v847 = vld [vmem:[%s243 + $0x1100] sm:$0xff]
        %v848 = vld [vmem:[%s243 + $0x1108] sm:$0xff]
        %v849 = vld [vmem:[%s243 + $0x1110] sm:$0xff]
        %v850 = vld [vmem:[%s243 + $0x1118] sm:$0xff]
        %v851 = vld [vmem:[%s243 + $0x1120] sm:$0xff]
        %v852 = vld [vmem:[%s243 + $0x1128] sm:$0xff]
        %v853 = vld [vmem:[%s243 + $0x1130] sm:$0xff]
        %v854 = vld [vmem:[%s243 + $0x1138] sm:$0xff]
        %v855 = vld [vmem:[%s243 + $0x1140] sm:$0xff]
        %v856 = vld [vmem:[%s243 + $0x1148] sm:$0xff]
        %v857 = vld [vmem:[%s243 + $0x1150] sm:$0xff]
        %v858 = vld [vmem:[%s243 + $0x1158] sm:$0xff]
        %v859 = vld [vmem:[%s243 + $0x1160] sm:$0xff]
        %v860 = vld [vmem:[%s243 + $0x1168] sm:$0xff]
        %v861 = vld [vmem:[%s243 + $0x1170] sm:$0xff]
        %v862 = vld [vmem:[%s243 + $0x1178] sm:$0xff]
        %v863 = vld [vmem:[%s243 + $0x1180] sm:$0xff]
        %v864 = vld [vmem:[%s243 + $0x1188] sm:$0xff]
        %v865 = vld [vmem:[%s243 + $0x1190] sm:$0xff]
        %v866 = vld [vmem:[%s243 + $0x1198] sm:$0xff]
        %v867 = vld [vmem:[%s243 + $0x11a0] sm:$0xff]
        %v868 = vld [vmem:[%s243 + $0x11a8] sm:$0xff]
        %v869 = vld [vmem:[%s243 + $0x11b0] sm:$0xff]
        %v870 = vld [vmem:[%s243 + $0x11b8] sm:$0xff]
        %v871 = vld [vmem:[%s243 + $0x11c0] sm:$0xff]
        %v872 = vld [vmem:[%s243 + $0x11c8] sm:$0xff]
        %v873 = vld [vmem:[%s243 + $0x11d0] sm:$0xff]
        %v874 = vld [vmem:[%s243 + $0x11d8] sm:$0xff]
        %v875 = vld [vmem:[%s243 + $0x11e0] sm:$0xff]
        %v876 = vld [vmem:[%s243 + $0x11e8] sm:$0xff]
        %v877 = vld [vmem:[%s243 + $0x11f0] sm:$0xff]
        %v878 = vld [vmem:[%s243 + $0x11f8] sm:$0xff]
        %v879 = vld [vmem:[%s243 + $0x1200] sm:$0xff]
        %v880 = vld [vmem:[%s243 + $0x1208] sm:$0xff]
        %v881 = vld [vmem:[%s243 + $0x1210] sm:$0xff]
        %v882 = vld [vmem:[%s243 + $0x1218] sm:$0xff]
        %v883 = vld [vmem:[%s243 + $0x1220] sm:$0xff]
        %v884 = vld [vmem:[%s243 + $0x1228] sm:$0xff]
        %v885 = vld [vmem:[%s243 + $0x1230] sm:$0xff]
        %v886 = vld [vmem:[%s243 + $0x1238] sm:$0xff]
        %v887 = vld [vmem:[%s243 + $0x1240] sm:$0xff]
        %v888 = vld [vmem:[%s243 + $0x1248] sm:$0xff]
        %v889 = vld [vmem:[%s243 + $0x1250] sm:$0xff]
        %v890 = vld [vmem:[%s243 + $0x1258] sm:$0xff]
        %v891 = vld [vmem:[%s243 + $0x1260] sm:$0xff]
        %v892 = vld [vmem:[%s243 + $0x1268] sm:$0xff]
        %v893 = vld [vmem:[%s243 + $0x1270] sm:$0xff]
        %v894 = vld [vmem:[%s243 + $0x1278] sm:$0xff]
        %v895 = vld [vmem:[%s243 + $0x1280] sm:$0xff]
        %v896 = vld [vmem:[%s243 + $0x1288] sm:$0xff]
        %v897 = vld [vmem:[%s243 + $0x1290] sm:$0xff]
        %v898 = vld [vmem:[%s243 + $0x1298] sm:$0xff]
        %v899 = vld [vmem:[%s243 + $0x12a0] sm:$0xff]
        %v900 = vld [vmem:[%s243 + $0x12a8] sm:$0xff]
        %v901 = vld [vmem:[%s243 + $0x12b0] sm:$0xff]
        %v902 = vld [vmem:[%s243 + $0x12b8] sm:$0xff]
        %v903 = vld [vmem:[%s243 + $0x12c0] sm:$0xff]
        %v904 = vld [vmem:[%s243 + $0x12c8] sm:$0xff]
        %v905 = vld [vmem:[%s243 + $0x12d0] sm:$0xff]
        %v906 = vld [vmem:[%s243 + $0x12d8] sm:$0xff]
        %v907 = vld [vmem:[%s243 + $0x12e0] sm:$0xff]
        %v908 = vld [vmem:[%s243 + $0x12e8] sm:$0xff]
        %v909 = vld [vmem:[%s243 + $0x12f0] sm:$0xff]
        %v910 = vld [vmem:[%s243 + $0x12f8] sm:$0xff]
        %v911 = vld [vmem:[%s243 + $0x1300] sm:$0xff]
        %v912 = vld [vmem:[%s243 + $0x1308] sm:$0xff]
        %v913 = vld [vmem:[%s243 + $0x1310] sm:$0xff]
        %v914 = vld [vmem:[%s243 + $0x1318] sm:$0xff]
        %v915 = vld [vmem:[%s243 + $0x1320] sm:$0xff]
        %v916 = vld [vmem:[%s243 + $0x1328] sm:$0xff]
        %v917 = vld [vmem:[%s243 + $0x1330] sm:$0xff]
        %v918 = vld [vmem:[%s243 + $0x1338] sm:$0xff]
        %v919 = vld [vmem:[%s243 + $0x1340] sm:$0xff]
        %v920 = vld [vmem:[%s243 + $0x1348] sm:$0xff]
        %v921 = vld [vmem:[%s243 + $0x1350] sm:$0xff]
        %v922 = vld [vmem:[%s243 + $0x1358] sm:$0xff]
        %v923 = vld [vmem:[%s243 + $0x1360] sm:$0xff]
        %v924 = vld [vmem:[%s243 + $0x1368] sm:$0xff]
        %v925 = vld [vmem:[%s243 + $0x1370] sm:$0xff]
        %v926 = vld [vmem:[%s243 + $0x1378] sm:$0xff]
        %v927 = vld [vmem:[%s243 + $0x1380] sm:$0xff]
        %v928 = vld [vmem:[%s243 + $0x1388] sm:$0xff]
        %v929 = vld [vmem:[%s243 + $0x1390] sm:$0xff]
        %v930 = vld [vmem:[%s243 + $0x1398] sm:$0xff]
        %v931 = vld [vmem:[%s243 + $0x13a0] sm:$0xff]
        %v932 = vld [vmem:[%s243 + $0x13a8] sm:$0xff]
        %v933 = vld [vmem:[%s243 + $0x13b0] sm:$0xff]
        %v934 = vld [vmem:[%s243 + $0x13b8] sm:$0xff]
        %v935 = vld [vmem:[%s243 + $0x13c0] sm:$0xff]
        %v936 = vld [vmem:[%s243 + $0x13c8] sm:$0xff]
        %v937 = vld [vmem:[%s243 + $0x13d0] sm:$0xff]
        %v938 = vld [vmem:[%s243 + $0x13d8] sm:$0xff]
        %v939 = vld [vmem:[%s243 + $0x13e0] sm:$0xff]
        %v940 = vld [vmem:[%s243 + $0x13e8] sm:$0xff]
        %v941 = vld [vmem:[%s243 + $0x13f0] sm:$0xff]
        %v942 = vld [vmem:[%s243 + $0x13f8] sm:$0xff]
        %v943 = vld [vmem:[%s243 + $0x1400] sm:$0xff]
        %v944 = vld [vmem:[%s243 + $0x1408] sm:$0xff]
        %v945 = vld [vmem:[%s243 + $0x1410] sm:$0xff]
        %v946 = vld [vmem:[%s243 + $0x1418] sm:$0xff]
        %v947 = vld [vmem:[%s243 + $0x1420] sm:$0xff]
        %v948 = vld [vmem:[%s243 + $0x1428] sm:$0xff]
        %v949 = vld [vmem:[%s243 + $0x1430] sm:$0xff]
        %v950 = vld [vmem:[%s243 + $0x1438] sm:$0xff]
        %v951 = vld [vmem:[%s243 + $0x1440] sm:$0xff]
        %v952 = vld [vmem:[%s243 + $0x1448] sm:$0xff]
        %v953 = vld [vmem:[%s243 + $0x1450] sm:$0xff]
        %v954 = vld [vmem:[%s243 + $0x1458] sm:$0xff]
        %v955 = vld [vmem:[%s243 + $0x1460] sm:$0xff]
        %v956 = vld [vmem:[%s243 + $0x1468] sm:$0xff]
        %v957 = vld [vmem:[%s243 + $0x1470] sm:$0xff]
        %v958 = vld [vmem:[%s243 + $0x1478] sm:$0xff]
        %v959 = vld [vmem:[%s243 + $0x1480] sm:$0xff]
        %v960 = vld [vmem:[%s243 + $0x1488] sm:$0xff]
        %v961 = vld [vmem:[%s243 + $0x1490] sm:$0xff]
        %v962 = vld [vmem:[%s243 + $0x1498] sm:$0xff]
        %v963 = vld [vmem:[%s243 + $0x14a0] sm:$0xff]
        %v964 = vld [vmem:[%s243 + $0x14a8] sm:$0xff]
        %v965 = vld [vmem:[%s243 + $0x14b0] sm:$0xff]
        %v966 = vld [vmem:[%s243 + $0x14b8] sm:$0xff]
        %v967 = vld [vmem:[%s243 + $0x14c0] sm:$0xff]
        %v968 = vld [vmem:[%s243 + $0x14c8] sm:$0xff]
        %v969 = vld [vmem:[%s243 + $0x14d0] sm:$0xff]
        %v970 = vld [vmem:[%s243 + $0x14d8] sm:$0xff]
        %v971 = vld [vmem:[%s243 + $0x14e0] sm:$0xff]
        %v972 = vld [vmem:[%s243 + $0x14e8] sm:$0xff]
        %v973 = vld [vmem:[%s243 + $0x14f0] sm:$0xff]
        %v974 = vld [vmem:[%s243 + $0x14f8] sm:$0xff]
        %v975 = vld [vmem:[%s243 + $0x1500] sm:$0xff]
        %v976 = vld [vmem:[%s243 + $0x1508] sm:$0xff]
        %v977 = vld [vmem:[%s243 + $0x1510] sm:$0xff]
        %v978 = vld [vmem:[%s243 + $0x1518] sm:$0xff]
        %v979 = vld [vmem:[%s243 + $0x1520] sm:$0xff]
        %v980 = vld [vmem:[%s243 + $0x1528] sm:$0xff]
        %v981 = vld [vmem:[%s243 + $0x1530] sm:$0xff]
        %v982 = vld [vmem:[%s243 + $0x1538] sm:$0xff]
        %v983 = vld [vmem:[%s243 + $0x1540] sm:$0xff]
        %v984 = vld [vmem:[%s243 + $0x1548] sm:$0xff]
        %v985 = vld [vmem:[%s243 + $0x1550] sm:$0xff]
        %v986 = vld [vmem:[%s243 + $0x1558] sm:$0xff]
        %v987 = vld [vmem:[%s243 + $0x1560] sm:$0xff]
        %v988 = vld [vmem:[%s243 + $0x1568] sm:$0xff]
        %v989 = vld [vmem:[%s243 + $0x1570] sm:$0xff]
        %v990 = vld [vmem:[%s243 + $0x1578] sm:$0xff]
        %v991 = vld [vmem:[%s243 + $0x1580] sm:$0xff]
        %v992 = vld [vmem:[%s243 + $0x1588] sm:$0xff]
        %v993 = vld [vmem:[%s243 + $0x1590] sm:$0xff]
        %v994 = vld [vmem:[%s243 + $0x1598] sm:$0xff]
        %v995 = vld [vmem:[%s243 + $0x15a0] sm:$0xff]
        %v996 = vld [vmem:[%s243 + $0x15a8] sm:$0xff]
        %v997 = vld [vmem:[%s243 + $0x15b0] sm:$0xff]
        %v998 = vld [vmem:[%s243 + $0x15b8] sm:$0xff]
        %v999 = vld [vmem:[%s243 + $0x15c0] sm:$0xff]
        %v1000 = vld [vmem:[%s243 + $0x15c8] sm:$0xff]
        %v1001 = vld [vmem:[%s243 + $0x15d0] sm:$0xff]
        %v1002 = vld [vmem:[%s243 + $0x15d8] sm:$0xff]
        %v1003 = vld [vmem:[%s243 + $0x15e0] sm:$0xff]
        %v1004 = vld [vmem:[%s243 + $0x15e8] sm:$0xff]
        %v1005 = vld [vmem:[%s243 + $0x15f0] sm:$0xff]
        %v1006 = vld [vmem:[%s243 + $0x15f8] sm:$0xff]
        %v1007 = vld [vmem:[%s243 + $0x1600] sm:$0xff]
        %v1008 = vld [vmem:[%s243 + $0x1608] sm:$0xff]
        %v1009 = vld [vmem:[%s243 + $0x1610] sm:$0xff]
        %v1010 = vld [vmem:[%s243 + $0x1618] sm:$0xff]
        %v1011 = vld [vmem:[%s243 + $0x1620] sm:$0xff]
        %v1012 = vld [vmem:[%s243 + $0x1628] sm:$0xff]
        %v1013 = vld [vmem:[%s243 + $0x1630] sm:$0xff]
        %v1014 = vld [vmem:[%s243 + $0x1638] sm:$0xff]
        %v1015 = vld [vmem:[%s243 + $0x1640] sm:$0xff]
        %v1016 = vld [vmem:[%s243 + $0x1648] sm:$0xff]
        %v1017 = vld [vmem:[%s243 + $0x1650] sm:$0xff]
        %v1018 = vld [vmem:[%s243 + $0x1658] sm:$0xff]
        %v1019 = vld [vmem:[%s243 + $0x1660] sm:$0xff]
        %v1020 = vld [vmem:[%s243 + $0x1668] sm:$0xff]
        %v1021 = vld [vmem:[%s243 + $0x1670] sm:$0xff]
        %v1022 = vld [vmem:[%s243 + $0x1678] sm:$0xff]
        %v1023 = vld [vmem:[%s243 + $0x1680] sm:$0xff]
        %v1024 = vld [vmem:[%s243 + $0x1688] sm:$0xff]
        %v1025 = vld [vmem:[%s243 + $0x1690] sm:$0xff]
        %v1026 = vld [vmem:[%s243 + $0x1698] sm:$0xff]
        %v1027 = vld [vmem:[%s243 + $0x16a0] sm:$0xff]
        %v1028 = vld [vmem:[%s243 + $0x16a8] sm:$0xff]
        %v1029 = vld [vmem:[%s243 + $0x16b0] sm:$0xff]
        %v1030 = vld [vmem:[%s243 + $0x16b8] sm:$0xff]
        %v1031 = vld [vmem:[%s243 + $0x16c0] sm:$0xff]
        %v1032 = vld [vmem:[%s243 + $0x16c8] sm:$0xff]
        %v1033 = vld [vmem:[%s243 + $0x16d0] sm:$0xff]
        %v1034 = vld [vmem:[%s243 + $0x16d8] sm:$0xff]
        %v1035 = vld [vmem:[%s243 + $0x16e0] sm:$0xff]
        %v1036 = vld [vmem:[%s243 + $0x16e8] sm:$0xff]
        %v1037 = vld [vmem:[%s243 + $0x16f0] sm:$0xff]
        %v1038 = vld [vmem:[%s243 + $0x16f8] sm:$0xff]
        %v1039 = vld [vmem:[%s243 + $0x1700] sm:$0xff]
        %v1040 = vld [vmem:[%s243 + $0x1708] sm:$0xff]
        %v1041 = vld [vmem:[%s243 + $0x1710] sm:$0xff]
        %v1042 = vld [vmem:[%s243 + $0x1718] sm:$0xff]
        %v1043 = vld [vmem:[%s243 + $0x1720] sm:$0xff]
        %v1044 = vld [vmem:[%s243 + $0x1728] sm:$0xff]
        %v1045 = vld [vmem:[%s243 + $0x1730] sm:$0xff]
        %v1046 = vld [vmem:[%s243 + $0x1738] sm:$0xff]
        %v1047 = vld [vmem:[%s243 + $0x1740] sm:$0xff]
        %v1048 = vld [vmem:[%s243 + $0x1748] sm:$0xff]
        %v1049 = vld [vmem:[%s243 + $0x1750] sm:$0xff]
        %v1050 = vld [vmem:[%s243 + $0x1758] sm:$0xff]
        %v1051 = vld [vmem:[%s243 + $0x1760] sm:$0xff]
        %v1052 = vld [vmem:[%s243 + $0x1768] sm:$0xff]
        %v1053 = vld [vmem:[%s243 + $0x1770] sm:$0xff]
        %v1054 = vld [vmem:[%s243 + $0x1778] sm:$0xff]
        %v1055 = vld [vmem:[%s243 + $0x1780] sm:$0xff]
        %v1056 = vld [vmem:[%s243 + $0x1788] sm:$0xff]
        %v1057 = vld [vmem:[%s243 + $0x1790] sm:$0xff]
        %v1058 = vld [vmem:[%s243 + $0x1798] sm:$0xff]
        %v1059 = vld [vmem:[%s243 + $0x17a0] sm:$0xff]
        %v1060 = vld [vmem:[%s243 + $0x17a8] sm:$0xff]
        %v1061 = vld [vmem:[%s243 + $0x17b0] sm:$0xff]
        %v1062 = vld [vmem:[%s243 + $0x17b8] sm:$0xff]
        %v1063 = vld [vmem:[%s243 + $0x17c0] sm:$0xff]
        %v1064 = vld [vmem:[%s243 + $0x17c8] sm:$0xff]
        %v1065 = vld [vmem:[%s243 + $0x17d0] sm:$0xff]
        %v1066 = vld [vmem:[%s243 + $0x17d8] sm:$0xff]
        %v1067 = vld [vmem:[%s243 + $0x17e0] sm:$0xff]
        %v1068 = vld [vmem:[%s243 + $0x17e8] sm:$0xff]
        %v1069 = vld [vmem:[%s243 + $0x17f0] sm:$0xff]
        %v1070 = vld [vmem:[%s243 + $0x17f8] sm:$0xff]
        %v1071 = vld [vmem:[%s243 + $0x1800] sm:$0xff]
        %v1072 = vld [vmem:[%s243 + $0x1808] sm:$0xff]
        %v1073 = vld [vmem:[%s243 + $0x1810] sm:$0xff]
        %v1074 = vld [vmem:[%s243 + $0x1818] sm:$0xff]
        %v1075 = vld [vmem:[%s243 + $0x1820] sm:$0xff]
        %v1076 = vld [vmem:[%s243 + $0x1828] sm:$0xff]
        %v1077 = vld [vmem:[%s243 + $0x1830] sm:$0xff]
        %v1078 = vld [vmem:[%s243 + $0x1838] sm:$0xff]
        %v1079 = vld [vmem:[%s243 + $0x1840] sm:$0xff]
        %v1080 = vld [vmem:[%s243 + $0x1848] sm:$0xff]
        %v1081 = vld [vmem:[%s243 + $0x1850] sm:$0xff]
        %v1082 = vld [vmem:[%s243 + $0x1858] sm:$0xff]
        %v1083 = vld [vmem:[%s243 + $0x1860] sm:$0xff]
        %v1084 = vld [vmem:[%s243 + $0x1868] sm:$0xff]
        %v1085 = vld [vmem:[%s243 + $0x1870] sm:$0xff]
        %v1086 = vld [vmem:[%s243 + $0x1878] sm:$0xff]
        %v1087 = vld [vmem:[%s243 + $0x1880] sm:$0xff]
        %v1088 = vld [vmem:[%s243 + $0x1888] sm:$0xff]
        %v1089 = vld [vmem:[%s243 + $0x1890] sm:$0xff]
        %v1090 = vld [vmem:[%s243 + $0x1898] sm:$0xff]
        %v1091 = vld [vmem:[%s243 + $0x18a0] sm:$0xff]
        %v1092 = vld [vmem:[%s243 + $0x18a8] sm:$0xff]
        %v1093 = vld [vmem:[%s243 + $0x18b0] sm:$0xff]
        %v1094 = vld [vmem:[%s243 + $0x18b8] sm:$0xff]
        %v1095 = vld [vmem:[%s243 + $0x18c0] sm:$0xff]
        %v1096 = vld [vmem:[%s243 + $0x18c8] sm:$0xff]
        %v1097 = vld [vmem:[%s243 + $0x18d0] sm:$0xff]
        %v1098 = vld [vmem:[%s243 + $0x18d8] sm:$0xff]
        %v1099 = vld [vmem:[%s243 + $0x18e0] sm:$0xff]
        %v1100 = vld [vmem:[%s243 + $0x18e8] sm:$0xff]
        %v1101 = vld [vmem:[%s243 + $0x18f0] sm:$0xff]
        %v1102 = vld [vmem:[%s243 + $0x18f8] sm:$0xff]
        %v1103 = vld [vmem:[%s243 + $0x1900] sm:$0xff]
        %v1104 = vld [vmem:[%s243 + $0x1908] sm:$0xff]
        %v1105 = vld [vmem:[%s243 + $0x1910] sm:$0xff]
        %v1106 = vld [vmem:[%s243 + $0x1918] sm:$0xff]
        %v1107 = vld [vmem:[%s243 + $0x1920] sm:$0xff]
        %v1108 = vld [vmem:[%s243 + $0x1928] sm:$0xff]
        %v1109 = vld [vmem:[%s243 + $0x1930] sm:$0xff]
        %v1110 = vld [vmem:[%s243 + $0x1938] sm:$0xff]
        %v1111 = vld [vmem:[%s243 + $0x1940] sm:$0xff]
        %v1112 = vld [vmem:[%s243 + $0x1948] sm:$0xff]
        %v1113 = vld [vmem:[%s243 + $0x1950] sm:$0xff]
        %v1114 = vld [vmem:[%s243 + $0x1958] sm:$0xff]
        %v1115 = vld [vmem:[%s243 + $0x1960] sm:$0xff]
        %v1116 = vld [vmem:[%s243 + $0x1968] sm:$0xff]
        %v1117 = vld [vmem:[%s243 + $0x1970] sm:$0xff]
        %v1118 = vld [vmem:[%s243 + $0x1978] sm:$0xff]
        %v1119 = vld [vmem:[%s243 + $0x1980] sm:$0xff]
        %v1120 = vld [vmem:[%s243 + $0x1988] sm:$0xff]
        %v1121 = vld [vmem:[%s243 + $0x1990] sm:$0xff]
        %v1122 = vld [vmem:[%s243 + $0x1998] sm:$0xff]
        %v1123 = vld [vmem:[%s243 + $0x19a0] sm:$0xff]
        %v1124 = vld [vmem:[%s243 + $0x19a8] sm:$0xff]
        %v1125 = vld [vmem:[%s243 + $0x19b0] sm:$0xff]
        %v1126 = vld [vmem:[%s243 + $0x19b8] sm:$0xff]
        %v1127 = vld [vmem:[%s243 + $0x19c0] sm:$0xff]
        %v1128 = vld [vmem:[%s243 + $0x19c8] sm:$0xff]
        %v1129 = vld [vmem:[%s243 + $0x19d0] sm:$0xff]
        %v1130 = vld [vmem:[%s243 + $0x19d8] sm:$0xff]
        %v1131 = vld [vmem:[%s243 + $0x19e0] sm:$0xff]
        %v1132 = vld [vmem:[%s243 + $0x19e8] sm:$0xff]
        %v1133 = vld [vmem:[%s243 + $0x19f0] sm:$0xff]
        %v1134 = vld [vmem:[%s243 + $0x19f8] sm:$0xff]
        %v1135 = vld [vmem:[%s243 + $0x1a00] sm:$0xff]
        %v1136 = vld [vmem:[%s243 + $0x1a08] sm:$0xff]
        %v1137 = vld [vmem:[%s243 + $0x1a10] sm:$0xff]
        %v1138 = vld [vmem:[%s243 + $0x1a18] sm:$0xff]
        %v1139 = vld [vmem:[%s243 + $0x1a20] sm:$0xff]
        %v1140 = vld [vmem:[%s243 + $0x1a28] sm:$0xff]
        %v1141 = vld [vmem:[%s243 + $0x1a30] sm:$0xff]
        %v1142 = vld [vmem:[%s243 + $0x1a38] sm:$0xff]
        %v1143 = vld [vmem:[%s243 + $0x1a40] sm:$0xff]
        %v1144 = vld [vmem:[%s243 + $0x1a48] sm:$0xff]
        %v1145 = vld [vmem:[%s243 + $0x1a50] sm:$0xff]
        %v1146 = vld [vmem:[%s243 + $0x1a58] sm:$0xff]
        %v1147 = vld [vmem:[%s243 + $0x1a60] sm:$0xff]
        %v1148 = vld [vmem:[%s243 + $0x1a68] sm:$0xff]
        %v1149 = vld [vmem:[%s243 + $0x1a70] sm:$0xff]
        %v1150 = vld [vmem:[%s243 + $0x1a78] sm:$0xff]
        %v1151 = vld [vmem:[%s243 + $0x1a80] sm:$0xff]
        %v1152 = vld [vmem:[%s243 + $0x1a88] sm:$0xff]
        %v1153 = vld [vmem:[%s243 + $0x1a90] sm:$0xff]
        %v1154 = vld [vmem:[%s243 + $0x1a98] sm:$0xff]
        %v1155 = vld [vmem:[%s243 + $0x1aa0] sm:$0xff]
        %v1156 = vld [vmem:[%s243 + $0x1aa8] sm:$0xff]
        %v1157 = vld [vmem:[%s243 + $0x1ab0] sm:$0xff]
        %v1158 = vld [vmem:[%s243 + $0x1ab8] sm:$0xff]
        %v1159 = vld [vmem:[%s243 + $0x1ac0] sm:$0xff]
        %v1160 = vld [vmem:[%s243 + $0x1ac8] sm:$0xff]
        %v1161 = vld [vmem:[%s243 + $0x1ad0] sm:$0xff]
        %v1162 = vld [vmem:[%s243 + $0x1ad8] sm:$0xff]
        %v1163 = vld [vmem:[%s243 + $0x1ae0] sm:$0xff]
        %v1164 = vld [vmem:[%s243 + $0x1ae8] sm:$0xff]
        %v1165 = vld [vmem:[%s243 + $0x1af0] sm:$0xff]
        %v1166 = vld [vmem:[%s243 + $0x1af8] sm:$0xff]
        %v1167 = vld [vmem:[%s243 + $0x1b00] sm:$0xff]
        %v1168 = vld [vmem:[%s243 + $0x1b08] sm:$0xff]
        %v1169 = vld [vmem:[%s243 + $0x1b10] sm:$0xff]
        %v1170 = vld [vmem:[%s243 + $0x1b18] sm:$0xff]
        %v1171 = vld [vmem:[%s243 + $0x1b20] sm:$0xff]
        %v1172 = vld [vmem:[%s243 + $0x1b28] sm:$0xff]
        %v1173 = vld [vmem:[%s243 + $0x1b30] sm:$0xff]
        %v1174 = vld [vmem:[%s243 + $0x1b38] sm:$0xff]
        %v1175 = vld [vmem:[%s243 + $0x1b40] sm:$0xff]
        %v1176 = vld [vmem:[%s243 + $0x1b48] sm:$0xff]
        %v1177 = vld [vmem:[%s243 + $0x1b50] sm:$0xff]
        %v1178 = vld [vmem:[%s243 + $0x1b58] sm:$0xff]
        %v1179 = vld [vmem:[%s243 + $0x1b60] sm:$0xff]
        %v1180 = vld [vmem:[%s243 + $0x1b68] sm:$0xff]
        %v1181 = vld [vmem:[%s243 + $0x1b70] sm:$0xff]
        %v1182 = vld [vmem:[%s243 + $0x1b78] sm:$0xff]
        %v1183 = vld [vmem:[%s243 + $0x1b80] sm:$0xff]
        %v1184 = vld [vmem:[%s243 + $0x1b88] sm:$0xff]
        %v1185 = vld [vmem:[%s243 + $0x1b90] sm:$0xff]
        %v1186 = vld [vmem:[%s243 + $0x1b98] sm:$0xff]
        %v1187 = vld [vmem:[%s243 + $0x1ba0] sm:$0xff]
        %v1188 = vld [vmem:[%s243 + $0x1ba8] sm:$0xff]
        %v1189 = vld [vmem:[%s243 + $0x1bb0] sm:$0xff]
        %v1190 = vld [vmem:[%s243 + $0x1bb8] sm:$0xff]
        %v1191 = vld [vmem:[%s243 + $0x1bc0] sm:$0xff]
        %v1192 = vld [vmem:[%s243 + $0x1bc8] sm:$0xff]
        %v1193 = vld [vmem:[%s243 + $0x1bd0] sm:$0xff]
        %v1194 = vld [vmem:[%s243 + $0x1bd8] sm:$0xff]
        %v1195 = vld [vmem:[%s243 + $0x1be0] sm:$0xff]
        %v1196 = vld [vmem:[%s243 + $0x1be8] sm:$0xff]
        %v1197 = vld [vmem:[%s243 + $0x1bf0] sm:$0xff]
        %v1198 = vld [vmem:[%s243 + $0x1bf8] sm:$0xff]
        %v1199 = vld [vmem:[%s243 + $0x1c00] sm:$0xff]
        %v1200 = vld [vmem:[%s243 + $0x1c08] sm:$0xff]
        %v1201 = vld [vmem:[%s243 + $0x1c10] sm:$0xff]
        %v1202 = vld [vmem:[%s243 + $0x1c18] sm:$0xff]
        %v1203 = vld [vmem:[%s243 + $0x1c20] sm:$0xff]
        %v1204 = vld [vmem:[%s243 + $0x1c28] sm:$0xff]
        %v1205 = vld [vmem:[%s243 + $0x1c30] sm:$0xff]
        %v1206 = vld [vmem:[%s243 + $0x1c38] sm:$0xff]
        %v1207 = vld [vmem:[%s243 + $0x1c40] sm:$0xff]
        %v1208 = vld [vmem:[%s243 + $0x1c48] sm:$0xff]
        %v1209 = vld [vmem:[%s243 + $0x1c50] sm:$0xff]
        %v1210 = vld [vmem:[%s243 + $0x1c58] sm:$0xff]
        %v1211 = vld [vmem:[%s243 + $0x1c60] sm:$0xff]
        %v1212 = vld [vmem:[%s243 + $0x1c68] sm:$0xff]
        %v1213 = vld [vmem:[%s243 + $0x1c70] sm:$0xff]
        %v1214 = vld [vmem:[%s243 + $0x1c78] sm:$0xff]
        %v1215 = vld [vmem:[%s243 + $0x1c80] sm:$0xff]
        %v1216 = vld [vmem:[%s243 + $0x1c88] sm:$0xff]
        %v1217 = vld [vmem:[%s243 + $0x1c90] sm:$0xff]
        %v1218 = vld [vmem:[%s243 + $0x1c98] sm:$0xff]
        %v1219 = vld [vmem:[%s243 + $0x1ca0] sm:$0xff]
        %v1220 = vld [vmem:[%s243 + $0x1ca8] sm:$0xff]
        %v1221 = vld [vmem:[%s243 + $0x1cb0] sm:$0xff]
        %v1222 = vld [vmem:[%s243 + $0x1cb8] sm:$0xff]
        %v1223 = vld [vmem:[%s243 + $0x1cc0] sm:$0xff]
        %v1224 = vld [vmem:[%s243 + $0x1cc8] sm:$0xff]
        %v1225 = vld [vmem:[%s243 + $0x1cd0] sm:$0xff]
        %v1226 = vld [vmem:[%s243 + $0x1cd8] sm:$0xff]
        %v1227 = vld [vmem:[%s243 + $0x1ce0] sm:$0xff]
        %v1228 = vld [vmem:[%s243 + $0x1ce8] sm:$0xff]
        %v1229 = vld [vmem:[%s243 + $0x1cf0] sm:$0xff]
        %v1230 = vld [vmem:[%s243 + $0x1cf8] sm:$0xff]
        %v1231 = vld [vmem:[%s243 + $0x1d00] sm:$0xff]
        %v1232 = vld [vmem:[%s243 + $0x1d08] sm:$0xff]
        %v1233 = vld [vmem:[%s243 + $0x1d10] sm:$0xff]
        %v1234 = vld [vmem:[%s243 + $0x1d18] sm:$0xff]
        %v1235 = vld [vmem:[%s243 + $0x1d20] sm:$0xff]
        %v1236 = vld [vmem:[%s243 + $0x1d28] sm:$0xff]
        %v1237 = vld [vmem:[%s243 + $0x1d30] sm:$0xff]
        %v1238 = vld [vmem:[%s243 + $0x1d38] sm:$0xff]
        %v1239 = vld [vmem:[%s243 + $0x1d40] sm:$0xff]
        %v1240 = vld [vmem:[%s243 + $0x1d48] sm:$0xff]
        %v1241 = vld [vmem:[%s243 + $0x1d50] sm:$0xff]
        %v1242 = vld [vmem:[%s243 + $0x1d58] sm:$0xff]
        %v1243 = vld [vmem:[%s243 + $0x1d60] sm:$0xff]
        %v1244 = vld [vmem:[%s243 + $0x1d68] sm:$0xff]
        %v1245 = vld [vmem:[%s243 + $0x1d70] sm:$0xff]
        %v1246 = vld [vmem:[%s243 + $0x1d78] sm:$0xff]
        %v1247 = vld [vmem:[%s243 + $0x1d80] sm:$0xff]
        %v1248 = vld [vmem:[%s243 + $0x1d88] sm:$0xff]
        %v1249 = vld [vmem:[%s243 + $0x1d90] sm:$0xff]
        %v1250 = vld [vmem:[%s243 + $0x1d98] sm:$0xff]
        %v1251 = vld [vmem:[%s243 + $0x1da0] sm:$0xff]
        %v1252 = vld [vmem:[%s243 + $0x1da8] sm:$0xff]
        %v1253 = vld [vmem:[%s243 + $0x1db0] sm:$0xff]
        %v1254 = vld [vmem:[%s243 + $0x1db8] sm:$0xff]
        %v1255 = vld [vmem:[%s243 + $0x1dc0] sm:$0xff]
        %v1256 = vld [vmem:[%s243 + $0x1dc8] sm:$0xff]
        %v1257 = vld [vmem:[%s243 + $0x1dd0] sm:$0xff]
        %v1258 = vld [vmem:[%s243 + $0x1dd8] sm:$0xff]
        %v1259 = vld [vmem:[%s243 + $0x1de0] sm:$0xff]
        %v1260 = vld [vmem:[%s243 + $0x1de8] sm:$0xff]
        %v1261 = vld [vmem:[%s243 + $0x1df0] sm:$0xff]
        %v1262 = vld [vmem:[%s243 + $0x1df8] sm:$0xff]
        %v1263 = vld [vmem:[%s243 + $0x1e00] sm:$0xff]
        %v1264 = vld [vmem:[%s243 + $0x1e08] sm:$0xff]
        %v1265 = vld [vmem:[%s243 + $0x1e10] sm:$0xff]
        %v1266 = vld [vmem:[%s243 + $0x1e18] sm:$0xff]
        %v1267 = vld [vmem:[%s243 + $0x1e20] sm:$0xff]
        %v1268 = vld [vmem:[%s243 + $0x1e28] sm:$0xff]
        %v1269 = vld [vmem:[%s243 + $0x1e30] sm:$0xff]
        %v1270 = vld [vmem:[%s243 + $0x1e38] sm:$0xff]
        %v1271 = vld [vmem:[%s243 + $0x1e40] sm:$0xff]
        %v1272 = vld [vmem:[%s243 + $0x1e48] sm:$0xff]
        %v1273 = vld [vmem:[%s243 + $0x1e50] sm:$0xff]
        %v1274 = vld [vmem:[%s243 + $0x1e58] sm:$0xff]
        %v1275 = vld [vmem:[%s243 + $0x1e60] sm:$0xff]
        %v1276 = vld [vmem:[%s243 + $0x1e68] sm:$0xff]
        %v1277 = vld [vmem:[%s243 + $0x1e70] sm:$0xff]
        %v1278 = vld [vmem:[%s243 + $0x1e78] sm:$0xff]
        %v1279 = vld [vmem:[%s243 + $0x1e80] sm:$0xff]
        %v1280 = vld [vmem:[%s243 + $0x1e88] sm:$0xff]
        %v1281 = vld [vmem:[%s243 + $0x1e90] sm:$0xff]
        %v1282 = vld [vmem:[%s243 + $0x1e98] sm:$0xff]
        %v1283 = vld [vmem:[%s243 + $0x1ea0] sm:$0xff]
        %v1284 = vld [vmem:[%s243 + $0x1ea8] sm:$0xff]
        %v1285 = vld [vmem:[%s243 + $0x1eb0] sm:$0xff]
        %v1286 = vld [vmem:[%s243 + $0x1eb8] sm:$0xff]
        %v1287 = vld [vmem:[%s243 + $0x1ec0] sm:$0xff]
        %v1288 = vld [vmem:[%s243 + $0x1ec8] sm:$0xff]
        %v1289 = vld [vmem:[%s243 + $0x1ed0] sm:$0xff]
        %v1290 = vld [vmem:[%s243 + $0x1ed8] sm:$0xff]
        %v1291 = vld [vmem:[%s243 + $0x1ee0] sm:$0xff]
        %v1292 = vld [vmem:[%s243 + $0x1ee8] sm:$0xff]
        %v1293 = vld [vmem:[%s243 + $0x1ef0] sm:$0xff]
        %v1294 = vld [vmem:[%s243 + $0x1ef8] sm:$0xff]
        %v1295 = vld [vmem:[%s243 + $0x1f00] sm:$0xff]
        %v1296 = vld [vmem:[%s243 + $0x1f08] sm:$0xff]
        %v1297 = vld [vmem:[%s243 + $0x1f10] sm:$0xff]
        %v1298 = vld [vmem:[%s243 + $0x1f18] sm:$0xff]
        %v1299 = vld [vmem:[%s243 + $0x1f20] sm:$0xff]
        %v1300 = vld [vmem:[%s243 + $0x1f28] sm:$0xff]
        %v1301 = vld [vmem:[%s243 + $0x1f30] sm:$0xff]
        %v1302 = vld [vmem:[%s243 + $0x1f38] sm:$0xff]
        %v1303 = vld [vmem:[%s243 + $0x1f40] sm:$0xff]
        %v1304 = vld [vmem:[%s243 + $0x1f48] sm:$0xff]
        %v1305 = vld [vmem:[%s243 + $0x1f50] sm:$0xff]
        %v1306 = vld [vmem:[%s243 + $0x1f58] sm:$0xff]
        %v1307 = vld [vmem:[%s243 + $0x1f60] sm:$0xff]
        %v1308 = vld [vmem:[%s243 + $0x1f68] sm:$0xff]
        %v1309 = vld [vmem:[%s243 + $0x1f70] sm:$0xff]
        %v1310 = vld [vmem:[%s243 + $0x1f78] sm:$0xff]
        %v1311 = vld [vmem:[%s243 + $0x1f80] sm:$0xff]
        %v1312 = vld [vmem:[%s243 + $0x1f88] sm:$0xff]
        %v1313 = vld [vmem:[%s243 + $0x1f90] sm:$0xff]
        %v1314 = vld [vmem:[%s243 + $0x1f98] sm:$0xff]
        %v1315 = vld [vmem:[%s243 + $0x1fa0] sm:$0xff]
        %v1316 = vld [vmem:[%s243 + $0x1fa8] sm:$0xff]
        %v1317 = vld [vmem:[%s243 + $0x1fb0] sm:$0xff]
        %v1318 = vld [vmem:[%s243 + $0x1fb8] sm:$0xff]
        %v1319 = vld [vmem:[%s243 + $0x1fc0] sm:$0xff]
        %v1320 = vld [vmem:[%s243 + $0x1fc8] sm:$0xff]
        %v1321 = vld [vmem:[%s243 + $0x1fd0] sm:$0xff]
        %v1322 = vld [vmem:[%s243 + $0x1fd8] sm:$0xff]
        %v1323 = vld [vmem:[%s243 + $0x1fe0] sm:$0xff]
        %v1324 = vld [vmem:[%s243 + $0x1fe8] sm:$0xff]
        %v1325 = vld [vmem:[%s243 + $0x1ff0] sm:$0xff]
        %v1326 = vld [vmem:[%s243 + $0x1ff8] sm:$0xff]
        %v1343 = vunpack.c.l.b16 %v287
        %v1344 = vunpack.c.h.b16 %v287
        %v1345 = vunpack.c.l.b16 %v288
        %v1346 = vunpack.c.h.b16 %v288
        %v1347 = vunpack.c.l.b16 %v289
        %v1348 = vunpack.c.h.b16 %v289
        %v1349 = vunpack.c.l.b16 %v290
        %v1350 = vunpack.c.h.b16 %v290
        %v1351 = vunpack.c.l.b16 %v291
        %v1352 = vunpack.c.h.b16 %v291
        %v1353 = vunpack.c.l.b16 %v292
        %v1354 = vunpack.c.h.b16 %v292
        %v1355 = vunpack.c.l.b16 %v293
        %v1356 = vunpack.c.h.b16 %v293
        %v1357 = vunpack.c.l.b16 %v294
        %v1358 = vunpack.c.h.b16 %v294
        %v1359 = vunpack.c.l.b16 %v295
        %v1360 = vunpack.c.h.b16 %v295
        %v1361 = vunpack.c.l.b16 %v296
        %v1362 = vunpack.c.h.b16 %v296
        %v1363 = vunpack.c.l.b16 %v297
        %v1364 = vunpack.c.h.b16 %v297
        %v1365 = vunpack.c.l.b16 %v298
        %v1366 = vunpack.c.h.b16 %v298
        %v1367 = vunpack.c.l.b16 %v299
        %v1368 = vunpack.c.h.b16 %v299
        %v1369 = vunpack.c.l.b16 %v300
        %v1370 = vunpack.c.h.b16 %v300
        %v1371 = vunpack.c.l.b16 %v301
        %v1372 = vunpack.c.h.b16 %v301
        %v1373 = vunpack.c.l.b16 %v302
        %v1374 = vunpack.c.h.b16 %v302
        %v1375 = vpack.c.b16 %v1343, %v1343
        %v1376 = vpack.c.b16 %v1344, %v1344
        %v1377 = vpack.c.b16 %v1345, %v1345
        %v1378 = vpack.c.b16 %v1346, %v1346
        %v1379 = vpack.c.b16 %v1347, %v1347
        %v1380 = vpack.c.b16 %v1348, %v1348
        %v1381 = vpack.c.b16 %v1349, %v1349
        %v1382 = vpack.c.b16 %v1350, %v1350
        %v1383 = vpack.c.b16 %v1351, %v1351
        %v1384 = vpack.c.b16 %v1352, %v1352
        %v1385 = vpack.c.b16 %v1353, %v1353
        %v1386 = vpack.c.b16 %v1354, %v1354
        %v1387 = vpack.c.b16 %v1355, %v1355
        %v1388 = vpack.c.b16 %v1356, %v1356
        %v1389 = vpack.c.b16 %v1357, %v1357
        %v1390 = vpack.c.b16 %v1358, %v1358
        %v1391 = vpack.c.b16 %v1359, %v1359
        %v1392 = vpack.c.b16 %v1360, %v1360
        %v1393 = vpack.c.b16 %v1361, %v1361
        %v1394 = vpack.c.b16 %v1362, %v1362
        %v1395 = vpack.c.b16 %v1363, %v1363
        %v1396 = vpack.c.b16 %v1364, %v1364
        %v1397 = vpack.c.b16 %v1365, %v1365
        %v1398 = vpack.c.b16 %v1366, %v1366
        %v1399 = vpack.c.b16 %v1367, %v1367
        %v1400 = vpack.c.b16 %v1368, %v1368
        %v1401 = vpack.c.b16 %v1369, %v1369
        %v1402 = vpack.c.b16 %v1370, %v1370
        %v1403 = vpack.c.b16 %v1371, %v1371
        %v1404 = vpack.c.b16 %v1372, %v1372
        %v1405 = vpack.c.b16 %v1373, %v1373
        %v1406 = vpack.c.b16 %v1374, %v1374
        %v2463 = vunpack.c.l.b16 %v303
        %v2464 = vunpack.c.h.b16 %v303
        %v2465 = vunpack.c.l.b16 %v304
        %v2466 = vunpack.c.h.b16 %v304
        %v2467 = vunpack.c.l.b16 %v305
        %v2468 = vunpack.c.h.b16 %v305
        %v2469 = vunpack.c.l.b16 %v306
        %v2470 = vunpack.c.h.b16 %v306
        %v2471 = vunpack.c.l.b16 %v307
        %v2472 = vunpack.c.h.b16 %v307
        %v2473 = vunpack.c.l.b16 %v308
        %v2474 = vunpack.c.h.b16 %v308
        %v2475 = vunpack.c.l.b16 %v309
        %v2476 = vunpack.c.h.b16 %v309
        %v2477 = vunpack.c.l.b16 %v310
        %v2478 = vunpack.c.h.b16 %v310
        %v2479 = vunpack.c.l.b16 %v311
        %v2480 = vunpack.c.h.b16 %v311
        %v2481 = vunpack.c.l.b16 %v312
        %v2482 = vunpack.c.h.b16 %v312
        %v2483 = vunpack.c.l.b16 %v313
        %v2484 = vunpack.c.h.b16 %v313
        %v2485 = vunpack.c.l.b16 %v314
        %v2486 = vunpack.c.h.b16 %v314
        %v2487 = vunpack.c.l.b16 %v315
        %v2488 = vunpack.c.h.b16 %v315
        %v2489 = vunpack.c.l.b16 %v316
        %v2490 = vunpack.c.h.b16 %v316
        %v2491 = vunpack.c.l.b16 %v317
        %v2492 = vunpack.c.h.b16 %v317
        %v2493 = vunpack.c.l.b16 %v318
        %v2494 = vunpack.c.h.b16 %v318
        %v2495 = vunpack.c.l.b16 %v319
        %v2496 = vunpack.c.h.b16 %v319
        %v2497 = vunpack.c.l.b16 %v320
        %v2498 = vunpack.c.h.b16 %v320
        %v2499 = vunpack.c.l.b16 %v321
        %v2500 = vunpack.c.h.b16 %v321
        %v2501 = vunpack.c.l.b16 %v322
        %v2502 = vunpack.c.h.b16 %v322
        %v2503 = vunpack.c.l.b16 %v323
        %v2504 = vunpack.c.h.b16 %v323
        %v2505 = vunpack.c.l.b16 %v324
        %v2506 = vunpack.c.h.b16 %v324
        %v2507 = vunpack.c.l.b16 %v325
        %v2508 = vunpack.c.h.b16 %v325
        %v2509 = vunpack.c.l.b16 %v326
        %v2510 = vunpack.c.h.b16 %v326
        %v2511 = vunpack.c.l.b16 %v327
        %v2512 = vunpack.c.h.b16 %v327
        %v2513 = vunpack.c.l.b16 %v328
        %v2514 = vunpack.c.h.b16 %v328
        %v2515 = vunpack.c.l.b16 %v329
        %v2516 = vunpack.c.h.b16 %v329
        %v2517 = vunpack.c.l.b16 %v330
        %v2518 = vunpack.c.h.b16 %v330
        %v2519 = vunpack.c.l.b16 %v331
        %v2520 = vunpack.c.h.b16 %v331
        %v2521 = vunpack.c.l.b16 %v332
        %v2522 = vunpack.c.h.b16 %v332
        %v2523 = vunpack.c.l.b16 %v333
        %v2524 = vunpack.c.h.b16 %v333
        %v2525 = vunpack.c.l.b16 %v334
        %v2526 = vunpack.c.h.b16 %v334
        %v2527 = vunpack.c.l.b16 %v335
        %v2528 = vunpack.c.h.b16 %v335
        %v2529 = vunpack.c.l.b16 %v336
        %v2530 = vunpack.c.h.b16 %v336
        %v2531 = vunpack.c.l.b16 %v337
        %v2532 = vunpack.c.h.b16 %v337
        %v2533 = vunpack.c.l.b16 %v338
        %v2534 = vunpack.c.h.b16 %v338
        %v2535 = vunpack.c.l.b16 %v339
        %v2536 = vunpack.c.h.b16 %v339
        %v2537 = vunpack.c.l.b16 %v340
        %v2538 = vunpack.c.h.b16 %v340
        %v2539 = vunpack.c.l.b16 %v341
        %v2540 = vunpack.c.h.b16 %v341
        %v2541 = vunpack.c.l.b16 %v342
        %v2542 = vunpack.c.h.b16 %v342
        %v2543 = vunpack.c.l.b16 %v343
        %v2544 = vunpack.c.h.b16 %v343
        %v2545 = vunpack.c.l.b16 %v344
        %v2546 = vunpack.c.h.b16 %v344
        %v2547 = vunpack.c.l.b16 %v345
        %v2548 = vunpack.c.h.b16 %v345
        %v2549 = vunpack.c.l.b16 %v346
        %v2550 = vunpack.c.h.b16 %v346
        %v2551 = vunpack.c.l.b16 %v347
        %v2552 = vunpack.c.h.b16 %v347
        %v2553 = vunpack.c.l.b16 %v348
        %v2554 = vunpack.c.h.b16 %v348
        %v2555 = vunpack.c.l.b16 %v349
        %v2556 = vunpack.c.h.b16 %v349
        %v2557 = vunpack.c.l.b16 %v350
        %v2558 = vunpack.c.h.b16 %v350
        %v2559 = vunpack.c.l.b16 %v351
        %v2560 = vunpack.c.h.b16 %v351
        %v2561 = vunpack.c.l.b16 %v352
        %v2562 = vunpack.c.h.b16 %v352
        %v2563 = vunpack.c.l.b16 %v353
        %v2564 = vunpack.c.h.b16 %v353
        %v2565 = vunpack.c.l.b16 %v354
        %v2566 = vunpack.c.h.b16 %v354
        %v2567 = vunpack.c.l.b16 %v355
        %v2568 = vunpack.c.h.b16 %v355
        %v2569 = vunpack.c.l.b16 %v356
        %v2570 = vunpack.c.h.b16 %v356
        %v2571 = vunpack.c.l.b16 %v357
        %v2572 = vunpack.c.h.b16 %v357
        %v2573 = vunpack.c.l.b16 %v358
        %v2574 = vunpack.c.h.b16 %v358
        %v2575 = vunpack.c.l.b16 %v359
        %v2576 = vunpack.c.h.b16 %v359
        %v2577 = vunpack.c.l.b16 %v360
        %v2578 = vunpack.c.h.b16 %v360
        %v2579 = vunpack.c.l.b16 %v361
        %v2580 = vunpack.c.h.b16 %v361
        %v2581 = vunpack.c.l.b16 %v362
        %v2582 = vunpack.c.h.b16 %v362
        %v2583 = vunpack.c.l.b16 %v363
        %v2584 = vunpack.c.h.b16 %v363
        %v2585 = vunpack.c.l.b16 %v364
        %v2586 = vunpack.c.h.b16 %v364
        %v2587 = vunpack.c.l.b16 %v365
        %v2588 = vunpack.c.h.b16 %v365
        %v2589 = vunpack.c.l.b16 %v366
        %v2590 = vunpack.c.h.b16 %v366
        %v2591 = vunpack.c.l.b16 %v367
        %v2592 = vunpack.c.h.b16 %v367
        %v2593 = vunpack.c.l.b16 %v368
        %v2594 = vunpack.c.h.b16 %v368
        %v2595 = vunpack.c.l.b16 %v369
        %v2596 = vunpack.c.h.b16 %v369
        %v2597 = vunpack.c.l.b16 %v370
        %v2598 = vunpack.c.h.b16 %v370
        %v2599 = vunpack.c.l.b16 %v371
        %v2600 = vunpack.c.h.b16 %v371
        %v2601 = vunpack.c.l.b16 %v372
        %v2602 = vunpack.c.h.b16 %v372
        %v2603 = vunpack.c.l.b16 %v373
        %v2604 = vunpack.c.h.b16 %v373
        %v2605 = vunpack.c.l.b16 %v374
        %v2606 = vunpack.c.h.b16 %v374
        %v2607 = vunpack.c.l.b16 %v375
        %v2608 = vunpack.c.h.b16 %v375
        %v2609 = vunpack.c.l.b16 %v376
        %v2610 = vunpack.c.h.b16 %v376
        %v2611 = vunpack.c.l.b16 %v377
        %v2612 = vunpack.c.h.b16 %v377
        %v2613 = vunpack.c.l.b16 %v378
        %v2614 = vunpack.c.h.b16 %v378
        %v2615 = vunpack.c.l.b16 %v379
        %v2616 = vunpack.c.h.b16 %v379
        %v2617 = vunpack.c.l.b16 %v380
        %v2618 = vunpack.c.h.b16 %v380
        %v2619 = vunpack.c.l.b16 %v381
        %v2620 = vunpack.c.h.b16 %v381
        %v2621 = vunpack.c.l.b16 %v382
        %v2622 = vunpack.c.h.b16 %v382
        %v2623 = vunpack.c.l.b16 %v383
        %v2624 = vunpack.c.h.b16 %v383
        %v2625 = vunpack.c.l.b16 %v384
        %v2626 = vunpack.c.h.b16 %v384
        %v2627 = vunpack.c.l.b16 %v385
        %v2628 = vunpack.c.h.b16 %v385
        %v2629 = vunpack.c.l.b16 %v386
        %v2630 = vunpack.c.h.b16 %v386
        %v2631 = vunpack.c.l.b16 %v387
        %v2632 = vunpack.c.h.b16 %v387
        %v2633 = vunpack.c.l.b16 %v388
        %v2634 = vunpack.c.h.b16 %v388
        %v2635 = vunpack.c.l.b16 %v389
        %v2636 = vunpack.c.h.b16 %v389
        %v2637 = vunpack.c.l.b16 %v390
        %v2638 = vunpack.c.h.b16 %v390
        %v2639 = vunpack.c.l.b16 %v391
        %v2640 = vunpack.c.h.b16 %v391
        %v2641 = vunpack.c.l.b16 %v392
        %v2642 = vunpack.c.h.b16 %v392
        %v2643 = vunpack.c.l.b16 %v393
        %v2644 = vunpack.c.h.b16 %v393
        %v2645 = vunpack.c.l.b16 %v394
        %v2646 = vunpack.c.h.b16 %v394
        %v2647 = vunpack.c.l.b16 %v395
        %v2648 = vunpack.c.h.b16 %v395
        %v2649 = vunpack.c.l.b16 %v396
        %v2650 = vunpack.c.h.b16 %v396
        %v2651 = vunpack.c.l.b16 %v397
        %v2652 = vunpack.c.h.b16 %v397
        %v2653 = vunpack.c.l.b16 %v398
        %v2654 = vunpack.c.h.b16 %v398
        %v2655 = vunpack.c.l.b16 %v399
        %v2656 = vunpack.c.h.b16 %v399
        %v2657 = vunpack.c.l.b16 %v400
        %v2658 = vunpack.c.h.b16 %v400
        %v2659 = vunpack.c.l.b16 %v401
        %v2660 = vunpack.c.h.b16 %v401
        %v2661 = vunpack.c.l.b16 %v402
        %v2662 = vunpack.c.h.b16 %v402
        %v2663 = vunpack.c.l.b16 %v403
        %v2664 = vunpack.c.h.b16 %v403
        %v2665 = vunpack.c.l.b16 %v404
        %v2666 = vunpack.c.h.b16 %v404
        %v2667 = vunpack.c.l.b16 %v405
        %v2668 = vunpack.c.h.b16 %v405
        %v2669 = vunpack.c.l.b16 %v406
        %v2670 = vunpack.c.h.b16 %v406
        %v2671 = vunpack.c.l.b16 %v407
        %v2672 = vunpack.c.h.b16 %v407
        %v2673 = vunpack.c.l.b16 %v408
        %v2674 = vunpack.c.h.b16 %v408
        %v2675 = vunpack.c.l.b16 %v409
        %v2676 = vunpack.c.h.b16 %v409
        %v2677 = vunpack.c.l.b16 %v410
        %v2678 = vunpack.c.h.b16 %v410
        %v2679 = vunpack.c.l.b16 %v411
        %v2680 = vunpack.c.h.b16 %v411
        %v2681 = vunpack.c.l.b16 %v412
        %v2682 = vunpack.c.h.b16 %v412
        %v2683 = vunpack.c.l.b16 %v413
        %v2684 = vunpack.c.h.b16 %v413
        %v2685 = vunpack.c.l.b16 %v414
        %v2686 = vunpack.c.h.b16 %v414
        %v2687 = vunpack.c.l.b16 %v415
        %v2688 = vunpack.c.h.b16 %v415
        %v2689 = vunpack.c.l.b16 %v416
        %v2690 = vunpack.c.h.b16 %v416
        %v2691 = vunpack.c.l.b16 %v417
        %v2692 = vunpack.c.h.b16 %v417
        %v2693 = vunpack.c.l.b16 %v418
        %v2694 = vunpack.c.h.b16 %v418
        %v2695 = vunpack.c.l.b16 %v419
        %v2696 = vunpack.c.h.b16 %v419
        %v2697 = vunpack.c.l.b16 %v420
        %v2698 = vunpack.c.h.b16 %v420
        %v2699 = vunpack.c.l.b16 %v421
        %v2700 = vunpack.c.h.b16 %v421
        %v2701 = vunpack.c.l.b16 %v422
        %v2702 = vunpack.c.h.b16 %v422
        %v2703 = vunpack.c.l.b16 %v423
        %v2704 = vunpack.c.h.b16 %v423
        %v2705 = vunpack.c.l.b16 %v424
        %v2706 = vunpack.c.h.b16 %v424
        %v2707 = vunpack.c.l.b16 %v425
        %v2708 = vunpack.c.h.b16 %v425
        %v2709 = vunpack.c.l.b16 %v426
        %v2710 = vunpack.c.h.b16 %v426
        %v2711 = vunpack.c.l.b16 %v427
        %v2712 = vunpack.c.h.b16 %v427
        %v2713 = vunpack.c.l.b16 %v428
        %v2714 = vunpack.c.h.b16 %v428
        %v2715 = vunpack.c.l.b16 %v429
        %v2716 = vunpack.c.h.b16 %v429
        %v2717 = vunpack.c.l.b16 %v430
        %v2718 = vunpack.c.h.b16 %v430
        %v2719 = vunpack.c.l.b16 %v431
        %v2720 = vunpack.c.h.b16 %v431
        %v2721 = vunpack.c.l.b16 %v432
        %v2722 = vunpack.c.h.b16 %v432
        %v2723 = vunpack.c.l.b16 %v433
        %v2724 = vunpack.c.h.b16 %v433
        %v2725 = vunpack.c.l.b16 %v434
        %v2726 = vunpack.c.h.b16 %v434
        %v2727 = vunpack.c.l.b16 %v435
        %v2728 = vunpack.c.h.b16 %v435
        %v2729 = vunpack.c.l.b16 %v436
        %v2730 = vunpack.c.h.b16 %v436
        %v2731 = vunpack.c.l.b16 %v437
        %v2732 = vunpack.c.h.b16 %v437
        %v2733 = vunpack.c.l.b16 %v438
        %v2734 = vunpack.c.h.b16 %v438
        %v2735 = vunpack.c.l.b16 %v439
        %v2736 = vunpack.c.h.b16 %v439
        %v2737 = vunpack.c.l.b16 %v440
        %v2738 = vunpack.c.h.b16 %v440
        %v2739 = vunpack.c.l.b16 %v441
        %v2740 = vunpack.c.h.b16 %v441
        %v2741 = vunpack.c.l.b16 %v442
        %v2742 = vunpack.c.h.b16 %v442
        %v2743 = vunpack.c.l.b16 %v443
        %v2744 = vunpack.c.h.b16 %v443
        %v2745 = vunpack.c.l.b16 %v444
        %v2746 = vunpack.c.h.b16 %v444
        %v2747 = vunpack.c.l.b16 %v445
        %v2748 = vunpack.c.h.b16 %v445
        %v2749 = vunpack.c.l.b16 %v446
        %v2750 = vunpack.c.h.b16 %v446
        %v2751 = vunpack.c.l.b16 %v447
        %v2752 = vunpack.c.h.b16 %v447
        %v2753 = vunpack.c.l.b16 %v448
        %v2754 = vunpack.c.h.b16 %v448
        %v2755 = vunpack.c.l.b16 %v449
        %v2756 = vunpack.c.h.b16 %v449
        %v2757 = vunpack.c.l.b16 %v450
        %v2758 = vunpack.c.h.b16 %v450
        %v2759 = vunpack.c.l.b16 %v451
        %v2760 = vunpack.c.h.b16 %v451
        %v2761 = vunpack.c.l.b16 %v452
        %v2762 = vunpack.c.h.b16 %v452
        %v2763 = vunpack.c.l.b16 %v453
        %v2764 = vunpack.c.h.b16 %v453
        %v2765 = vunpack.c.l.b16 %v454
        %v2766 = vunpack.c.h.b16 %v454
        %v2767 = vunpack.c.l.b16 %v455
        %v2768 = vunpack.c.h.b16 %v455
        %v2769 = vunpack.c.l.b16 %v456
        %v2770 = vunpack.c.h.b16 %v456
        %v2771 = vunpack.c.l.b16 %v457
        %v2772 = vunpack.c.h.b16 %v457
        %v2773 = vunpack.c.l.b16 %v458
        %v2774 = vunpack.c.h.b16 %v458
        %v2775 = vunpack.c.l.b16 %v459
        %v2776 = vunpack.c.h.b16 %v459
        %v2777 = vunpack.c.l.b16 %v460
        %v2778 = vunpack.c.h.b16 %v460
        %v2779 = vunpack.c.l.b16 %v461
        %v2780 = vunpack.c.h.b16 %v461
        %v2781 = vunpack.c.l.b16 %v462
        %v2782 = vunpack.c.h.b16 %v462
        %v2783 = vunpack.c.l.b16 %v463
        %v2784 = vunpack.c.h.b16 %v463
        %v2785 = vunpack.c.l.b16 %v464
        %v2786 = vunpack.c.h.b16 %v464
        %v2787 = vunpack.c.l.b16 %v465
        %v2788 = vunpack.c.h.b16 %v465
        %v2789 = vunpack.c.l.b16 %v466
        %v2790 = vunpack.c.h.b16 %v466
        %v2791 = vunpack.c.l.b16 %v467
        %v2792 = vunpack.c.h.b16 %v467
        %v2793 = vunpack.c.l.b16 %v468
        %v2794 = vunpack.c.h.b16 %v468
        %v2795 = vunpack.c.l.b16 %v469
        %v2796 = vunpack.c.h.b16 %v469
        %v2797 = vunpack.c.l.b16 %v470
        %v2798 = vunpack.c.h.b16 %v470
        %v2799 = vunpack.c.l.b16 %v471
        %v2800 = vunpack.c.h.b16 %v471
        %v2801 = vunpack.c.l.b16 %v472
        %v2802 = vunpack.c.h.b16 %v472
        %v2803 = vunpack.c.l.b16 %v473
        %v2804 = vunpack.c.h.b16 %v473
        %v2805 = vunpack.c.l.b16 %v474
        %v2806 = vunpack.c.h.b16 %v474
        %v2807 = vunpack.c.l.b16 %v475
        %v2808 = vunpack.c.h.b16 %v475
        %v2809 = vunpack.c.l.b16 %v476
        %v2810 = vunpack.c.h.b16 %v476
        %v2811 = vunpack.c.l.b16 %v477
        %v2812 = vunpack.c.h.b16 %v477
        %v2813 = vunpack.c.l.b16 %v478
        %v2814 = vunpack.c.h.b16 %v478
        %v2815 = vunpack.c.l.b16 %v479
        %v2816 = vunpack.c.h.b16 %v479
        %v2817 = vunpack.c.l.b16 %v480
        %v2818 = vunpack.c.h.b16 %v480
        %v2819 = vunpack.c.l.b16 %v481
        %v2820 = vunpack.c.h.b16 %v481
        %v2821 = vunpack.c.l.b16 %v482
        %v2822 = vunpack.c.h.b16 %v482
        %v2823 = vunpack.c.l.b16 %v483
        %v2824 = vunpack.c.h.b16 %v483
        %v2825 = vunpack.c.l.b16 %v484
        %v2826 = vunpack.c.h.b16 %v484
        %v2827 = vunpack.c.l.b16 %v485
        %v2828 = vunpack.c.h.b16 %v485
        %v2829 = vunpack.c.l.b16 %v486
        %v2830 = vunpack.c.h.b16 %v486
        %v2831 = vunpack.c.l.b16 %v487
        %v2832 = vunpack.c.h.b16 %v487
        %v2833 = vunpack.c.l.b16 %v488
        %v2834 = vunpack.c.h.b16 %v488
        %v2835 = vunpack.c.l.b16 %v489
        %v2836 = vunpack.c.h.b16 %v489
        %v2837 = vunpack.c.l.b16 %v490
        %v2838 = vunpack.c.h.b16 %v490
        %v2839 = vunpack.c.l.b16 %v491
        %v2840 = vunpack.c.h.b16 %v491
        %v2841 = vunpack.c.l.b16 %v492
        %v2842 = vunpack.c.h.b16 %v492
        %v2843 = vunpack.c.l.b16 %v493
        %v2844 = vunpack.c.h.b16 %v493
        %v2845 = vunpack.c.l.b16 %v494
        %v2846 = vunpack.c.h.b16 %v494
        %v2847 = vunpack.c.l.b16 %v495
        %v2848 = vunpack.c.h.b16 %v495
        %v2849 = vunpack.c.l.b16 %v496
        %v2850 = vunpack.c.h.b16 %v496
        %v2851 = vunpack.c.l.b16 %v497
        %v2852 = vunpack.c.h.b16 %v497
        %v2853 = vunpack.c.l.b16 %v498
        %v2854 = vunpack.c.h.b16 %v498
        %v2855 = vunpack.c.l.b16 %v499
        %v2856 = vunpack.c.h.b16 %v499
        %v2857 = vunpack.c.l.b16 %v500
        %v2858 = vunpack.c.h.b16 %v500
        %v2859 = vunpack.c.l.b16 %v501
        %v2860 = vunpack.c.h.b16 %v501
        %v2861 = vunpack.c.l.b16 %v502
        %v2862 = vunpack.c.h.b16 %v502
        %v2863 = vunpack.c.l.b16 %v503
        %v2864 = vunpack.c.h.b16 %v503
        %v2865 = vunpack.c.l.b16 %v504
        %v2866 = vunpack.c.h.b16 %v504
        %v2867 = vunpack.c.l.b16 %v505
        %v2868 = vunpack.c.h.b16 %v505
        %v2869 = vunpack.c.l.b16 %v506
        %v2870 = vunpack.c.h.b16 %v506
        %v2871 = vunpack.c.l.b16 %v507
        %v2872 = vunpack.c.h.b16 %v507
        %v2873 = vunpack.c.l.b16 %v508
        %v2874 = vunpack.c.h.b16 %v508
        %v2875 = vunpack.c.l.b16 %v509
        %v2876 = vunpack.c.h.b16 %v509
        %v2877 = vunpack.c.l.b16 %v510
        %v2878 = vunpack.c.h.b16 %v510
        %v2879 = vunpack.c.l.b16 %v511
        %v2880 = vunpack.c.h.b16 %v511
        %v2881 = vunpack.c.l.b16 %v512
        %v2882 = vunpack.c.h.b16 %v512
        %v2883 = vunpack.c.l.b16 %v513
        %v2884 = vunpack.c.h.b16 %v513
        %v2885 = vunpack.c.l.b16 %v514
        %v2886 = vunpack.c.h.b16 %v514
        %v2887 = vunpack.c.l.b16 %v515
        %v2888 = vunpack.c.h.b16 %v515
        %v2889 = vunpack.c.l.b16 %v516
        %v2890 = vunpack.c.h.b16 %v516
        %v2891 = vunpack.c.l.b16 %v517
        %v2892 = vunpack.c.h.b16 %v517
        %v2893 = vunpack.c.l.b16 %v518
        %v2894 = vunpack.c.h.b16 %v518
        %v2895 = vunpack.c.l.b16 %v519
        %v2896 = vunpack.c.h.b16 %v519
        %v2897 = vunpack.c.l.b16 %v520
        %v2898 = vunpack.c.h.b16 %v520
        %v2899 = vunpack.c.l.b16 %v521
        %v2900 = vunpack.c.h.b16 %v521
        %v2901 = vunpack.c.l.b16 %v522
        %v2902 = vunpack.c.h.b16 %v522
        %v2903 = vunpack.c.l.b16 %v523
        %v2904 = vunpack.c.h.b16 %v523
        %v2905 = vunpack.c.l.b16 %v524
        %v2906 = vunpack.c.h.b16 %v524
        %v2907 = vunpack.c.l.b16 %v525
        %v2908 = vunpack.c.h.b16 %v525
        %v2909 = vunpack.c.l.b16 %v526
        %v2910 = vunpack.c.h.b16 %v526
        %v2911 = vunpack.c.l.b16 %v527
        %v2912 = vunpack.c.h.b16 %v527
        %v2913 = vunpack.c.l.b16 %v528
        %v2914 = vunpack.c.h.b16 %v528
        %v2915 = vunpack.c.l.b16 %v529
        %v2916 = vunpack.c.h.b16 %v529
        %v2917 = vunpack.c.l.b16 %v530
        %v2918 = vunpack.c.h.b16 %v530
        %v2919 = vunpack.c.l.b16 %v531
        %v2920 = vunpack.c.h.b16 %v531
        %v2921 = vunpack.c.l.b16 %v532
        %v2922 = vunpack.c.h.b16 %v532
        %v2923 = vunpack.c.l.b16 %v533
        %v2924 = vunpack.c.h.b16 %v533
        %v2925 = vunpack.c.l.b16 %v534
        %v2926 = vunpack.c.h.b16 %v534
        %v2927 = vunpack.c.l.b16 %v535
        %v2928 = vunpack.c.h.b16 %v535
        %v2929 = vunpack.c.l.b16 %v536
        %v2930 = vunpack.c.h.b16 %v536
        %v2931 = vunpack.c.l.b16 %v537
        %v2932 = vunpack.c.h.b16 %v537
        %v2933 = vunpack.c.l.b16 %v538
        %v2934 = vunpack.c.h.b16 %v538
        %v2935 = vunpack.c.l.b16 %v539
        %v2936 = vunpack.c.h.b16 %v539
        %v2937 = vunpack.c.l.b16 %v540
        %v2938 = vunpack.c.h.b16 %v540
        %v2939 = vunpack.c.l.b16 %v541
        %v2940 = vunpack.c.h.b16 %v541
        %v2941 = vunpack.c.l.b16 %v542
        %v2942 = vunpack.c.h.b16 %v542
        %v2943 = vunpack.c.l.b16 %v543
        %v2944 = vunpack.c.h.b16 %v543
        %v2945 = vunpack.c.l.b16 %v544
        %v2946 = vunpack.c.h.b16 %v544
        %v2947 = vunpack.c.l.b16 %v545
        %v2948 = vunpack.c.h.b16 %v545
        %v2949 = vunpack.c.l.b16 %v546
        %v2950 = vunpack.c.h.b16 %v546
        %v2951 = vunpack.c.l.b16 %v547
        %v2952 = vunpack.c.h.b16 %v547
        %v2953 = vunpack.c.l.b16 %v548
        %v2954 = vunpack.c.h.b16 %v548
        %v2955 = vunpack.c.l.b16 %v549
        %v2956 = vunpack.c.h.b16 %v549
        %v2957 = vunpack.c.l.b16 %v550
        %v2958 = vunpack.c.h.b16 %v550
        %v2959 = vunpack.c.l.b16 %v551
        %v2960 = vunpack.c.h.b16 %v551
        %v2961 = vunpack.c.l.b16 %v552
        %v2962 = vunpack.c.h.b16 %v552
        %v2963 = vunpack.c.l.b16 %v553
        %v2964 = vunpack.c.h.b16 %v553
        %v2965 = vunpack.c.l.b16 %v554
        %v2966 = vunpack.c.h.b16 %v554
        %v2967 = vunpack.c.l.b16 %v555
        %v2968 = vunpack.c.h.b16 %v555
        %v2969 = vunpack.c.l.b16 %v556
        %v2970 = vunpack.c.h.b16 %v556
        %v2971 = vunpack.c.l.b16 %v557
        %v2972 = vunpack.c.h.b16 %v557
        %v2973 = vunpack.c.l.b16 %v558
        %v2974 = vunpack.c.h.b16 %v558
        %v2975 = vunpack.c.l.b16 %v559
        %v2976 = vunpack.c.h.b16 %v559
        %v2977 = vunpack.c.l.b16 %v560
        %v2978 = vunpack.c.h.b16 %v560
        %v2979 = vunpack.c.l.b16 %v561
        %v2980 = vunpack.c.h.b16 %v561
        %v2981 = vunpack.c.l.b16 %v562
        %v2982 = vunpack.c.h.b16 %v562
        %v2983 = vunpack.c.l.b16 %v563
        %v2984 = vunpack.c.h.b16 %v563
        %v2985 = vunpack.c.l.b16 %v564
        %v2986 = vunpack.c.h.b16 %v564
        %v2987 = vunpack.c.l.b16 %v565
        %v2988 = vunpack.c.h.b16 %v565
        %v2989 = vunpack.c.l.b16 %v566
        %v2990 = vunpack.c.h.b16 %v566
        %v2991 = vunpack.c.l.b16 %v567
        %v2992 = vunpack.c.h.b16 %v567
        %v2993 = vunpack.c.l.b16 %v568
        %v2994 = vunpack.c.h.b16 %v568
        %v2995 = vunpack.c.l.b16 %v569
        %v2996 = vunpack.c.h.b16 %v569
        %v2997 = vunpack.c.l.b16 %v570
        %v2998 = vunpack.c.h.b16 %v570
        %v2999 = vunpack.c.l.b16 %v571
        %v3000 = vunpack.c.h.b16 %v571
        %v3001 = vunpack.c.l.b16 %v572
        %v3002 = vunpack.c.h.b16 %v572
        %v3003 = vunpack.c.l.b16 %v573
        %v3004 = vunpack.c.h.b16 %v573
        %v3005 = vunpack.c.l.b16 %v574
        %v3006 = vunpack.c.h.b16 %v574
        %v3007 = vunpack.c.l.b16 %v575
        %v3008 = vunpack.c.h.b16 %v575
        %v3009 = vunpack.c.l.b16 %v576
        %v3010 = vunpack.c.h.b16 %v576
        %v3011 = vunpack.c.l.b16 %v577
        %v3012 = vunpack.c.h.b16 %v577
        %v3013 = vunpack.c.l.b16 %v578
        %v3014 = vunpack.c.h.b16 %v578
        %v3015 = vunpack.c.l.b16 %v579
        %v3016 = vunpack.c.h.b16 %v579
        %v3017 = vunpack.c.l.b16 %v580
        %v3018 = vunpack.c.h.b16 %v580
        %v3019 = vunpack.c.l.b16 %v581
        %v3020 = vunpack.c.h.b16 %v581
        %v3021 = vunpack.c.l.b16 %v582
        %v3022 = vunpack.c.h.b16 %v582
        %v3023 = vunpack.c.l.b16 %v583
        %v3024 = vunpack.c.h.b16 %v583
        %v3025 = vunpack.c.l.b16 %v584
        %v3026 = vunpack.c.h.b16 %v584
        %v3027 = vunpack.c.l.b16 %v585
        %v3028 = vunpack.c.h.b16 %v585
        %v3029 = vunpack.c.l.b16 %v586
        %v3030 = vunpack.c.h.b16 %v586
        %v3031 = vunpack.c.l.b16 %v587
        %v3032 = vunpack.c.h.b16 %v587
        %v3033 = vunpack.c.l.b16 %v588
        %v3034 = vunpack.c.h.b16 %v588
        %v3035 = vunpack.c.l.b16 %v589
        %v3036 = vunpack.c.h.b16 %v589
        %v3037 = vunpack.c.l.b16 %v590
        %v3038 = vunpack.c.h.b16 %v590
        %v3039 = vunpack.c.l.b16 %v591
        %v3040 = vunpack.c.h.b16 %v591
        %v3041 = vunpack.c.l.b16 %v592
        %v3042 = vunpack.c.h.b16 %v592
        %v3043 = vunpack.c.l.b16 %v593
        %v3044 = vunpack.c.h.b16 %v593
        %v3045 = vunpack.c.l.b16 %v594
        %v3046 = vunpack.c.h.b16 %v594
        %v3047 = vunpack.c.l.b16 %v595
        %v3048 = vunpack.c.h.b16 %v595
        %v3049 = vunpack.c.l.b16 %v596
        %v3050 = vunpack.c.h.b16 %v596
        %v3051 = vunpack.c.l.b16 %v597
        %v3052 = vunpack.c.h.b16 %v597
        %v3053 = vunpack.c.l.b16 %v598
        %v3054 = vunpack.c.h.b16 %v598
        %v3055 = vunpack.c.l.b16 %v599
        %v3056 = vunpack.c.h.b16 %v599
        %v3057 = vunpack.c.l.b16 %v600
        %v3058 = vunpack.c.h.b16 %v600
        %v3059 = vunpack.c.l.b16 %v601
        %v3060 = vunpack.c.h.b16 %v601
        %v3061 = vunpack.c.l.b16 %v602
        %v3062 = vunpack.c.h.b16 %v602
        %v3063 = vunpack.c.l.b16 %v603
        %v3064 = vunpack.c.h.b16 %v603
        %v3065 = vunpack.c.l.b16 %v604
        %v3066 = vunpack.c.h.b16 %v604
        %v3067 = vunpack.c.l.b16 %v605
        %v3068 = vunpack.c.h.b16 %v605
        %v3069 = vunpack.c.l.b16 %v606
        %v3070 = vunpack.c.h.b16 %v606
        %v3071 = vunpack.c.l.b16 %v607
        %v3072 = vunpack.c.h.b16 %v607
        %v3073 = vunpack.c.l.b16 %v608
        %v3074 = vunpack.c.h.b16 %v608
        %v3075 = vunpack.c.l.b16 %v609
        %v3076 = vunpack.c.h.b16 %v609
        %v3077 = vunpack.c.l.b16 %v610
        %v3078 = vunpack.c.h.b16 %v610
        %v3079 = vunpack.c.l.b16 %v611
        %v3080 = vunpack.c.h.b16 %v611
        %v3081 = vunpack.c.l.b16 %v612
        %v3082 = vunpack.c.h.b16 %v612
        %v3083 = vunpack.c.l.b16 %v613
        %v3084 = vunpack.c.h.b16 %v613
        %v3085 = vunpack.c.l.b16 %v614
        %v3086 = vunpack.c.h.b16 %v614
        %v3087 = vunpack.c.l.b16 %v615
        %v3088 = vunpack.c.h.b16 %v615
        %v3089 = vunpack.c.l.b16 %v616
        %v3090 = vunpack.c.h.b16 %v616
        %v3091 = vunpack.c.l.b16 %v617
        %v3092 = vunpack.c.h.b16 %v617
        %v3093 = vunpack.c.l.b16 %v618
        %v3094 = vunpack.c.h.b16 %v618
        %v3095 = vunpack.c.l.b16 %v619
        %v3096 = vunpack.c.h.b16 %v619
        %v3097 = vunpack.c.l.b16 %v620
        %v3098 = vunpack.c.h.b16 %v620
        %v3099 = vunpack.c.l.b16 %v621
        %v3100 = vunpack.c.h.b16 %v621
        %v3101 = vunpack.c.l.b16 %v622
        %v3102 = vunpack.c.h.b16 %v622
        %v3103 = vunpack.c.l.b16 %v623
        %v3104 = vunpack.c.h.b16 %v623
        %v3105 = vunpack.c.l.b16 %v624
        %v3106 = vunpack.c.h.b16 %v624
        %v3107 = vunpack.c.l.b16 %v625
        %v3108 = vunpack.c.h.b16 %v625
        %v3109 = vunpack.c.l.b16 %v626
        %v3110 = vunpack.c.h.b16 %v626
        %v3111 = vunpack.c.l.b16 %v627
        %v3112 = vunpack.c.h.b16 %v627
        %v3113 = vunpack.c.l.b16 %v628
        %v3114 = vunpack.c.h.b16 %v628
        %v3115 = vunpack.c.l.b16 %v629
        %v3116 = vunpack.c.h.b16 %v629
        %v3117 = vunpack.c.l.b16 %v630
        %v3118 = vunpack.c.h.b16 %v630
        %v3119 = vunpack.c.l.b16 %v631
        %v3120 = vunpack.c.h.b16 %v631
        %v3121 = vunpack.c.l.b16 %v632
        %v3122 = vunpack.c.h.b16 %v632
        %v3123 = vunpack.c.l.b16 %v633
        %v3124 = vunpack.c.h.b16 %v633
        %v3125 = vunpack.c.l.b16 %v634
        %v3126 = vunpack.c.h.b16 %v634
        %v3127 = vunpack.c.l.b16 %v635
        %v3128 = vunpack.c.h.b16 %v635
        %v3129 = vunpack.c.l.b16 %v636
        %v3130 = vunpack.c.h.b16 %v636
        %v3131 = vunpack.c.l.b16 %v637
        %v3132 = vunpack.c.h.b16 %v637
        %v3133 = vunpack.c.l.b16 %v638
        %v3134 = vunpack.c.h.b16 %v638
        %v3135 = vunpack.c.l.b16 %v639
        %v3136 = vunpack.c.h.b16 %v639
        %v3137 = vunpack.c.l.b16 %v640
        %v3138 = vunpack.c.h.b16 %v640
        %v3139 = vunpack.c.l.b16 %v641
        %v3140 = vunpack.c.h.b16 %v641
        %v3141 = vunpack.c.l.b16 %v642
        %v3142 = vunpack.c.h.b16 %v642
        %v3143 = vunpack.c.l.b16 %v643
        %v3144 = vunpack.c.h.b16 %v643
        %v3145 = vunpack.c.l.b16 %v644
        %v3146 = vunpack.c.h.b16 %v644
        %v3147 = vunpack.c.l.b16 %v645
        %v3148 = vunpack.c.h.b16 %v645
        %v3149 = vunpack.c.l.b16 %v646
        %v3150 = vunpack.c.h.b16 %v646
        %v3151 = vunpack.c.l.b16 %v647
        %v3152 = vunpack.c.h.b16 %v647
        %v3153 = vunpack.c.l.b16 %v648
        %v3154 = vunpack.c.h.b16 %v648
        %v3155 = vunpack.c.l.b16 %v649
        %v3156 = vunpack.c.h.b16 %v649
        %v3157 = vunpack.c.l.b16 %v650
        %v3158 = vunpack.c.h.b16 %v650
        %v3159 = vunpack.c.l.b16 %v651
        %v3160 = vunpack.c.h.b16 %v651
        %v3161 = vunpack.c.l.b16 %v652
        %v3162 = vunpack.c.h.b16 %v652
        %v3163 = vunpack.c.l.b16 %v653
        %v3164 = vunpack.c.h.b16 %v653
        %v3165 = vunpack.c.l.b16 %v654
        %v3166 = vunpack.c.h.b16 %v654
        %v3167 = vunpack.c.l.b16 %v655
        %v3168 = vunpack.c.h.b16 %v655
        %v3169 = vunpack.c.l.b16 %v656
        %v3170 = vunpack.c.h.b16 %v656
        %v3171 = vunpack.c.l.b16 %v657
        %v3172 = vunpack.c.h.b16 %v657
        %v3173 = vunpack.c.l.b16 %v658
        %v3174 = vunpack.c.h.b16 %v658
        %v3175 = vunpack.c.l.b16 %v659
        %v3176 = vunpack.c.h.b16 %v659
        %v3177 = vunpack.c.l.b16 %v660
        %v3178 = vunpack.c.h.b16 %v660
        %v3179 = vunpack.c.l.b16 %v661
        %v3180 = vunpack.c.h.b16 %v661
        %v3181 = vunpack.c.l.b16 %v662
        %v3182 = vunpack.c.h.b16 %v662
        %v3183 = vunpack.c.l.b16 %v663
        %v3184 = vunpack.c.h.b16 %v663
        %v3185 = vunpack.c.l.b16 %v664
        %v3186 = vunpack.c.h.b16 %v664
        %v3187 = vunpack.c.l.b16 %v665
        %v3188 = vunpack.c.h.b16 %v665
        %v3189 = vunpack.c.l.b16 %v666
        %v3190 = vunpack.c.h.b16 %v666
        %v3191 = vunpack.c.l.b16 %v667
        %v3192 = vunpack.c.h.b16 %v667
        %v3193 = vunpack.c.l.b16 %v668
        %v3194 = vunpack.c.h.b16 %v668
        %v3195 = vunpack.c.l.b16 %v669
        %v3196 = vunpack.c.h.b16 %v669
        %v3197 = vunpack.c.l.b16 %v670
        %v3198 = vunpack.c.h.b16 %v670
        %v3199 = vunpack.c.l.b16 %v671
        %v3200 = vunpack.c.h.b16 %v671
        %v3201 = vunpack.c.l.b16 %v672
        %v3202 = vunpack.c.h.b16 %v672
        %v3203 = vunpack.c.l.b16 %v673
        %v3204 = vunpack.c.h.b16 %v673
        %v3205 = vunpack.c.l.b16 %v674
        %v3206 = vunpack.c.h.b16 %v674
        %v3207 = vunpack.c.l.b16 %v675
        %v3208 = vunpack.c.h.b16 %v675
        %v3209 = vunpack.c.l.b16 %v676
        %v3210 = vunpack.c.h.b16 %v676
        %v3211 = vunpack.c.l.b16 %v677
        %v3212 = vunpack.c.h.b16 %v677
        %v3213 = vunpack.c.l.b16 %v678
        %v3214 = vunpack.c.h.b16 %v678
        %v3215 = vunpack.c.l.b16 %v679
        %v3216 = vunpack.c.h.b16 %v679
        %v3217 = vunpack.c.l.b16 %v680
        %v3218 = vunpack.c.h.b16 %v680
        %v3219 = vunpack.c.l.b16 %v681
        %v3220 = vunpack.c.h.b16 %v681
        %v3221 = vunpack.c.l.b16 %v682
        %v3222 = vunpack.c.h.b16 %v682
        %v3223 = vunpack.c.l.b16 %v683
        %v3224 = vunpack.c.h.b16 %v683
        %v3225 = vunpack.c.l.b16 %v684
        %v3226 = vunpack.c.h.b16 %v684
        %v3227 = vunpack.c.l.b16 %v685
        %v3228 = vunpack.c.h.b16 %v685
        %v3229 = vunpack.c.l.b16 %v686
        %v3230 = vunpack.c.h.b16 %v686
        %v3231 = vunpack.c.l.b16 %v687
        %v3232 = vunpack.c.h.b16 %v687
        %v3233 = vunpack.c.l.b16 %v688
        %v3234 = vunpack.c.h.b16 %v688
        %v3235 = vunpack.c.l.b16 %v689
        %v3236 = vunpack.c.h.b16 %v689
        %v3237 = vunpack.c.l.b16 %v690
        %v3238 = vunpack.c.h.b16 %v690
        %v3239 = vunpack.c.l.b16 %v691
        %v3240 = vunpack.c.h.b16 %v691
        %v3241 = vunpack.c.l.b16 %v692
        %v3242 = vunpack.c.h.b16 %v692
        %v3243 = vunpack.c.l.b16 %v693
        %v3244 = vunpack.c.h.b16 %v693
        %v3245 = vunpack.c.l.b16 %v694
        %v3246 = vunpack.c.h.b16 %v694
        %v3247 = vunpack.c.l.b16 %v695
        %v3248 = vunpack.c.h.b16 %v695
        %v3249 = vunpack.c.l.b16 %v696
        %v3250 = vunpack.c.h.b16 %v696
        %v3251 = vunpack.c.l.b16 %v697
        %v3252 = vunpack.c.h.b16 %v697
        %v3253 = vunpack.c.l.b16 %v698
        %v3254 = vunpack.c.h.b16 %v698
        %v3255 = vunpack.c.l.b16 %v699
        %v3256 = vunpack.c.h.b16 %v699
        %v3257 = vunpack.c.l.b16 %v700
        %v3258 = vunpack.c.h.b16 %v700
        %v3259 = vunpack.c.l.b16 %v701
        %v3260 = vunpack.c.h.b16 %v701
        %v3261 = vunpack.c.l.b16 %v702
        %v3262 = vunpack.c.h.b16 %v702
        %v3263 = vunpack.c.l.b16 %v703
        %v3264 = vunpack.c.h.b16 %v703
        %v3265 = vunpack.c.l.b16 %v704
        %v3266 = vunpack.c.h.b16 %v704
        %v3267 = vunpack.c.l.b16 %v705
        %v3268 = vunpack.c.h.b16 %v705
        %v3269 = vunpack.c.l.b16 %v706
        %v3270 = vunpack.c.h.b16 %v706
        %v3271 = vunpack.c.l.b16 %v707
        %v3272 = vunpack.c.h.b16 %v707
        %v3273 = vunpack.c.l.b16 %v708
        %v3274 = vunpack.c.h.b16 %v708
        %v3275 = vunpack.c.l.b16 %v709
        %v3276 = vunpack.c.h.b16 %v709
        %v3277 = vunpack.c.l.b16 %v710
        %v3278 = vunpack.c.h.b16 %v710
        %v3279 = vunpack.c.l.b16 %v711
        %v3280 = vunpack.c.h.b16 %v711
        %v3281 = vunpack.c.l.b16 %v712
        %v3282 = vunpack.c.h.b16 %v712
        %v3283 = vunpack.c.l.b16 %v713
        %v3284 = vunpack.c.h.b16 %v713
        %v3285 = vunpack.c.l.b16 %v714
        %v3286 = vunpack.c.h.b16 %v714
        %v3287 = vunpack.c.l.b16 %v715
        %v3288 = vunpack.c.h.b16 %v715
        %v3289 = vunpack.c.l.b16 %v716
        %v3290 = vunpack.c.h.b16 %v716
        %v3291 = vunpack.c.l.b16 %v717
        %v3292 = vunpack.c.h.b16 %v717
        %v3293 = vunpack.c.l.b16 %v718
        %v3294 = vunpack.c.h.b16 %v718
        %v3295 = vunpack.c.l.b16 %v719
        %v3296 = vunpack.c.h.b16 %v719
        %v3297 = vunpack.c.l.b16 %v720
        %v3298 = vunpack.c.h.b16 %v720
        %v3299 = vunpack.c.l.b16 %v721
        %v3300 = vunpack.c.h.b16 %v721
        %v3301 = vunpack.c.l.b16 %v722
        %v3302 = vunpack.c.h.b16 %v722
        %v3303 = vunpack.c.l.b16 %v723
        %v3304 = vunpack.c.h.b16 %v723
        %v3305 = vunpack.c.l.b16 %v724
        %v3306 = vunpack.c.h.b16 %v724
        %v3307 = vunpack.c.l.b16 %v725
        %v3308 = vunpack.c.h.b16 %v725
        %v3309 = vunpack.c.l.b16 %v726
        %v3310 = vunpack.c.h.b16 %v726
        %v3311 = vunpack.c.l.b16 %v727
        %v3312 = vunpack.c.h.b16 %v727
        %v3313 = vunpack.c.l.b16 %v728
        %v3314 = vunpack.c.h.b16 %v728
        %v3315 = vunpack.c.l.b16 %v729
        %v3316 = vunpack.c.h.b16 %v729
        %v3317 = vunpack.c.l.b16 %v730
        %v3318 = vunpack.c.h.b16 %v730
        %v3319 = vunpack.c.l.b16 %v731
        %v3320 = vunpack.c.h.b16 %v731
        %v3321 = vunpack.c.l.b16 %v732
        %v3322 = vunpack.c.h.b16 %v732
        %v3323 = vunpack.c.l.b16 %v733
        %v3324 = vunpack.c.h.b16 %v733
        %v3325 = vunpack.c.l.b16 %v734
        %v3326 = vunpack.c.h.b16 %v734
        %v3327 = vunpack.c.l.b16 %v735
        %v3328 = vunpack.c.h.b16 %v735
        %v3329 = vunpack.c.l.b16 %v736
        %v3330 = vunpack.c.h.b16 %v736
        %v3331 = vunpack.c.l.b16 %v737
        %v3332 = vunpack.c.h.b16 %v737
        %v3333 = vunpack.c.l.b16 %v738
        %v3334 = vunpack.c.h.b16 %v738
        %v3335 = vunpack.c.l.b16 %v739
        %v3336 = vunpack.c.h.b16 %v739
        %v3337 = vunpack.c.l.b16 %v740
        %v3338 = vunpack.c.h.b16 %v740
        %v3339 = vunpack.c.l.b16 %v741
        %v3340 = vunpack.c.h.b16 %v741
        %v3341 = vunpack.c.l.b16 %v742
        %v3342 = vunpack.c.h.b16 %v742
        %v3343 = vunpack.c.l.b16 %v743
        %v3344 = vunpack.c.h.b16 %v743
        %v3345 = vunpack.c.l.b16 %v744
        %v3346 = vunpack.c.h.b16 %v744
        %v3347 = vunpack.c.l.b16 %v745
        %v3348 = vunpack.c.h.b16 %v745
        %v3349 = vunpack.c.l.b16 %v746
        %v3350 = vunpack.c.h.b16 %v746
        %v3351 = vunpack.c.l.b16 %v747
        %v3352 = vunpack.c.h.b16 %v747
        %v3353 = vunpack.c.l.b16 %v748
        %v3354 = vunpack.c.h.b16 %v748
        %v3355 = vunpack.c.l.b16 %v749
        %v3356 = vunpack.c.h.b16 %v749
        %v3357 = vunpack.c.l.b16 %v750
        %v3358 = vunpack.c.h.b16 %v750
        %v3359 = vunpack.c.l.b16 %v751
        %v3360 = vunpack.c.h.b16 %v751
        %v3361 = vunpack.c.l.b16 %v752
        %v3362 = vunpack.c.h.b16 %v752
        %v3363 = vunpack.c.l.b16 %v753
        %v3364 = vunpack.c.h.b16 %v753
        %v3365 = vunpack.c.l.b16 %v754
        %v3366 = vunpack.c.h.b16 %v754
        %v3367 = vunpack.c.l.b16 %v755
        %v3368 = vunpack.c.h.b16 %v755
        %v3369 = vunpack.c.l.b16 %v756
        %v3370 = vunpack.c.h.b16 %v756
        %v3371 = vunpack.c.l.b16 %v757
        %v3372 = vunpack.c.h.b16 %v757
        %v3373 = vunpack.c.l.b16 %v758
        %v3374 = vunpack.c.h.b16 %v758
        %v3375 = vunpack.c.l.b16 %v759
        %v3376 = vunpack.c.h.b16 %v759
        %v3377 = vunpack.c.l.b16 %v760
        %v3378 = vunpack.c.h.b16 %v760
        %v3379 = vunpack.c.l.b16 %v761
        %v3380 = vunpack.c.h.b16 %v761
        %v3381 = vunpack.c.l.b16 %v762
        %v3382 = vunpack.c.h.b16 %v762
        %v3383 = vunpack.c.l.b16 %v763
        %v3384 = vunpack.c.h.b16 %v763
        %v3385 = vunpack.c.l.b16 %v764
        %v3386 = vunpack.c.h.b16 %v764
        %v3387 = vunpack.c.l.b16 %v765
        %v3388 = vunpack.c.h.b16 %v765
        %v3389 = vunpack.c.l.b16 %v766
        %v3390 = vunpack.c.h.b16 %v766
        %v3391 = vunpack.c.l.b16 %v767
        %v3392 = vunpack.c.h.b16 %v767
        %v3393 = vunpack.c.l.b16 %v768
        %v3394 = vunpack.c.h.b16 %v768
        %v3395 = vunpack.c.l.b16 %v769
        %v3396 = vunpack.c.h.b16 %v769
        %v3397 = vunpack.c.l.b16 %v770
        %v3398 = vunpack.c.h.b16 %v770
        %v3399 = vunpack.c.l.b16 %v771
        %v3400 = vunpack.c.h.b16 %v771
        %v3401 = vunpack.c.l.b16 %v772
        %v3402 = vunpack.c.h.b16 %v772
        %v3403 = vunpack.c.l.b16 %v773
        %v3404 = vunpack.c.h.b16 %v773
        %v3405 = vunpack.c.l.b16 %v774
        %v3406 = vunpack.c.h.b16 %v774
        %v3407 = vunpack.c.l.b16 %v775
        %v3408 = vunpack.c.h.b16 %v775
        %v3409 = vunpack.c.l.b16 %v776
        %v3410 = vunpack.c.h.b16 %v776
        %v3411 = vunpack.c.l.b16 %v777
        %v3412 = vunpack.c.h.b16 %v777
        %v3413 = vunpack.c.l.b16 %v778
        %v3414 = vunpack.c.h.b16 %v778
        %v3415 = vunpack.c.l.b16 %v779
        %v3416 = vunpack.c.h.b16 %v779
        %v3417 = vunpack.c.l.b16 %v780
        %v3418 = vunpack.c.h.b16 %v780
        %v3419 = vunpack.c.l.b16 %v781
        %v3420 = vunpack.c.h.b16 %v781
        %v3421 = vunpack.c.l.b16 %v782
        %v3422 = vunpack.c.h.b16 %v782
        %v3423 = vunpack.c.l.b16 %v783
        %v3424 = vunpack.c.h.b16 %v783
        %v3425 = vunpack.c.l.b16 %v784
        %v3426 = vunpack.c.h.b16 %v784
        %v3427 = vunpack.c.l.b16 %v785
        %v3428 = vunpack.c.h.b16 %v785
        %v3429 = vunpack.c.l.b16 %v786
        %v3430 = vunpack.c.h.b16 %v786
        %v3431 = vunpack.c.l.b16 %v787
        %v3432 = vunpack.c.h.b16 %v787
        %v3433 = vunpack.c.l.b16 %v788
        %v3434 = vunpack.c.h.b16 %v788
        %v3435 = vunpack.c.l.b16 %v789
        %v3436 = vunpack.c.h.b16 %v789
        %v3437 = vunpack.c.l.b16 %v790
        %v3438 = vunpack.c.h.b16 %v790
        %v3439 = vunpack.c.l.b16 %v791
        %v3440 = vunpack.c.h.b16 %v791
        %v3441 = vunpack.c.l.b16 %v792
        %v3442 = vunpack.c.h.b16 %v792
        %v3443 = vunpack.c.l.b16 %v793
        %v3444 = vunpack.c.h.b16 %v793
        %v3445 = vunpack.c.l.b16 %v794
        %v3446 = vunpack.c.h.b16 %v794
        %v3447 = vunpack.c.l.b16 %v795
        %v3448 = vunpack.c.h.b16 %v795
        %v3449 = vunpack.c.l.b16 %v796
        %v3450 = vunpack.c.h.b16 %v796
        %v3451 = vunpack.c.l.b16 %v797
        %v3452 = vunpack.c.h.b16 %v797
        %v3453 = vunpack.c.l.b16 %v798
        %v3454 = vunpack.c.h.b16 %v798
        %v3455 = vunpack.c.l.b16 %v799
        %v3456 = vunpack.c.h.b16 %v799
        %v3457 = vunpack.c.l.b16 %v800
        %v3458 = vunpack.c.h.b16 %v800
        %v3459 = vunpack.c.l.b16 %v801
        %v3460 = vunpack.c.h.b16 %v801
        %v3461 = vunpack.c.l.b16 %v802
        %v3462 = vunpack.c.h.b16 %v802
        %v3463 = vunpack.c.l.b16 %v803
        %v3464 = vunpack.c.h.b16 %v803
        %v3465 = vunpack.c.l.b16 %v804
        %v3466 = vunpack.c.h.b16 %v804
        %v3467 = vunpack.c.l.b16 %v805
        %v3468 = vunpack.c.h.b16 %v805
        %v3469 = vunpack.c.l.b16 %v806
        %v3470 = vunpack.c.h.b16 %v806
        %v3471 = vunpack.c.l.b16 %v807
        %v3472 = vunpack.c.h.b16 %v807
        %v3473 = vunpack.c.l.b16 %v808
        %v3474 = vunpack.c.h.b16 %v808
        %v3475 = vunpack.c.l.b16 %v809
        %v3476 = vunpack.c.h.b16 %v809
        %v3477 = vunpack.c.l.b16 %v810
        %v3478 = vunpack.c.h.b16 %v810
        %v3479 = vunpack.c.l.b16 %v811
        %v3480 = vunpack.c.h.b16 %v811
        %v3481 = vunpack.c.l.b16 %v812
        %v3482 = vunpack.c.h.b16 %v812
        %v3483 = vunpack.c.l.b16 %v813
        %v3484 = vunpack.c.h.b16 %v813
        %v3485 = vunpack.c.l.b16 %v814
        %v3486 = vunpack.c.h.b16 %v814
        %v3487 = vunpack.c.l.b16 %v815
        %v3488 = vunpack.c.h.b16 %v815
        %v3489 = vunpack.c.l.b16 %v816
        %v3490 = vunpack.c.h.b16 %v816
        %v3491 = vunpack.c.l.b16 %v817
        %v3492 = vunpack.c.h.b16 %v817
        %v3493 = vunpack.c.l.b16 %v818
        %v3494 = vunpack.c.h.b16 %v818
        %v3495 = vunpack.c.l.b16 %v819
        %v3496 = vunpack.c.h.b16 %v819
        %v3497 = vunpack.c.l.b16 %v820
        %v3498 = vunpack.c.h.b16 %v820
        %v3499 = vunpack.c.l.b16 %v821
        %v3500 = vunpack.c.h.b16 %v821
        %v3501 = vunpack.c.l.b16 %v822
        %v3502 = vunpack.c.h.b16 %v822
        %v3503 = vunpack.c.l.b16 %v823
        %v3504 = vunpack.c.h.b16 %v823
        %v3505 = vunpack.c.l.b16 %v824
        %v3506 = vunpack.c.h.b16 %v824
        %v3507 = vunpack.c.l.b16 %v825
        %v3508 = vunpack.c.h.b16 %v825
        %v3509 = vunpack.c.l.b16 %v826
        %v3510 = vunpack.c.h.b16 %v826
        %v3511 = vunpack.c.l.b16 %v827
        %v3512 = vunpack.c.h.b16 %v827
        %v3513 = vunpack.c.l.b16 %v828
        %v3514 = vunpack.c.h.b16 %v828
        %v3515 = vunpack.c.l.b16 %v829
        %v3516 = vunpack.c.h.b16 %v829
        %v3517 = vunpack.c.l.b16 %v830
        %v3518 = vunpack.c.h.b16 %v830
        %v3519 = vunpack.c.l.b16 %v831
        %v3520 = vunpack.c.h.b16 %v831
        %v3521 = vunpack.c.l.b16 %v832
        %v3522 = vunpack.c.h.b16 %v832
        %v3523 = vunpack.c.l.b16 %v833
        %v3524 = vunpack.c.h.b16 %v833
        %v3525 = vunpack.c.l.b16 %v834
        %v3526 = vunpack.c.h.b16 %v834
        %v3527 = vunpack.c.l.b16 %v835
        %v3528 = vunpack.c.h.b16 %v835
        %v3529 = vunpack.c.l.b16 %v836
        %v3530 = vunpack.c.h.b16 %v836
        %v3531 = vunpack.c.l.b16 %v837
        %v3532 = vunpack.c.h.b16 %v837
        %v3533 = vunpack.c.l.b16 %v838
        %v3534 = vunpack.c.h.b16 %v838
        %v3535 = vunpack.c.l.b16 %v839
        %v3536 = vunpack.c.h.b16 %v839
        %v3537 = vunpack.c.l.b16 %v840
        %v3538 = vunpack.c.h.b16 %v840
        %v3539 = vunpack.c.l.b16 %v841
        %v3540 = vunpack.c.h.b16 %v841
        %v3541 = vunpack.c.l.b16 %v842
        %v3542 = vunpack.c.h.b16 %v842
        %v3543 = vunpack.c.l.b16 %v843
        %v3544 = vunpack.c.h.b16 %v843
        %v3545 = vunpack.c.l.b16 %v844
        %v3546 = vunpack.c.h.b16 %v844
        %v3547 = vunpack.c.l.b16 %v845
        %v3548 = vunpack.c.h.b16 %v845
        %v3549 = vunpack.c.l.b16 %v846
        %v3550 = vunpack.c.h.b16 %v846
        %v3551 = vunpack.c.l.b16 %v847
        %v3552 = vunpack.c.h.b16 %v847
        %v3553 = vunpack.c.l.b16 %v848
        %v3554 = vunpack.c.h.b16 %v848
        %v3555 = vunpack.c.l.b16 %v849
        %v3556 = vunpack.c.h.b16 %v849
        %v3557 = vunpack.c.l.b16 %v850
        %v3558 = vunpack.c.h.b16 %v850
        %v3559 = vunpack.c.l.b16 %v851
        %v3560 = vunpack.c.h.b16 %v851
        %v3561 = vunpack.c.l.b16 %v852
        %v3562 = vunpack.c.h.b16 %v852
        %v3563 = vunpack.c.l.b16 %v853
        %v3564 = vunpack.c.h.b16 %v853
        %v3565 = vunpack.c.l.b16 %v854
        %v3566 = vunpack.c.h.b16 %v854
        %v3567 = vunpack.c.l.b16 %v855
        %v3568 = vunpack.c.h.b16 %v855
        %v3569 = vunpack.c.l.b16 %v856
        %v3570 = vunpack.c.h.b16 %v856
        %v3571 = vunpack.c.l.b16 %v857
        %v3572 = vunpack.c.h.b16 %v857
        %v3573 = vunpack.c.l.b16 %v858
        %v3574 = vunpack.c.h.b16 %v858
        %v3575 = vunpack.c.l.b16 %v859
        %v3576 = vunpack.c.h.b16 %v859
        %v3577 = vunpack.c.l.b16 %v860
        %v3578 = vunpack.c.h.b16 %v860
        %v3579 = vunpack.c.l.b16 %v861
        %v3580 = vunpack.c.h.b16 %v861
        %v3581 = vunpack.c.l.b16 %v862
        %v3582 = vunpack.c.h.b16 %v862
        %v3583 = vunpack.c.l.b16 %v863
        %v3584 = vunpack.c.h.b16 %v863
        %v3585 = vunpack.c.l.b16 %v864
        %v3586 = vunpack.c.h.b16 %v864
        %v3587 = vunpack.c.l.b16 %v865
        %v3588 = vunpack.c.h.b16 %v865
        %v3589 = vunpack.c.l.b16 %v866
        %v3590 = vunpack.c.h.b16 %v866
        %v3591 = vunpack.c.l.b16 %v867
        %v3592 = vunpack.c.h.b16 %v867
        %v3593 = vunpack.c.l.b16 %v868
        %v3594 = vunpack.c.h.b16 %v868
        %v3595 = vunpack.c.l.b16 %v869
        %v3596 = vunpack.c.h.b16 %v869
        %v3597 = vunpack.c.l.b16 %v870
        %v3598 = vunpack.c.h.b16 %v870
        %v3599 = vunpack.c.l.b16 %v871
        %v3600 = vunpack.c.h.b16 %v871
        %v3601 = vunpack.c.l.b16 %v872
        %v3602 = vunpack.c.h.b16 %v872
        %v3603 = vunpack.c.l.b16 %v873
        %v3604 = vunpack.c.h.b16 %v873
        %v3605 = vunpack.c.l.b16 %v874
        %v3606 = vunpack.c.h.b16 %v874
        %v3607 = vunpack.c.l.b16 %v875
        %v3608 = vunpack.c.h.b16 %v875
        %v3609 = vunpack.c.l.b16 %v876
        %v3610 = vunpack.c.h.b16 %v876
        %v3611 = vunpack.c.l.b16 %v877
        %v3612 = vunpack.c.h.b16 %v877
        %v3613 = vunpack.c.l.b16 %v878
        %v3614 = vunpack.c.h.b16 %v878
        %v3615 = vunpack.c.l.b16 %v879
        %v3616 = vunpack.c.h.b16 %v879
        %v3617 = vunpack.c.l.b16 %v880
        %v3618 = vunpack.c.h.b16 %v880
        %v3619 = vunpack.c.l.b16 %v881
        %v3620 = vunpack.c.h.b16 %v881
        %v3621 = vunpack.c.l.b16 %v882
        %v3622 = vunpack.c.h.b16 %v882
        %v3623 = vunpack.c.l.b16 %v883
        %v3624 = vunpack.c.h.b16 %v883
        %v3625 = vunpack.c.l.b16 %v884
        %v3626 = vunpack.c.h.b16 %v884
        %v3627 = vunpack.c.l.b16 %v885
        %v3628 = vunpack.c.h.b16 %v885
        %v3629 = vunpack.c.l.b16 %v886
        %v3630 = vunpack.c.h.b16 %v886
        %v3631 = vunpack.c.l.b16 %v887
        %v3632 = vunpack.c.h.b16 %v887
        %v3633 = vunpack.c.l.b16 %v888
        %v3634 = vunpack.c.h.b16 %v888
        %v3635 = vunpack.c.l.b16 %v889
        %v3636 = vunpack.c.h.b16 %v889
        %v3637 = vunpack.c.l.b16 %v890
        %v3638 = vunpack.c.h.b16 %v890
        %v3639 = vunpack.c.l.b16 %v891
        %v3640 = vunpack.c.h.b16 %v891
        %v3641 = vunpack.c.l.b16 %v892
        %v3642 = vunpack.c.h.b16 %v892
        %v3643 = vunpack.c.l.b16 %v893
        %v3644 = vunpack.c.h.b16 %v893
        %v3645 = vunpack.c.l.b16 %v894
        %v3646 = vunpack.c.h.b16 %v894
        %v3647 = vunpack.c.l.b16 %v895
        %v3648 = vunpack.c.h.b16 %v895
        %v3649 = vunpack.c.l.b16 %v896
        %v3650 = vunpack.c.h.b16 %v896
        %v3651 = vunpack.c.l.b16 %v897
        %v3652 = vunpack.c.h.b16 %v897
        %v3653 = vunpack.c.l.b16 %v898
        %v3654 = vunpack.c.h.b16 %v898
        %v3655 = vunpack.c.l.b16 %v899
        %v3656 = vunpack.c.h.b16 %v899
        %v3657 = vunpack.c.l.b16 %v900
        %v3658 = vunpack.c.h.b16 %v900
        %v3659 = vunpack.c.l.b16 %v901
        %v3660 = vunpack.c.h.b16 %v901
        %v3661 = vunpack.c.l.b16 %v902
        %v3662 = vunpack.c.h.b16 %v902
        %v3663 = vunpack.c.l.b16 %v903
        %v3664 = vunpack.c.h.b16 %v903
        %v3665 = vunpack.c.l.b16 %v904
        %v3666 = vunpack.c.h.b16 %v904
        %v3667 = vunpack.c.l.b16 %v905
        %v3668 = vunpack.c.h.b16 %v905
        %v3669 = vunpack.c.l.b16 %v906
        %v3670 = vunpack.c.h.b16 %v906
        %v3671 = vunpack.c.l.b16 %v907
        %v3672 = vunpack.c.h.b16 %v907
        %v3673 = vunpack.c.l.b16 %v908
        %v3674 = vunpack.c.h.b16 %v908
        %v3675 = vunpack.c.l.b16 %v909
        %v3676 = vunpack.c.h.b16 %v909
        %v3677 = vunpack.c.l.b16 %v910
        %v3678 = vunpack.c.h.b16 %v910
        %v3679 = vunpack.c.l.b16 %v911
        %v3680 = vunpack.c.h.b16 %v911
        %v3681 = vunpack.c.l.b16 %v912
        %v3682 = vunpack.c.h.b16 %v912
        %v3683 = vunpack.c.l.b16 %v913
        %v3684 = vunpack.c.h.b16 %v913
        %v3685 = vunpack.c.l.b16 %v914
        %v3686 = vunpack.c.h.b16 %v914
        %v3687 = vunpack.c.l.b16 %v915
        %v3688 = vunpack.c.h.b16 %v915
        %v3689 = vunpack.c.l.b16 %v916
        %v3690 = vunpack.c.h.b16 %v916
        %v3691 = vunpack.c.l.b16 %v917
        %v3692 = vunpack.c.h.b16 %v917
        %v3693 = vunpack.c.l.b16 %v918
        %v3694 = vunpack.c.h.b16 %v918
        %v3695 = vunpack.c.l.b16 %v919
        %v3696 = vunpack.c.h.b16 %v919
        %v3697 = vunpack.c.l.b16 %v920
        %v3698 = vunpack.c.h.b16 %v920
        %v3699 = vunpack.c.l.b16 %v921
        %v3700 = vunpack.c.h.b16 %v921
        %v3701 = vunpack.c.l.b16 %v922
        %v3702 = vunpack.c.h.b16 %v922
        %v3703 = vunpack.c.l.b16 %v923
        %v3704 = vunpack.c.h.b16 %v923
        %v3705 = vunpack.c.l.b16 %v924
        %v3706 = vunpack.c.h.b16 %v924
        %v3707 = vunpack.c.l.b16 %v925
        %v3708 = vunpack.c.h.b16 %v925
        %v3709 = vunpack.c.l.b16 %v926
        %v3710 = vunpack.c.h.b16 %v926
        %v3711 = vunpack.c.l.b16 %v927
        %v3712 = vunpack.c.h.b16 %v927
        %v3713 = vunpack.c.l.b16 %v928
        %v3714 = vunpack.c.h.b16 %v928
        %v3715 = vunpack.c.l.b16 %v929
        %v3716 = vunpack.c.h.b16 %v929
        %v3717 = vunpack.c.l.b16 %v930
        %v3718 = vunpack.c.h.b16 %v930
        %v3719 = vunpack.c.l.b16 %v931
        %v3720 = vunpack.c.h.b16 %v931
        %v3721 = vunpack.c.l.b16 %v932
        %v3722 = vunpack.c.h.b16 %v932
        %v3723 = vunpack.c.l.b16 %v933
        %v3724 = vunpack.c.h.b16 %v933
        %v3725 = vunpack.c.l.b16 %v934
        %v3726 = vunpack.c.h.b16 %v934
        %v3727 = vunpack.c.l.b16 %v935
        %v3728 = vunpack.c.h.b16 %v935
        %v3729 = vunpack.c.l.b16 %v936
        %v3730 = vunpack.c.h.b16 %v936
        %v3731 = vunpack.c.l.b16 %v937
        %v3732 = vunpack.c.h.b16 %v937
        %v3733 = vunpack.c.l.b16 %v938
        %v3734 = vunpack.c.h.b16 %v938
        %v3735 = vunpack.c.l.b16 %v939
        %v3736 = vunpack.c.h.b16 %v939
        %v3737 = vunpack.c.l.b16 %v940
        %v3738 = vunpack.c.h.b16 %v940
        %v3739 = vunpack.c.l.b16 %v941
        %v3740 = vunpack.c.h.b16 %v941
        %v3741 = vunpack.c.l.b16 %v942
        %v3742 = vunpack.c.h.b16 %v942
        %v3743 = vunpack.c.l.b16 %v943
        %v3744 = vunpack.c.h.b16 %v943
        %v3745 = vunpack.c.l.b16 %v944
        %v3746 = vunpack.c.h.b16 %v944
        %v3747 = vunpack.c.l.b16 %v945
        %v3748 = vunpack.c.h.b16 %v945
        %v3749 = vunpack.c.l.b16 %v946
        %v3750 = vunpack.c.h.b16 %v946
        %v3751 = vunpack.c.l.b16 %v947
        %v3752 = vunpack.c.h.b16 %v947
        %v3753 = vunpack.c.l.b16 %v948
        %v3754 = vunpack.c.h.b16 %v948
        %v3755 = vunpack.c.l.b16 %v949
        %v3756 = vunpack.c.h.b16 %v949
        %v3757 = vunpack.c.l.b16 %v950
        %v3758 = vunpack.c.h.b16 %v950
        %v3759 = vunpack.c.l.b16 %v951
        %v3760 = vunpack.c.h.b16 %v951
        %v3761 = vunpack.c.l.b16 %v952
        %v3762 = vunpack.c.h.b16 %v952
        %v3763 = vunpack.c.l.b16 %v953
        %v3764 = vunpack.c.h.b16 %v953
        %v3765 = vunpack.c.l.b16 %v954
        %v3766 = vunpack.c.h.b16 %v954
        %v3767 = vunpack.c.l.b16 %v955
        %v3768 = vunpack.c.h.b16 %v955
        %v3769 = vunpack.c.l.b16 %v956
        %v3770 = vunpack.c.h.b16 %v956
        %v3771 = vunpack.c.l.b16 %v957
        %v3772 = vunpack.c.h.b16 %v957
        %v3773 = vunpack.c.l.b16 %v958
        %v3774 = vunpack.c.h.b16 %v958
        %v3775 = vunpack.c.l.b16 %v959
        %v3776 = vunpack.c.h.b16 %v959
        %v3777 = vunpack.c.l.b16 %v960
        %v3778 = vunpack.c.h.b16 %v960
        %v3779 = vunpack.c.l.b16 %v961
        %v3780 = vunpack.c.h.b16 %v961
        %v3781 = vunpack.c.l.b16 %v962
        %v3782 = vunpack.c.h.b16 %v962
        %v3783 = vunpack.c.l.b16 %v963
        %v3784 = vunpack.c.h.b16 %v963
        %v3785 = vunpack.c.l.b16 %v964
        %v3786 = vunpack.c.h.b16 %v964
        %v3787 = vunpack.c.l.b16 %v965
        %v3788 = vunpack.c.h.b16 %v965
        %v3789 = vunpack.c.l.b16 %v966
        %v3790 = vunpack.c.h.b16 %v966
        %v3791 = vunpack.c.l.b16 %v967
        %v3792 = vunpack.c.h.b16 %v967
        %v3793 = vunpack.c.l.b16 %v968
        %v3794 = vunpack.c.h.b16 %v968
        %v3795 = vunpack.c.l.b16 %v969
        %v3796 = vunpack.c.h.b16 %v969
        %v3797 = vunpack.c.l.b16 %v970
        %v3798 = vunpack.c.h.b16 %v970
        %v3799 = vunpack.c.l.b16 %v971
        %v3800 = vunpack.c.h.b16 %v971
        %v3801 = vunpack.c.l.b16 %v972
        %v3802 = vunpack.c.h.b16 %v972
        %v3803 = vunpack.c.l.b16 %v973
        %v3804 = vunpack.c.h.b16 %v973
        %v3805 = vunpack.c.l.b16 %v974
        %v3806 = vunpack.c.h.b16 %v974
        %v3807 = vunpack.c.l.b16 %v975
        %v3808 = vunpack.c.h.b16 %v975
        %v3809 = vunpack.c.l.b16 %v976
        %v3810 = vunpack.c.h.b16 %v976
        %v3811 = vunpack.c.l.b16 %v977
        %v3812 = vunpack.c.h.b16 %v977
        %v3813 = vunpack.c.l.b16 %v978
        %v3814 = vunpack.c.h.b16 %v978
        %v3815 = vunpack.c.l.b16 %v979
        %v3816 = vunpack.c.h.b16 %v979
        %v3817 = vunpack.c.l.b16 %v980
        %v3818 = vunpack.c.h.b16 %v980
        %v3819 = vunpack.c.l.b16 %v981
        %v3820 = vunpack.c.h.b16 %v981
        %v3821 = vunpack.c.l.b16 %v982
        %v3822 = vunpack.c.h.b16 %v982
        %v3823 = vunpack.c.l.b16 %v983
        %v3824 = vunpack.c.h.b16 %v983
        %v3825 = vunpack.c.l.b16 %v984
        %v3826 = vunpack.c.h.b16 %v984
        %v3827 = vunpack.c.l.b16 %v985
        %v3828 = vunpack.c.h.b16 %v985
        %v3829 = vunpack.c.l.b16 %v986
        %v3830 = vunpack.c.h.b16 %v986
        %v3831 = vunpack.c.l.b16 %v987
        %v3832 = vunpack.c.h.b16 %v987
        %v3833 = vunpack.c.l.b16 %v988
        %v3834 = vunpack.c.h.b16 %v988
        %v3835 = vunpack.c.l.b16 %v989
        %v3836 = vunpack.c.h.b16 %v989
        %v3837 = vunpack.c.l.b16 %v990
        %v3838 = vunpack.c.h.b16 %v990
        %v3839 = vunpack.c.l.b16 %v991
        %v3840 = vunpack.c.h.b16 %v991
        %v3841 = vunpack.c.l.b16 %v992
        %v3842 = vunpack.c.h.b16 %v992
        %v3843 = vunpack.c.l.b16 %v993
        %v3844 = vunpack.c.h.b16 %v993
        %v3845 = vunpack.c.l.b16 %v994
        %v3846 = vunpack.c.h.b16 %v994
        %v3847 = vunpack.c.l.b16 %v995
        %v3848 = vunpack.c.h.b16 %v995
        %v3849 = vunpack.c.l.b16 %v996
        %v3850 = vunpack.c.h.b16 %v996
        %v3851 = vunpack.c.l.b16 %v997
        %v3852 = vunpack.c.h.b16 %v997
        %v3853 = vunpack.c.l.b16 %v998
        %v3854 = vunpack.c.h.b16 %v998
        %v3855 = vunpack.c.l.b16 %v999
        %v3856 = vunpack.c.h.b16 %v999
        %v3857 = vunpack.c.l.b16 %v1000
        %v3858 = vunpack.c.h.b16 %v1000
        %v3859 = vunpack.c.l.b16 %v1001
        %v3860 = vunpack.c.h.b16 %v1001
        %v3861 = vunpack.c.l.b16 %v1002
        %v3862 = vunpack.c.h.b16 %v1002
        %v3863 = vunpack.c.l.b16 %v1003
        %v3864 = vunpack.c.h.b16 %v1003
        %v3865 = vunpack.c.l.b16 %v1004
        %v3866 = vunpack.c.h.b16 %v1004
        %v3867 = vunpack.c.l.b16 %v1005
        %v3868 = vunpack.c.h.b16 %v1005
        %v3869 = vunpack.c.l.b16 %v1006
        %v3870 = vunpack.c.h.b16 %v1006
        %v3871 = vunpack.c.l.b16 %v1007
        %v3872 = vunpack.c.h.b16 %v1007
        %v3873 = vunpack.c.l.b16 %v1008
        %v3874 = vunpack.c.h.b16 %v1008
        %v3875 = vunpack.c.l.b16 %v1009
        %v3876 = vunpack.c.h.b16 %v1009
        %v3877 = vunpack.c.l.b16 %v1010
        %v3878 = vunpack.c.h.b16 %v1010
        %v3879 = vunpack.c.l.b16 %v1011
        %v3880 = vunpack.c.h.b16 %v1011
        %v3881 = vunpack.c.l.b16 %v1012
        %v3882 = vunpack.c.h.b16 %v1012
        %v3883 = vunpack.c.l.b16 %v1013
        %v3884 = vunpack.c.h.b16 %v1013
        %v3885 = vunpack.c.l.b16 %v1014
        %v3886 = vunpack.c.h.b16 %v1014
        %v3887 = vunpack.c.l.b16 %v1015
        %v3888 = vunpack.c.h.b16 %v1015
        %v3889 = vunpack.c.l.b16 %v1016
        %v3890 = vunpack.c.h.b16 %v1016
        %v3891 = vunpack.c.l.b16 %v1017
        %v3892 = vunpack.c.h.b16 %v1017
        %v3893 = vunpack.c.l.b16 %v1018
        %v3894 = vunpack.c.h.b16 %v1018
        %v3895 = vunpack.c.l.b16 %v1019
        %v3896 = vunpack.c.h.b16 %v1019
        %v3897 = vunpack.c.l.b16 %v1020
        %v3898 = vunpack.c.h.b16 %v1020
        %v3899 = vunpack.c.l.b16 %v1021
        %v3900 = vunpack.c.h.b16 %v1021
        %v3901 = vunpack.c.l.b16 %v1022
        %v3902 = vunpack.c.h.b16 %v1022
        %v3903 = vunpack.c.l.b16 %v1023
        %v3904 = vunpack.c.h.b16 %v1023
        %v3905 = vunpack.c.l.b16 %v1024
        %v3906 = vunpack.c.h.b16 %v1024
        %v3907 = vunpack.c.l.b16 %v1025
        %v3908 = vunpack.c.h.b16 %v1025
        %v3909 = vunpack.c.l.b16 %v1026
        %v3910 = vunpack.c.h.b16 %v1026
        %v3911 = vunpack.c.l.b16 %v1027
        %v3912 = vunpack.c.h.b16 %v1027
        %v3913 = vunpack.c.l.b16 %v1028
        %v3914 = vunpack.c.h.b16 %v1028
        %v3915 = vunpack.c.l.b16 %v1029
        %v3916 = vunpack.c.h.b16 %v1029
        %v3917 = vunpack.c.l.b16 %v1030
        %v3918 = vunpack.c.h.b16 %v1030
        %v3919 = vunpack.c.l.b16 %v1031
        %v3920 = vunpack.c.h.b16 %v1031
        %v3921 = vunpack.c.l.b16 %v1032
        %v3922 = vunpack.c.h.b16 %v1032
        %v3923 = vunpack.c.l.b16 %v1033
        %v3924 = vunpack.c.h.b16 %v1033
        %v3925 = vunpack.c.l.b16 %v1034
        %v3926 = vunpack.c.h.b16 %v1034
        %v3927 = vunpack.c.l.b16 %v1035
        %v3928 = vunpack.c.h.b16 %v1035
        %v3929 = vunpack.c.l.b16 %v1036
        %v3930 = vunpack.c.h.b16 %v1036
        %v3931 = vunpack.c.l.b16 %v1037
        %v3932 = vunpack.c.h.b16 %v1037
        %v3933 = vunpack.c.l.b16 %v1038
        %v3934 = vunpack.c.h.b16 %v1038
        %v3935 = vunpack.c.l.b16 %v1039
        %v3936 = vunpack.c.h.b16 %v1039
        %v3937 = vunpack.c.l.b16 %v1040
        %v3938 = vunpack.c.h.b16 %v1040
        %v3939 = vunpack.c.l.b16 %v1041
        %v3940 = vunpack.c.h.b16 %v1041
        %v3941 = vunpack.c.l.b16 %v1042
        %v3942 = vunpack.c.h.b16 %v1042
        %v3943 = vunpack.c.l.b16 %v1043
        %v3944 = vunpack.c.h.b16 %v1043
        %v3945 = vunpack.c.l.b16 %v1044
        %v3946 = vunpack.c.h.b16 %v1044
        %v3947 = vunpack.c.l.b16 %v1045
        %v3948 = vunpack.c.h.b16 %v1045
        %v3949 = vunpack.c.l.b16 %v1046
        %v3950 = vunpack.c.h.b16 %v1046
        %v3951 = vunpack.c.l.b16 %v1047
        %v3952 = vunpack.c.h.b16 %v1047
        %v3953 = vunpack.c.l.b16 %v1048
        %v3954 = vunpack.c.h.b16 %v1048
        %v3955 = vunpack.c.l.b16 %v1049
        %v3956 = vunpack.c.h.b16 %v1049
        %v3957 = vunpack.c.l.b16 %v1050
        %v3958 = vunpack.c.h.b16 %v1050
        %v3959 = vunpack.c.l.b16 %v1051
        %v3960 = vunpack.c.h.b16 %v1051
        %v3961 = vunpack.c.l.b16 %v1052
        %v3962 = vunpack.c.h.b16 %v1052
        %v3963 = vunpack.c.l.b16 %v1053
        %v3964 = vunpack.c.h.b16 %v1053
        %v3965 = vunpack.c.l.b16 %v1054
        %v3966 = vunpack.c.h.b16 %v1054
        %v3967 = vunpack.c.l.b16 %v1055
        %v3968 = vunpack.c.h.b16 %v1055
        %v3969 = vunpack.c.l.b16 %v1056
        %v3970 = vunpack.c.h.b16 %v1056
        %v3971 = vunpack.c.l.b16 %v1057
        %v3972 = vunpack.c.h.b16 %v1057
        %v3973 = vunpack.c.l.b16 %v1058
        %v3974 = vunpack.c.h.b16 %v1058
        %v3975 = vunpack.c.l.b16 %v1059
        %v3976 = vunpack.c.h.b16 %v1059
        %v3977 = vunpack.c.l.b16 %v1060
        %v3978 = vunpack.c.h.b16 %v1060
        %v3979 = vunpack.c.l.b16 %v1061
        %v3980 = vunpack.c.h.b16 %v1061
        %v3981 = vunpack.c.l.b16 %v1062
        %v3982 = vunpack.c.h.b16 %v1062
        %v3983 = vunpack.c.l.b16 %v1063
        %v3984 = vunpack.c.h.b16 %v1063
        %v3985 = vunpack.c.l.b16 %v1064
        %v3986 = vunpack.c.h.b16 %v1064
        %v3987 = vunpack.c.l.b16 %v1065
        %v3988 = vunpack.c.h.b16 %v1065
        %v3989 = vunpack.c.l.b16 %v1066
        %v3990 = vunpack.c.h.b16 %v1066
        %v3991 = vunpack.c.l.b16 %v1067
        %v3992 = vunpack.c.h.b16 %v1067
        %v3993 = vunpack.c.l.b16 %v1068
        %v3994 = vunpack.c.h.b16 %v1068
        %v3995 = vunpack.c.l.b16 %v1069
        %v3996 = vunpack.c.h.b16 %v1069
        %v3997 = vunpack.c.l.b16 %v1070
        %v3998 = vunpack.c.h.b16 %v1070
        %v3999 = vunpack.c.l.b16 %v1071
        %v4000 = vunpack.c.h.b16 %v1071
        %v4001 = vunpack.c.l.b16 %v1072
        %v4002 = vunpack.c.h.b16 %v1072
        %v4003 = vunpack.c.l.b16 %v1073
        %v4004 = vunpack.c.h.b16 %v1073
        %v4005 = vunpack.c.l.b16 %v1074
        %v4006 = vunpack.c.h.b16 %v1074
        %v4007 = vunpack.c.l.b16 %v1075
        %v4008 = vunpack.c.h.b16 %v1075
        %v4009 = vunpack.c.l.b16 %v1076
        %v4010 = vunpack.c.h.b16 %v1076
        %v4011 = vunpack.c.l.b16 %v1077
        %v4012 = vunpack.c.h.b16 %v1077
        %v4013 = vunpack.c.l.b16 %v1078
        %v4014 = vunpack.c.h.b16 %v1078
        %v4015 = vunpack.c.l.b16 %v1079
        %v4016 = vunpack.c.h.b16 %v1079
        %v4017 = vunpack.c.l.b16 %v1080
        %v4018 = vunpack.c.h.b16 %v1080
        %v4019 = vunpack.c.l.b16 %v1081
        %v4020 = vunpack.c.h.b16 %v1081
        %v4021 = vunpack.c.l.b16 %v1082
        %v4022 = vunpack.c.h.b16 %v1082
        %v4023 = vunpack.c.l.b16 %v1083
        %v4024 = vunpack.c.h.b16 %v1083
        %v4025 = vunpack.c.l.b16 %v1084
        %v4026 = vunpack.c.h.b16 %v1084
        %v4027 = vunpack.c.l.b16 %v1085
        %v4028 = vunpack.c.h.b16 %v1085
        %v4029 = vunpack.c.l.b16 %v1086
        %v4030 = vunpack.c.h.b16 %v1086
        %v4031 = vunpack.c.l.b16 %v1087
        %v4032 = vunpack.c.h.b16 %v1087
        %v4033 = vunpack.c.l.b16 %v1088
        %v4034 = vunpack.c.h.b16 %v1088
        %v4035 = vunpack.c.l.b16 %v1089
        %v4036 = vunpack.c.h.b16 %v1089
        %v4037 = vunpack.c.l.b16 %v1090
        %v4038 = vunpack.c.h.b16 %v1090
        %v4039 = vunpack.c.l.b16 %v1091
        %v4040 = vunpack.c.h.b16 %v1091
        %v4041 = vunpack.c.l.b16 %v1092
        %v4042 = vunpack.c.h.b16 %v1092
        %v4043 = vunpack.c.l.b16 %v1093
        %v4044 = vunpack.c.h.b16 %v1093
        %v4045 = vunpack.c.l.b16 %v1094
        %v4046 = vunpack.c.h.b16 %v1094
        %v4047 = vunpack.c.l.b16 %v1095
        %v4048 = vunpack.c.h.b16 %v1095
        %v4049 = vunpack.c.l.b16 %v1096
        %v4050 = vunpack.c.h.b16 %v1096
        %v4051 = vunpack.c.l.b16 %v1097
        %v4052 = vunpack.c.h.b16 %v1097
        %v4053 = vunpack.c.l.b16 %v1098
        %v4054 = vunpack.c.h.b16 %v1098
        %v4055 = vunpack.c.l.b16 %v1099
        %v4056 = vunpack.c.h.b16 %v1099
        %v4057 = vunpack.c.l.b16 %v1100
        %v4058 = vunpack.c.h.b16 %v1100
        %v4059 = vunpack.c.l.b16 %v1101
        %v4060 = vunpack.c.h.b16 %v1101
        %v4061 = vunpack.c.l.b16 %v1102
        %v4062 = vunpack.c.h.b16 %v1102
        %v4063 = vunpack.c.l.b16 %v1103
        %v4064 = vunpack.c.h.b16 %v1103
        %v4065 = vunpack.c.l.b16 %v1104
        %v4066 = vunpack.c.h.b16 %v1104
        %v4067 = vunpack.c.l.b16 %v1105
        %v4068 = vunpack.c.h.b16 %v1105
        %v4069 = vunpack.c.l.b16 %v1106
        %v4070 = vunpack.c.h.b16 %v1106
        %v4071 = vunpack.c.l.b16 %v1107
        %v4072 = vunpack.c.h.b16 %v1107
        %v4073 = vunpack.c.l.b16 %v1108
        %v4074 = vunpack.c.h.b16 %v1108
        %v4075 = vunpack.c.l.b16 %v1109
        %v4076 = vunpack.c.h.b16 %v1109
        %v4077 = vunpack.c.l.b16 %v1110
        %v4078 = vunpack.c.h.b16 %v1110
        %v4079 = vunpack.c.l.b16 %v1111
        %v4080 = vunpack.c.h.b16 %v1111
        %v4081 = vunpack.c.l.b16 %v1112
        %v4082 = vunpack.c.h.b16 %v1112
        %v4083 = vunpack.c.l.b16 %v1113
        %v4084 = vunpack.c.h.b16 %v1113
        %v4085 = vunpack.c.l.b16 %v1114
        %v4086 = vunpack.c.h.b16 %v1114
        %v4087 = vunpack.c.l.b16 %v1115
        %v4088 = vunpack.c.h.b16 %v1115
        %v4089 = vunpack.c.l.b16 %v1116
        %v4090 = vunpack.c.h.b16 %v1116
        %v4091 = vunpack.c.l.b16 %v1117
        %v4092 = vunpack.c.h.b16 %v1117
        %v4093 = vunpack.c.l.b16 %v1118
        %v4094 = vunpack.c.h.b16 %v1118
        %v4095 = vunpack.c.l.b16 %v1119
        %v4096 = vunpack.c.h.b16 %v1119
        %v4097 = vunpack.c.l.b16 %v1120
        %v4098 = vunpack.c.h.b16 %v1120
        %v4099 = vunpack.c.l.b16 %v1121
        %v4100 = vunpack.c.h.b16 %v1121
        %v4101 = vunpack.c.l.b16 %v1122
        %v4102 = vunpack.c.h.b16 %v1122
        %v4103 = vunpack.c.l.b16 %v1123
        %v4104 = vunpack.c.h.b16 %v1123
        %v4105 = vunpack.c.l.b16 %v1124
        %v4106 = vunpack.c.h.b16 %v1124
        %v4107 = vunpack.c.l.b16 %v1125
        %v4108 = vunpack.c.h.b16 %v1125
        %v4109 = vunpack.c.l.b16 %v1126
        %v4110 = vunpack.c.h.b16 %v1126
        %v4111 = vunpack.c.l.b16 %v1127
        %v4112 = vunpack.c.h.b16 %v1127
        %v4113 = vunpack.c.l.b16 %v1128
        %v4114 = vunpack.c.h.b16 %v1128
        %v4115 = vunpack.c.l.b16 %v1129
        %v4116 = vunpack.c.h.b16 %v1129
        %v4117 = vunpack.c.l.b16 %v1130
        %v4118 = vunpack.c.h.b16 %v1130
        %v4119 = vunpack.c.l.b16 %v1131
        %v4120 = vunpack.c.h.b16 %v1131
        %v4121 = vunpack.c.l.b16 %v1132
        %v4122 = vunpack.c.h.b16 %v1132
        %v4123 = vunpack.c.l.b16 %v1133
        %v4124 = vunpack.c.h.b16 %v1133
        %v4125 = vunpack.c.l.b16 %v1134
        %v4126 = vunpack.c.h.b16 %v1134
        %v4127 = vunpack.c.l.b16 %v1135
        %v4128 = vunpack.c.h.b16 %v1135
        %v4129 = vunpack.c.l.b16 %v1136
        %v4130 = vunpack.c.h.b16 %v1136
        %v4131 = vunpack.c.l.b16 %v1137
        %v4132 = vunpack.c.h.b16 %v1137
        %v4133 = vunpack.c.l.b16 %v1138
        %v4134 = vunpack.c.h.b16 %v1138
        %v4135 = vunpack.c.l.b16 %v1139
        %v4136 = vunpack.c.h.b16 %v1139
        %v4137 = vunpack.c.l.b16 %v1140
        %v4138 = vunpack.c.h.b16 %v1140
        %v4139 = vunpack.c.l.b16 %v1141
        %v4140 = vunpack.c.h.b16 %v1141
        %v4141 = vunpack.c.l.b16 %v1142
        %v4142 = vunpack.c.h.b16 %v1142
        %v4143 = vunpack.c.l.b16 %v1143
        %v4144 = vunpack.c.h.b16 %v1143
        %v4145 = vunpack.c.l.b16 %v1144
        %v4146 = vunpack.c.h.b16 %v1144
        %v4147 = vunpack.c.l.b16 %v1145
        %v4148 = vunpack.c.h.b16 %v1145
        %v4149 = vunpack.c.l.b16 %v1146
        %v4150 = vunpack.c.h.b16 %v1146
        %v4151 = vunpack.c.l.b16 %v1147
        %v4152 = vunpack.c.h.b16 %v1147
        %v4153 = vunpack.c.l.b16 %v1148
        %v4154 = vunpack.c.h.b16 %v1148
        %v4155 = vunpack.c.l.b16 %v1149
        %v4156 = vunpack.c.h.b16 %v1149
        %v4157 = vunpack.c.l.b16 %v1150
        %v4158 = vunpack.c.h.b16 %v1150
        %v4159 = vunpack.c.l.b16 %v1151
        %v4160 = vunpack.c.h.b16 %v1151
        %v4161 = vunpack.c.l.b16 %v1152
        %v4162 = vunpack.c.h.b16 %v1152
        %v4163 = vunpack.c.l.b16 %v1153
        %v4164 = vunpack.c.h.b16 %v1153
        %v4165 = vunpack.c.l.b16 %v1154
        %v4166 = vunpack.c.h.b16 %v1154
        %v4167 = vunpack.c.l.b16 %v1155
        %v4168 = vunpack.c.h.b16 %v1155
        %v4169 = vunpack.c.l.b16 %v1156
        %v4170 = vunpack.c.h.b16 %v1156
        %v4171 = vunpack.c.l.b16 %v1157
        %v4172 = vunpack.c.h.b16 %v1157
        %v4173 = vunpack.c.l.b16 %v1158
        %v4174 = vunpack.c.h.b16 %v1158
        %v4175 = vunpack.c.l.b16 %v1159
        %v4176 = vunpack.c.h.b16 %v1159
        %v4177 = vunpack.c.l.b16 %v1160
        %v4178 = vunpack.c.h.b16 %v1160
        %v4179 = vunpack.c.l.b16 %v1161
        %v4180 = vunpack.c.h.b16 %v1161
        %v4181 = vunpack.c.l.b16 %v1162
        %v4182 = vunpack.c.h.b16 %v1162
        %v4183 = vunpack.c.l.b16 %v1163
        %v4184 = vunpack.c.h.b16 %v1163
        %v4185 = vunpack.c.l.b16 %v1164
        %v4186 = vunpack.c.h.b16 %v1164
        %v4187 = vunpack.c.l.b16 %v1165
        %v4188 = vunpack.c.h.b16 %v1165
        %v4189 = vunpack.c.l.b16 %v1166
        %v4190 = vunpack.c.h.b16 %v1166
        %v4191 = vunpack.c.l.b16 %v1167
        %v4192 = vunpack.c.h.b16 %v1167
        %v4193 = vunpack.c.l.b16 %v1168
        %v4194 = vunpack.c.h.b16 %v1168
        %v4195 = vunpack.c.l.b16 %v1169
        %v4196 = vunpack.c.h.b16 %v1169
        %v4197 = vunpack.c.l.b16 %v1170
        %v4198 = vunpack.c.h.b16 %v1170
        %v4199 = vunpack.c.l.b16 %v1171
        %v4200 = vunpack.c.h.b16 %v1171
        %v4201 = vunpack.c.l.b16 %v1172
        %v4202 = vunpack.c.h.b16 %v1172
        %v4203 = vunpack.c.l.b16 %v1173
        %v4204 = vunpack.c.h.b16 %v1173
        %v4205 = vunpack.c.l.b16 %v1174
        %v4206 = vunpack.c.h.b16 %v1174
        %v4207 = vunpack.c.l.b16 %v1175
        %v4208 = vunpack.c.h.b16 %v1175
        %v4209 = vunpack.c.l.b16 %v1176
        %v4210 = vunpack.c.h.b16 %v1176
        %v4211 = vunpack.c.l.b16 %v1177
        %v4212 = vunpack.c.h.b16 %v1177
        %v4213 = vunpack.c.l.b16 %v1178
        %v4214 = vunpack.c.h.b16 %v1178
        %v4215 = vunpack.c.l.b16 %v1179
        %v4216 = vunpack.c.h.b16 %v1179
        %v4217 = vunpack.c.l.b16 %v1180
        %v4218 = vunpack.c.h.b16 %v1180
        %v4219 = vunpack.c.l.b16 %v1181
        %v4220 = vunpack.c.h.b16 %v1181
        %v4221 = vunpack.c.l.b16 %v1182
        %v4222 = vunpack.c.h.b16 %v1182
        %v4223 = vunpack.c.l.b16 %v1183
        %v4224 = vunpack.c.h.b16 %v1183
        %v4225 = vunpack.c.l.b16 %v1184
        %v4226 = vunpack.c.h.b16 %v1184
        %v4227 = vunpack.c.l.b16 %v1185
        %v4228 = vunpack.c.h.b16 %v1185
        %v4229 = vunpack.c.l.b16 %v1186
        %v4230 = vunpack.c.h.b16 %v1186
        %v4231 = vunpack.c.l.b16 %v1187
        %v4232 = vunpack.c.h.b16 %v1187
        %v4233 = vunpack.c.l.b16 %v1188
        %v4234 = vunpack.c.h.b16 %v1188
        %v4235 = vunpack.c.l.b16 %v1189
        %v4236 = vunpack.c.h.b16 %v1189
        %v4237 = vunpack.c.l.b16 %v1190
        %v4238 = vunpack.c.h.b16 %v1190
        %v4239 = vunpack.c.l.b16 %v1191
        %v4240 = vunpack.c.h.b16 %v1191
        %v4241 = vunpack.c.l.b16 %v1192
        %v4242 = vunpack.c.h.b16 %v1192
        %v4243 = vunpack.c.l.b16 %v1193
        %v4244 = vunpack.c.h.b16 %v1193
        %v4245 = vunpack.c.l.b16 %v1194
        %v4246 = vunpack.c.h.b16 %v1194
        %v4247 = vunpack.c.l.b16 %v1195
        %v4248 = vunpack.c.h.b16 %v1195
        %v4249 = vunpack.c.l.b16 %v1196
        %v4250 = vunpack.c.h.b16 %v1196
        %v4251 = vunpack.c.l.b16 %v1197
        %v4252 = vunpack.c.h.b16 %v1197
        %v4253 = vunpack.c.l.b16 %v1198
        %v4254 = vunpack.c.h.b16 %v1198
        %v4255 = vunpack.c.l.b16 %v1199
        %v4256 = vunpack.c.h.b16 %v1199
        %v4257 = vunpack.c.l.b16 %v1200
        %v4258 = vunpack.c.h.b16 %v1200
        %v4259 = vunpack.c.l.b16 %v1201
        %v4260 = vunpack.c.h.b16 %v1201
        %v4261 = vunpack.c.l.b16 %v1202
        %v4262 = vunpack.c.h.b16 %v1202
        %v4263 = vunpack.c.l.b16 %v1203
        %v4264 = vunpack.c.h.b16 %v1203
        %v4265 = vunpack.c.l.b16 %v1204
        %v4266 = vunpack.c.h.b16 %v1204
        %v4267 = vunpack.c.l.b16 %v1205
        %v4268 = vunpack.c.h.b16 %v1205
        %v4269 = vunpack.c.l.b16 %v1206
        %v4270 = vunpack.c.h.b16 %v1206
        %v4271 = vunpack.c.l.b16 %v1207
        %v4272 = vunpack.c.h.b16 %v1207
        %v4273 = vunpack.c.l.b16 %v1208
        %v4274 = vunpack.c.h.b16 %v1208
        %v4275 = vunpack.c.l.b16 %v1209
        %v4276 = vunpack.c.h.b16 %v1209
        %v4277 = vunpack.c.l.b16 %v1210
        %v4278 = vunpack.c.h.b16 %v1210
        %v4279 = vunpack.c.l.b16 %v1211
        %v4280 = vunpack.c.h.b16 %v1211
        %v4281 = vunpack.c.l.b16 %v1212
        %v4282 = vunpack.c.h.b16 %v1212
        %v4283 = vunpack.c.l.b16 %v1213
        %v4284 = vunpack.c.h.b16 %v1213
        %v4285 = vunpack.c.l.b16 %v1214
        %v4286 = vunpack.c.h.b16 %v1214
        %v4287 = vunpack.c.l.b16 %v1215
        %v4288 = vunpack.c.h.b16 %v1215
        %v4289 = vunpack.c.l.b16 %v1216
        %v4290 = vunpack.c.h.b16 %v1216
        %v4291 = vunpack.c.l.b16 %v1217
        %v4292 = vunpack.c.h.b16 %v1217
        %v4293 = vunpack.c.l.b16 %v1218
        %v4294 = vunpack.c.h.b16 %v1218
        %v4295 = vunpack.c.l.b16 %v1219
        %v4296 = vunpack.c.h.b16 %v1219
        %v4297 = vunpack.c.l.b16 %v1220
        %v4298 = vunpack.c.h.b16 %v1220
        %v4299 = vunpack.c.l.b16 %v1221
        %v4300 = vunpack.c.h.b16 %v1221
        %v4301 = vunpack.c.l.b16 %v1222
        %v4302 = vunpack.c.h.b16 %v1222
        %v4303 = vunpack.c.l.b16 %v1223
        %v4304 = vunpack.c.h.b16 %v1223
        %v4305 = vunpack.c.l.b16 %v1224
        %v4306 = vunpack.c.h.b16 %v1224
        %v4307 = vunpack.c.l.b16 %v1225
        %v4308 = vunpack.c.h.b16 %v1225
        %v4309 = vunpack.c.l.b16 %v1226
        %v4310 = vunpack.c.h.b16 %v1226
        %v4311 = vunpack.c.l.b16 %v1227
        %v4312 = vunpack.c.h.b16 %v1227
        %v4313 = vunpack.c.l.b16 %v1228
        %v4314 = vunpack.c.h.b16 %v1228
        %v4315 = vunpack.c.l.b16 %v1229
        %v4316 = vunpack.c.h.b16 %v1229
        %v4317 = vunpack.c.l.b16 %v1230
        %v4318 = vunpack.c.h.b16 %v1230
        %v4319 = vunpack.c.l.b16 %v1231
        %v4320 = vunpack.c.h.b16 %v1231
        %v4321 = vunpack.c.l.b16 %v1232
        %v4322 = vunpack.c.h.b16 %v1232
        %v4323 = vunpack.c.l.b16 %v1233
        %v4324 = vunpack.c.h.b16 %v1233
        %v4325 = vunpack.c.l.b16 %v1234
        %v4326 = vunpack.c.h.b16 %v1234
        %v4327 = vunpack.c.l.b16 %v1235
        %v4328 = vunpack.c.h.b16 %v1235
        %v4329 = vunpack.c.l.b16 %v1236
        %v4330 = vunpack.c.h.b16 %v1236
        %v4331 = vunpack.c.l.b16 %v1237
        %v4332 = vunpack.c.h.b16 %v1237
        %v4333 = vunpack.c.l.b16 %v1238
        %v4334 = vunpack.c.h.b16 %v1238
        %v4335 = vunpack.c.l.b16 %v1239
        %v4336 = vunpack.c.h.b16 %v1239
        %v4337 = vunpack.c.l.b16 %v1240
        %v4338 = vunpack.c.h.b16 %v1240
        %v4339 = vunpack.c.l.b16 %v1241
        %v4340 = vunpack.c.h.b16 %v1241
        %v4341 = vunpack.c.l.b16 %v1242
        %v4342 = vunpack.c.h.b16 %v1242
        %v4343 = vunpack.c.l.b16 %v1243
        %v4344 = vunpack.c.h.b16 %v1243
        %v4345 = vunpack.c.l.b16 %v1244
        %v4346 = vunpack.c.h.b16 %v1244
        %v4347 = vunpack.c.l.b16 %v1245
        %v4348 = vunpack.c.h.b16 %v1245
        %v4349 = vunpack.c.l.b16 %v1246
        %v4350 = vunpack.c.h.b16 %v1246
        %v4351 = vunpack.c.l.b16 %v1247
        %v4352 = vunpack.c.h.b16 %v1247
        %v4353 = vunpack.c.l.b16 %v1248
        %v4354 = vunpack.c.h.b16 %v1248
        %v4355 = vunpack.c.l.b16 %v1249
        %v4356 = vunpack.c.h.b16 %v1249
        %v4357 = vunpack.c.l.b16 %v1250
        %v4358 = vunpack.c.h.b16 %v1250
        %v4359 = vunpack.c.l.b16 %v1251
        %v4360 = vunpack.c.h.b16 %v1251
        %v4361 = vunpack.c.l.b16 %v1252
        %v4362 = vunpack.c.h.b16 %v1252
        %v4363 = vunpack.c.l.b16 %v1253
        %v4364 = vunpack.c.h.b16 %v1253
        %v4365 = vunpack.c.l.b16 %v1254
        %v4366 = vunpack.c.h.b16 %v1254
        %v4367 = vunpack.c.l.b16 %v1255
        %v4368 = vunpack.c.h.b16 %v1255
        %v4369 = vunpack.c.l.b16 %v1256
        %v4370 = vunpack.c.h.b16 %v1256
        %v4371 = vunpack.c.l.b16 %v1257
        %v4372 = vunpack.c.h.b16 %v1257
        %v4373 = vunpack.c.l.b16 %v1258
        %v4374 = vunpack.c.h.b16 %v1258
        %v4375 = vunpack.c.l.b16 %v1259
        %v4376 = vunpack.c.h.b16 %v1259
        %v4377 = vunpack.c.l.b16 %v1260
        %v4378 = vunpack.c.h.b16 %v1260
        %v4379 = vunpack.c.l.b16 %v1261
        %v4380 = vunpack.c.h.b16 %v1261
        %v4381 = vunpack.c.l.b16 %v1262
        %v4382 = vunpack.c.h.b16 %v1262
        %v4383 = vunpack.c.l.b16 %v1263
        %v4384 = vunpack.c.h.b16 %v1263
        %v4385 = vunpack.c.l.b16 %v1264
        %v4386 = vunpack.c.h.b16 %v1264
        %v4387 = vunpack.c.l.b16 %v1265
        %v4388 = vunpack.c.h.b16 %v1265
        %v4389 = vunpack.c.l.b16 %v1266
        %v4390 = vunpack.c.h.b16 %v1266
        %v4391 = vunpack.c.l.b16 %v1267
        %v4392 = vunpack.c.h.b16 %v1267
        %v4393 = vunpack.c.l.b16 %v1268
        %v4394 = vunpack.c.h.b16 %v1268
        %v4395 = vunpack.c.l.b16 %v1269
        %v4396 = vunpack.c.h.b16 %v1269
        %v4397 = vunpack.c.l.b16 %v1270
        %v4398 = vunpack.c.h.b16 %v1270
        %v4399 = vunpack.c.l.b16 %v1271
        %v4400 = vunpack.c.h.b16 %v1271
        %v4401 = vunpack.c.l.b16 %v1272
        %v4402 = vunpack.c.h.b16 %v1272
        %v4403 = vunpack.c.l.b16 %v1273
        %v4404 = vunpack.c.h.b16 %v1273
        %v4405 = vunpack.c.l.b16 %v1274
        %v4406 = vunpack.c.h.b16 %v1274
        %v4407 = vunpack.c.l.b16 %v1275
        %v4408 = vunpack.c.h.b16 %v1275
        %v4409 = vunpack.c.l.b16 %v1276
        %v4410 = vunpack.c.h.b16 %v1276
        %v4411 = vunpack.c.l.b16 %v1277
        %v4412 = vunpack.c.h.b16 %v1277
        %v4413 = vunpack.c.l.b16 %v1278
        %v4414 = vunpack.c.h.b16 %v1278
        %v4415 = vunpack.c.l.b16 %v1279
        %v4416 = vunpack.c.h.b16 %v1279
        %v4417 = vunpack.c.l.b16 %v1280
        %v4418 = vunpack.c.h.b16 %v1280
        %v4419 = vunpack.c.l.b16 %v1281
        %v4420 = vunpack.c.h.b16 %v1281
        %v4421 = vunpack.c.l.b16 %v1282
        %v4422 = vunpack.c.h.b16 %v1282
        %v4423 = vunpack.c.l.b16 %v1283
        %v4424 = vunpack.c.h.b16 %v1283
        %v4425 = vunpack.c.l.b16 %v1284
        %v4426 = vunpack.c.h.b16 %v1284
        %v4427 = vunpack.c.l.b16 %v1285
        %v4428 = vunpack.c.h.b16 %v1285
        %v4429 = vunpack.c.l.b16 %v1286
        %v4430 = vunpack.c.h.b16 %v1286
        %v4431 = vunpack.c.l.b16 %v1287
        %v4432 = vunpack.c.h.b16 %v1287
        %v4433 = vunpack.c.l.b16 %v1288
        %v4434 = vunpack.c.h.b16 %v1288
        %v4435 = vunpack.c.l.b16 %v1289
        %v4436 = vunpack.c.h.b16 %v1289
        %v4437 = vunpack.c.l.b16 %v1290
        %v4438 = vunpack.c.h.b16 %v1290
        %v4439 = vunpack.c.l.b16 %v1291
        %v4440 = vunpack.c.h.b16 %v1291
        %v4441 = vunpack.c.l.b16 %v1292
        %v4442 = vunpack.c.h.b16 %v1292
        %v4443 = vunpack.c.l.b16 %v1293
        %v4444 = vunpack.c.h.b16 %v1293
        %v4445 = vunpack.c.l.b16 %v1294
        %v4446 = vunpack.c.h.b16 %v1294
        %v4447 = vunpack.c.l.b16 %v1295
        %v4448 = vunpack.c.h.b16 %v1295
        %v4449 = vunpack.c.l.b16 %v1296
        %v4450 = vunpack.c.h.b16 %v1296
        %v4451 = vunpack.c.l.b16 %v1297
        %v4452 = vunpack.c.h.b16 %v1297
        %v4453 = vunpack.c.l.b16 %v1298
        %v4454 = vunpack.c.h.b16 %v1298
        %v4455 = vunpack.c.l.b16 %v1299
        %v4456 = vunpack.c.h.b16 %v1299
        %v4457 = vunpack.c.l.b16 %v1300
        %v4458 = vunpack.c.h.b16 %v1300
        %v4459 = vunpack.c.l.b16 %v1301
        %v4460 = vunpack.c.h.b16 %v1301
        %v4461 = vunpack.c.l.b16 %v1302
        %v4462 = vunpack.c.h.b16 %v1302
        %v4463 = vunpack.c.l.b16 %v1303
        %v4464 = vunpack.c.h.b16 %v1303
        %v4465 = vunpack.c.l.b16 %v1304
        %v4466 = vunpack.c.h.b16 %v1304
        %v4467 = vunpack.c.l.b16 %v1305
        %v4468 = vunpack.c.h.b16 %v1305
        %v4469 = vunpack.c.l.b16 %v1306
        %v4470 = vunpack.c.h.b16 %v1306
        %v4471 = vunpack.c.l.b16 %v1307
        %v4472 = vunpack.c.h.b16 %v1307
        %v4473 = vunpack.c.l.b16 %v1308
        %v4474 = vunpack.c.h.b16 %v1308
        %v4475 = vunpack.c.l.b16 %v1309
        %v4476 = vunpack.c.h.b16 %v1309
        %v4477 = vunpack.c.l.b16 %v1310
        %v4478 = vunpack.c.h.b16 %v1310
        %v4479 = vunpack.c.l.b16 %v1311
        %v4480 = vunpack.c.h.b16 %v1311
        %v4481 = vunpack.c.l.b16 %v1312
        %v4482 = vunpack.c.h.b16 %v1312
        %v4483 = vunpack.c.l.b16 %v1313
        %v4484 = vunpack.c.h.b16 %v1313
        %v4485 = vunpack.c.l.b16 %v1314
        %v4486 = vunpack.c.h.b16 %v1314
        %v4487 = vunpack.c.l.b16 %v1315
        %v4488 = vunpack.c.h.b16 %v1315
        %v4489 = vunpack.c.l.b16 %v1316
        %v4490 = vunpack.c.h.b16 %v1316
        %v4491 = vunpack.c.l.b16 %v1317
        %v4492 = vunpack.c.h.b16 %v1317
        %v4493 = vunpack.c.l.b16 %v1318
        %v4494 = vunpack.c.h.b16 %v1318
        %v4495 = vunpack.c.l.b16 %v1319
        %v4496 = vunpack.c.h.b16 %v1319
        %v4497 = vunpack.c.l.b16 %v1320
        %v4498 = vunpack.c.h.b16 %v1320
        %v4499 = vunpack.c.l.b16 %v1321
        %v4500 = vunpack.c.h.b16 %v1321
        %v4501 = vunpack.c.l.b16 %v1322
        %v4502 = vunpack.c.h.b16 %v1322
        %v4503 = vunpack.c.l.b16 %v1323
        %v4504 = vunpack.c.h.b16 %v1323
        %v4505 = vunpack.c.l.b16 %v1324
        %v4506 = vunpack.c.h.b16 %v1324
        %v4507 = vunpack.c.l.b16 %v1325
        %v4508 = vunpack.c.h.b16 %v1325
        %v4509 = vunpack.c.l.b16 %v1326
        %v4510 = vunpack.c.h.b16 %v1326
        %v4511 = vpack.c.b16 %v2467, %v2463
        %v4512 = vpack.c.b16 %v2468, %v2464
        %v4513 = vpack.c.b16 %v2469, %v2465
        %v4514 = vpack.c.b16 %v2470, %v2466
        %v4515 = vpack.c.b16 %v2475, %v2471
        %v4516 = vpack.c.b16 %v2476, %v2472
        %v4517 = vpack.c.b16 %v2477, %v2473
        %v4518 = vpack.c.b16 %v2478, %v2474
        %v4519 = vpack.c.b16 %v2483, %v2479
        %v4520 = vpack.c.b16 %v2484, %v2480
        %v4521 = vpack.c.b16 %v2485, %v2481
        %v4522 = vpack.c.b16 %v2486, %v2482
        %v4523 = vpack.c.b16 %v2491, %v2487
        %v4524 = vpack.c.b16 %v2492, %v2488
        %v4525 = vpack.c.b16 %v2493, %v2489
        %v4526 = vpack.c.b16 %v2494, %v2490
        %v4527 = vpack.c.b16 %v2499, %v2495
        %v4528 = vpack.c.b16 %v2500, %v2496
        %v4529 = vpack.c.b16 %v2501, %v2497
        %v4530 = vpack.c.b16 %v2502, %v2498
        %v4531 = vpack.c.b16 %v2507, %v2503
        %v4532 = vpack.c.b16 %v2508, %v2504
        %v4533 = vpack.c.b16 %v2509, %v2505
        %v4534 = vpack.c.b16 %v2510, %v2506
        %v4535 = vpack.c.b16 %v2515, %v2511
        %v4536 = vpack.c.b16 %v2516, %v2512
        %v4537 = vpack.c.b16 %v2517, %v2513
        %v4538 = vpack.c.b16 %v2518, %v2514
        %v4539 = vpack.c.b16 %v2523, %v2519
        %v4540 = vpack.c.b16 %v2524, %v2520
        %v4541 = vpack.c.b16 %v2525, %v2521
        %v4542 = vpack.c.b16 %v2526, %v2522
        %v4543 = vpack.c.b16 %v2531, %v2527
        %v4544 = vpack.c.b16 %v2532, %v2528
        %v4545 = vpack.c.b16 %v2533, %v2529
        %v4546 = vpack.c.b16 %v2534, %v2530
        %v4547 = vpack.c.b16 %v2539, %v2535
        %v4548 = vpack.c.b16 %v2540, %v2536
        %v4549 = vpack.c.b16 %v2541, %v2537
        %v4550 = vpack.c.b16 %v2542, %v2538
        %v4551 = vpack.c.b16 %v2547, %v2543
        %v4552 = vpack.c.b16 %v2548, %v2544
        %v4553 = vpack.c.b16 %v2549, %v2545
        %v4554 = vpack.c.b16 %v2550, %v2546
        %v4555 = vpack.c.b16 %v2555, %v2551
        %v4556 = vpack.c.b16 %v2556, %v2552
        %v4557 = vpack.c.b16 %v2557, %v2553
        %v4558 = vpack.c.b16 %v2558, %v2554
        %v4559 = vpack.c.b16 %v2563, %v2559
        %v4560 = vpack.c.b16 %v2564, %v2560
        %v4561 = vpack.c.b16 %v2565, %v2561
        %v4562 = vpack.c.b16 %v2566, %v2562
        %v4563 = vpack.c.b16 %v2571, %v2567
        %v4564 = vpack.c.b16 %v2572, %v2568
        %v4565 = vpack.c.b16 %v2573, %v2569
        %v4566 = vpack.c.b16 %v2574, %v2570
        %v4567 = vpack.c.b16 %v2579, %v2575
        %v4568 = vpack.c.b16 %v2580, %v2576
        %v4569 = vpack.c.b16 %v2581, %v2577
        %v4570 = vpack.c.b16 %v2582, %v2578
        %v4571 = vpack.c.b16 %v2587, %v2583
        %v4572 = vpack.c.b16 %v2588, %v2584
        %v4573 = vpack.c.b16 %v2589, %v2585
        %v4574 = vpack.c.b16 %v2590, %v2586
        %v4575 = vpack.c.b16 %v2595, %v2591
        %v4576 = vpack.c.b16 %v2596, %v2592
        %v4577 = vpack.c.b16 %v2597, %v2593
        %v4578 = vpack.c.b16 %v2598, %v2594
        %v4579 = vpack.c.b16 %v2603, %v2599
        %v4580 = vpack.c.b16 %v2604, %v2600
        %v4581 = vpack.c.b16 %v2605, %v2601
        %v4582 = vpack.c.b16 %v2606, %v2602
        %v4583 = vpack.c.b16 %v2611, %v2607
        %v4584 = vpack.c.b16 %v2612, %v2608
        %v4585 = vpack.c.b16 %v2613, %v2609
        %v4586 = vpack.c.b16 %v2614, %v2610
        %v4587 = vpack.c.b16 %v2619, %v2615
        %v4588 = vpack.c.b16 %v2620, %v2616
        %v4589 = vpack.c.b16 %v2621, %v2617
        %v4590 = vpack.c.b16 %v2622, %v2618
        %v4591 = vpack.c.b16 %v2627, %v2623
        %v4592 = vpack.c.b16 %v2628, %v2624
        %v4593 = vpack.c.b16 %v2629, %v2625
        %v4594 = vpack.c.b16 %v2630, %v2626
        %v4595 = vpack.c.b16 %v2635, %v2631
        %v4596 = vpack.c.b16 %v2636, %v2632
        %v4597 = vpack.c.b16 %v2637, %v2633
        %v4598 = vpack.c.b16 %v2638, %v2634
        %v4599 = vpack.c.b16 %v2643, %v2639
        %v4600 = vpack.c.b16 %v2644, %v2640
        %v4601 = vpack.c.b16 %v2645, %v2641
        %v4602 = vpack.c.b16 %v2646, %v2642
        %v4603 = vpack.c.b16 %v2651, %v2647
        %v4604 = vpack.c.b16 %v2652, %v2648
        %v4605 = vpack.c.b16 %v2653, %v2649
        %v4606 = vpack.c.b16 %v2654, %v2650
        %v4607 = vpack.c.b16 %v2659, %v2655
        %v4608 = vpack.c.b16 %v2660, %v2656
        %v4609 = vpack.c.b16 %v2661, %v2657
        %v4610 = vpack.c.b16 %v2662, %v2658
        %v4611 = vpack.c.b16 %v2667, %v2663
        %v4612 = vpack.c.b16 %v2668, %v2664
        %v4613 = vpack.c.b16 %v2669, %v2665
        %v4614 = vpack.c.b16 %v2670, %v2666
        %v4615 = vpack.c.b16 %v2675, %v2671
        %v4616 = vpack.c.b16 %v2676, %v2672
        %v4617 = vpack.c.b16 %v2677, %v2673
        %v4618 = vpack.c.b16 %v2678, %v2674
        %v4619 = vpack.c.b16 %v2683, %v2679
        %v4620 = vpack.c.b16 %v2684, %v2680
        %v4621 = vpack.c.b16 %v2685, %v2681
        %v4622 = vpack.c.b16 %v2686, %v2682
        %v4623 = vpack.c.b16 %v2691, %v2687
        %v4624 = vpack.c.b16 %v2692, %v2688
        %v4625 = vpack.c.b16 %v2693, %v2689
        %v4626 = vpack.c.b16 %v2694, %v2690
        %v4627 = vpack.c.b16 %v2699, %v2695
        %v4628 = vpack.c.b16 %v2700, %v2696
        %v4629 = vpack.c.b16 %v2701, %v2697
        %v4630 = vpack.c.b16 %v2702, %v2698
        %v4631 = vpack.c.b16 %v2707, %v2703
        %v4632 = vpack.c.b16 %v2708, %v2704
        %v4633 = vpack.c.b16 %v2709, %v2705
        %v4634 = vpack.c.b16 %v2710, %v2706
        %v4635 = vpack.c.b16 %v2715, %v2711
        %v4636 = vpack.c.b16 %v2716, %v2712
        %v4637 = vpack.c.b16 %v2717, %v2713
        %v4638 = vpack.c.b16 %v2718, %v2714
        %v4639 = vpack.c.b16 %v2723, %v2719
        %v4640 = vpack.c.b16 %v2724, %v2720
        %v4641 = vpack.c.b16 %v2725, %v2721
        %v4642 = vpack.c.b16 %v2726, %v2722
        %v4643 = vpack.c.b16 %v2731, %v2727
        %v4644 = vpack.c.b16 %v2732, %v2728
        %v4645 = vpack.c.b16 %v2733, %v2729
        %v4646 = vpack.c.b16 %v2734, %v2730
        %v4647 = vpack.c.b16 %v2739, %v2735
        %v4648 = vpack.c.b16 %v2740, %v2736
        %v4649 = vpack.c.b16 %v2741, %v2737
        %v4650 = vpack.c.b16 %v2742, %v2738
        %v4651 = vpack.c.b16 %v2747, %v2743
        %v4652 = vpack.c.b16 %v2748, %v2744
        %v4653 = vpack.c.b16 %v2749, %v2745
        %v4654 = vpack.c.b16 %v2750, %v2746
        %v4655 = vpack.c.b16 %v2755, %v2751
        %v4656 = vpack.c.b16 %v2756, %v2752
        %v4657 = vpack.c.b16 %v2757, %v2753
        %v4658 = vpack.c.b16 %v2758, %v2754
        %v4659 = vpack.c.b16 %v2763, %v2759
        %v4660 = vpack.c.b16 %v2764, %v2760
        %v4661 = vpack.c.b16 %v2765, %v2761
        %v4662 = vpack.c.b16 %v2766, %v2762
        %v4663 = vpack.c.b16 %v2771, %v2767
        %v4664 = vpack.c.b16 %v2772, %v2768
        %v4665 = vpack.c.b16 %v2773, %v2769
        %v4666 = vpack.c.b16 %v2774, %v2770
        %v4667 = vpack.c.b16 %v2779, %v2775
        %v4668 = vpack.c.b16 %v2780, %v2776
        %v4669 = vpack.c.b16 %v2781, %v2777
        %v4670 = vpack.c.b16 %v2782, %v2778
        %v4671 = vpack.c.b16 %v2787, %v2783
        %v4672 = vpack.c.b16 %v2788, %v2784
        %v4673 = vpack.c.b16 %v2789, %v2785
        %v4674 = vpack.c.b16 %v2790, %v2786
        %v4675 = vpack.c.b16 %v2795, %v2791
        %v4676 = vpack.c.b16 %v2796, %v2792
        %v4677 = vpack.c.b16 %v2797, %v2793
        %v4678 = vpack.c.b16 %v2798, %v2794
        %v4679 = vpack.c.b16 %v2803, %v2799
        %v4680 = vpack.c.b16 %v2804, %v2800
        %v4681 = vpack.c.b16 %v2805, %v2801
        %v4682 = vpack.c.b16 %v2806, %v2802
        %v4683 = vpack.c.b16 %v2811, %v2807
        %v4684 = vpack.c.b16 %v2812, %v2808
        %v4685 = vpack.c.b16 %v2813, %v2809
        %v4686 = vpack.c.b16 %v2814, %v2810
        %v4687 = vpack.c.b16 %v2819, %v2815
        %v4688 = vpack.c.b16 %v2820, %v2816
        %v4689 = vpack.c.b16 %v2821, %v2817
        %v4690 = vpack.c.b16 %v2822, %v2818
        %v4691 = vpack.c.b16 %v2827, %v2823
        %v4692 = vpack.c.b16 %v2828, %v2824
        %v4693 = vpack.c.b16 %v2829, %v2825
        %v4694 = vpack.c.b16 %v2830, %v2826
        %v4695 = vpack.c.b16 %v2835, %v2831
        %v4696 = vpack.c.b16 %v2836, %v2832
        %v4697 = vpack.c.b16 %v2837, %v2833
        %v4698 = vpack.c.b16 %v2838, %v2834
        %v4699 = vpack.c.b16 %v2843, %v2839
        %v4700 = vpack.c.b16 %v2844, %v2840
        %v4701 = vpack.c.b16 %v2845, %v2841
        %v4702 = vpack.c.b16 %v2846, %v2842
        %v4703 = vpack.c.b16 %v2851, %v2847
        %v4704 = vpack.c.b16 %v2852, %v2848
        %v4705 = vpack.c.b16 %v2853, %v2849
        %v4706 = vpack.c.b16 %v2854, %v2850
        %v4707 = vpack.c.b16 %v2859, %v2855
        %v4708 = vpack.c.b16 %v2860, %v2856
        %v4709 = vpack.c.b16 %v2861, %v2857
        %v4710 = vpack.c.b16 %v2862, %v2858
        %v4711 = vpack.c.b16 %v2867, %v2863
        %v4712 = vpack.c.b16 %v2868, %v2864
        %v4713 = vpack.c.b16 %v2869, %v2865
        %v4714 = vpack.c.b16 %v2870, %v2866
        %v4715 = vpack.c.b16 %v2875, %v2871
        %v4716 = vpack.c.b16 %v2876, %v2872
        %v4717 = vpack.c.b16 %v2877, %v2873
        %v4718 = vpack.c.b16 %v2878, %v2874
        %v4719 = vpack.c.b16 %v2883, %v2879
        %v4720 = vpack.c.b16 %v2884, %v2880
        %v4721 = vpack.c.b16 %v2885, %v2881
        %v4722 = vpack.c.b16 %v2886, %v2882
        %v4723 = vpack.c.b16 %v2891, %v2887
        %v4724 = vpack.c.b16 %v2892, %v2888
        %v4725 = vpack.c.b16 %v2893, %v2889
        %v4726 = vpack.c.b16 %v2894, %v2890
        %v4727 = vpack.c.b16 %v2899, %v2895
        %v4728 = vpack.c.b16 %v2900, %v2896
        %v4729 = vpack.c.b16 %v2901, %v2897
        %v4730 = vpack.c.b16 %v2902, %v2898
        %v4731 = vpack.c.b16 %v2907, %v2903
        %v4732 = vpack.c.b16 %v2908, %v2904
        %v4733 = vpack.c.b16 %v2909, %v2905
        %v4734 = vpack.c.b16 %v2910, %v2906
        %v4735 = vpack.c.b16 %v2915, %v2911
        %v4736 = vpack.c.b16 %v2916, %v2912
        %v4737 = vpack.c.b16 %v2917, %v2913
        %v4738 = vpack.c.b16 %v2918, %v2914
        %v4739 = vpack.c.b16 %v2923, %v2919
        %v4740 = vpack.c.b16 %v2924, %v2920
        %v4741 = vpack.c.b16 %v2925, %v2921
        %v4742 = vpack.c.b16 %v2926, %v2922
        %v4743 = vpack.c.b16 %v2931, %v2927
        %v4744 = vpack.c.b16 %v2932, %v2928
        %v4745 = vpack.c.b16 %v2933, %v2929
        %v4746 = vpack.c.b16 %v2934, %v2930
        %v4747 = vpack.c.b16 %v2939, %v2935
        %v4748 = vpack.c.b16 %v2940, %v2936
        %v4749 = vpack.c.b16 %v2941, %v2937
        %v4750 = vpack.c.b16 %v2942, %v2938
        %v4751 = vpack.c.b16 %v2947, %v2943
        %v4752 = vpack.c.b16 %v2948, %v2944
        %v4753 = vpack.c.b16 %v2949, %v2945
        %v4754 = vpack.c.b16 %v2950, %v2946
        %v4755 = vpack.c.b16 %v2955, %v2951
        %v4756 = vpack.c.b16 %v2956, %v2952
        %v4757 = vpack.c.b16 %v2957, %v2953
        %v4758 = vpack.c.b16 %v2958, %v2954
        %v4759 = vpack.c.b16 %v2963, %v2959
        %v4760 = vpack.c.b16 %v2964, %v2960
        %v4761 = vpack.c.b16 %v2965, %v2961
        %v4762 = vpack.c.b16 %v2966, %v2962
        %v4763 = vpack.c.b16 %v2971, %v2967
        %v4764 = vpack.c.b16 %v2972, %v2968
        %v4765 = vpack.c.b16 %v2973, %v2969
        %v4766 = vpack.c.b16 %v2974, %v2970
        %v4767 = vpack.c.b16 %v2979, %v2975
        %v4768 = vpack.c.b16 %v2980, %v2976
        %v4769 = vpack.c.b16 %v2981, %v2977
        %v4770 = vpack.c.b16 %v2982, %v2978
        %v4771 = vpack.c.b16 %v2987, %v2983
        %v4772 = vpack.c.b16 %v2988, %v2984
        %v4773 = vpack.c.b16 %v2989, %v2985
        %v4774 = vpack.c.b16 %v2990, %v2986
        %v4775 = vpack.c.b16 %v2995, %v2991
        %v4776 = vpack.c.b16 %v2996, %v2992
        %v4777 = vpack.c.b16 %v2997, %v2993
        %v4778 = vpack.c.b16 %v2998, %v2994
        %v4779 = vpack.c.b16 %v3003, %v2999
        %v4780 = vpack.c.b16 %v3004, %v3000
        %v4781 = vpack.c.b16 %v3005, %v3001
        %v4782 = vpack.c.b16 %v3006, %v3002
        %v4783 = vpack.c.b16 %v3011, %v3007
        %v4784 = vpack.c.b16 %v3012, %v3008
        %v4785 = vpack.c.b16 %v3013, %v3009
        %v4786 = vpack.c.b16 %v3014, %v3010
        %v4787 = vpack.c.b16 %v3019, %v3015
        %v4788 = vpack.c.b16 %v3020, %v3016
        %v4789 = vpack.c.b16 %v3021, %v3017
        %v4790 = vpack.c.b16 %v3022, %v3018
        %v4791 = vpack.c.b16 %v3027, %v3023
        %v4792 = vpack.c.b16 %v3028, %v3024
        %v4793 = vpack.c.b16 %v3029, %v3025
        %v4794 = vpack.c.b16 %v3030, %v3026
        %v4795 = vpack.c.b16 %v3035, %v3031
        %v4796 = vpack.c.b16 %v3036, %v3032
        %v4797 = vpack.c.b16 %v3037, %v3033
        %v4798 = vpack.c.b16 %v3038, %v3034
        %v4799 = vpack.c.b16 %v3043, %v3039
        %v4800 = vpack.c.b16 %v3044, %v3040
        %v4801 = vpack.c.b16 %v3045, %v3041
        %v4802 = vpack.c.b16 %v3046, %v3042
        %v4803 = vpack.c.b16 %v3051, %v3047
        %v4804 = vpack.c.b16 %v3052, %v3048
        %v4805 = vpack.c.b16 %v3053, %v3049
        %v4806 = vpack.c.b16 %v3054, %v3050
        %v4807 = vpack.c.b16 %v3059, %v3055
        %v4808 = vpack.c.b16 %v3060, %v3056
        %v4809 = vpack.c.b16 %v3061, %v3057
        %v4810 = vpack.c.b16 %v3062, %v3058
        %v4811 = vpack.c.b16 %v3067, %v3063
        %v4812 = vpack.c.b16 %v3068, %v3064
        %v4813 = vpack.c.b16 %v3069, %v3065
        %v4814 = vpack.c.b16 %v3070, %v3066
        %v4815 = vpack.c.b16 %v3075, %v3071
        %v4816 = vpack.c.b16 %v3076, %v3072
        %v4817 = vpack.c.b16 %v3077, %v3073
        %v4818 = vpack.c.b16 %v3078, %v3074
        %v4819 = vpack.c.b16 %v3083, %v3079
        %v4820 = vpack.c.b16 %v3084, %v3080
        %v4821 = vpack.c.b16 %v3085, %v3081
        %v4822 = vpack.c.b16 %v3086, %v3082
        %v4823 = vpack.c.b16 %v3091, %v3087
        %v4824 = vpack.c.b16 %v3092, %v3088
        %v4825 = vpack.c.b16 %v3093, %v3089
        %v4826 = vpack.c.b16 %v3094, %v3090
        %v4827 = vpack.c.b16 %v3099, %v3095
        %v4828 = vpack.c.b16 %v3100, %v3096
        %v4829 = vpack.c.b16 %v3101, %v3097
        %v4830 = vpack.c.b16 %v3102, %v3098
        %v4831 = vpack.c.b16 %v3107, %v3103
        %v4832 = vpack.c.b16 %v3108, %v3104
        %v4833 = vpack.c.b16 %v3109, %v3105
        %v4834 = vpack.c.b16 %v3110, %v3106
        %v4835 = vpack.c.b16 %v3115, %v3111
        %v4836 = vpack.c.b16 %v3116, %v3112
        %v4837 = vpack.c.b16 %v3117, %v3113
        %v4838 = vpack.c.b16 %v3118, %v3114
        %v4839 = vpack.c.b16 %v3123, %v3119
        %v4840 = vpack.c.b16 %v3124, %v3120
        %v4841 = vpack.c.b16 %v3125, %v3121
        %v4842 = vpack.c.b16 %v3126, %v3122
        %v4843 = vpack.c.b16 %v3131, %v3127
        %v4844 = vpack.c.b16 %v3132, %v3128
        %v4845 = vpack.c.b16 %v3133, %v3129
        %v4846 = vpack.c.b16 %v3134, %v3130
        %v4847 = vpack.c.b16 %v3139, %v3135
        %v4848 = vpack.c.b16 %v3140, %v3136
        %v4849 = vpack.c.b16 %v3141, %v3137
        %v4850 = vpack.c.b16 %v3142, %v3138
        %v4851 = vpack.c.b16 %v3147, %v3143
        %v4852 = vpack.c.b16 %v3148, %v3144
        %v4853 = vpack.c.b16 %v3149, %v3145
        %v4854 = vpack.c.b16 %v3150, %v3146
        %v4855 = vpack.c.b16 %v3155, %v3151
        %v4856 = vpack.c.b16 %v3156, %v3152
        %v4857 = vpack.c.b16 %v3157, %v3153
        %v4858 = vpack.c.b16 %v3158, %v3154
        %v4859 = vpack.c.b16 %v3163, %v3159
        %v4860 = vpack.c.b16 %v3164, %v3160
        %v4861 = vpack.c.b16 %v3165, %v3161
        %v4862 = vpack.c.b16 %v3166, %v3162
        %v4863 = vpack.c.b16 %v3171, %v3167
        %v4864 = vpack.c.b16 %v3172, %v3168
        %v4865 = vpack.c.b16 %v3173, %v3169
        %v4866 = vpack.c.b16 %v3174, %v3170
        %v4867 = vpack.c.b16 %v3179, %v3175
        %v4868 = vpack.c.b16 %v3180, %v3176
        %v4869 = vpack.c.b16 %v3181, %v3177
        %v4870 = vpack.c.b16 %v3182, %v3178
        %v4871 = vpack.c.b16 %v3187, %v3183
        %v4872 = vpack.c.b16 %v3188, %v3184
        %v4873 = vpack.c.b16 %v3189, %v3185
        %v4874 = vpack.c.b16 %v3190, %v3186
        %v4875 = vpack.c.b16 %v3195, %v3191
        %v4876 = vpack.c.b16 %v3196, %v3192
        %v4877 = vpack.c.b16 %v3197, %v3193
        %v4878 = vpack.c.b16 %v3198, %v3194
        %v4879 = vpack.c.b16 %v3203, %v3199
        %v4880 = vpack.c.b16 %v3204, %v3200
        %v4881 = vpack.c.b16 %v3205, %v3201
        %v4882 = vpack.c.b16 %v3206, %v3202
        %v4883 = vpack.c.b16 %v3211, %v3207
        %v4884 = vpack.c.b16 %v3212, %v3208
        %v4885 = vpack.c.b16 %v3213, %v3209
        %v4886 = vpack.c.b16 %v3214, %v3210
        %v4887 = vpack.c.b16 %v3219, %v3215
        %v4888 = vpack.c.b16 %v3220, %v3216
        %v4889 = vpack.c.b16 %v3221, %v3217
        %v4890 = vpack.c.b16 %v3222, %v3218
        %v4891 = vpack.c.b16 %v3227, %v3223
        %v4892 = vpack.c.b16 %v3228, %v3224
        %v4893 = vpack.c.b16 %v3229, %v3225
        %v4894 = vpack.c.b16 %v3230, %v3226
        %v4895 = vpack.c.b16 %v3235, %v3231
        %v4896 = vpack.c.b16 %v3236, %v3232
        %v4897 = vpack.c.b16 %v3237, %v3233
        %v4898 = vpack.c.b16 %v3238, %v3234
        %v4899 = vpack.c.b16 %v3243, %v3239
        %v4900 = vpack.c.b16 %v3244, %v3240
        %v4901 = vpack.c.b16 %v3245, %v3241
        %v4902 = vpack.c.b16 %v3246, %v3242
        %v4903 = vpack.c.b16 %v3251, %v3247
        %v4904 = vpack.c.b16 %v3252, %v3248
        %v4905 = vpack.c.b16 %v3253, %v3249
        %v4906 = vpack.c.b16 %v3254, %v3250
        %v4907 = vpack.c.b16 %v3259, %v3255
        %v4908 = vpack.c.b16 %v3260, %v3256
        %v4909 = vpack.c.b16 %v3261, %v3257
        %v4910 = vpack.c.b16 %v3262, %v3258
        %v4911 = vpack.c.b16 %v3267, %v3263
        %v4912 = vpack.c.b16 %v3268, %v3264
        %v4913 = vpack.c.b16 %v3269, %v3265
        %v4914 = vpack.c.b16 %v3270, %v3266
        %v4915 = vpack.c.b16 %v3275, %v3271
        %v4916 = vpack.c.b16 %v3276, %v3272
        %v4917 = vpack.c.b16 %v3277, %v3273
        %v4918 = vpack.c.b16 %v3278, %v3274
        %v4919 = vpack.c.b16 %v3283, %v3279
        %v4920 = vpack.c.b16 %v3284, %v3280
        %v4921 = vpack.c.b16 %v3285, %v3281
        %v4922 = vpack.c.b16 %v3286, %v3282
        %v4923 = vpack.c.b16 %v3291, %v3287
        %v4924 = vpack.c.b16 %v3292, %v3288
        %v4925 = vpack.c.b16 %v3293, %v3289
        %v4926 = vpack.c.b16 %v3294, %v3290
        %v4927 = vpack.c.b16 %v3299, %v3295
        %v4928 = vpack.c.b16 %v3300, %v3296
        %v4929 = vpack.c.b16 %v3301, %v3297
        %v4930 = vpack.c.b16 %v3302, %v3298
        %v4931 = vpack.c.b16 %v3307, %v3303
        %v4932 = vpack.c.b16 %v3308, %v3304
        %v4933 = vpack.c.b16 %v3309, %v3305
        %v4934 = vpack.c.b16 %v3310, %v3306
        %v4935 = vpack.c.b16 %v3315, %v3311
        %v4936 = vpack.c.b16 %v3316, %v3312
        %v4937 = vpack.c.b16 %v3317, %v3313
        %v4938 = vpack.c.b16 %v3318, %v3314
        %v4939 = vpack.c.b16 %v3323, %v3319
        %v4940 = vpack.c.b16 %v3324, %v3320
        %v4941 = vpack.c.b16 %v3325, %v3321
        %v4942 = vpack.c.b16 %v3326, %v3322
        %v4943 = vpack.c.b16 %v3331, %v3327
        %v4944 = vpack.c.b16 %v3332, %v3328
        %v4945 = vpack.c.b16 %v3333, %v3329
        %v4946 = vpack.c.b16 %v3334, %v3330
        %v4947 = vpack.c.b16 %v3339, %v3335
        %v4948 = vpack.c.b16 %v3340, %v3336
        %v4949 = vpack.c.b16 %v3341, %v3337
        %v4950 = vpack.c.b16 %v3342, %v3338
        %v4951 = vpack.c.b16 %v3347, %v3343
        %v4952 = vpack.c.b16 %v3348, %v3344
        %v4953 = vpack.c.b16 %v3349, %v3345
        %v4954 = vpack.c.b16 %v3350, %v3346
        %v4955 = vpack.c.b16 %v3355, %v3351
        %v4956 = vpack.c.b16 %v3356, %v3352
        %v4957 = vpack.c.b16 %v3357, %v3353
        %v4958 = vpack.c.b16 %v3358, %v3354
        %v4959 = vpack.c.b16 %v3363, %v3359
        %v4960 = vpack.c.b16 %v3364, %v3360
        %v4961 = vpack.c.b16 %v3365, %v3361
        %v4962 = vpack.c.b16 %v3366, %v3362
        %v4963 = vpack.c.b16 %v3371, %v3367
        %v4964 = vpack.c.b16 %v3372, %v3368
        %v4965 = vpack.c.b16 %v3373, %v3369
        %v4966 = vpack.c.b16 %v3374, %v3370
        %v4967 = vpack.c.b16 %v3379, %v3375
        %v4968 = vpack.c.b16 %v3380, %v3376
        %v4969 = vpack.c.b16 %v3381, %v3377
        %v4970 = vpack.c.b16 %v3382, %v3378
        %v4971 = vpack.c.b16 %v3387, %v3383
        %v4972 = vpack.c.b16 %v3388, %v3384
        %v4973 = vpack.c.b16 %v3389, %v3385
        %v4974 = vpack.c.b16 %v3390, %v3386
        %v4975 = vpack.c.b16 %v3395, %v3391
        %v4976 = vpack.c.b16 %v3396, %v3392
        %v4977 = vpack.c.b16 %v3397, %v3393
        %v4978 = vpack.c.b16 %v3398, %v3394
        %v4979 = vpack.c.b16 %v3403, %v3399
        %v4980 = vpack.c.b16 %v3404, %v3400
        %v4981 = vpack.c.b16 %v3405, %v3401
        %v4982 = vpack.c.b16 %v3406, %v3402
        %v4983 = vpack.c.b16 %v3411, %v3407
        %v4984 = vpack.c.b16 %v3412, %v3408
        %v4985 = vpack.c.b16 %v3413, %v3409
        %v4986 = vpack.c.b16 %v3414, %v3410
        %v4987 = vpack.c.b16 %v3419, %v3415
        %v4988 = vpack.c.b16 %v3420, %v3416
        %v4989 = vpack.c.b16 %v3421, %v3417
        %v4990 = vpack.c.b16 %v3422, %v3418
        %v4991 = vpack.c.b16 %v3427, %v3423
        %v4992 = vpack.c.b16 %v3428, %v3424
        %v4993 = vpack.c.b16 %v3429, %v3425
        %v4994 = vpack.c.b16 %v3430, %v3426
        %v4995 = vpack.c.b16 %v3435, %v3431
        %v4996 = vpack.c.b16 %v3436, %v3432
        %v4997 = vpack.c.b16 %v3437, %v3433
        %v4998 = vpack.c.b16 %v3438, %v3434
        %v4999 = vpack.c.b16 %v3443, %v3439
        %v5000 = vpack.c.b16 %v3444, %v3440
        %v5001 = vpack.c.b16 %v3445, %v3441
        %v5002 = vpack.c.b16 %v3446, %v3442
        %v5003 = vpack.c.b16 %v3451, %v3447
        %v5004 = vpack.c.b16 %v3452, %v3448
        %v5005 = vpack.c.b16 %v3453, %v3449
        %v5006 = vpack.c.b16 %v3454, %v3450
        %v5007 = vpack.c.b16 %v3459, %v3455
        %v5008 = vpack.c.b16 %v3460, %v3456
        %v5009 = vpack.c.b16 %v3461, %v3457
        %v5010 = vpack.c.b16 %v3462, %v3458
        %v5011 = vpack.c.b16 %v3467, %v3463
        %v5012 = vpack.c.b16 %v3468, %v3464
        %v5013 = vpack.c.b16 %v3469, %v3465
        %v5014 = vpack.c.b16 %v3470, %v3466
        %v5015 = vpack.c.b16 %v3475, %v3471
        %v5016 = vpack.c.b16 %v3476, %v3472
        %v5017 = vpack.c.b16 %v3477, %v3473
        %v5018 = vpack.c.b16 %v3478, %v3474
        %v5019 = vpack.c.b16 %v3483, %v3479
        %v5020 = vpack.c.b16 %v3484, %v3480
        %v5021 = vpack.c.b16 %v3485, %v3481
        %v5022 = vpack.c.b16 %v3486, %v3482
        %v5023 = vpack.c.b16 %v3491, %v3487
        %v5024 = vpack.c.b16 %v3492, %v3488
        %v5025 = vpack.c.b16 %v3493, %v3489
        %v5026 = vpack.c.b16 %v3494, %v3490
        %v5027 = vpack.c.b16 %v3499, %v3495
        %v5028 = vpack.c.b16 %v3500, %v3496
        %v5029 = vpack.c.b16 %v3501, %v3497
        %v5030 = vpack.c.b16 %v3502, %v3498
        %v5031 = vpack.c.b16 %v3507, %v3503
        %v5032 = vpack.c.b16 %v3508, %v3504
        %v5033 = vpack.c.b16 %v3509, %v3505
        %v5034 = vpack.c.b16 %v3510, %v3506
        %v5035 = vpack.c.b16 %v3515, %v3511
        %v5036 = vpack.c.b16 %v3516, %v3512
        %v5037 = vpack.c.b16 %v3517, %v3513
        %v5038 = vpack.c.b16 %v3518, %v3514
        %v5039 = vpack.c.b16 %v3523, %v3519
        %v5040 = vpack.c.b16 %v3524, %v3520
        %v5041 = vpack.c.b16 %v3525, %v3521
        %v5042 = vpack.c.b16 %v3526, %v3522
        %v5043 = vpack.c.b16 %v3531, %v3527
        %v5044 = vpack.c.b16 %v3532, %v3528
        %v5045 = vpack.c.b16 %v3533, %v3529
        %v5046 = vpack.c.b16 %v3534, %v3530
        %v5047 = vpack.c.b16 %v3539, %v3535
        %v5048 = vpack.c.b16 %v3540, %v3536
        %v5049 = vpack.c.b16 %v3541, %v3537
        %v5050 = vpack.c.b16 %v3542, %v3538
        %v5051 = vpack.c.b16 %v3547, %v3543
        %v5052 = vpack.c.b16 %v3548, %v3544
        %v5053 = vpack.c.b16 %v3549, %v3545
        %v5054 = vpack.c.b16 %v3550, %v3546
        %v5055 = vpack.c.b16 %v3555, %v3551
        %v5056 = vpack.c.b16 %v3556, %v3552
        %v5057 = vpack.c.b16 %v3557, %v3553
        %v5058 = vpack.c.b16 %v3558, %v3554
        %v5059 = vpack.c.b16 %v3563, %v3559
        %v5060 = vpack.c.b16 %v3564, %v3560
        %v5061 = vpack.c.b16 %v3565, %v3561
        %v5062 = vpack.c.b16 %v3566, %v3562
        %v5063 = vpack.c.b16 %v3571, %v3567
        %v5064 = vpack.c.b16 %v3572, %v3568
        %v5065 = vpack.c.b16 %v3573, %v3569
        %v5066 = vpack.c.b16 %v3574, %v3570
        %v5067 = vpack.c.b16 %v3579, %v3575
        %v5068 = vpack.c.b16 %v3580, %v3576
        %v5069 = vpack.c.b16 %v3581, %v3577
        %v5070 = vpack.c.b16 %v3582, %v3578
        %v5071 = vpack.c.b16 %v3587, %v3583
        %v5072 = vpack.c.b16 %v3588, %v3584
        %v5073 = vpack.c.b16 %v3589, %v3585
        %v5074 = vpack.c.b16 %v3590, %v3586
        %v5075 = vpack.c.b16 %v3595, %v3591
        %v5076 = vpack.c.b16 %v3596, %v3592
        %v5077 = vpack.c.b16 %v3597, %v3593
        %v5078 = vpack.c.b16 %v3598, %v3594
        %v5079 = vpack.c.b16 %v3603, %v3599
        %v5080 = vpack.c.b16 %v3604, %v3600
        %v5081 = vpack.c.b16 %v3605, %v3601
        %v5082 = vpack.c.b16 %v3606, %v3602
        %v5083 = vpack.c.b16 %v3611, %v3607
        %v5084 = vpack.c.b16 %v3612, %v3608
        %v5085 = vpack.c.b16 %v3613, %v3609
        %v5086 = vpack.c.b16 %v3614, %v3610
        %v5087 = vpack.c.b16 %v3619, %v3615
        %v5088 = vpack.c.b16 %v3620, %v3616
        %v5089 = vpack.c.b16 %v3621, %v3617
        %v5090 = vpack.c.b16 %v3622, %v3618
        %v5091 = vpack.c.b16 %v3627, %v3623
        %v5092 = vpack.c.b16 %v3628, %v3624
        %v5093 = vpack.c.b16 %v3629, %v3625
        %v5094 = vpack.c.b16 %v3630, %v3626
        %v5095 = vpack.c.b16 %v3635, %v3631
        %v5096 = vpack.c.b16 %v3636, %v3632
        %v5097 = vpack.c.b16 %v3637, %v3633
        %v5098 = vpack.c.b16 %v3638, %v3634
        %v5099 = vpack.c.b16 %v3643, %v3639
        %v5100 = vpack.c.b16 %v3644, %v3640
        %v5101 = vpack.c.b16 %v3645, %v3641
        %v5102 = vpack.c.b16 %v3646, %v3642
        %v5103 = vpack.c.b16 %v3651, %v3647
        %v5104 = vpack.c.b16 %v3652, %v3648
        %v5105 = vpack.c.b16 %v3653, %v3649
        %v5106 = vpack.c.b16 %v3654, %v3650
        %v5107 = vpack.c.b16 %v3659, %v3655
        %v5108 = vpack.c.b16 %v3660, %v3656
        %v5109 = vpack.c.b16 %v3661, %v3657
        %v5110 = vpack.c.b16 %v3662, %v3658
        %v5111 = vpack.c.b16 %v3667, %v3663
        %v5112 = vpack.c.b16 %v3668, %v3664
        %v5113 = vpack.c.b16 %v3669, %v3665
        %v5114 = vpack.c.b16 %v3670, %v3666
        %v5115 = vpack.c.b16 %v3675, %v3671
        %v5116 = vpack.c.b16 %v3676, %v3672
        %v5117 = vpack.c.b16 %v3677, %v3673
        %v5118 = vpack.c.b16 %v3678, %v3674
        %v5119 = vpack.c.b16 %v3683, %v3679
        %v5120 = vpack.c.b16 %v3684, %v3680
        %v5121 = vpack.c.b16 %v3685, %v3681
        %v5122 = vpack.c.b16 %v3686, %v3682
        %v5123 = vpack.c.b16 %v3691, %v3687
        %v5124 = vpack.c.b16 %v3692, %v3688
        %v5125 = vpack.c.b16 %v3693, %v3689
        %v5126 = vpack.c.b16 %v3694, %v3690
        %v5127 = vpack.c.b16 %v3699, %v3695
        %v5128 = vpack.c.b16 %v3700, %v3696
        %v5129 = vpack.c.b16 %v3701, %v3697
        %v5130 = vpack.c.b16 %v3702, %v3698
        %v5131 = vpack.c.b16 %v3707, %v3703
        %v5132 = vpack.c.b16 %v3708, %v3704
        %v5133 = vpack.c.b16 %v3709, %v3705
        %v5134 = vpack.c.b16 %v3710, %v3706
        %v5135 = vpack.c.b16 %v3715, %v3711
        %v5136 = vpack.c.b16 %v3716, %v3712
        %v5137 = vpack.c.b16 %v3717, %v3713
        %v5138 = vpack.c.b16 %v3718, %v3714
        %v5139 = vpack.c.b16 %v3723, %v3719
        %v5140 = vpack.c.b16 %v3724, %v3720
        %v5141 = vpack.c.b16 %v3725, %v3721
        %v5142 = vpack.c.b16 %v3726, %v3722
        %v5143 = vpack.c.b16 %v3731, %v3727
        %v5144 = vpack.c.b16 %v3732, %v3728
        %v5145 = vpack.c.b16 %v3733, %v3729
        %v5146 = vpack.c.b16 %v3734, %v3730
        %v5147 = vpack.c.b16 %v3739, %v3735
        %v5148 = vpack.c.b16 %v3740, %v3736
        %v5149 = vpack.c.b16 %v3741, %v3737
        %v5150 = vpack.c.b16 %v3742, %v3738
        %v5151 = vpack.c.b16 %v3747, %v3743
        %v5152 = vpack.c.b16 %v3748, %v3744
        %v5153 = vpack.c.b16 %v3749, %v3745
        %v5154 = vpack.c.b16 %v3750, %v3746
        %v5155 = vpack.c.b16 %v3755, %v3751
        %v5156 = vpack.c.b16 %v3756, %v3752
        %v5157 = vpack.c.b16 %v3757, %v3753
        %v5158 = vpack.c.b16 %v3758, %v3754
        %v5159 = vpack.c.b16 %v3763, %v3759
        %v5160 = vpack.c.b16 %v3764, %v3760
        %v5161 = vpack.c.b16 %v3765, %v3761
        %v5162 = vpack.c.b16 %v3766, %v3762
        %v5163 = vpack.c.b16 %v3771, %v3767
        %v5164 = vpack.c.b16 %v3772, %v3768
        %v5165 = vpack.c.b16 %v3773, %v3769
        %v5166 = vpack.c.b16 %v3774, %v3770
        %v5167 = vpack.c.b16 %v3779, %v3775
        %v5168 = vpack.c.b16 %v3780, %v3776
        %v5169 = vpack.c.b16 %v3781, %v3777
        %v5170 = vpack.c.b16 %v3782, %v3778
        %v5171 = vpack.c.b16 %v3787, %v3783
        %v5172 = vpack.c.b16 %v3788, %v3784
        %v5173 = vpack.c.b16 %v3789, %v3785
        %v5174 = vpack.c.b16 %v3790, %v3786
        %v5175 = vpack.c.b16 %v3795, %v3791
        %v5176 = vpack.c.b16 %v3796, %v3792
        %v5177 = vpack.c.b16 %v3797, %v3793
        %v5178 = vpack.c.b16 %v3798, %v3794
        %v5179 = vpack.c.b16 %v3803, %v3799
        %v5180 = vpack.c.b16 %v3804, %v3800
        %v5181 = vpack.c.b16 %v3805, %v3801
        %v5182 = vpack.c.b16 %v3806, %v3802
        %v5183 = vpack.c.b16 %v3811, %v3807
        %v5184 = vpack.c.b16 %v3812, %v3808
        %v5185 = vpack.c.b16 %v3813, %v3809
        %v5186 = vpack.c.b16 %v3814, %v3810
        %v5187 = vpack.c.b16 %v3819, %v3815
        %v5188 = vpack.c.b16 %v3820, %v3816
        %v5189 = vpack.c.b16 %v3821, %v3817
        %v5190 = vpack.c.b16 %v3822, %v3818
        %v5191 = vpack.c.b16 %v3827, %v3823
        %v5192 = vpack.c.b16 %v3828, %v3824
        %v5193 = vpack.c.b16 %v3829, %v3825
        %v5194 = vpack.c.b16 %v3830, %v3826
        %v5195 = vpack.c.b16 %v3835, %v3831
        %v5196 = vpack.c.b16 %v3836, %v3832
        %v5197 = vpack.c.b16 %v3837, %v3833
        %v5198 = vpack.c.b16 %v3838, %v3834
        %v5199 = vpack.c.b16 %v3843, %v3839
        %v5200 = vpack.c.b16 %v3844, %v3840
        %v5201 = vpack.c.b16 %v3845, %v3841
        %v5202 = vpack.c.b16 %v3846, %v3842
        %v5203 = vpack.c.b16 %v3851, %v3847
        %v5204 = vpack.c.b16 %v3852, %v3848
        %v5205 = vpack.c.b16 %v3853, %v3849
        %v5206 = vpack.c.b16 %v3854, %v3850
        %v5207 = vpack.c.b16 %v3859, %v3855
        %v5208 = vpack.c.b16 %v3860, %v3856
        %v5209 = vpack.c.b16 %v3861, %v3857
        %v5210 = vpack.c.b16 %v3862, %v3858
        %v5211 = vpack.c.b16 %v3867, %v3863
        %v5212 = vpack.c.b16 %v3868, %v3864
        %v5213 = vpack.c.b16 %v3869, %v3865
        %v5214 = vpack.c.b16 %v3870, %v3866
        %v5215 = vpack.c.b16 %v3875, %v3871
        %v5216 = vpack.c.b16 %v3876, %v3872
        %v5217 = vpack.c.b16 %v3877, %v3873
        %v5218 = vpack.c.b16 %v3878, %v3874
        %v5219 = vpack.c.b16 %v3883, %v3879
        %v5220 = vpack.c.b16 %v3884, %v3880
        %v5221 = vpack.c.b16 %v3885, %v3881
        %v5222 = vpack.c.b16 %v3886, %v3882
        %v5223 = vpack.c.b16 %v3891, %v3887
        %v5224 = vpack.c.b16 %v3892, %v3888
        %v5225 = vpack.c.b16 %v3893, %v3889
        %v5226 = vpack.c.b16 %v3894, %v3890
        %v5227 = vpack.c.b16 %v3899, %v3895
        %v5228 = vpack.c.b16 %v3900, %v3896
        %v5229 = vpack.c.b16 %v3901, %v3897
        %v5230 = vpack.c.b16 %v3902, %v3898
        %v5231 = vpack.c.b16 %v3907, %v3903
        %v5232 = vpack.c.b16 %v3908, %v3904
        %v5233 = vpack.c.b16 %v3909, %v3905
        %v5234 = vpack.c.b16 %v3910, %v3906
        %v5235 = vpack.c.b16 %v3915, %v3911
        %v5236 = vpack.c.b16 %v3916, %v3912
        %v5237 = vpack.c.b16 %v3917, %v3913
        %v5238 = vpack.c.b16 %v3918, %v3914
        %v5239 = vpack.c.b16 %v3923, %v3919
        %v5240 = vpack.c.b16 %v3924, %v3920
        %v5241 = vpack.c.b16 %v3925, %v3921
        %v5242 = vpack.c.b16 %v3926, %v3922
        %v5243 = vpack.c.b16 %v3931, %v3927
        %v5244 = vpack.c.b16 %v3932, %v3928
        %v5245 = vpack.c.b16 %v3933, %v3929
        %v5246 = vpack.c.b16 %v3934, %v3930
        %v5247 = vpack.c.b16 %v3939, %v3935
        %v5248 = vpack.c.b16 %v3940, %v3936
        %v5249 = vpack.c.b16 %v3941, %v3937
        %v5250 = vpack.c.b16 %v3942, %v3938
        %v5251 = vpack.c.b16 %v3947, %v3943
        %v5252 = vpack.c.b16 %v3948, %v3944
        %v5253 = vpack.c.b16 %v3949, %v3945
        %v5254 = vpack.c.b16 %v3950, %v3946
        %v5255 = vpack.c.b16 %v3955, %v3951
        %v5256 = vpack.c.b16 %v3956, %v3952
        %v5257 = vpack.c.b16 %v3957, %v3953
        %v5258 = vpack.c.b16 %v3958, %v3954
        %v5259 = vpack.c.b16 %v3963, %v3959
        %v5260 = vpack.c.b16 %v3964, %v3960
        %v5261 = vpack.c.b16 %v3965, %v3961
        %v5262 = vpack.c.b16 %v3966, %v3962
        %v5263 = vpack.c.b16 %v3971, %v3967
        %v5264 = vpack.c.b16 %v3972, %v3968
        %v5265 = vpack.c.b16 %v3973, %v3969
        %v5266 = vpack.c.b16 %v3974, %v3970
        %v5267 = vpack.c.b16 %v3979, %v3975
        %v5268 = vpack.c.b16 %v3980, %v3976
        %v5269 = vpack.c.b16 %v3981, %v3977
        %v5270 = vpack.c.b16 %v3982, %v3978
        %v5271 = vpack.c.b16 %v3987, %v3983
        %v5272 = vpack.c.b16 %v3988, %v3984
        %v5273 = vpack.c.b16 %v3989, %v3985
        %v5274 = vpack.c.b16 %v3990, %v3986
        %v5275 = vpack.c.b16 %v3995, %v3991
        %v5276 = vpack.c.b16 %v3996, %v3992
        %v5277 = vpack.c.b16 %v3997, %v3993
        %v5278 = vpack.c.b16 %v3998, %v3994
        %v5279 = vpack.c.b16 %v4003, %v3999
        %v5280 = vpack.c.b16 %v4004, %v4000
        %v5281 = vpack.c.b16 %v4005, %v4001
        %v5282 = vpack.c.b16 %v4006, %v4002
        %v5283 = vpack.c.b16 %v4011, %v4007
        %v5284 = vpack.c.b16 %v4012, %v4008
        %v5285 = vpack.c.b16 %v4013, %v4009
        %v5286 = vpack.c.b16 %v4014, %v4010
        %v5287 = vpack.c.b16 %v4019, %v4015
        %v5288 = vpack.c.b16 %v4020, %v4016
        %v5289 = vpack.c.b16 %v4021, %v4017
        %v5290 = vpack.c.b16 %v4022, %v4018
        %v5291 = vpack.c.b16 %v4027, %v4023
        %v5292 = vpack.c.b16 %v4028, %v4024
        %v5293 = vpack.c.b16 %v4029, %v4025
        %v5294 = vpack.c.b16 %v4030, %v4026
        %v5295 = vpack.c.b16 %v4035, %v4031
        %v5296 = vpack.c.b16 %v4036, %v4032
        %v5297 = vpack.c.b16 %v4037, %v4033
        %v5298 = vpack.c.b16 %v4038, %v4034
        %v5299 = vpack.c.b16 %v4043, %v4039
        %v5300 = vpack.c.b16 %v4044, %v4040
        %v5301 = vpack.c.b16 %v4045, %v4041
        %v5302 = vpack.c.b16 %v4046, %v4042
        %v5303 = vpack.c.b16 %v4051, %v4047
        %v5304 = vpack.c.b16 %v4052, %v4048
        %v5305 = vpack.c.b16 %v4053, %v4049
        %v5306 = vpack.c.b16 %v4054, %v4050
        %v5307 = vpack.c.b16 %v4059, %v4055
        %v5308 = vpack.c.b16 %v4060, %v4056
        %v5309 = vpack.c.b16 %v4061, %v4057
        %v5310 = vpack.c.b16 %v4062, %v4058
        %v5311 = vpack.c.b16 %v4067, %v4063
        %v5312 = vpack.c.b16 %v4068, %v4064
        %v5313 = vpack.c.b16 %v4069, %v4065
        %v5314 = vpack.c.b16 %v4070, %v4066
        %v5315 = vpack.c.b16 %v4075, %v4071
        %v5316 = vpack.c.b16 %v4076, %v4072
        %v5317 = vpack.c.b16 %v4077, %v4073
        %v5318 = vpack.c.b16 %v4078, %v4074
        %v5319 = vpack.c.b16 %v4083, %v4079
        %v5320 = vpack.c.b16 %v4084, %v4080
        %v5321 = vpack.c.b16 %v4085, %v4081
        %v5322 = vpack.c.b16 %v4086, %v4082
        %v5323 = vpack.c.b16 %v4091, %v4087
        %v5324 = vpack.c.b16 %v4092, %v4088
        %v5325 = vpack.c.b16 %v4093, %v4089
        %v5326 = vpack.c.b16 %v4094, %v4090
        %v5327 = vpack.c.b16 %v4099, %v4095
        %v5328 = vpack.c.b16 %v4100, %v4096
        %v5329 = vpack.c.b16 %v4101, %v4097
        %v5330 = vpack.c.b16 %v4102, %v4098
        %v5331 = vpack.c.b16 %v4107, %v4103
        %v5332 = vpack.c.b16 %v4108, %v4104
        %v5333 = vpack.c.b16 %v4109, %v4105
        %v5334 = vpack.c.b16 %v4110, %v4106
        %v5335 = vpack.c.b16 %v4115, %v4111
        %v5336 = vpack.c.b16 %v4116, %v4112
        %v5337 = vpack.c.b16 %v4117, %v4113
        %v5338 = vpack.c.b16 %v4118, %v4114
        %v5339 = vpack.c.b16 %v4123, %v4119
        %v5340 = vpack.c.b16 %v4124, %v4120
        %v5341 = vpack.c.b16 %v4125, %v4121
        %v5342 = vpack.c.b16 %v4126, %v4122
        %v5343 = vpack.c.b16 %v4131, %v4127
        %v5344 = vpack.c.b16 %v4132, %v4128
        %v5345 = vpack.c.b16 %v4133, %v4129
        %v5346 = vpack.c.b16 %v4134, %v4130
        %v5347 = vpack.c.b16 %v4139, %v4135
        %v5348 = vpack.c.b16 %v4140, %v4136
        %v5349 = vpack.c.b16 %v4141, %v4137
        %v5350 = vpack.c.b16 %v4142, %v4138
        %v5351 = vpack.c.b16 %v4147, %v4143
        %v5352 = vpack.c.b16 %v4148, %v4144
        %v5353 = vpack.c.b16 %v4149, %v4145
        %v5354 = vpack.c.b16 %v4150, %v4146
        %v5355 = vpack.c.b16 %v4155, %v4151
        %v5356 = vpack.c.b16 %v4156, %v4152
        %v5357 = vpack.c.b16 %v4157, %v4153
        %v5358 = vpack.c.b16 %v4158, %v4154
        %v5359 = vpack.c.b16 %v4163, %v4159
        %v5360 = vpack.c.b16 %v4164, %v4160
        %v5361 = vpack.c.b16 %v4165, %v4161
        %v5362 = vpack.c.b16 %v4166, %v4162
        %v5363 = vpack.c.b16 %v4171, %v4167
        %v5364 = vpack.c.b16 %v4172, %v4168
        %v5365 = vpack.c.b16 %v4173, %v4169
        %v5366 = vpack.c.b16 %v4174, %v4170
        %v5367 = vpack.c.b16 %v4179, %v4175
        %v5368 = vpack.c.b16 %v4180, %v4176
        %v5369 = vpack.c.b16 %v4181, %v4177
        %v5370 = vpack.c.b16 %v4182, %v4178
        %v5371 = vpack.c.b16 %v4187, %v4183
        %v5372 = vpack.c.b16 %v4188, %v4184
        %v5373 = vpack.c.b16 %v4189, %v4185
        %v5374 = vpack.c.b16 %v4190, %v4186
        %v5375 = vpack.c.b16 %v4195, %v4191
        %v5376 = vpack.c.b16 %v4196, %v4192
        %v5377 = vpack.c.b16 %v4197, %v4193
        %v5378 = vpack.c.b16 %v4198, %v4194
        %v5379 = vpack.c.b16 %v4203, %v4199
        %v5380 = vpack.c.b16 %v4204, %v4200
        %v5381 = vpack.c.b16 %v4205, %v4201
        %v5382 = vpack.c.b16 %v4206, %v4202
        %v5383 = vpack.c.b16 %v4211, %v4207
        %v5384 = vpack.c.b16 %v4212, %v4208
        %v5385 = vpack.c.b16 %v4213, %v4209
        %v5386 = vpack.c.b16 %v4214, %v4210
        %v5387 = vpack.c.b16 %v4219, %v4215
        %v5388 = vpack.c.b16 %v4220, %v4216
        %v5389 = vpack.c.b16 %v4221, %v4217
        %v5390 = vpack.c.b16 %v4222, %v4218
        %v5391 = vpack.c.b16 %v4227, %v4223
        %v5392 = vpack.c.b16 %v4228, %v4224
        %v5393 = vpack.c.b16 %v4229, %v4225
        %v5394 = vpack.c.b16 %v4230, %v4226
        %v5395 = vpack.c.b16 %v4235, %v4231
        %v5396 = vpack.c.b16 %v4236, %v4232
        %v5397 = vpack.c.b16 %v4237, %v4233
        %v5398 = vpack.c.b16 %v4238, %v4234
        %v5399 = vpack.c.b16 %v4243, %v4239
        %v5400 = vpack.c.b16 %v4244, %v4240
        %v5401 = vpack.c.b16 %v4245, %v4241
        %v5402 = vpack.c.b16 %v4246, %v4242
        %v5403 = vpack.c.b16 %v4251, %v4247
        %v5404 = vpack.c.b16 %v4252, %v4248
        %v5405 = vpack.c.b16 %v4253, %v4249
        %v5406 = vpack.c.b16 %v4254, %v4250
        %v5407 = vpack.c.b16 %v4259, %v4255
        %v5408 = vpack.c.b16 %v4260, %v4256
        %v5409 = vpack.c.b16 %v4261, %v4257
        %v5410 = vpack.c.b16 %v4262, %v4258
        %v5411 = vpack.c.b16 %v4267, %v4263
        %v5412 = vpack.c.b16 %v4268, %v4264
        %v5413 = vpack.c.b16 %v4269, %v4265
        %v5414 = vpack.c.b16 %v4270, %v4266
        %v5415 = vpack.c.b16 %v4275, %v4271
        %v5416 = vpack.c.b16 %v4276, %v4272
        %v5417 = vpack.c.b16 %v4277, %v4273
        %v5418 = vpack.c.b16 %v4278, %v4274
        %v5419 = vpack.c.b16 %v4283, %v4279
        %v5420 = vpack.c.b16 %v4284, %v4280
        %v5421 = vpack.c.b16 %v4285, %v4281
        %v5422 = vpack.c.b16 %v4286, %v4282
        %v5423 = vpack.c.b16 %v4291, %v4287
        %v5424 = vpack.c.b16 %v4292, %v4288
        %v5425 = vpack.c.b16 %v4293, %v4289
        %v5426 = vpack.c.b16 %v4294, %v4290
        %v5427 = vpack.c.b16 %v4299, %v4295
        %v5428 = vpack.c.b16 %v4300, %v4296
        %v5429 = vpack.c.b16 %v4301, %v4297
        %v5430 = vpack.c.b16 %v4302, %v4298
        %v5431 = vpack.c.b16 %v4307, %v4303
        %v5432 = vpack.c.b16 %v4308, %v4304
        %v5433 = vpack.c.b16 %v4309, %v4305
        %v5434 = vpack.c.b16 %v4310, %v4306
        %v5435 = vpack.c.b16 %v4315, %v4311
        %v5436 = vpack.c.b16 %v4316, %v4312
        %v5437 = vpack.c.b16 %v4317, %v4313
        %v5438 = vpack.c.b16 %v4318, %v4314
        %v5439 = vpack.c.b16 %v4323, %v4319
        %v5440 = vpack.c.b16 %v4324, %v4320
        %v5441 = vpack.c.b16 %v4325, %v4321
        %v5442 = vpack.c.b16 %v4326, %v4322
        %v5443 = vpack.c.b16 %v4331, %v4327
        %v5444 = vpack.c.b16 %v4332, %v4328
        %v5445 = vpack.c.b16 %v4333, %v4329
        %v5446 = vpack.c.b16 %v4334, %v4330
        %v5447 = vpack.c.b16 %v4339, %v4335
        %v5448 = vpack.c.b16 %v4340, %v4336
        %v5449 = vpack.c.b16 %v4341, %v4337
        %v5450 = vpack.c.b16 %v4342, %v4338
        %v5451 = vpack.c.b16 %v4347, %v4343
        %v5452 = vpack.c.b16 %v4348, %v4344
        %v5453 = vpack.c.b16 %v4349, %v4345
        %v5454 = vpack.c.b16 %v4350, %v4346
        %v5455 = vpack.c.b16 %v4355, %v4351
        %v5456 = vpack.c.b16 %v4356, %v4352
        %v5457 = vpack.c.b16 %v4357, %v4353
        %v5458 = vpack.c.b16 %v4358, %v4354
        %v5459 = vpack.c.b16 %v4363, %v4359
        %v5460 = vpack.c.b16 %v4364, %v4360
        %v5461 = vpack.c.b16 %v4365, %v4361
        %v5462 = vpack.c.b16 %v4366, %v4362
        %v5463 = vpack.c.b16 %v4371, %v4367
        %v5464 = vpack.c.b16 %v4372, %v4368
        %v5465 = vpack.c.b16 %v4373, %v4369
        %v5466 = vpack.c.b16 %v4374, %v4370
        %v5467 = vpack.c.b16 %v4379, %v4375
        %v5468 = vpack.c.b16 %v4380, %v4376
        %v5469 = vpack.c.b16 %v4381, %v4377
        %v5470 = vpack.c.b16 %v4382, %v4378
        %v5471 = vpack.c.b16 %v4387, %v4383
        %v5472 = vpack.c.b16 %v4388, %v4384
        %v5473 = vpack.c.b16 %v4389, %v4385
        %v5474 = vpack.c.b16 %v4390, %v4386
        %v5475 = vpack.c.b16 %v4395, %v4391
        %v5476 = vpack.c.b16 %v4396, %v4392
        %v5477 = vpack.c.b16 %v4397, %v4393
        %v5478 = vpack.c.b16 %v4398, %v4394
        %v5479 = vpack.c.b16 %v4403, %v4399
        %v5480 = vpack.c.b16 %v4404, %v4400
        %v5481 = vpack.c.b16 %v4405, %v4401
        %v5482 = vpack.c.b16 %v4406, %v4402
        %v5483 = vpack.c.b16 %v4411, %v4407
        %v5484 = vpack.c.b16 %v4412, %v4408
        %v5485 = vpack.c.b16 %v4413, %v4409
        %v5486 = vpack.c.b16 %v4414, %v4410
        %v5487 = vpack.c.b16 %v4419, %v4415
        %v5488 = vpack.c.b16 %v4420, %v4416
        %v5489 = vpack.c.b16 %v4421, %v4417
        %v5490 = vpack.c.b16 %v4422, %v4418
        %v5491 = vpack.c.b16 %v4427, %v4423
        %v5492 = vpack.c.b16 %v4428, %v4424
        %v5493 = vpack.c.b16 %v4429, %v4425
        %v5494 = vpack.c.b16 %v4430, %v4426
        %v5495 = vpack.c.b16 %v4435, %v4431
        %v5496 = vpack.c.b16 %v4436, %v4432
        %v5497 = vpack.c.b16 %v4437, %v4433
        %v5498 = vpack.c.b16 %v4438, %v4434
        %v5499 = vpack.c.b16 %v4443, %v4439
        %v5500 = vpack.c.b16 %v4444, %v4440
        %v5501 = vpack.c.b16 %v4445, %v4441
        %v5502 = vpack.c.b16 %v4446, %v4442
        %v5503 = vpack.c.b16 %v4451, %v4447
        %v5504 = vpack.c.b16 %v4452, %v4448
        %v5505 = vpack.c.b16 %v4453, %v4449
        %v5506 = vpack.c.b16 %v4454, %v4450
        %v5507 = vpack.c.b16 %v4459, %v4455
        %v5508 = vpack.c.b16 %v4460, %v4456
        %v5509 = vpack.c.b16 %v4461, %v4457
        %v5510 = vpack.c.b16 %v4462, %v4458
        %v5511 = vpack.c.b16 %v4467, %v4463
        %v5512 = vpack.c.b16 %v4468, %v4464
        %v5513 = vpack.c.b16 %v4469, %v4465
        %v5514 = vpack.c.b16 %v4470, %v4466
        %v5515 = vpack.c.b16 %v4475, %v4471
        %v5516 = vpack.c.b16 %v4476, %v4472
        %v5517 = vpack.c.b16 %v4477, %v4473
        %v5518 = vpack.c.b16 %v4478, %v4474
        %v5519 = vpack.c.b16 %v4483, %v4479
        %v5520 = vpack.c.b16 %v4484, %v4480
        %v5521 = vpack.c.b16 %v4485, %v4481
        %v5522 = vpack.c.b16 %v4486, %v4482
        %v5523 = vpack.c.b16 %v4491, %v4487
        %v5524 = vpack.c.b16 %v4492, %v4488
        %v5525 = vpack.c.b16 %v4493, %v4489
        %v5526 = vpack.c.b16 %v4494, %v4490
        %v5527 = vpack.c.b16 %v4499, %v4495
        %v5528 = vpack.c.b16 %v4500, %v4496
        %v5529 = vpack.c.b16 %v4501, %v4497
        %v5530 = vpack.c.b16 %v4502, %v4498
        %v5531 = vpack.c.b16 %v4507, %v4503
        %v5532 = vpack.c.b16 %v4508, %v4504
        %v5533 = vpack.c.b16 %v4509, %v4505
        %v5534 = vpack.c.b16 %v4510, %v4506
        %6559 = vmatprep.subr.bf16.mxu0 %v4512
        %6560 = vmatpush1.bf16.msra.mxu0 %v4511
        %6561 = vmatprep.subr.bf16.mxu0 %v4516
        %6562 = vmatpush1.bf16.msra.mxu0 %v4515
        %6563 = vmatprep.subr.bf16.mxu0 %v4520
        %6564 = vmatpush1.bf16.msra.mxu0 %v4519
        %6565 = vmatprep.subr.bf16.mxu0 %v4524
        %6566 = vmatpush1.bf16.msra.mxu0 %v4523
        %6567 = vmatprep.subr.bf16.mxu0 %v4528
        %6568 = vmatpush1.bf16.msra.mxu0 %v4527
        %6569 = vmatprep.subr.bf16.mxu0 %v4532
        %6570 = vmatpush1.bf16.msra.mxu0 %v4531
        %6571 = vmatprep.subr.bf16.mxu0 %v4536
        %6572 = vmatpush1.bf16.msra.mxu0 %v4535
        %6573 = vmatprep.subr.bf16.mxu0 %v4540
        %6574 = vmatpush1.bf16.msra.mxu0 %v4539
        %6575 = vmatprep.subr.bf16.mxu0 %v4544
        %6576 = vmatpush1.bf16.msra.mxu0 %v4543
        %6577 = vmatprep.subr.bf16.mxu0 %v4548
        %6578 = vmatpush1.bf16.msra.mxu0 %v4547
        %6579 = vmatprep.subr.bf16.mxu0 %v4552
        %6580 = vmatpush1.bf16.msra.mxu0 %v4551
        %6581 = vmatprep.subr.bf16.mxu0 %v4556
        %6582 = vmatpush1.bf16.msra.mxu0 %v4555
        %6583 = vmatprep.subr.bf16.mxu0 %v4560
        %6584 = vmatpush1.bf16.msra.mxu0 %v4559
        %6585 = vmatprep.subr.bf16.mxu0 %v4564
        %6586 = vmatpush1.bf16.msra.mxu0 %v4563
        %6587 = vmatprep.subr.bf16.mxu0 %v4568
        %6588 = vmatpush1.bf16.msra.mxu0 %v4567
        %6589 = vmatprep.subr.bf16.mxu0 %v4572
        %6590 = vmatpush1.bf16.msra.mxu0 %v4571
        %6591 = vmatprep.mubr.bf16.mxu0 %v1376
        %6592 = vmatmul.mubr.bf16.gmra.mrb[0].mxu0 %v1375
        %v6593 = vpop.f32.mrb[0].mxu0
        %v6594 = vadd.f32 0.0, %v6593
        %v6595 = vpop.f32.mrb[0].mxu0
        %v6596 = vadd.f32 0.0, %v6595
        %v6597 = vpop.f32.mrb[0].mxu0
        %v6598 = vpop.f32.mrb[0].mxu0
        %6599 = vdwg.mxu0
        %6600 = vmatprep.subr.bf16.mxu0 %v4576
        %6601 = vmatpush1.bf16.msra.mxu0 %v4575
        %6602 = vmatprep.subr.bf16.mxu0 %v4580
        %6603 = vmatpush1.bf16.msra.mxu0 %v4579
        %6604 = vmatprep.subr.bf16.mxu0 %v4584
        %6605 = vmatpush1.bf16.msra.mxu0 %v4583
        %6606 = vmatprep.subr.bf16.mxu0 %v4588
        %6607 = vmatpush1.bf16.msra.mxu0 %v4587
        %6608 = vmatprep.subr.bf16.mxu0 %v4592
        %6609 = vmatpush1.bf16.msra.mxu0 %v4591
        %6610 = vmatprep.subr.bf16.mxu0 %v4596
        %6611 = vmatpush1.bf16.msra.mxu0 %v4595
        %6612 = vmatprep.subr.bf16.mxu0 %v4600
        %6613 = vmatpush1.bf16.msra.mxu0 %v4599
        %6614 = vmatprep.subr.bf16.mxu0 %v4604
        %6615 = vmatpush1.bf16.msra.mxu0 %v4603
        %6616 = vmatprep.subr.bf16.mxu0 %v4608
        %6617 = vmatpush1.bf16.msra.mxu0 %v4607
        %6618 = vmatprep.subr.bf16.mxu0 %v4612
        %6619 = vmatpush1.bf16.msra.mxu0 %v4611
        %6620 = vmatprep.subr.bf16.mxu0 %v4616
        %6621 = vmatpush1.bf16.msra.mxu0 %v4615
        %6622 = vmatprep.subr.bf16.mxu0 %v4620
        %6623 = vmatpush1.bf16.msra.mxu0 %v4619
        %6624 = vmatprep.subr.bf16.mxu0 %v4624
        %6625 = vmatpush1.bf16.msra.mxu0 %v4623
        %6626 = vmatprep.subr.bf16.mxu0 %v4628
        %6627 = vmatpush1.bf16.msra.mxu0 %v4627
        %6628 = vmatprep.subr.bf16.mxu0 %v4632
        %6629 = vmatpush1.bf16.msra.mxu0 %v4631
        %6630 = vmatprep.subr.bf16.mxu0 %v4636
        %6631 = vmatpush1.bf16.msra.mxu0 %v4635
        %6632 = vmatprep.mubr.bf16.mxu0 %v1378
        %6633 = vmatmul.mubr.bf16.gmra.mrb[0].mxu0 %v1377
        %v6634 = vpop.f32.mrb[0].mxu0
        %v6635 = vadd.f32 %v6594, %v6634
        %v6636 = vpop.f32.mrb[0].mxu0
        %v6637 = vadd.f32 %v6596, %v6636
        %v6638 = vpop.f32.mrb[0].mxu0
        %v6639 = vpop.f32.mrb[0].mxu0
        %6640 = vdwg.mxu0
        %6641 = vmatprep.subr.bf16.mxu0 %v4640
        %6642 = vmatpush1.bf16.msra.mxu0 %v4639
        %6643 = vmatprep.subr.bf16.mxu0 %v4644
        %6644 = vmatpush1.bf16.msra.mxu0 %v4643
        %6645 = vmatprep.subr.bf16.mxu0 %v4648
        %6646 = vmatpush1.bf16.msra.mxu0 %v4647
        %6647 = vmatprep.subr.bf16.mxu0 %v4652
        %6648 = vmatpush1.bf16.msra.mxu0 %v4651
        %6649 = vmatprep.subr.bf16.mxu0 %v4656
        %6650 = vmatpush1.bf16.msra.mxu0 %v4655
        %6651 = vmatprep.subr.bf16.mxu0 %v4660
        %6652 = vmatpush1.bf16.msra.mxu0 %v4659
        %6653 = vmatprep.subr.bf16.mxu0 %v4664
        %6654 = vmatpush1.bf16.msra.mxu0 %v4663
        %6655 = vmatprep.subr.bf16.mxu0 %v4668
        %6656 = vmatpush1.bf16.msra.mxu0 %v4667
        %6657 = vmatprep.subr.bf16.mxu0 %v4672
        %6658 = vmatpush1.bf16.msra.mxu0 %v4671
        %6659 = vmatprep.subr.bf16.mxu0 %v4676
        %6660 = vmatpush1.bf16.msra.mxu0 %v4675
        %6661 = vmatprep.subr.bf16.mxu0 %v4680
        %6662 = vmatpush1.bf16.msra.mxu0 %v4679
        %6663 = vmatprep.subr.bf16.mxu0 %v4684
        %6664 = vmatpush1.bf16.msra.mxu0 %v4683
        %6665 = vmatprep.subr.bf16.mxu0 %v4688
        %6666 = vmatpush1.bf16.msra.mxu0 %v4687
        %6667 = vmatprep.subr.bf16.mxu0 %v4692
        %6668 = vmatpush1.bf16.msra.mxu0 %v4691
        %6669 = vmatprep.subr.bf16.mxu0 %v4696
        %6670 = vmatpush1.bf16.msra.mxu0 %v4695
        %6671 = vmatprep.subr.bf16.mxu0 %v4700
        %6672 = vmatpush1.bf16.msra.mxu0 %v4699
        %6673 = vmatprep.mubr.bf16.mxu0 %v1380
        %6674 = vmatmul.mubr.bf16.gmra.mrb[0].mxu0 %v1379
        %v6675 = vpop.f32.mrb[0].mxu0
        %v6676 = vadd.f32 %v6635, %v6675
        %v6677 = vpop.f32.mrb[0].mxu0
        %v6678 = vadd.f32 %v6637, %v6677
        %v6679 = vpop.f32.mrb[0].mxu0
        %v6680 = vpop.f32.mrb[0].mxu0
        %6681 = vdwg.mxu0
        %6682 = vmatprep.subr.bf16.mxu0 %v4704
        %6683 = vmatpush1.bf16.msra.mxu0 %v4703
        %6684 = vmatprep.subr.bf16.mxu0 %v4708
        %6685 = vmatpush1.bf16.msra.mxu0 %v4707
        %6686 = vmatprep.subr.bf16.mxu0 %v4712
        %6687 = vmatpush1.bf16.msra.mxu0 %v4711
        %6688 = vmatprep.subr.bf16.mxu0 %v4716
        %6689 = vmatpush1.bf16.msra.mxu0 %v4715
        %6690 = vmatprep.subr.bf16.mxu0 %v4720
        %6691 = vmatpush1.bf16.msra.mxu0 %v4719
        %6692 = vmatprep.subr.bf16.mxu0 %v4724
        %6693 = vmatpush1.bf16.msra.mxu0 %v4723
        %6694 = vmatprep.subr.bf16.mxu0 %v4728
        %6695 = vmatpush1.bf16.msra.mxu0 %v4727
        %6696 = vmatprep.subr.bf16.mxu0 %v4732
        %6697 = vmatpush1.bf16.msra.mxu0 %v4731
        %6698 = vmatprep.subr.bf16.mxu0 %v4736
        %6699 = vmatpush1.bf16.msra.mxu0 %v4735
        %6700 = vmatprep.subr.bf16.mxu0 %v4740
        %6701 = vmatpush1.bf16.msra.mxu0 %v4739
        %6702 = vmatprep.subr.bf16.mxu0 %v4744
        %6703 = vmatpush1.bf16.msra.mxu0 %v4743
        %6704 = vmatprep.subr.bf16.mxu0 %v4748
        %6705 = vmatpush1.bf16.msra.mxu0 %v4747
        %6706 = vmatprep.subr.bf16.mxu0 %v4752
        %6707 = vmatpush1.bf16.msra.mxu0 %v4751
        %6708 = vmatprep.subr.bf16.mxu0 %v4756
        %6709 = vmatpush1.bf16.msra.mxu0 %v4755
        %6710 = vmatprep.subr.bf16.mxu0 %v4760
        %6711 = vmatpush1.bf16.msra.mxu0 %v4759
        %6712 = vmatprep.subr.bf16.mxu0 %v4764
        %6713 = vmatpush1.bf16.msra.mxu0 %v4763
        %6714 = vmatprep.mubr.bf16.mxu0 %v1382
        %6715 = vmatmul.mubr.bf16.gmra.mrb[0].mxu0 %v1381
        %v6716 = vpop.f32.mrb[0].mxu0
        %v6717 = vadd.f32 %v6676, %v6716
        %v6718 = vpop.f32.mrb[0].mxu0
        %v6719 = vadd.f32 %v6678, %v6718
        %v6720 = vpop.f32.mrb[0].mxu0
        %v6721 = vpop.f32.mrb[0].mxu0
        %6722 = vdwg.mxu0
        %6723 = vmatprep.subr.bf16.mxu0 %v4768
        %6724 = vmatpush1.bf16.msra.mxu0 %v4767
        %6725 = vmatprep.subr.bf16.mxu0 %v4772
        %6726 = vmatpush1.bf16.msra.mxu0 %v4771
        %6727 = vmatprep.subr.bf16.mxu0 %v4776
        %6728 = vmatpush1.bf16.msra.mxu0 %v4775
        %6729 = vmatprep.subr.bf16.mxu0 %v4780
        %6730 = vmatpush1.bf16.msra.mxu0 %v4779
        %6731 = vmatprep.subr.bf16.mxu0 %v4784
        %6732 = vmatpush1.bf16.msra.mxu0 %v4783
        %6733 = vmatprep.subr.bf16.mxu0 %v4788
        %6734 = vmatpush1.bf16.msra.mxu0 %v4787
        %6735 = vmatprep.subr.bf16.mxu0 %v4792
        %6736 = vmatpush1.bf16.msra.mxu0 %v4791
        %6737 = vmatprep.subr.bf16.mxu0 %v4796
        %6738 = vmatpush1.bf16.msra.mxu0 %v4795
        %6739 = vmatprep.subr.bf16.mxu0 %v4800
        %6740 = vmatpush1.bf16.msra.mxu0 %v4799
        %6741 = vmatprep.subr.bf16.mxu0 %v4804
        %6742 = vmatpush1.bf16.msra.mxu0 %v4803
        %6743 = vmatprep.subr.bf16.mxu0 %v4808
        %6744 = vmatpush1.bf16.msra.mxu0 %v4807
        %6745 = vmatprep.subr.bf16.mxu0 %v4812
        %6746 = vmatpush1.bf16.msra.mxu0 %v4811
        %6747 = vmatprep.subr.bf16.mxu0 %v4816
        %6748 = vmatpush1.bf16.msra.mxu0 %v4815
        %6749 = vmatprep.subr.bf16.mxu0 %v4820
        %6750 = vmatpush1.bf16.msra.mxu0 %v4819
        %6751 = vmatprep.subr.bf16.mxu0 %v4824
        %6752 = vmatpush1.bf16.msra.mxu0 %v4823
        %6753 = vmatprep.subr.bf16.mxu0 %v4828
        %6754 = vmatpush1.bf16.msra.mxu0 %v4827
        %6755 = vmatprep.mubr.bf16.mxu0 %v1384
        %6756 = vmatmul.mubr.bf16.gmra.mrb[0].mxu0 %v1383
        %v6757 = vpop.f32.mrb[0].mxu0
        %v6758 = vadd.f32 %v6717, %v6757
        %v6759 = vpop.f32.mrb[0].mxu0
        %v6760 = vadd.f32 %v6719, %v6759
        %v6761 = vpop.f32.mrb[0].mxu0
        %v6762 = vpop.f32.mrb[0].mxu0
        %6763 = vdwg.mxu0
        %6764 = vmatprep.subr.bf16.mxu0 %v4832
        %6765 = vmatpush1.bf16.msra.mxu0 %v4831
        %6766 = vmatprep.subr.bf16.mxu0 %v4836
        %6767 = vmatpush1.bf16.msra.mxu0 %v4835
        %6768 = vmatprep.subr.bf16.mxu0 %v4840
        %6769 = vmatpush1.bf16.msra.mxu0 %v4839
        %6770 = vmatprep.subr.bf16.mxu0 %v4844
        %6771 = vmatpush1.bf16.msra.mxu0 %v4843
        %6772 = vmatprep.subr.bf16.mxu0 %v4848
        %6773 = vmatpush1.bf16.msra.mxu0 %v4847
        %6774 = vmatprep.subr.bf16.mxu0 %v4852
        %6775 = vmatpush1.bf16.msra.mxu0 %v4851
        %6776 = vmatprep.subr.bf16.mxu0 %v4856
        %6777 = vmatpush1.bf16.msra.mxu0 %v4855
        %6778 = vmatprep.subr.bf16.mxu0 %v4860
        %6779 = vmatpush1.bf16.msra.mxu0 %v4859
        %6780 = vmatprep.subr.bf16.mxu0 %v4864
        %6781 = vmatpush1.bf16.msra.mxu0 %v4863
        %6782 = vmatprep.subr.bf16.mxu0 %v4868
        %6783 = vmatpush1.bf16.msra.mxu0 %v4867
        %6784 = vmatprep.subr.bf16.mxu0 %v4872
        %6785 = vmatpush1.bf16.msra.mxu0 %v4871
        %6786 = vmatprep.subr.bf16.mxu0 %v4876
        %6787 = vmatpush1.bf16.msra.mxu0 %v4875
        %6788 = vmatprep.subr.bf16.mxu0 %v4880
        %6789 = vmatpush1.bf16.msra.mxu0 %v4879
        %6790 = vmatprep.subr.bf16.mxu0 %v4884
        %6791 = vmatpush1.bf16.msra.mxu0 %v4883
        %6792 = vmatprep.subr.bf16.mxu0 %v4888
        %6793 = vmatpush1.bf16.msra.mxu0 %v4887
        %6794 = vmatprep.subr.bf16.mxu0 %v4892
        %6795 = vmatpush1.bf16.msra.mxu0 %v4891
        %6796 = vmatprep.mubr.bf16.mxu0 %v1386
        %6797 = vmatmul.mubr.bf16.gmra.mrb[0].mxu0 %v1385
        %v6798 = vpop.f32.mrb[0].mxu0
        %v6799 = vadd.f32 %v6758, %v6798
        %v6800 = vpop.f32.mrb[0].mxu0
        %v6801 = vadd.f32 %v6760, %v6800
        %v6802 = vpop.f32.mrb[0].mxu0
        %v6803 = vpop.f32.mrb[0].mxu0
        %6804 = vdwg.mxu0
        %6805 = vmatprep.subr.bf16.mxu0 %v4896
        %6806 = vmatpush1.bf16.msra.mxu0 %v4895
        %6807 = vmatprep.subr.bf16.mxu0 %v4900
        %6808 = vmatpush1.bf16.msra.mxu0 %v4899
        %6809 = vmatprep.subr.bf16.mxu0 %v4904
        %6810 = vmatpush1.bf16.msra.mxu0 %v4903
        %6811 = vmatprep.subr.bf16.mxu0 %v4908
        %6812 = vmatpush1.bf16.msra.mxu0 %v4907
        %6813 = vmatprep.subr.bf16.mxu0 %v4912
        %6814 = vmatpush1.bf16.msra.mxu0 %v4911
        %6815 = vmatprep.subr.bf16.mxu0 %v4916
        %6816 = vmatpush1.bf16.msra.mxu0 %v4915
        %6817 = vmatprep.subr.bf16.mxu0 %v4920
        %6818 = vmatpush1.bf16.msra.mxu0 %v4919
        %6819 = vmatprep.subr.bf16.mxu0 %v4924
        %6820 = vmatpush1.bf16.msra.mxu0 %v4923
        %6821 = vmatprep.subr.bf16.mxu0 %v4928
        %6822 = vmatpush1.bf16.msra.mxu0 %v4927
        %6823 = vmatprep.subr.bf16.mxu0 %v4932
        %6824 = vmatpush1.bf16.msra.mxu0 %v4931
        %6825 = vmatprep.subr.bf16.mxu0 %v4936
        %6826 = vmatpush1.bf16.msra.mxu0 %v4935
        %6827 = vmatprep.subr.bf16.mxu0 %v4940
        %6828 = vmatpush1.bf16.msra.mxu0 %v4939
        %6829 = vmatprep.subr.bf16.mxu0 %v4944
        %6830 = vmatpush1.bf16.msra.mxu0 %v4943
        %6831 = vmatprep.subr.bf16.mxu0 %v4948
        %6832 = vmatpush1.bf16.msra.mxu0 %v4947
        %6833 = vmatprep.subr.bf16.mxu0 %v4952
        %6834 = vmatpush1.bf16.msra.mxu0 %v4951
        %6835 = vmatprep.subr.bf16.mxu0 %v4956
        %6836 = vmatpush1.bf16.msra.mxu0 %v4955
        %6837 = vmatprep.mubr.bf16.mxu0 %v1388
        %6838 = vmatmul.mubr.bf16.gmra.mrb[0].mxu0 %v1387
        %v6839 = vpop.f32.mrb[0].mxu0
        %v6840 = vadd.f32 %v6799, %v6839
        %v6841 = vpop.f32.mrb[0].mxu0
        %v6842 = vadd.f32 %v6801, %v6841
        %v6843 = vpop.f32.mrb[0].mxu0
        %v6844 = vpop.f32.mrb[0].mxu0
        %6845 = vdwg.mxu0
        %6846 = vmatprep.subr.bf16.mxu0 %v4960
        %6847 = vmatpush1.bf16.msra.mxu0 %v4959
        %6848 = vmatprep.subr.bf16.mxu0 %v4964
        %6849 = vmatpush1.bf16.msra.mxu0 %v4963
        %6850 = vmatprep.subr.bf16.mxu0 %v4968
        %6851 = vmatpush1.bf16.msra.mxu0 %v4967
        %6852 = vmatprep.subr.bf16.mxu0 %v4972
        %6853 = vmatpush1.bf16.msra.mxu0 %v4971
        %6854 = vmatprep.subr.bf16.mxu0 %v4976
        %6855 = vmatpush1.bf16.msra.mxu0 %v4975
        %6856 = vmatprep.subr.bf16.mxu0 %v4980
        %6857 = vmatpush1.bf16.msra.mxu0 %v4979
        %6858 = vmatprep.subr.bf16.mxu0 %v4984
        %6859 = vmatpush1.bf16.msra.mxu0 %v4983
        %6860 = vmatprep.subr.bf16.mxu0 %v4988
        %6861 = vmatpush1.bf16.msra.mxu0 %v4987
        %6862 = vmatprep.subr.bf16.mxu0 %v4992
        %6863 = vmatpush1.bf16.msra.mxu0 %v4991
        %6864 = vmatprep.subr.bf16.mxu0 %v4996
        %6865 = vmatpush1.bf16.msra.mxu0 %v4995
        %6866 = vmatprep.subr.bf16.mxu0 %v5000
        %6867 = vmatpush1.bf16.msra.mxu0 %v4999
        %6868 = vmatprep.subr.bf16.mxu0 %v5004
        %6869 = vmatpush1.bf16.msra.mxu0 %v5003
        %6870 = vmatprep.subr.bf16.mxu0 %v5008
        %6871 = vmatpush1.bf16.msra.mxu0 %v5007
        %6872 = vmatprep.subr.bf16.mxu0 %v5012
        %6873 = vmatpush1.bf16.msra.mxu0 %v5011
        %6874 = vmatprep.subr.bf16.mxu0 %v5016
        %6875 = vmatpush1.bf16.msra.mxu0 %v5015
        %6876 = vmatprep.subr.bf16.mxu0 %v5020
        %6877 = vmatpush1.bf16.msra.mxu0 %v5019
        %6878 = vmatprep.mubr.bf16.mxu0 %v1390
        %6879 = vmatmul.mubr.bf16.gmra.mrb[0].mxu0 %v1389
        %v6880 = vpop.f32.mrb[0].mxu0
        %v6881 = vadd.f32 %v6840, %v6880
        %v6882 = vpop.f32.mrb[0].mxu0
        %v6883 = vadd.f32 %v6842, %v6882
        %v6884 = vpop.f32.mrb[0].mxu0
        %v6885 = vpop.f32.mrb[0].mxu0
        %6886 = vdwg.mxu0
        %6887 = vmatprep.subr.bf16.mxu0 %v5024
        %6888 = vmatpush1.bf16.msra.mxu0 %v5023
        %6889 = vmatprep.subr.bf16.mxu0 %v5028
        %6890 = vmatpush1.bf16.msra.mxu0 %v5027
        %6891 = vmatprep.subr.bf16.mxu0 %v5032
        %6892 = vmatpush1.bf16.msra.mxu0 %v5031
        %6893 = vmatprep.subr.bf16.mxu0 %v5036
        %6894 = vmatpush1.bf16.msra.mxu0 %v5035
        %6895 = vmatprep.subr.bf16.mxu0 %v5040
        %6896 = vmatpush1.bf16.msra.mxu0 %v5039
        %6897 = vmatprep.subr.bf16.mxu0 %v5044
        %6898 = vmatpush1.bf16.msra.mxu0 %v5043
        %6899 = vmatprep.subr.bf16.mxu0 %v5048
        %6900 = vmatpush1.bf16.msra.mxu0 %v5047
        %6901 = vmatprep.subr.bf16.mxu0 %v5052
        %6902 = vmatpush1.bf16.msra.mxu0 %v5051
        %6903 = vmatprep.subr.bf16.mxu0 %v5056
        %6904 = vmatpush1.bf16.msra.mxu0 %v5055
        %6905 = vmatprep.subr.bf16.mxu0 %v5060
        %6906 = vmatpush1.bf16.msra.mxu0 %v5059
        %6907 = vmatprep.subr.bf16.mxu0 %v5064
        %6908 = vmatpush1.bf16.msra.mxu0 %v5063
        %6909 = vmatprep.subr.bf16.mxu0 %v5068
        %6910 = vmatpush1.bf16.msra.mxu0 %v5067
        %6911 = vmatprep.subr.bf16.mxu0 %v5072
        %6912 = vmatpush1.bf16.msra.mxu0 %v5071
        %6913 = vmatprep.subr.bf16.mxu0 %v5076
        %6914 = vmatpush1.bf16.msra.mxu0 %v5075
        %6915 = vmatprep.subr.bf16.mxu0 %v5080
        %6916 = vmatpush1.bf16.msra.mxu0 %v5079
        %6917 = vmatprep.subr.bf16.mxu0 %v5084
        %6918 = vmatpush1.bf16.msra.mxu0 %v5083
        %6919 = vmatprep.mubr.bf16.mxu0 %v1392
        %6920 = vmatmul.mubr.bf16.gmra.mrb[0].mxu0 %v1391
        %v6921 = vpop.f32.mrb[0].mxu0
        %v6922 = vadd.f32 %v6881, %v6921
        %v6923 = vpop.f32.mrb[0].mxu0
        %v6924 = vadd.f32 %v6883, %v6923
        %v6925 = vpop.f32.mrb[0].mxu0
        %v6926 = vpop.f32.mrb[0].mxu0
        %6927 = vdwg.mxu0
        %6928 = vmatprep.subr.bf16.mxu0 %v5088
        %6929 = vmatpush1.bf16.msra.mxu0 %v5087
        %6930 = vmatprep.subr.bf16.mxu0 %v5092
        %6931 = vmatpush1.bf16.msra.mxu0 %v5091
        %6932 = vmatprep.subr.bf16.mxu0 %v5096
        %6933 = vmatpush1.bf16.msra.mxu0 %v5095
        %6934 = vmatprep.subr.bf16.mxu0 %v5100
        %6935 = vmatpush1.bf16.msra.mxu0 %v5099
        %6936 = vmatprep.subr.bf16.mxu0 %v5104
        %6937 = vmatpush1.bf16.msra.mxu0 %v5103
        %6938 = vmatprep.subr.bf16.mxu0 %v5108
        %6939 = vmatpush1.bf16.msra.mxu0 %v5107
        %6940 = vmatprep.subr.bf16.mxu0 %v5112
        %6941 = vmatpush1.bf16.msra.mxu0 %v5111
        %6942 = vmatprep.subr.bf16.mxu0 %v5116
        %6943 = vmatpush1.bf16.msra.mxu0 %v5115
        %6944 = vmatprep.subr.bf16.mxu0 %v5120
        %6945 = vmatpush1.bf16.msra.mxu0 %v5119
        %6946 = vmatprep.subr.bf16.mxu0 %v5124
        %6947 = vmatpush1.bf16.msra.mxu0 %v5123
        %6948 = vmatprep.subr.bf16.mxu0 %v5128
        %6949 = vmatpush1.bf16.msra.mxu0 %v5127
        %6950 = vmatprep.subr.bf16.mxu0 %v5132
        %6951 = vmatpush1.bf16.msra.mxu0 %v5131
        %6952 = vmatprep.subr.bf16.mxu0 %v5136
        %6953 = vmatpush1.bf16.msra.mxu0 %v5135
        %6954 = vmatprep.subr.bf16.mxu0 %v5140
        %6955 = vmatpush1.bf16.msra.mxu0 %v5139
        %6956 = vmatprep.subr.bf16.mxu0 %v5144
        %6957 = vmatpush1.bf16.msra.mxu0 %v5143
        %6958 = vmatprep.subr.bf16.mxu0 %v5148
        %6959 = vmatpush1.bf16.msra.mxu0 %v5147
        %6960 = vmatprep.mubr.bf16.mxu0 %v1394
        %6961 = vmatmul.mubr.bf16.gmra.mrb[0].mxu0 %v1393
        %v6962 = vpop.f32.mrb[0].mxu0
        %v6963 = vadd.f32 %v6922, %v6962
        %v6964 = vpop.f32.mrb[0].mxu0
        %v6965 = vadd.f32 %v6924, %v6964
        %v6966 = vpop.f32.mrb[0].mxu0
        %v6967 = vpop.f32.mrb[0].mxu0
        %6968 = vdwg.mxu0
        %6969 = vmatprep.subr.bf16.mxu0 %v5152
        %6970 = vmatpush1.bf16.msra.mxu0 %v5151
        %6971 = vmatprep.subr.bf16.mxu0 %v5156
        %6972 = vmatpush1.bf16.msra.mxu0 %v5155
        %6973 = vmatprep.subr.bf16.mxu0 %v5160
        %6974 = vmatpush1.bf16.msra.mxu0 %v5159
        %6975 = vmatprep.subr.bf16.mxu0 %v5164
        %6976 = vmatpush1.bf16.msra.mxu0 %v5163
        %6977 = vmatprep.subr.bf16.mxu0 %v5168
        %6978 = vmatpush1.bf16.msra.mxu0 %v5167
        %6979 = vmatprep.subr.bf16.mxu0 %v5172
        %6980 = vmatpush1.bf16.msra.mxu0 %v5171
        %6981 = vmatprep.subr.bf16.mxu0 %v5176
        %6982 = vmatpush1.bf16.msra.mxu0 %v5175
        %6983 = vmatprep.subr.bf16.mxu0 %v5180
        %6984 = vmatpush1.bf16.msra.mxu0 %v5179
        %6985 = vmatprep.subr.bf16.mxu0 %v5184
        %6986 = vmatpush1.bf16.msra.mxu0 %v5183
        %6987 = vmatprep.subr.bf16.mxu0 %v5188
        %6988 = vmatpush1.bf16.msra.mxu0 %v5187
        %6989 = vmatprep.subr.bf16.mxu0 %v5192
        %6990 = vmatpush1.bf16.msra.mxu0 %v5191
        %6991 = vmatprep.subr.bf16.mxu0 %v5196
        %6992 = vmatpush1.bf16.msra.mxu0 %v5195
        %6993 = vmatprep.subr.bf16.mxu0 %v5200
        %6994 = vmatpush1.bf16.msra.mxu0 %v5199
        %6995 = vmatprep.subr.bf16.mxu0 %v5204
        %6996 = vmatpush1.bf16.msra.mxu0 %v5203
        %6997 = vmatprep.subr.bf16.mxu0 %v5208
        %6998 = vmatpush1.bf16.msra.mxu0 %v5207
        %6999 = vmatprep.subr.bf16.mxu0 %v5212
        %7000 = vmatpush1.bf16.msra.mxu0 %v5211
        %7001 = vmatprep.mubr.bf16.mxu0 %v1396
        %7002 = vmatmul.mubr.bf16.gmra.mrb[0].mxu0 %v1395
        %v7003 = vpop.f32.mrb[0].mxu0
        %v7004 = vadd.f32 %v6963, %v7003
        %v7005 = vpop.f32.mrb[0].mxu0
        %v7006 = vadd.f32 %v6965, %v7005
        %v7007 = vpop.f32.mrb[0].mxu0
        %v7008 = vpop.f32.mrb[0].mxu0
        %7009 = vdwg.mxu0
        %7010 = vmatprep.subr.bf16.mxu0 %v5216
        %7011 = vmatpush1.bf16.msra.mxu0 %v5215
        %7012 = vmatprep.subr.bf16.mxu0 %v5220
        %7013 = vmatpush1.bf16.msra.mxu0 %v5219
        %7014 = vmatprep.subr.bf16.mxu0 %v5224
        %7015 = vmatpush1.bf16.msra.mxu0 %v5223
        %7016 = vmatprep.subr.bf16.mxu0 %v5228
        %7017 = vmatpush1.bf16.msra.mxu0 %v5227
        %7018 = vmatprep.subr.bf16.mxu0 %v5232
        %7019 = vmatpush1.bf16.msra.mxu0 %v5231
        %7020 = vmatprep.subr.bf16.mxu0 %v5236
        %7021 = vmatpush1.bf16.msra.mxu0 %v5235
        %7022 = vmatprep.subr.bf16.mxu0 %v5240
        %7023 = vmatpush1.bf16.msra.mxu0 %v5239
        %7024 = vmatprep.subr.bf16.mxu0 %v5244
        %7025 = vmatpush1.bf16.msra.mxu0 %v5243
        %7026 = vmatprep.subr.bf16.mxu0 %v5248
        %7027 = vmatpush1.bf16.msra.mxu0 %v5247
        %7028 = vmatprep.subr.bf16.mxu0 %v5252
        %7029 = vmatpush1.bf16.msra.mxu0 %v5251
        %7030 = vmatprep.subr.bf16.mxu0 %v5256
        %7031 = vmatpush1.bf16.msra.mxu0 %v5255
        %7032 = vmatprep.subr.bf16.mxu0 %v5260
        %7033 = vmatpush1.bf16.msra.mxu0 %v5259
        %7034 = vmatprep.subr.bf16.mxu0 %v5264
        %7035 = vmatpush1.bf16.msra.mxu0 %v5263
        %7036 = vmatprep.subr.bf16.mxu0 %v5268
        %7037 = vmatpush1.bf16.msra.mxu0 %v5267
        %7038 = vmatprep.subr.bf16.mxu0 %v5272
        %7039 = vmatpush1.bf16.msra.mxu0 %v5271
        %7040 = vmatprep.subr.bf16.mxu0 %v5276
        %7041 = vmatpush1.bf16.msra.mxu0 %v5275
        %7042 = vmatprep.mubr.bf16.mxu0 %v1398
        %7043 = vmatmul.mubr.bf16.gmra.mrb[0].mxu0 %v1397
        %v7044 = vpop.f32.mrb[0].mxu0
        %v7045 = vadd.f32 %v7004, %v7044
        %v7046 = vpop.f32.mrb[0].mxu0
        %v7047 = vadd.f32 %v7006, %v7046
        %v7048 = vpop.f32.mrb[0].mxu0
        %v7049 = vpop.f32.mrb[0].mxu0
        %7050 = vdwg.mxu0
        %7051 = vmatprep.subr.bf16.mxu0 %v5280
        %7052 = vmatpush1.bf16.msra.mxu0 %v5279
        %7053 = vmatprep.subr.bf16.mxu0 %v5284
        %7054 = vmatpush1.bf16.msra.mxu0 %v5283
        %7055 = vmatprep.subr.bf16.mxu0 %v5288
        %7056 = vmatpush1.bf16.msra.mxu0 %v5287
        %7057 = vmatprep.subr.bf16.mxu0 %v5292
        %7058 = vmatpush1.bf16.msra.mxu0 %v5291
        %7059 = vmatprep.subr.bf16.mxu0 %v5296
        %7060 = vmatpush1.bf16.msra.mxu0 %v5295
        %7061 = vmatprep.subr.bf16.mxu0 %v5300
        %7062 = vmatpush1.bf16.msra.mxu0 %v5299
        %7063 = vmatprep.subr.bf16.mxu0 %v5304
        %7064 = vmatpush1.bf16.msra.mxu0 %v5303
        %7065 = vmatprep.subr.bf16.mxu0 %v5308
        %7066 = vmatpush1.bf16.msra.mxu0 %v5307
        %7067 = vmatprep.subr.bf16.mxu0 %v5312
        %7068 = vmatpush1.bf16.msra.mxu0 %v5311
        %7069 = vmatprep.subr.bf16.mxu0 %v5316
        %7070 = vmatpush1.bf16.msra.mxu0 %v5315
        %7071 = vmatprep.subr.bf16.mxu0 %v5320
        %7072 = vmatpush1.bf16.msra.mxu0 %v5319
        %7073 = vmatprep.subr.bf16.mxu0 %v5324
        %7074 = vmatpush1.bf16.msra.mxu0 %v5323
        %7075 = vmatprep.subr.bf16.mxu0 %v5328
        %7076 = vmatpush1.bf16.msra.mxu0 %v5327
        %7077 = vmatprep.subr.bf16.mxu0 %v5332
        %7078 = vmatpush1.bf16.msra.mxu0 %v5331
        %7079 = vmatprep.subr.bf16.mxu0 %v5336
        %7080 = vmatpush1.bf16.msra.mxu0 %v5335
        %7081 = vmatprep.subr.bf16.mxu0 %v5340
        %7082 = vmatpush1.bf16.msra.mxu0 %v5339
        %7083 = vmatprep.mubr.bf16.mxu0 %v1400
        %7084 = vmatmul.mubr.bf16.gmra.mrb[0].mxu0 %v1399
        %v7085 = vpop.f32.mrb[0].mxu0
        %v7086 = vadd.f32 %v7045, %v7085
        %v7087 = vpop.f32.mrb[0].mxu0
        %v7088 = vadd.f32 %v7047, %v7087
        %v7089 = vpop.f32.mrb[0].mxu0
        %v7090 = vpop.f32.mrb[0].mxu0
        %7091 = vdwg.mxu0
        %7092 = vmatprep.subr.bf16.mxu0 %v5344
        %7093 = vmatpush1.bf16.msra.mxu0 %v5343
        %7094 = vmatprep.subr.bf16.mxu0 %v5348
        %7095 = vmatpush1.bf16.msra.mxu0 %v5347
        %7096 = vmatprep.subr.bf16.mxu0 %v5352
        %7097 = vmatpush1.bf16.msra.mxu0 %v5351
        %7098 = vmatprep.subr.bf16.mxu0 %v5356
        %7099 = vmatpush1.bf16.msra.mxu0 %v5355
        %7100 = vmatprep.subr.bf16.mxu0 %v5360
        %7101 = vmatpush1.bf16.msra.mxu0 %v5359
        %7102 = vmatprep.subr.bf16.mxu0 %v5364
        %7103 = vmatpush1.bf16.msra.mxu0 %v5363
        %7104 = vmatprep.subr.bf16.mxu0 %v5368
        %7105 = vmatpush1.bf16.msra.mxu0 %v5367
        %7106 = vmatprep.subr.bf16.mxu0 %v5372
        %7107 = vmatpush1.bf16.msra.mxu0 %v5371
        %7108 = vmatprep.subr.bf16.mxu0 %v5376
        %7109 = vmatpush1.bf16.msra.mxu0 %v5375
        %7110 = vmatprep.subr.bf16.mxu0 %v5380
        %7111 = vmatpush1.bf16.msra.mxu0 %v5379
        %7112 = vmatprep.subr.bf16.mxu0 %v5384
        %7113 = vmatpush1.bf16.msra.mxu0 %v5383
        %7114 = vmatprep.subr.bf16.mxu0 %v5388
        %7115 = vmatpush1.bf16.msra.mxu0 %v5387
        %7116 = vmatprep.subr.bf16.mxu0 %v5392
        %7117 = vmatpush1.bf16.msra.mxu0 %v5391
        %7118 = vmatprep.subr.bf16.mxu0 %v5396
        %7119 = vmatpush1.bf16.msra.mxu0 %v5395
        %7120 = vmatprep.subr.bf16.mxu0 %v5400
        %7121 = vmatpush1.bf16.msra.mxu0 %v5399
        %7122 = vmatprep.subr.bf16.mxu0 %v5404
        %7123 = vmatpush1.bf16.msra.mxu0 %v5403
        %7124 = vmatprep.mubr.bf16.mxu0 %v1402
        %7125 = vmatmul.mubr.bf16.gmra.mrb[0].mxu0 %v1401
        %v7126 = vpop.f32.mrb[0].mxu0
        %v7127 = vadd.f32 %v7086, %v7126
        %v7128 = vpop.f32.mrb[0].mxu0
        %v7129 = vadd.f32 %v7088, %v7128
        %v7130 = vpop.f32.mrb[0].mxu0
        %v7131 = vpop.f32.mrb[0].mxu0
        %7132 = vdwg.mxu0
        %7133 = vmatprep.subr.bf16.mxu0 %v5408
        %7134 = vmatpush1.bf16.msra.mxu0 %v5407
        %7135 = vmatprep.subr.bf16.mxu0 %v5412
        %7136 = vmatpush1.bf16.msra.mxu0 %v5411
        %7137 = vmatprep.subr.bf16.mxu0 %v5416
        %7138 = vmatpush1.bf16.msra.mxu0 %v5415
        %7139 = vmatprep.subr.bf16.mxu0 %v5420
        %7140 = vmatpush1.bf16.msra.mxu0 %v5419
        %7141 = vmatprep.subr.bf16.mxu0 %v5424
        %7142 = vmatpush1.bf16.msra.mxu0 %v5423
        %7143 = vmatprep.subr.bf16.mxu0 %v5428
        %7144 = vmatpush1.bf16.msra.mxu0 %v5427
        %7145 = vmatprep.subr.bf16.mxu0 %v5432
        %7146 = vmatpush1.bf16.msra.mxu0 %v5431
        %7147 = vmatprep.subr.bf16.mxu0 %v5436
        %7148 = vmatpush1.bf16.msra.mxu0 %v5435
        %7149 = vmatprep.subr.bf16.mxu0 %v5440
        %7150 = vmatpush1.bf16.msra.mxu0 %v5439
        %7151 = vmatprep.subr.bf16.mxu0 %v5444
        %7152 = vmatpush1.bf16.msra.mxu0 %v5443
        %7153 = vmatprep.subr.bf16.mxu0 %v5448
        %7154 = vmatpush1.bf16.msra.mxu0 %v5447
        %7155 = vmatprep.subr.bf16.mxu0 %v5452
        %7156 = vmatpush1.bf16.msra.mxu0 %v5451
        %7157 = vmatprep.subr.bf16.mxu0 %v5456
        %7158 = vmatpush1.bf16.msra.mxu0 %v5455
        %7159 = vmatprep.subr.bf16.mxu0 %v5460
        %7160 = vmatpush1.bf16.msra.mxu0 %v5459
        %7161 = vmatprep.subr.bf16.mxu0 %v5464
        %7162 = vmatpush1.bf16.msra.mxu0 %v5463
        %7163 = vmatprep.subr.bf16.mxu0 %v5468
        %7164 = vmatpush1.bf16.msra.mxu0 %v5467
        %7165 = vmatprep.mubr.bf16.mxu0 %v1404
        %7166 = vmatmul.mubr.bf16.gmra.mrb[0].mxu0 %v1403
        %v7167 = vpop.f32.mrb[0].mxu0
        %v7168 = vadd.f32 %v7127, %v7167
        %v7169 = vpop.f32.mrb[0].mxu0
        %v7170 = vadd.f32 %v7129, %v7169
        %v7171 = vpop.f32.mrb[0].mxu0
        %v7172 = vpop.f32.mrb[0].mxu0
        %7173 = vdwg.mxu0
        %7174 = vmatprep.subr.bf16.mxu0 %v5472
        %7175 = vmatpush1.bf16.msra.mxu0 %v5471
        %7176 = vmatprep.subr.bf16.mxu0 %v5476
        %7177 = vmatpush1.bf16.msra.mxu0 %v5475
        %7178 = vmatprep.subr.bf16.mxu0 %v5480
        %7179 = vmatpush1.bf16.msra.mxu0 %v5479
        %7180 = vmatprep.subr.bf16.mxu0 %v5484
        %7181 = vmatpush1.bf16.msra.mxu0 %v5483
        %7182 = vmatprep.subr.bf16.mxu0 %v5488
        %7183 = vmatpush1.bf16.msra.mxu0 %v5487
        %7184 = vmatprep.subr.bf16.mxu0 %v5492
        %7185 = vmatpush1.bf16.msra.mxu0 %v5491
        %7186 = vmatprep.subr.bf16.mxu0 %v5496
        %7187 = vmatpush1.bf16.msra.mxu0 %v5495
        %7188 = vmatprep.subr.bf16.mxu0 %v5500
        %7189 = vmatpush1.bf16.msra.mxu0 %v5499
        %7190 = vmatprep.subr.bf16.mxu0 %v5504
        %7191 = vmatpush1.bf16.msra.mxu0 %v5503
        %7192 = vmatprep.subr.bf16.mxu0 %v5508
        %7193 = vmatpush1.bf16.msra.mxu0 %v5507
        %7194 = vmatprep.subr.bf16.mxu0 %v5512
        %7195 = vmatpush1.bf16.msra.mxu0 %v5511
        %7196 = vmatprep.subr.bf16.mxu0 %v5516
        %7197 = vmatpush1.bf16.msra.mxu0 %v5515
        %7198 = vmatprep.subr.bf16.mxu0 %v5520
        %7199 = vmatpush1.bf16.msra.mxu0 %v5519
        %7200 = vmatprep.subr.bf16.mxu0 %v5524
        %7201 = vmatpush1.bf16.msra.mxu0 %v5523
        %7202 = vmatprep.subr.bf16.mxu0 %v5528
        %7203 = vmatpush1.bf16.msra.mxu0 %v5527
        %7204 = vmatprep.subr.bf16.mxu0 %v5532
        %7205 = vmatpush1.bf16.msra.mxu0 %v5531
        %7206 = vmatprep.mubr.bf16.mxu0 %v1406
        %7207 = vmatmul.mubr.bf16.gmra.mrb[0].mxu0 %v1405
        %v7208 = vpop.f32.mrb[0].mxu0
        %v7209 = vadd.f32 %v7168, %v7208
        %v7210 = vpop.f32.mrb[0].mxu0
        %v7211 = vadd.f32 %v7170, %v7210
        %v7212 = vpop.f32.mrb[0].mxu0
        %v7213 = vpop.f32.mrb[0].mxu0
        %7214 = vdwg.mxu0
        %7215 = vmatprep.subr.bf16.mxu0 %v4514
        %7216 = vmatpush1.bf16.msra.mxu0 %v4513
        %7217 = vmatprep.subr.bf16.mxu0 %v4518
        %7218 = vmatpush1.bf16.msra.mxu0 %v4517
        %7219 = vmatprep.subr.bf16.mxu0 %v4522
        %7220 = vmatpush1.bf16.msra.mxu0 %v4521
        %7221 = vmatprep.subr.bf16.mxu0 %v4526
        %7222 = vmatpush1.bf16.msra.mxu0 %v4525
        %7223 = vmatprep.subr.bf16.mxu0 %v4530
        %7224 = vmatpush1.bf16.msra.mxu0 %v4529
        %7225 = vmatprep.subr.bf16.mxu0 %v4534
        %7226 = vmatpush1.bf16.msra.mxu0 %v4533
        %7227 = vmatprep.subr.bf16.mxu0 %v4538
        %7228 = vmatpush1.bf16.msra.mxu0 %v4537
        %7229 = vmatprep.subr.bf16.mxu0 %v4542
        %7230 = vmatpush1.bf16.msra.mxu0 %v4541
        %7231 = vmatprep.subr.bf16.mxu0 %v4546
        %7232 = vmatpush1.bf16.msra.mxu0 %v4545
        %7233 = vmatprep.subr.bf16.mxu0 %v4550
        %7234 = vmatpush1.bf16.msra.mxu0 %v4549
        %7235 = vmatprep.subr.bf16.mxu0 %v4554
        %7236 = vmatpush1.bf16.msra.mxu0 %v4553
        %7237 = vmatprep.subr.bf16.mxu0 %v4558
        %7238 = vmatpush1.bf16.msra.mxu0 %v4557
        %7239 = vmatprep.subr.bf16.mxu0 %v4562
        %7240 = vmatpush1.bf16.msra.mxu0 %v4561
        %7241 = vmatprep.subr.bf16.mxu0 %v4566
        %7242 = vmatpush1.bf16.msra.mxu0 %v4565
        %7243 = vmatprep.subr.bf16.mxu0 %v4570
        %7244 = vmatpush1.bf16.msra.mxu0 %v4569
        %7245 = vmatprep.subr.bf16.mxu0 %v4574
        %7246 = vmatpush1.bf16.msra.mxu0 %v4573
        %7247 = vmatprep.mubr.bf16.mxu0 %v1376
        %7248 = vmatmul.mubr.bf16.gmra.mrb[0].mxu0 %v1375
        %v7249 = vpop.f32.mrb[0].mxu0
        %v7250 = vadd.f32 0.0, %v7249
        %v7251 = vpop.f32.mrb[0].mxu0
        %v7252 = vadd.f32 0.0, %v7251
        %v7253 = vpop.f32.mrb[0].mxu0
        %v7254 = vpop.f32.mrb[0].mxu0
        %7255 = vdwg.mxu0
        %7256 = vmatprep.subr.bf16.mxu0 %v4578
        %7257 = vmatpush1.bf16.msra.mxu0 %v4577
        %7258 = vmatprep.subr.bf16.mxu0 %v4582
        %7259 = vmatpush1.bf16.msra.mxu0 %v4581
        %7260 = vmatprep.subr.bf16.mxu0 %v4586
        %7261 = vmatpush1.bf16.msra.mxu0 %v4585
        %7262 = vmatprep.subr.bf16.mxu0 %v4590
        %7263 = vmatpush1.bf16.msra.mxu0 %v4589
        %7264 = vmatprep.subr.bf16.mxu0 %v4594
        %7265 = vmatpush1.bf16.msra.mxu0 %v4593
        %7266 = vmatprep.subr.bf16.mxu0 %v4598
        %7267 = vmatpush1.bf16.msra.mxu0 %v4597
        %7268 = vmatprep.subr.bf16.mxu0 %v4602
        %7269 = vmatpush1.bf16.msra.mxu0 %v4601
        %7270 = vmatprep.subr.bf16.mxu0 %v4606
        %7271 = vmatpush1.bf16.msra.mxu0 %v4605
        %7272 = vmatprep.subr.bf16.mxu0 %v4610
        %7273 = vmatpush1.bf16.msra.mxu0 %v4609
        %7274 = vmatprep.subr.bf16.mxu0 %v4614
        %7275 = vmatpush1.bf16.msra.mxu0 %v4613
        %7276 = vmatprep.subr.bf16.mxu0 %v4618
        %7277 = vmatpush1.bf16.msra.mxu0 %v4617
        %7278 = vmatprep.subr.bf16.mxu0 %v4622
        %7279 = vmatpush1.bf16.msra.mxu0 %v4621
        %7280 = vmatprep.subr.bf16.mxu0 %v4626
        %7281 = vmatpush1.bf16.msra.mxu0 %v4625
        %7282 = vmatprep.subr.bf16.mxu0 %v4630
        %7283 = vmatpush1.bf16.msra.mxu0 %v4629
        %7284 = vmatprep.subr.bf16.mxu0 %v4634
        %7285 = vmatpush1.bf16.msra.mxu0 %v4633
        %7286 = vmatprep.subr.bf16.mxu0 %v4638
        %7287 = vmatpush1.bf16.msra.mxu0 %v4637
        %7288 = vmatprep.mubr.bf16.mxu0 %v1378
        %7289 = vmatmul.mubr.bf16.gmra.mrb[0].mxu0 %v1377
        %v7290 = vpop.f32.mrb[0].mxu0
        %v7291 = vadd.f32 %v7250, %v7290
        %v7292 = vpop.f32.mrb[0].mxu0
        %v7293 = vadd.f32 %v7252, %v7292
        %v7294 = vpop.f32.mrb[0].mxu0
        %v7295 = vpop.f32.mrb[0].mxu0
        %7296 = vdwg.mxu0
        %7297 = vmatprep.subr.bf16.mxu0 %v4642
        %7298 = vmatpush1.bf16.msra.mxu0 %v4641
        %7299 = vmatprep.subr.bf16.mxu0 %v4646
        %7300 = vmatpush1.bf16.msra.mxu0 %v4645
        %7301 = vmatprep.subr.bf16.mxu0 %v4650
        %7302 = vmatpush1.bf16.msra.mxu0 %v4649
        %7303 = vmatprep.subr.bf16.mxu0 %v4654
        %7304 = vmatpush1.bf16.msra.mxu0 %v4653
        %7305 = vmatprep.subr.bf16.mxu0 %v4658
        %7306 = vmatpush1.bf16.msra.mxu0 %v4657
        %7307 = vmatprep.subr.bf16.mxu0 %v4662
        %7308 = vmatpush1.bf16.msra.mxu0 %v4661
        %7309 = vmatprep.subr.bf16.mxu0 %v4666
        %7310 = vmatpush1.bf16.msra.mxu0 %v4665
        %7311 = vmatprep.subr.bf16.mxu0 %v4670
        %7312 = vmatpush1.bf16.msra.mxu0 %v4669
        %7313 = vmatprep.subr.bf16.mxu0 %v4674
        %7314 = vmatpush1.bf16.msra.mxu0 %v4673
        %7315 = vmatprep.subr.bf16.mxu0 %v4678
        %7316 = vmatpush1.bf16.msra.mxu0 %v4677
        %7317 = vmatprep.subr.bf16.mxu0 %v4682
        %7318 = vmatpush1.bf16.msra.mxu0 %v4681
        %7319 = vmatprep.subr.bf16.mxu0 %v4686
        %7320 = vmatpush1.bf16.msra.mxu0 %v4685
        %7321 = vmatprep.subr.bf16.mxu0 %v4690
        %7322 = vmatpush1.bf16.msra.mxu0 %v4689
        %7323 = vmatprep.subr.bf16.mxu0 %v4694
        %7324 = vmatpush1.bf16.msra.mxu0 %v4693
        %7325 = vmatprep.subr.bf16.mxu0 %v4698
        %7326 = vmatpush1.bf16.msra.mxu0 %v4697
        %7327 = vmatprep.subr.bf16.mxu0 %v4702
        %7328 = vmatpush1.bf16.msra.mxu0 %v4701
        %7329 = vmatprep.mubr.bf16.mxu0 %v1380
        %7330 = vmatmul.mubr.bf16.gmra.mrb[0].mxu0 %v1379
        %v7331 = vpop.f32.mrb[0].mxu0
        %v7332 = vadd.f32 %v7291, %v7331
        %v7333 = vpop.f32.mrb[0].mxu0
        %v7334 = vadd.f32 %v7293, %v7333
        %v7335 = vpop.f32.mrb[0].mxu0
        %v7336 = vpop.f32.mrb[0].mxu0
        %7337 = vdwg.mxu0
        %7338 = vmatprep.subr.bf16.mxu0 %v4706
        %7339 = vmatpush1.bf16.msra.mxu0 %v4705
        %7340 = vmatprep.subr.bf16.mxu0 %v4710
        %7341 = vmatpush1.bf16.msra.mxu0 %v4709
        %7342 = vmatprep.subr.bf16.mxu0 %v4714
        %7343 = vmatpush1.bf16.msra.mxu0 %v4713
        %7344 = vmatprep.subr.bf16.mxu0 %v4718
        %7345 = vmatpush1.bf16.msra.mxu0 %v4717
        %7346 = vmatprep.subr.bf16.mxu0 %v4722
        %7347 = vmatpush1.bf16.msra.mxu0 %v4721
        %7348 = vmatprep.subr.bf16.mxu0 %v4726
        %7349 = vmatpush1.bf16.msra.mxu0 %v4725
        %7350 = vmatprep.subr.bf16.mxu0 %v4730
        %7351 = vmatpush1.bf16.msra.mxu0 %v4729
        %7352 = vmatprep.subr.bf16.mxu0 %v4734
        %7353 = vmatpush1.bf16.msra.mxu0 %v4733
        %7354 = vmatprep.subr.bf16.mxu0 %v4738
        %7355 = vmatpush1.bf16.msra.mxu0 %v4737
        %7356 = vmatprep.subr.bf16.mxu0 %v4742
        %7357 = vmatpush1.bf16.msra.mxu0 %v4741
        %7358 = vmatprep.subr.bf16.mxu0 %v4746
        %7359 = vmatpush1.bf16.msra.mxu0 %v4745
        %7360 = vmatprep.subr.bf16.mxu0 %v4750
        %7361 = vmatpush1.bf16.msra.mxu0 %v4749
        %7362 = vmatprep.subr.bf16.mxu0 %v4754
        %7363 = vmatpush1.bf16.msra.mxu0 %v4753
        %7364 = vmatprep.subr.bf16.mxu0 %v4758
        %7365 = vmatpush1.bf16.msra.mxu0 %v4757
        %7366 = vmatprep.subr.bf16.mxu0 %v4762
        %7367 = vmatpush1.bf16.msra.mxu0 %v4761
        %7368 = vmatprep.subr.bf16.mxu0 %v4766
        %7369 = vmatpush1.bf16.msra.mxu0 %v4765
        %7370 = vmatprep.mubr.bf16.mxu0 %v1382
        %7371 = vmatmul.mubr.bf16.gmra.mrb[0].mxu0 %v1381
        %v7372 = vpop.f32.mrb[0].mxu0
        %v7373 = vadd.f32 %v7332, %v7372
        %v7374 = vpop.f32.mrb[0].mxu0
        %v7375 = vadd.f32 %v7334, %v7374
        %v7376 = vpop.f32.mrb[0].mxu0
        %v7377 = vpop.f32.mrb[0].mxu0
        %7378 = vdwg.mxu0
        %7379 = vmatprep.subr.bf16.mxu0 %v4770
        %7380 = vmatpush1.bf16.msra.mxu0 %v4769
        %7381 = vmatprep.subr.bf16.mxu0 %v4774
        %7382 = vmatpush1.bf16.msra.mxu0 %v4773
        %7383 = vmatprep.subr.bf16.mxu0 %v4778
        %7384 = vmatpush1.bf16.msra.mxu0 %v4777
        %7385 = vmatprep.subr.bf16.mxu0 %v4782
        %7386 = vmatpush1.bf16.msra.mxu0 %v4781
        %7387 = vmatprep.subr.bf16.mxu0 %v4786
        %7388 = vmatpush1.bf16.msra.mxu0 %v4785
        %7389 = vmatprep.subr.bf16.mxu0 %v4790
        %7390 = vmatpush1.bf16.msra.mxu0 %v4789
        %7391 = vmatprep.subr.bf16.mxu0 %v4794
        %7392 = vmatpush1.bf16.msra.mxu0 %v4793
        %7393 = vmatprep.subr.bf16.mxu0 %v4798
        %7394 = vmatpush1.bf16.msra.mxu0 %v4797
        %7395 = vmatprep.subr.bf16.mxu0 %v4802
        %7396 = vmatpush1.bf16.msra.mxu0 %v4801
        %7397 = vmatprep.subr.bf16.mxu0 %v4806
        %7398 = vmatpush1.bf16.msra.mxu0 %v4805
        %7399 = vmatprep.subr.bf16.mxu0 %v4810
        %7400 = vmatpush1.bf16.msra.mxu0 %v4809
        %7401 = vmatprep.subr.bf16.mxu0 %v4814
        %7402 = vmatpush1.bf16.msra.mxu0 %v4813
        %7403 = vmatprep.subr.bf16.mxu0 %v4818
        %7404 = vmatpush1.bf16.msra.mxu0 %v4817
        %7405 = vmatprep.subr.bf16.mxu0 %v4822
        %7406 = vmatpush1.bf16.msra.mxu0 %v4821
        %7407 = vmatprep.subr.bf16.mxu0 %v4826
        %7408 = vmatpush1.bf16.msra.mxu0 %v4825
        %7409 = vmatprep.subr.bf16.mxu0 %v4830
        %7410 = vmatpush1.bf16.msra.mxu0 %v4829
        %7411 = vmatprep.mubr.bf16.mxu0 %v1384
        %7412 = vmatmul.mubr.bf16.gmra.mrb[0].mxu0 %v1383
        %v7413 = vpop.f32.mrb[0].mxu0
        %v7414 = vadd.f32 %v7373, %v7413
        %v7415 = vpop.f32.mrb[0].mxu0
        %v7416 = vadd.f32 %v7375, %v7415
        %v7417 = vpop.f32.mrb[0].mxu0
        %v7418 = vpop.f32.mrb[0].mxu0
        %7419 = vdwg.mxu0
        %7420 = vmatprep.subr.bf16.mxu0 %v4834
        %7421 = vmatpush1.bf16.msra.mxu0 %v4833
        %7422 = vmatprep.subr.bf16.mxu0 %v4838
        %7423 = vmatpush1.bf16.msra.mxu0 %v4837
        %7424 = vmatprep.subr.bf16.mxu0 %v4842
        %7425 = vmatpush1.bf16.msra.mxu0 %v4841
        %7426 = vmatprep.subr.bf16.mxu0 %v4846
        %7427 = vmatpush1.bf16.msra.mxu0 %v4845
        %7428 = vmatprep.subr.bf16.mxu0 %v4850
        %7429 = vmatpush1.bf16.msra.mxu0 %v4849
        %7430 = vmatprep.subr.bf16.mxu0 %v4854
        %7431 = vmatpush1.bf16.msra.mxu0 %v4853
        %7432 = vmatprep.subr.bf16.mxu0 %v4858
        %7433 = vmatpush1.bf16.msra.mxu0 %v4857
        %7434 = vmatprep.subr.bf16.mxu0 %v4862
        %7435 = vmatpush1.bf16.msra.mxu0 %v4861
        %7436 = vmatprep.subr.bf16.mxu0 %v4866
        %7437 = vmatpush1.bf16.msra.mxu0 %v4865
        %7438 = vmatprep.subr.bf16.mxu0 %v4870
        %7439 = vmatpush1.bf16.msra.mxu0 %v4869
        %7440 = vmatprep.subr.bf16.mxu0 %v4874
        %7441 = vmatpush1.bf16.msra.mxu0 %v4873
        %7442 = vmatprep.subr.bf16.mxu0 %v4878
        %7443 = vmatpush1.bf16.msra.mxu0 %v4877
        %7444 = vmatprep.subr.bf16.mxu0 %v4882
        %7445 = vmatpush1.bf16.msra.mxu0 %v4881
        %7446 = vmatprep.subr.bf16.mxu0 %v4886
        %7447 = vmatpush1.bf16.msra.mxu0 %v4885
        %7448 = vmatprep.subr.bf16.mxu0 %v4890
        %7449 = vmatpush1.bf16.msra.mxu0 %v4889
        %7450 = vmatprep.subr.bf16.mxu0 %v4894
        %7451 = vmatpush1.bf16.msra.mxu0 %v4893
        %7452 = vmatprep.mubr.bf16.mxu0 %v1386
        %7453 = vmatmul.mubr.bf16.gmra.mrb[0].mxu0 %v1385
        %v7454 = vpop.f32.mrb[0].mxu0
        %v7455 = vadd.f32 %v7414, %v7454
        %v7456 = vpop.f32.mrb[0].mxu0
        %v7457 = vadd.f32 %v7416, %v7456
        %v7458 = vpop.f32.mrb[0].mxu0
        %v7459 = vpop.f32.mrb[0].mxu0
        %7460 = vdwg.mxu0
        %7461 = vmatprep.subr.bf16.mxu0 %v4898
        %7462 = vmatpush1.bf16.msra.mxu0 %v4897
        %7463 = vmatprep.subr.bf16.mxu0 %v4902
        %7464 = vmatpush1.bf16.msra.mxu0 %v4901
        %7465 = vmatprep.subr.bf16.mxu0 %v4906
        %7466 = vmatpush1.bf16.msra.mxu0 %v4905
        %7467 = vmatprep.subr.bf16.mxu0 %v4910
        %7468 = vmatpush1.bf16.msra.mxu0 %v4909
        %7469 = vmatprep.subr.bf16.mxu0 %v4914
        %7470 = vmatpush1.bf16.msra.mxu0 %v4913
        %7471 = vmatprep.subr.bf16.mxu0 %v4918
        %7472 = vmatpush1.bf16.msra.mxu0 %v4917
        %7473 = vmatprep.subr.bf16.mxu0 %v4922
        %7474 = vmatpush1.bf16.msra.mxu0 %v4921
        %7475 = vmatprep.subr.bf16.mxu0 %v4926
        %7476 = vmatpush1.bf16.msra.mxu0 %v4925
        %7477 = vmatprep.subr.bf16.mxu0 %v4930
        %7478 = vmatpush1.bf16.msra.mxu0 %v4929
        %7479 = vmatprep.subr.bf16.mxu0 %v4934
        %7480 = vmatpush1.bf16.msra.mxu0 %v4933
        %7481 = vmatprep.subr.bf16.mxu0 %v4938
        %7482 = vmatpush1.bf16.msra.mxu0 %v4937
        %7483 = vmatprep.subr.bf16.mxu0 %v4942
        %7484 = vmatpush1.bf16.msra.mxu0 %v4941
        %7485 = vmatprep.subr.bf16.mxu0 %v4946
        %7486 = vmatpush1.bf16.msra.mxu0 %v4945
        %7487 = vmatprep.subr.bf16.mxu0 %v4950
        %7488 = vmatpush1.bf16.msra.mxu0 %v4949
        %7489 = vmatprep.subr.bf16.mxu0 %v4954
        %7490 = vmatpush1.bf16.msra.mxu0 %v4953
        %7491 = vmatprep.subr.bf16.mxu0 %v4958
        %7492 = vmatpush1.bf16.msra.mxu0 %v4957
        %7493 = vmatprep.mubr.bf16.mxu0 %v1388
        %7494 = vmatmul.mubr.bf16.gmra.mrb[0].mxu0 %v1387
        %v7495 = vpop.f32.mrb[0].mxu0
        %v7496 = vadd.f32 %v7455, %v7495
        %v7497 = vpop.f32.mrb[0].mxu0
        %v7498 = vadd.f32 %v7457, %v7497
        %v7499 = vpop.f32.mrb[0].mxu0
        %v7500 = vpop.f32.mrb[0].mxu0
        %7501 = vdwg.mxu0
        %7502 = vmatprep.subr.bf16.mxu0 %v4962
        %7503 = vmatpush1.bf16.msra.mxu0 %v4961
        %7504 = vmatprep.subr.bf16.mxu0 %v4966
        %7505 = vmatpush1.bf16.msra.mxu0 %v4965
        %7506 = vmatprep.subr.bf16.mxu0 %v4970
        %7507 = vmatpush1.bf16.msra.mxu0 %v4969
        %7508 = vmatprep.subr.bf16.mxu0 %v4974
        %7509 = vmatpush1.bf16.msra.mxu0 %v4973
        %7510 = vmatprep.subr.bf16.mxu0 %v4978
        %7511 = vmatpush1.bf16.msra.mxu0 %v4977
        %7512 = vmatprep.subr.bf16.mxu0 %v4982
        %7513 = vmatpush1.bf16.msra.mxu0 %v4981
        %7514 = vmatprep.subr.bf16.mxu0 %v4986
        %7515 = vmatpush1.bf16.msra.mxu0 %v4985
        %7516 = vmatprep.subr.bf16.mxu0 %v4990
        %7517 = vmatpush1.bf16.msra.mxu0 %v4989
        %7518 = vmatprep.subr.bf16.mxu0 %v4994
        %7519 = vmatpush1.bf16.msra.mxu0 %v4993
        %7520 = vmatprep.subr.bf16.mxu0 %v4998
        %7521 = vmatpush1.bf16.msra.mxu0 %v4997
        %7522 = vmatprep.subr.bf16.mxu0 %v5002
        %7523 = vmatpush1.bf16.msra.mxu0 %v5001
        %7524 = vmatprep.subr.bf16.mxu0 %v5006
        %7525 = vmatpush1.bf16.msra.mxu0 %v5005
        %7526 = vmatprep.subr.bf16.mxu0 %v5010
        %7527 = vmatpush1.bf16.msra.mxu0 %v5009
        %7528 = vmatprep.subr.bf16.mxu0 %v5014
        %7529 = vmatpush1.bf16.msra.mxu0 %v5013
        %7530 = vmatprep.subr.bf16.mxu0 %v5018
        %7531 = vmatpush1.bf16.msra.mxu0 %v5017
        %7532 = vmatprep.subr.bf16.mxu0 %v5022
        %7533 = vmatpush1.bf16.msra.mxu0 %v5021
        %7534 = vmatprep.mubr.bf16.mxu0 %v1390
        %7535 = vmatmul.mubr.bf16.gmra.mrb[0].mxu0 %v1389
        %v7536 = vpop.f32.mrb[0].mxu0
        %v7537 = vadd.f32 %v7496, %v7536
        %v7538 = vpop.f32.mrb[0].mxu0
        %v7539 = vadd.f32 %v7498, %v7538
        %v7540 = vpop.f32.mrb[0].mxu0
        %v7541 = vpop.f32.mrb[0].mxu0
        %7542 = vdwg.mxu0
        %7543 = vmatprep.subr.bf16.mxu0 %v5026
        %7544 = vmatpush1.bf16.msra.mxu0 %v5025
        %7545 = vmatprep.subr.bf16.mxu0 %v5030
        %7546 = vmatpush1.bf16.msra.mxu0 %v5029
        %7547 = vmatprep.subr.bf16.mxu0 %v5034
        %7548 = vmatpush1.bf16.msra.mxu0 %v5033
        %7549 = vmatprep.subr.bf16.mxu0 %v5038
        %7550 = vmatpush1.bf16.msra.mxu0 %v5037
        %7551 = vmatprep.subr.bf16.mxu0 %v5042
        %7552 = vmatpush1.bf16.msra.mxu0 %v5041
        %7553 = vmatprep.subr.bf16.mxu0 %v5046
        %7554 = vmatpush1.bf16.msra.mxu0 %v5045
        %7555 = vmatprep.subr.bf16.mxu0 %v5050
        %7556 = vmatpush1.bf16.msra.mxu0 %v5049
        %7557 = vmatprep.subr.bf16.mxu0 %v5054
        %7558 = vmatpush1.bf16.msra.mxu0 %v5053
        %7559 = vmatprep.subr.bf16.mxu0 %v5058
        %7560 = vmatpush1.bf16.msra.mxu0 %v5057
        %7561 = vmatprep.subr.bf16.mxu0 %v5062
        %7562 = vmatpush1.bf16.msra.mxu0 %v5061
        %7563 = vmatprep.subr.bf16.mxu0 %v5066
        %7564 = vmatpush1.bf16.msra.mxu0 %v5065
        %7565 = vmatprep.subr.bf16.mxu0 %v5070
        %7566 = vmatpush1.bf16.msra.mxu0 %v5069
        %7567 = vmatprep.subr.bf16.mxu0 %v5074
        %7568 = vmatpush1.bf16.msra.mxu0 %v5073
        %7569 = vmatprep.subr.bf16.mxu0 %v5078
        %7570 = vmatpush1.bf16.msra.mxu0 %v5077
        %7571 = vmatprep.subr.bf16.mxu0 %v5082
        %7572 = vmatpush1.bf16.msra.mxu0 %v5081
        %7573 = vmatprep.subr.bf16.mxu0 %v5086
        %7574 = vmatpush1.bf16.msra.mxu0 %v5085
        %7575 = vmatprep.mubr.bf16.mxu0 %v1392
        %7576 = vmatmul.mubr.bf16.gmra.mrb[0].mxu0 %v1391
        %v7577 = vpop.f32.mrb[0].mxu0
        %v7578 = vadd.f32 %v7537, %v7577
        %v7579 = vpop.f32.mrb[0].mxu0
        %v7580 = vadd.f32 %v7539, %v7579
        %v7581 = vpop.f32.mrb[0].mxu0
        %v7582 = vpop.f32.mrb[0].mxu0
        %7583 = vdwg.mxu0
        %7584 = vmatprep.subr.bf16.mxu0 %v5090
        %7585 = vmatpush1.bf16.msra.mxu0 %v5089
        %7586 = vmatprep.subr.bf16.mxu0 %v5094
        %7587 = vmatpush1.bf16.msra.mxu0 %v5093
        %7588 = vmatprep.subr.bf16.mxu0 %v5098
        %7589 = vmatpush1.bf16.msra.mxu0 %v5097
        %7590 = vmatprep.subr.bf16.mxu0 %v5102
        %7591 = vmatpush1.bf16.msra.mxu0 %v5101
        %7592 = vmatprep.subr.bf16.mxu0 %v5106
        %7593 = vmatpush1.bf16.msra.mxu0 %v5105
        %7594 = vmatprep.subr.bf16.mxu0 %v5110
        %7595 = vmatpush1.bf16.msra.mxu0 %v5109
        %7596 = vmatprep.subr.bf16.mxu0 %v5114
        %7597 = vmatpush1.bf16.msra.mxu0 %v5113
        %7598 = vmatprep.subr.bf16.mxu0 %v5118
        %7599 = vmatpush1.bf16.msra.mxu0 %v5117
        %7600 = vmatprep.subr.bf16.mxu0 %v5122
        %7601 = vmatpush1.bf16.msra.mxu0 %v5121
        %7602 = vmatprep.subr.bf16.mxu0 %v5126
        %7603 = vmatpush1.bf16.msra.mxu0 %v5125
        %7604 = vmatprep.subr.bf16.mxu0 %v5130
        %7605 = vmatpush1.bf16.msra.mxu0 %v5129
        %7606 = vmatprep.subr.bf16.mxu0 %v5134
        %7607 = vmatpush1.bf16.msra.mxu0 %v5133
        %7608 = vmatprep.subr.bf16.mxu0 %v5138
        %7609 = vmatpush1.bf16.msra.mxu0 %v5137
        %7610 = vmatprep.subr.bf16.mxu0 %v5142
        %7611 = vmatpush1.bf16.msra.mxu0 %v5141
        %7612 = vmatprep.subr.bf16.mxu0 %v5146
        %7613 = vmatpush1.bf16.msra.mxu0 %v5145
        %7614 = vmatprep.subr.bf16.mxu0 %v5150
        %7615 = vmatpush1.bf16.msra.mxu0 %v5149
        %7616 = vmatprep.mubr.bf16.mxu0 %v1394
        %7617 = vmatmul.mubr.bf16.gmra.mrb[0].mxu0 %v1393
        %v7618 = vpop.f32.mrb[0].mxu0
        %v7619 = vadd.f32 %v7578, %v7618
        %v7620 = vpop.f32.mrb[0].mxu0
        %v7621 = vadd.f32 %v7580, %v7620
        %v7622 = vpop.f32.mrb[0].mxu0
        %v7623 = vpop.f32.mrb[0].mxu0
        %7624 = vdwg.mxu0
        %7625 = vmatprep.subr.bf16.mxu0 %v5154
        %7626 = vmatpush1.bf16.msra.mxu0 %v5153
        %7627 = vmatprep.subr.bf16.mxu0 %v5158
        %7628 = vmatpush1.bf16.msra.mxu0 %v5157
        %7629 = vmatprep.subr.bf16.mxu0 %v5162
        %7630 = vmatpush1.bf16.msra.mxu0 %v5161
        %7631 = vmatprep.subr.bf16.mxu0 %v5166
        %7632 = vmatpush1.bf16.msra.mxu0 %v5165
        %7633 = vmatprep.subr.bf16.mxu0 %v5170
        %7634 = vmatpush1.bf16.msra.mxu0 %v5169
        %7635 = vmatprep.subr.bf16.mxu0 %v5174
        %7636 = vmatpush1.bf16.msra.mxu0 %v5173
        %7637 = vmatprep.subr.bf16.mxu0 %v5178
        %7638 = vmatpush1.bf16.msra.mxu0 %v5177
        %7639 = vmatprep.subr.bf16.mxu0 %v5182
        %7640 = vmatpush1.bf16.msra.mxu0 %v5181
        %7641 = vmatprep.subr.bf16.mxu0 %v5186
        %7642 = vmatpush1.bf16.msra.mxu0 %v5185
        %7643 = vmatprep.subr.bf16.mxu0 %v5190
        %7644 = vmatpush1.bf16.msra.mxu0 %v5189
        %7645 = vmatprep.subr.bf16.mxu0 %v5194
        %7646 = vmatpush1.bf16.msra.mxu0 %v5193
        %7647 = vmatprep.subr.bf16.mxu0 %v5198
        %7648 = vmatpush1.bf16.msra.mxu0 %v5197
        %7649 = vmatprep.subr.bf16.mxu0 %v5202
        %7650 = vmatpush1.bf16.msra.mxu0 %v5201
        %7651 = vmatprep.subr.bf16.mxu0 %v5206
        %7652 = vmatpush1.bf16.msra.mxu0 %v5205
        %7653 = vmatprep.subr.bf16.mxu0 %v5210
        %7654 = vmatpush1.bf16.msra.mxu0 %v5209
        %7655 = vmatprep.subr.bf16.mxu0 %v5214
        %7656 = vmatpush1.bf16.msra.mxu0 %v5213
        %7657 = vmatprep.mubr.bf16.mxu0 %v1396
        %7658 = vmatmul.mubr.bf16.gmra.mrb[0].mxu0 %v1395
        %v7659 = vpop.f32.mrb[0].mxu0
        %v7660 = vadd.f32 %v7619, %v7659
        %v7661 = vpop.f32.mrb[0].mxu0
        %v7662 = vadd.f32 %v7621, %v7661
        %v7663 = vpop.f32.mrb[0].mxu0
        %v7664 = vpop.f32.mrb[0].mxu0
        %7665 = vdwg.mxu0
        %7666 = vmatprep.subr.bf16.mxu0 %v5218
        %7667 = vmatpush1.bf16.msra.mxu0 %v5217
        %7668 = vmatprep.subr.bf16.mxu0 %v5222
        %7669 = vmatpush1.bf16.msra.mxu0 %v5221
        %7670 = vmatprep.subr.bf16.mxu0 %v5226
        %7671 = vmatpush1.bf16.msra.mxu0 %v5225
        %7672 = vmatprep.subr.bf16.mxu0 %v5230
        %7673 = vmatpush1.bf16.msra.mxu0 %v5229
        %7674 = vmatprep.subr.bf16.mxu0 %v5234
        %7675 = vmatpush1.bf16.msra.mxu0 %v5233
        %7676 = vmatprep.subr.bf16.mxu0 %v5238
        %7677 = vmatpush1.bf16.msra.mxu0 %v5237
        %7678 = vmatprep.subr.bf16.mxu0 %v5242
        %7679 = vmatpush1.bf16.msra.mxu0 %v5241
        %7680 = vmatprep.subr.bf16.mxu0 %v5246
        %7681 = vmatpush1.bf16.msra.mxu0 %v5245
        %7682 = vmatprep.subr.bf16.mxu0 %v5250
        %7683 = vmatpush1.bf16.msra.mxu0 %v5249
        %7684 = vmatprep.subr.bf16.mxu0 %v5254
        %7685 = vmatpush1.bf16.msra.mxu0 %v5253
        %7686 = vmatprep.subr.bf16.mxu0 %v5258
        %7687 = vmatpush1.bf16.msra.mxu0 %v5257
        %7688 = vmatprep.subr.bf16.mxu0 %v5262
        %7689 = vmatpush1.bf16.msra.mxu0 %v5261
        %7690 = vmatprep.subr.bf16.mxu0 %v5266
        %7691 = vmatpush1.bf16.msra.mxu0 %v5265
        %7692 = vmatprep.subr.bf16.mxu0 %v5270
        %7693 = vmatpush1.bf16.msra.mxu0 %v5269
        %7694 = vmatprep.subr.bf16.mxu0 %v5274
        %7695 = vmatpush1.bf16.msra.mxu0 %v5273
        %7696 = vmatprep.subr.bf16.mxu0 %v5278
        %7697 = vmatpush1.bf16.msra.mxu0 %v5277
        %7698 = vmatprep.mubr.bf16.mxu0 %v1398
        %7699 = vmatmul.mubr.bf16.gmra.mrb[0].mxu0 %v1397
        %v7700 = vpop.f32.mrb[0].mxu0
        %v7701 = vadd.f32 %v7660, %v7700
        %v7702 = vpop.f32.mrb[0].mxu0
        %v7703 = vadd.f32 %v7662, %v7702
        %v7704 = vpop.f32.mrb[0].mxu0
        %v7705 = vpop.f32.mrb[0].mxu0
        %7706 = vdwg.mxu0
        %7707 = vmatprep.subr.bf16.mxu0 %v5282
        %7708 = vmatpush1.bf16.msra.mxu0 %v5281
        %7709 = vmatprep.subr.bf16.mxu0 %v5286
        %7710 = vmatpush1.bf16.msra.mxu0 %v5285
        %7711 = vmatprep.subr.bf16.mxu0 %v5290
        %7712 = vmatpush1.bf16.msra.mxu0 %v5289
        %7713 = vmatprep.subr.bf16.mxu0 %v5294
        %7714 = vmatpush1.bf16.msra.mxu0 %v5293
        %7715 = vmatprep.subr.bf16.mxu0 %v5298
        %7716 = vmatpush1.bf16.msra.mxu0 %v5297
        %7717 = vmatprep.subr.bf16.mxu0 %v5302
        %7718 = vmatpush1.bf16.msra.mxu0 %v5301
        %7719 = vmatprep.subr.bf16.mxu0 %v5306
        %7720 = vmatpush1.bf16.msra.mxu0 %v5305
        %7721 = vmatprep.subr.bf16.mxu0 %v5310
        %7722 = vmatpush1.bf16.msra.mxu0 %v5309
        %7723 = vmatprep.subr.bf16.mxu0 %v5314
        %7724 = vmatpush1.bf16.msra.mxu0 %v5313
        %7725 = vmatprep.subr.bf16.mxu0 %v5318
        %7726 = vmatpush1.bf16.msra.mxu0 %v5317
        %7727 = vmatprep.subr.bf16.mxu0 %v5322
        %7728 = vmatpush1.bf16.msra.mxu0 %v5321
        %7729 = vmatprep.subr.bf16.mxu0 %v5326
        %7730 = vmatpush1.bf16.msra.mxu0 %v5325
        %7731 = vmatprep.subr.bf16.mxu0 %v5330
        %7732 = vmatpush1.bf16.msra.mxu0 %v5329
        %7733 = vmatprep.subr.bf16.mxu0 %v5334
        %7734 = vmatpush1.bf16.msra.mxu0 %v5333
        %7735 = vmatprep.subr.bf16.mxu0 %v5338
        %7736 = vmatpush1.bf16.msra.mxu0 %v5337
        %7737 = vmatprep.subr.bf16.mxu0 %v5342
        %7738 = vmatpush1.bf16.msra.mxu0 %v5341
        %7739 = vmatprep.mubr.bf16.mxu0 %v1400
        %7740 = vmatmul.mubr.bf16.gmra.mrb[0].mxu0 %v1399
        %v7741 = vpop.f32.mrb[0].mxu0
        %v7742 = vadd.f32 %v7701, %v7741
        %v7743 = vpop.f32.mrb[0].mxu0
        %v7744 = vadd.f32 %v7703, %v7743
        %v7745 = vpop.f32.mrb[0].mxu0
        %v7746 = vpop.f32.mrb[0].mxu0
        %7747 = vdwg.mxu0
        %7748 = vmatprep.subr.bf16.mxu0 %v5346
        %7749 = vmatpush1.bf16.msra.mxu0 %v5345
        %7750 = vmatprep.subr.bf16.mxu0 %v5350
        %7751 = vmatpush1.bf16.msra.mxu0 %v5349
        %7752 = vmatprep.subr.bf16.mxu0 %v5354
        %7753 = vmatpush1.bf16.msra.mxu0 %v5353
        %7754 = vmatprep.subr.bf16.mxu0 %v5358
        %7755 = vmatpush1.bf16.msra.mxu0 %v5357
        %7756 = vmatprep.subr.bf16.mxu0 %v5362
        %7757 = vmatpush1.bf16.msra.mxu0 %v5361
        %7758 = vmatprep.subr.bf16.mxu0 %v5366
        %7759 = vmatpush1.bf16.msra.mxu0 %v5365
        %7760 = vmatprep.subr.bf16.mxu0 %v5370
        %7761 = vmatpush1.bf16.msra.mxu0 %v5369
        %7762 = vmatprep.subr.bf16.mxu0 %v5374
        %7763 = vmatpush1.bf16.msra.mxu0 %v5373
        %7764 = vmatprep.subr.bf16.mxu0 %v5378
        %7765 = vmatpush1.bf16.msra.mxu0 %v5377
        %7766 = vmatprep.subr.bf16.mxu0 %v5382
        %7767 = vmatpush1.bf16.msra.mxu0 %v5381
        %7768 = vmatprep.subr.bf16.mxu0 %v5386
        %7769 = vmatpush1.bf16.msra.mxu0 %v5385
        %7770 = vmatprep.subr.bf16.mxu0 %v5390
        %7771 = vmatpush1.bf16.msra.mxu0 %v5389
        %7772 = vmatprep.subr.bf16.mxu0 %v5394
        %7773 = vmatpush1.bf16.msra.mxu0 %v5393
        %7774 = vmatprep.subr.bf16.mxu0 %v5398
        %7775 = vmatpush1.bf16.msra.mxu0 %v5397
        %7776 = vmatprep.subr.bf16.mxu0 %v5402
        %7777 = vmatpush1.bf16.msra.mxu0 %v5401
        %7778 = vmatprep.subr.bf16.mxu0 %v5406
        %7779 = vmatpush1.bf16.msra.mxu0 %v5405
        %7780 = vmatprep.mubr.bf16.mxu0 %v1402
        %7781 = vmatmul.mubr.bf16.gmra.mrb[0].mxu0 %v1401
        %v7782 = vpop.f32.mrb[0].mxu0
        %v7783 = vadd.f32 %v7742, %v7782
        %v7784 = vpop.f32.mrb[0].mxu0
        %v7785 = vadd.f32 %v7744, %v7784
        %v7786 = vpop.f32.mrb[0].mxu0
        %v7787 = vpop.f32.mrb[0].mxu0
        %7788 = vdwg.mxu0
        %7789 = vmatprep.subr.bf16.mxu0 %v5410
        %7790 = vmatpush1.bf16.msra.mxu0 %v5409
        %7791 = vmatprep.subr.bf16.mxu0 %v5414
        %7792 = vmatpush1.bf16.msra.mxu0 %v5413
        %7793 = vmatprep.subr.bf16.mxu0 %v5418
        %7794 = vmatpush1.bf16.msra.mxu0 %v5417
        %7795 = vmatprep.subr.bf16.mxu0 %v5422
        %7796 = vmatpush1.bf16.msra.mxu0 %v5421
        %7797 = vmatprep.subr.bf16.mxu0 %v5426
        %7798 = vmatpush1.bf16.msra.mxu0 %v5425
        %7799 = vmatprep.subr.bf16.mxu0 %v5430
        %7800 = vmatpush1.bf16.msra.mxu0 %v5429
        %7801 = vmatprep.subr.bf16.mxu0 %v5434
        %7802 = vmatpush1.bf16.msra.mxu0 %v5433
        %7803 = vmatprep.subr.bf16.mxu0 %v5438
        %7804 = vmatpush1.bf16.msra.mxu0 %v5437
        %7805 = vmatprep.subr.bf16.mxu0 %v5442
        %7806 = vmatpush1.bf16.msra.mxu0 %v5441
        %7807 = vmatprep.subr.bf16.mxu0 %v5446
        %7808 = vmatpush1.bf16.msra.mxu0 %v5445
        %7809 = vmatprep.subr.bf16.mxu0 %v5450
        %7810 = vmatpush1.bf16.msra.mxu0 %v5449
        %7811 = vmatprep.subr.bf16.mxu0 %v5454
        %7812 = vmatpush1.bf16.msra.mxu0 %v5453
        %7813 = vmatprep.subr.bf16.mxu0 %v5458
        %7814 = vmatpush1.bf16.msra.mxu0 %v5457
        %7815 = vmatprep.subr.bf16.mxu0 %v5462
        %7816 = vmatpush1.bf16.msra.mxu0 %v5461
        %7817 = vmatprep.subr.bf16.mxu0 %v5466
        %7818 = vmatpush1.bf16.msra.mxu0 %v5465
        %7819 = vmatprep.subr.bf16.mxu0 %v5470
        %7820 = vmatpush1.bf16.msra.mxu0 %v5469
        %7821 = vmatprep.mubr.bf16.mxu0 %v1404
        %7822 = vmatmul.mubr.bf16.gmra.mrb[0].mxu0 %v1403
        %v7823 = vpop.f32.mrb[0].mxu0
        %v7824 = vadd.f32 %v7783, %v7823
        %v7825 = vpop.f32.mrb[0].mxu0
        %v7826 = vadd.f32 %v7785, %v7825
        %v7827 = vpop.f32.mrb[0].mxu0
        %v7828 = vpop.f32.mrb[0].mxu0
        %7829 = vdwg.mxu0
        %7830 = vmatprep.subr.bf16.mxu0 %v5474
        %7831 = vmatpush1.bf16.msra.mxu0 %v5473
        %7832 = vmatprep.subr.bf16.mxu0 %v5478
        %7833 = vmatpush1.bf16.msra.mxu0 %v5477
        %7834 = vmatprep.subr.bf16.mxu0 %v5482
        %7835 = vmatpush1.bf16.msra.mxu0 %v5481
        %7836 = vmatprep.subr.bf16.mxu0 %v5486
        %7837 = vmatpush1.bf16.msra.mxu0 %v5485
        %7838 = vmatprep.subr.bf16.mxu0 %v5490
        %7839 = vmatpush1.bf16.msra.mxu0 %v5489
        %7840 = vmatprep.subr.bf16.mxu0 %v5494
        %7841 = vmatpush1.bf16.msra.mxu0 %v5493
        %7842 = vmatprep.subr.bf16.mxu0 %v5498
        %7843 = vmatpush1.bf16.msra.mxu0 %v5497
        %7844 = vmatprep.subr.bf16.mxu0 %v5502
        %7845 = vmatpush1.bf16.msra.mxu0 %v5501
        %7846 = vmatprep.subr.bf16.mxu0 %v5506
        %7847 = vmatpush1.bf16.msra.mxu0 %v5505
        %7848 = vmatprep.subr.bf16.mxu0 %v5510
        %7849 = vmatpush1.bf16.msra.mxu0 %v5509
        %7850 = vmatprep.subr.bf16.mxu0 %v5514
        %7851 = vmatpush1.bf16.msra.mxu0 %v5513
        %7852 = vmatprep.subr.bf16.mxu0 %v5518
        %7853 = vmatpush1.bf16.msra.mxu0 %v5517
        %7854 = vmatprep.subr.bf16.mxu0 %v5522
        %7855 = vmatpush1.bf16.msra.mxu0 %v5521
        %7856 = vmatprep.subr.bf16.mxu0 %v5526
        %7857 = vmatpush1.bf16.msra.mxu0 %v5525
        %7858 = vmatprep.subr.bf16.mxu0 %v5530
        %7859 = vmatpush1.bf16.msra.mxu0 %v5529
        %7860 = vmatprep.subr.bf16.mxu0 %v5534
        %7861 = vmatpush1.bf16.msra.mxu0 %v5533
        %7862 = vmatprep.mubr.bf16.mxu0 %v1406
        %7863 = vmatmul.mubr.bf16.gmra.mrb[0].mxu0 %v1405
        %v7864 = vpop.f32.mrb[0].mxu0
        %v7865 = vadd.f32 %v7824, %v7864
        %v7866 = vpop.f32.mrb[0].mxu0
        %v7867 = vadd.f32 %v7826, %v7866
        %v7868 = vpop.f32.mrb[0].mxu0
        %v7869 = vpop.f32.mrb[0].mxu0
        %7870 = vdwg.mxu0
        %v7871 = vadd.f32 %v283, %v7209
        %v7872 = vadd.f32 %v284, %v7211
        %v7873 = vadd.f32 %v285, %v7865
        %v7874 = vadd.f32 %v286, %v7867
        %7875 = vst [vmem:[#allocation2] sm:$0xff] %v7871
        %7876 = vst [vmem:[#allocation2 + $0x8] sm:$0xff] %v7872
        %7877 = vst [vmem:[#allocation2 + $0x10] sm:$0xff] %v7873
        %7878 = vst [vmem:[#allocation2 + $0x18] sm:$0xff] %v7874
        %p7879 = scmp.eq.s32.totalorder %s28, 1
        // Predicated region
        $region49: #{tpu_custom_call.1} parent=31 // pred_check
          %p7880 = pneg %p7879
        $region50: #{tpu_custom_call.1} parent=31 // pred_check_branch
          %7882 = sbr.rel (%p7880) target = $region52
        $region51: #{tpu_custom_call.1} parent=31 // pred_region
          %v7883 = vld [vmem:[#allocation2] sm:$0xff]
          %v7884 = vld [vmem:[#allocation2 + $0x8] sm:$0xff]
          %v7885 = vld [vmem:[#allocation2 + $0x10] sm:$0xff]
          %v7886 = vld [vmem:[#allocation2 + $0x18] sm:$0xff]
          %v7887 = vld [vmem:[#allocation8] sm:$0xf]
          %v7889 = vlaneseq
          %v7890 = vshrl.u32 %v7889, 7
          %v7891 = vsub.s32 0, %v7890
          %v7892 = vrot.slane %v7887, %v7891
          %v7893 = vlaneseq
          %v7894 = vshrl.u32 %v7893, 7
          %v7895 = vsub.s32 1, %v7894
          %v7896 = vrot.slane %v7887, %v7895
          %v7897 = vlaneseq
          %v7898 = vshrl.u32 %v7897, 7
          %v7899 = vsub.s32 2, %v7898
          %v7900 = vrot.slane %v7887, %v7899
          %v7901 = vlaneseq
          %v7902 = vshrl.u32 %v7901, 7
          %v7903 = vsub.s32 3, %v7902
          %v7904 = vrot.slane %v7887, %v7903
          %v7909 = vadd.f32 %v7883, %v7892
          %v7910 = vadd.f32 %v7884, %v7896
          %v7911 = vadd.f32 %v7885, %v7900
          %v7912 = vadd.f32 %v7886, %v7904
          %v7913 = vmax.f32 %v7909, 0.0
          %v7914 = vmax.f32 %v7910, 0.0
          %v7915 = vmax.f32 %v7911, 0.0
          %v7916 = vmax.f32 %v7912, 0.0
          %7917 = vst [vmem:[#allocation9] sm:$0xff] %v7913
          %7918 = vst [vmem:[#allocation9 + $0x8] sm:$0xff] %v7914
          %7919 = vst [vmem:[#allocation9 + $0x10] sm:$0xff] %v7915
          %7920 = vst [vmem:[#allocation9 + $0x18] sm:$0xff] %v7916
        $region52: #{tpu_custom_call.1} parent=31 // pred_fallthru
          _
        // Predicated region
        $region53: #{tpu_custom_call.1} parent=31 // pred_check
          %p7921 = pneg %p142
        $region54: #{tpu_custom_call.1} parent=31 // pred_check_branch
          %7923 = sbr.rel (%p7921) target = $region56
        $region55: #{tpu_custom_call.1} parent=31 // pred_region
          %s7924 = smul.u32 4, %s26
          %s7926 = ssub.s32 512, 512
          %7927 = vsyncadd [#allocation5], %s7926
          %s7928 = smul.addr %s27, 4
          %s7929 = sadd.s32 %s7924, %s7928
          %s7930 = smul.addr %s7929, 128
          %s7931 = scalar_lea.hbm %s3, %s7930
          %s7933 = sshll.u32 [#allocation9], 4
          %s7934 = int_to_ptr.vmem [resolvable:$true] %s7933
          %7936 = dma.vmem_to_hbm [thread:$0]  %s7934, 512, %s7931, [#allocation5]
        $region56: #{tpu_custom_call.1} parent=31 // pred_fallthru
          _
        // Predicated region
        $region57: #{tpu_custom_call.1} parent=31 // pred_check
          %p7937 = pneg %p142
        $region58: #{tpu_custom_call.1} parent=31 // pred_check_branch
          %7939 = sbr.rel (%p7937) target = $region60
        $region59: #{tpu_custom_call.1} parent=31 // pred_region
          %7940 = dma.done [#allocation5], 512
        $region60: #{tpu_custom_call.1} parent=31 // pred_fallthru
          _
      $region32: #{tpu_custom_call.1} parent=5 // pred_fallthru
        _
      %p7941 = scmp.le.s32.totalorder 2, %s16
      // Predicated region
      $region61: #{tpu_custom_call.1} parent=5 // pred_check
        %p7942 = pneg %p7941
      $region62: #{tpu_custom_call.1} parent=5 // pred_check_branch
        %7944 = sbr.rel (%p7942) target = $region64
      $region63: #{tpu_custom_call.1} parent=5 // pred_region
        %s7945 = ssub.s32 %s16, 2
      $region64: #{tpu_custom_call.1} parent=5 // pred_fallthru
        _
    $region6: #{tpu_custom_call.1} parent=1 // loop_footer
      %s20 = sadd.s32 1, %s16
    $region7: #{tpu_custom_call.1} parent=1 // loop_footer_branch
      %15 = sbr.rel target = $region3
    $region8: #{tpu_custom_call.1} parent=1 // loop_exit
      _
    %7946 = vsyncpa [#allocation4], 1
    %s7947 = scalar_lea.sflag [#allocation4], 1
    %7948 = vsyncpa %s7947, 1
    %7949 = vsyncpa [#allocation7], 1
    %s7950 = scalar_lea.sflag [#allocation7], 1
    %7951 = vsyncpa %s7950, 1
    %7952 = vsyncpa [#allocation5], 1
    %s7953 = scalar_lea.sflag [#allocation5], 1
    %7954 = vsyncpa %s7953, 1

</llo_original>
